<compile_context>
chip_gen: v7x
topology: tpu7x:2x2x1
jax: 0.10.0
libtpu: 0.0.40
codegen_flags: <defaults>
</compile_context>

<pallas_src>
import numpy as np
import jax
import jax.numpy as jnp
from jax.experimental import pallas as pl
from jax.experimental.pallas import tpu as pltpu

# ---------------- configuration ----------------
B = 256          # batch (number of 2-D input points)
TB = 256         # batch tile (lanes); 256 -> grid=1; use 128 for v7x 2-TC sharding
N_NODES = 32     # n_nodes
A_LO, B_HI = -3.0, 3.0   # DiTAC support [a, b]
K_CELLS = 8              # tessellation cells of the CPA velocity field
N_STEPS = 8              # Euler integration steps for the CPAB transform
H_CELL = (B_HI - A_LO) / K_CELLS


# ---------------- DiTAC (elementwise, VPU, select-chain interpolation) -----
def _ditac(h, slope_ref, icept_ref):
    """CPAB-based trainable activation (piecewise-linear velocity field).

    slope_ref / icept_ref: SMEM refs of shape (K_CELLS,) holding, per cell k,
    the coefficients of v_k(z) = slope[k]*z + icept[k], already scaled by
    dt = 1/N_STEPS (zero-boundary velocity).
    """
    # TODO(synk): DiTAC's out-of-range branch depends on `cpab_act_type`
    # (e.g. gelu-style tails); here values outside [a, b] pass through
    # unchanged, and the CPAB integral uses fixed-step Euler integration.
    z = jnp.clip(h, A_LO, B_HI)
    for _ in range(N_STEPS):
        # select-chain over cells: v = slope[cell(z)]*z + icept[cell(z)]
        v = slope_ref[0] * z + icept_ref[0]
        for k in range(1, K_CELLS):
            bk = A_LO + k * H_CELL
            v = jnp.where(z >= bk, slope_ref[k] * z + icept_ref[k], v)
        z = jnp.clip(z + v, A_LO, B_HI)           # v is already dt-scaled
    inside = (h >= A_LO) & (h <= B_HI)
    return jnp.where(inside, z, h)


# ---------------- Pallas kernel: whole MLP hot path ----------------
def mlp_kernel(slope1_ref, icept1_ref, slope2_ref, icept2_ref, b3_ref,
               x_ref, w1_ref, b1_ref, w2_ref, b2_ref, w3_ref,
               o_ref):
    # x_ref: (2, TB)  batch on lanes.
    x0 = x_ref[0:1, :]                                  # (1, TB)
    x1 = x_ref[1:2, :]                                  # (1, TB)

    # layer 1 (2 -> n): two broadcast FMAs on the VPU (MXU would run empty)
    h = w1_ref[:, 0:1] * x0 + w1_ref[:, 1:2] * x1 + b1_ref[...]      # (n, TB)
    h = _ditac(h, slope1_ref, icept1_ref)

    # layer 2 (n -> n): the only matmul worth the MXU
    h = jnp.dot(w2_ref[...], h, preferred_element_type=jnp.float32) \
        + b2_ref[...]                                                # (n, TB)
    h = _ditac(h, slope2_ref, icept2_ref)

    # layer 3 (n -> 1): lane-wise multiply + sublane reduce (XLU), + scalar bias
    y = jnp.sum(w3_ref[...] * h, axis=0, keepdims=True) + b3_ref[0]  # (1, TB)
    o_ref[...] = y.astype(o_ref.dtype)


# ---------------- wrapper ----------------
def _ditac_coeffs(theta):
    """Per-cell slope/intercept of the (dt-scaled) CPA velocity field."""
    theta_dt = theta / N_STEPS
    knots = A_LO + H_CELL * jnp.arange(K_CELLS, dtype=jnp.float32)
    slope = (theta_dt[1:] - theta_dt[:-1]) * (1.0 / H_CELL)          # (K,)
    icept = theta_dt[:-1] - slope * knots                            # (K,)
    return slope, icept


def mlp_triple_2d_pallas(x, params, tb=TB):
    # params in PyTorch layout: W (out, in), b (out,)
    (w1, b1, w2, b2, w3, b3, th1, th2) = params
    n = w1.shape[0]
    b_in = x.shape[0]
    bp = ((b_in + tb - 1) // tb) * tb

    # transpose to batch-on-lanes and pad batch to a multiple of the tile
    xt = jnp.zeros((2, bp), jnp.float32).at[:, :b_in].set(x.T)

    b1c = b1.reshape(n, 1)
    b2c = b2.reshape(n, 1)
    w3c = w3.reshape(n, 1)          # (1, n) -> (n, 1)
    b3s = b3.reshape(1)

    s1, c1 = _ditac_coeffs(th1)
    s2, c2 = _ditac_coeffs(th2)

    grid = (bp // tb,)
    out = pl.pallas_call(
        mlp_kernel,
        out_shape=jax.ShapeDtypeStruct((1, bp), jnp.float32),
        grid=grid,
        in_specs=[
            pl.BlockSpec(memory_space=pltpu.MemorySpace.SMEM),   # slope1
            pl.BlockSpec(memory_space=pltpu.MemorySpace.SMEM),   # icept1
            pl.BlockSpec(memory_space=pltpu.MemorySpace.SMEM),   # slope2
            pl.BlockSpec(memory_space=pltpu.MemorySpace.SMEM),   # icept2
            pl.BlockSpec(memory_space=pltpu.MemorySpace.SMEM),   # b3
            pl.BlockSpec((2, tb), lambda i: (0, i)),             # x^T
            pl.BlockSpec((n, 2), lambda i: (0, 0)),              # W1 (out,in)
            pl.BlockSpec((n, 1), lambda i: (0, 0)),              # b1
            pl.BlockSpec((n, n), lambda i: (0, 0)),              # W2 (out,in)
            pl.BlockSpec((n, 1), lambda i: (0, 0)),              # b2
            pl.BlockSpec((n, 1), lambda i: (0, 0)),              # W3^T
        ],
        out_specs=pl.BlockSpec((1, tb), lambda i: (0, i)),
        compiler_params=pltpu.CompilerParams(
            dimension_semantics=("parallel",)),
    )(s1, c1, s2, c2, b3s, xt, w1, b1c, w2, b2c, w3c)

    return out[:, :b_in].T                                        # (B, 1)


# ---------------- pure-JAX reference (original hat-function semantics) -----
def _ditac_ref(h, theta):
    z = jnp.clip(h, A_LO, B_HI)
    dt = 1.0 / N_STEPS
    for _ in range(N_STEPS):
        v = jnp.zeros_like(z)
        for k in range(K_CELLS + 1):
            xk = A_LO + k * H_CELL
            w = jnp.maximum(0.0, 1.0 - jnp.abs((z - xk) / H_CELL))
            v = v + theta[k] * w
        z = jnp.clip(z + dt * v, A_LO, B_HI)
    return jnp.where((h >= A_LO) & (h <= B_HI), z, h)


def mlp_triple_2d_ref(x, params):
    (w1, b1, w2, b2, w3, b3, th1, th2) = params
    h = x @ w1.T + b1
    h = _ditac_ref(h, th1)
    h = h @ w2.T + b2
    h = _ditac_ref(h, th2)
    return h @ w3.T + b3


# ---------------- deterministic parameter init (PyTorch-Linear style) ------
def init_params(key, n):
    ks = jax.random.split(key, 8)

    def linear(kw, kb, fan_in, fan_out):
        bound = 1.0 / np.sqrt(fan_in)
        w = jax.random.uniform(kw, (fan_out, fan_in), jnp.float32, -bound, bound)
        b = jax.random.uniform(kb, (fan_out,), jnp.float32, -bound, bound)
        return w, b

    w1, b1 = linear(ks[0], ks[1], 2, n)
    w2, b2 = linear(ks[2], ks[3], n, n)
    w3, b3 = linear(ks[4], ks[5], n, 1)
    # CPA velocity-field parameters of the two DiTAC activations
    # (zero-boundary so the diffeomorphism stays inside [a, b]).
    th1 = 0.5 * jax.random.normal(ks[6], (K_CELLS + 1,), jnp.float32)
    th2 = 0.5 * jax.random.normal(ks[7], (K_CELLS + 1,), jnp.float32)
    th1 = th1.at[0].set(0.0).at[K_CELLS].set(0.0)
    th2 = th2.at[0].set(0.0).at[K_CELLS].set(0.0)
    return (w1, b1, w2, b2, w3, b3, th1, th2)


if __name__ == "__main__":
    key = jax.random.PRNGKey(0)
    kx, kp = jax.random.split(key)
    x = jax.random.normal(kx, (B, 2), jnp.float32) * 2.0   # 2-D input points
    params = init_params(kp, N_NODES)

    y = mlp_triple_2d_pallas(x, params)
    y = jax.block_until_ready(y)

    y_ref = jax.block_until_ready(mlp_triple_2d_ref(x, params))
    assert y.shape == (B, 1)
    np.testing.assert_allclose(np.asarray(y), np.asarray(y_ref),
                               rtol=1e-4, atol=1e-4)
    print("KERNEL_OK")
</pallas_src>

<mosaic_0001>
module attributes {stable_mosaic.version = 11 : i64} {
  func.func @mlp_kernel(%arg0: i32, %arg1: memref<8xf32, #tpu.memory_space<smem>>, %arg2: memref<8xf32, #tpu.memory_space<smem>>, %arg3: memref<8xf32, #tpu.memory_space<smem>>, %arg4: memref<8xf32, #tpu.memory_space<smem>>, %arg5: memref<1xf32, #tpu.memory_space<smem>>, %arg6: memref<2x256xf32, #tpu.memory_space<vmem>>, %arg7: memref<32x2xf32, #tpu.memory_space<vmem>>, %arg8: memref<32x1xf32, #tpu.memory_space<vmem>>, %arg9: memref<32x32xf32, #tpu.memory_space<vmem>>, %arg10: memref<32x1xf32, #tpu.memory_space<vmem>>, %arg11: memref<32x1xf32, #tpu.memory_space<vmem>>, %arg12: memref<1x256xf32, #tpu.memory_space<vmem>>) attributes {dimension_semantics = [#tpu.dimension_semantics<parallel>], iteration_bounds = array<i64: 1>, scalar_prefetch = 0 : i64, scratch_operands = 0 : i64, tpu.core_type = #tpu.core_type<tc>, window_params = [{transform_indices = @transform_0, window_bounds = array<i64: 8>}, {transform_indices = @transform_1, window_bounds = array<i64: 8>}, {transform_indices = @transform_2, window_bounds = array<i64: 8>}, {transform_indices = @transform_3, window_bounds = array<i64: 8>}, {transform_indices = @transform_4, window_bounds = array<i64: 1>}, {transform_indices = @transform_5, window_bounds = array<i64: 2, 256>}, {pipeline_mode = #tpu.pipeline_mode<synchronous>, transform_indices = @transform_6, window_bounds = array<i64: 32, 2>}, {pipeline_mode = #tpu.pipeline_mode<synchronous>, transform_indices = @transform_7, window_bounds = array<i64: 32, 1>}, {pipeline_mode = #tpu.pipeline_mode<synchronous>, transform_indices = @transform_8, window_bounds = array<i64: 32, 32>}, {pipeline_mode = #tpu.pipeline_mode<synchronous>, transform_indices = @transform_9, window_bounds = array<i64: 32, 1>}, {pipeline_mode = #tpu.pipeline_mode<synchronous>, transform_indices = @transform_10, window_bounds = array<i64: 32, 1>}, {transform_indices = @transform_11, window_bounds = array<i64: 1, 256>}]} {
    %c0 = arith.constant 0 : index
    %c0_0 = arith.constant 0 : index
    %0 = vector.load %arg6[%c0, %c0_0] : memref<2x256xf32, #tpu.memory_space<vmem>>, vector<1x256xf32>
    %c1 = arith.constant 1 : index
    %c0_1 = arith.constant 0 : index
    %1 = vector.load %arg6[%c1, %c0_1] : memref<2x256xf32, #tpu.memory_space<vmem>>, vector<1x256xf32>
    %c0_2 = arith.constant 0 : index
    %c0_3 = arith.constant 0 : index
    %2 = vector.load %arg7[%c0_2, %c0_3] : memref<32x2xf32, #tpu.memory_space<vmem>>, vector<32x1xf32>
    %3 = vector.broadcast %2 : vector<32x1xf32> to vector<32x256xf32>
    %4 = vector.broadcast %0 : vector<1x256xf32> to vector<32x256xf32>
    %5 = arith.mulf %3, %4 : vector<32x256xf32>
    %c0_4 = arith.constant 0 : index
    %c1_5 = arith.constant 1 : index
    %6 = vector.load %arg7[%c0_4, %c1_5] : memref<32x2xf32, #tpu.memory_space<vmem>>, vector<32x1xf32>
    %7 = vector.broadcast %6 : vector<32x1xf32> to vector<32x256xf32>
    %8 = vector.broadcast %1 : vector<1x256xf32> to vector<32x256xf32>
    %9 = arith.mulf %7, %8 : vector<32x256xf32>
    %10 = arith.addf %5, %9 : vector<32x256xf32>
    %c0_6 = arith.constant 0 : index
    %c0_7 = arith.constant 0 : index
    %11 = vector.load %arg8[%c0_6, %c0_7] : memref<32x1xf32, #tpu.memory_space<vmem>>, vector<32x1xf32>
    %12 = vector.broadcast %11 : vector<32x1xf32> to vector<32x256xf32>
    %13 = arith.addf %10, %12 : vector<32x256xf32>
    %cst = arith.constant -3.000000e+00 : f32
    %cst_8 = arith.constant 3.000000e+00 : f32
    %14 = vector.broadcast %cst : f32 to vector<32x256xf32>
    %15 = arith.maximumf %14, %13 : vector<32x256xf32>
    %16 = vector.broadcast %cst_8 : f32 to vector<32x256xf32>
    %17 = arith.minimumf %16, %15 : vector<32x256xf32>
    %c0_9 = arith.constant 0 : index
    %18 = memref.load %arg1[%c0_9] : memref<8xf32, #tpu.memory_space<smem>>
    %19 = vector.broadcast %18 : f32 to vector<32x256xf32>
    %20 = arith.mulf %19, %17 : vector<32x256xf32>
    %c0_10 = arith.constant 0 : index
    %21 = memref.load %arg2[%c0_10] : memref<8xf32, #tpu.memory_space<smem>>
    %22 = vector.broadcast %21 : f32 to vector<32x256xf32>
    %23 = arith.addf %20, %22 : vector<32x256xf32>
    %cst_11 = arith.constant -2.250000e+00 : f32
    %24 = vector.broadcast %cst_11 : f32 to vector<32x256xf32>
    %25 = arith.cmpf oge, %17, %24 : vector<32x256xf32>
    %c1_12 = arith.constant 1 : index
    %26 = memref.load %arg1[%c1_12] : memref<8xf32, #tpu.memory_space<smem>>
    %27 = vector.broadcast %26 : f32 to vector<32x256xf32>
    %28 = arith.mulf %27, %17 : vector<32x256xf32>
    %c1_13 = arith.constant 1 : index
    %29 = memref.load %arg2[%c1_13] : memref<8xf32, #tpu.memory_space<smem>>
    %30 = vector.broadcast %29 : f32 to vector<32x256xf32>
    %31 = arith.addf %28, %30 : vector<32x256xf32>
    %32 = arith.select %25, %31, %23 : vector<32x256xi1>, vector<32x256xf32>
    %cst_14 = arith.constant -1.500000e+00 : f32
    %33 = vector.broadcast %cst_14 : f32 to vector<32x256xf32>
    %34 = arith.cmpf oge, %17, %33 : vector<32x256xf32>
    %c2 = arith.constant 2 : index
    %35 = memref.load %arg1[%c2] : memref<8xf32, #tpu.memory_space<smem>>
    %36 = vector.broadcast %35 : f32 to vector<32x256xf32>
    %37 = arith.mulf %36, %17 : vector<32x256xf32>
    %c2_15 = arith.constant 2 : index
    %38 = memref.load %arg2[%c2_15] : memref<8xf32, #tpu.memory_space<smem>>
    %39 = vector.broadcast %38 : f32 to vector<32x256xf32>
    %40 = arith.addf %37, %39 : vector<32x256xf32>
    %41 = arith.select %34, %40, %32 : vector<32x256xi1>, vector<32x256xf32>
    %cst_16 = arith.constant -7.500000e-01 : f32
    %42 = vector.broadcast %cst_16 : f32 to vector<32x256xf32>
    %43 = arith.cmpf oge, %17, %42 : vector<32x256xf32>
    %c3 = arith.constant 3 : index
    %44 = memref.load %arg1[%c3] : memref<8xf32, #tpu.memory_space<smem>>
    %45 = vector.broadcast %44 : f32 to vector<32x256xf32>
    %46 = arith.mulf %45, %17 : vector<32x256xf32>
    %c3_17 = arith.constant 3 : index
    %47 = memref.load %arg2[%c3_17] : memref<8xf32, #tpu.memory_space<smem>>
    %48 = vector.broadcast %47 : f32 to vector<32x256xf32>
    %49 = arith.addf %46, %48 : vector<32x256xf32>
    %50 = arith.select %43, %49, %41 : vector<32x256xi1>, vector<32x256xf32>
    %cst_18 = arith.constant 0.000000e+00 : f32
    %51 = vector.broadcast %cst_18 : f32 to vector<32x256xf32>
    %52 = arith.cmpf oge, %17, %51 : vector<32x256xf32>
    %c4 = arith.constant 4 : index
    %53 = memref.load %arg1[%c4] : memref<8xf32, #tpu.memory_space<smem>>
    %54 = vector.broadcast %53 : f32 to vector<32x256xf32>
    %55 = arith.mulf %54, %17 : vector<32x256xf32>
    %c4_19 = arith.constant 4 : index
    %56 = memref.load %arg2[%c4_19] : memref<8xf32, #tpu.memory_space<smem>>
    %57 = vector.broadcast %56 : f32 to vector<32x256xf32>
    %58 = arith.addf %55, %57 : vector<32x256xf32>
    %59 = arith.select %52, %58, %50 : vector<32x256xi1>, vector<32x256xf32>
    %cst_20 = arith.constant 7.500000e-01 : f32
    %60 = vector.broadcast %cst_20 : f32 to vector<32x256xf32>
    %61 = arith.cmpf oge, %17, %60 : vector<32x256xf32>
    %c5 = arith.constant 5 : index
    %62 = memref.load %arg1[%c5] : memref<8xf32, #tpu.memory_space<smem>>
    %63 = vector.broadcast %62 : f32 to vector<32x256xf32>
    %64 = arith.mulf %63, %17 : vector<32x256xf32>
    %c5_21 = arith.constant 5 : index
    %65 = memref.load %arg2[%c5_21] : memref<8xf32, #tpu.memory_space<smem>>
    %66 = vector.broadcast %65 : f32 to vector<32x256xf32>
    %67 = arith.addf %64, %66 : vector<32x256xf32>
    %68 = arith.select %61, %67, %59 : vector<32x256xi1>, vector<32x256xf32>
    %cst_22 = arith.constant 1.500000e+00 : f32
    %69 = vector.broadcast %cst_22 : f32 to vector<32x256xf32>
    %70 = arith.cmpf oge, %17, %69 : vector<32x256xf32>
    %c6 = arith.constant 6 : index
    %71 = memref.load %arg1[%c6] : memref<8xf32, #tpu.memory_space<smem>>
    %72 = vector.broadcast %71 : f32 to vector<32x256xf32>
    %73 = arith.mulf %72, %17 : vector<32x256xf32>
    %c6_23 = arith.constant 6 : index
    %74 = memref.load %arg2[%c6_23] : memref<8xf32, #tpu.memory_space<smem>>
    %75 = vector.broadcast %74 : f32 to vector<32x256xf32>
    %76 = arith.addf %73, %75 : vector<32x256xf32>
    %77 = arith.select %70, %76, %68 : vector<32x256xi1>, vector<32x256xf32>
    %cst_24 = arith.constant 2.250000e+00 : f32
    %78 = vector.broadcast %cst_24 : f32 to vector<32x256xf32>
    %79 = arith.cmpf oge, %17, %78 : vector<32x256xf32>
    %c7 = arith.constant 7 : index
    %80 = memref.load %arg1[%c7] : memref<8xf32, #tpu.memory_space<smem>>
    %81 = vector.broadcast %80 : f32 to vector<32x256xf32>
    %82 = arith.mulf %81, %17 : vector<32x256xf32>
    %c7_25 = arith.constant 7 : index
    %83 = memref.load %arg2[%c7_25] : memref<8xf32, #tpu.memory_space<smem>>
    %84 = vector.broadcast %83 : f32 to vector<32x256xf32>
    %85 = arith.addf %82, %84 : vector<32x256xf32>
    %86 = arith.select %79, %85, %77 : vector<32x256xi1>, vector<32x256xf32>
    %87 = arith.addf %17, %86 : vector<32x256xf32>
    %cst_26 = arith.constant -3.000000e+00 : f32
    %cst_27 = arith.constant 3.000000e+00 : f32
    %88 = vector.broadcast %cst_26 : f32 to vector<32x256xf32>
    %89 = arith.maximumf %88, %87 : vector<32x256xf32>
    %90 = vector.broadcast %cst_27 : f32 to vector<32x256xf32>
    %91 = arith.minimumf %90, %89 : vector<32x256xf32>
    %c0_28 = arith.constant 0 : index
    %92 = memref.load %arg1[%c0_28] : memref<8xf32, #tpu.memory_space<smem>>
    %93 = vector.broadcast %92 : f32 to vector<32x256xf32>
    %94 = arith.mulf %93, %91 : vector<32x256xf32>
    %c0_29 = arith.constant 0 : index
    %95 = memref.load %arg2[%c0_29] : memref<8xf32, #tpu.memory_space<smem>>
    %96 = vector.broadcast %95 : f32 to vector<32x256xf32>
    %97 = arith.addf %94, %96 : vector<32x256xf32>
    %cst_30 = arith.constant -2.250000e+00 : f32
    %98 = vector.broadcast %cst_30 : f32 to vector<32x256xf32>
    %99 = arith.cmpf oge, %91, %98 : vector<32x256xf32>
    %c1_31 = arith.constant 1 : index
    %100 = memref.load %arg1[%c1_31] : memref<8xf32, #tpu.memory_space<smem>>
    %101 = vector.broadcast %100 : f32 to vector<32x256xf32>
    %102 = arith.mulf %101, %91 : vector<32x256xf32>
    %c1_32 = arith.constant 1 : index
    %103 = memref.load %arg2[%c1_32] : memref<8xf32, #tpu.memory_space<smem>>
    %104 = vector.broadcast %103 : f32 to vector<32x256xf32>
    %105 = arith.addf %102, %104 : vector<32x256xf32>
    %106 = arith.select %99, %105, %97 : vector<32x256xi1>, vector<32x256xf32>
    %cst_33 = arith.constant -1.500000e+00 : f32
    %107 = vector.broadcast %cst_33 : f32 to vector<32x256xf32>
    %108 = arith.cmpf oge, %91, %107 : vector<32x256xf32>
    %c2_34 = arith.constant 2 : index
    %109 = memref.load %arg1[%c2_34] : memref<8xf32, #tpu.memory_space<smem>>
    %110 = vector.broadcast %109 : f32 to vector<32x256xf32>
    %111 = arith.mulf %110, %91 : vector<32x256xf32>
    %c2_35 = arith.constant 2 : index
    %112 = memref.load %arg2[%c2_35] : memref<8xf32, #tpu.memory_space<smem>>
    %113 = vector.broadcast %112 : f32 to vector<32x256xf32>
    %114 = arith.addf %111, %113 : vector<32x256xf32>
    %115 = arith.select %108, %114, %106 : vector<32x256xi1>, vector<32x256xf32>
    %cst_36 = arith.constant -7.500000e-01 : f32
    %116 = vector.broadcast %cst_36 : f32 to vector<32x256xf32>
    %117 = arith.cmpf oge, %91, %116 : vector<32x256xf32>
    %c3_37 = arith.constant 3 : index
    %118 = memref.load %arg1[%c3_37] : memref<8xf32, #tpu.memory_space<smem>>
    %119 = vector.broadcast %118 : f32 to vector<32x256xf32>
    %120 = arith.mulf %119, %91 : vector<32x256xf32>
    %c3_38 = arith.constant 3 : index
    %121 = memref.load %arg2[%c3_38] : memref<8xf32, #tpu.memory_space<smem>>
    %122 = vector.broadcast %121 : f32 to vector<32x256xf32>
    %123 = arith.addf %120, %122 : vector<32x256xf32>
    %124 = arith.select %117, %123, %115 : vector<32x256xi1>, vector<32x256xf32>
    %cst_39 = arith.constant 0.000000e+00 : f32
    %125 = vector.broadcast %cst_39 : f32 to vector<32x256xf32>
    %126 = arith.cmpf oge, %91, %125 : vector<32x256xf32>
    %c4_40 = arith.constant 4 : index
    %127 = memref.load %arg1[%c4_40] : memref<8xf32, #tpu.memory_space<smem>>
    %128 = vector.broadcast %127 : f32 to vector<32x256xf32>
    %129 = arith.mulf %128, %91 : vector<32x256xf32>
    %c4_41 = arith.constant 4 : index
    %130 = memref.load %arg2[%c4_41] : memref<8xf32, #tpu.memory_space<smem>>
    %131 = vector.broadcast %130 : f32 to vector<32x256xf32>
    %132 = arith.addf %129, %131 : vector<32x256xf32>
    %133 = arith.select %126, %132, %124 : vector<32x256xi1>, vector<32x256xf32>
    %cst_42 = arith.constant 7.500000e-01 : f32
    %134 = vector.broadcast %cst_42 : f32 to vector<32x256xf32>
    %135 = arith.cmpf oge, %91, %134 : vector<32x256xf32>
    %c5_43 = arith.constant 5 : index
    %136 = memref.load %arg1[%c5_43] : memref<8xf32, #tpu.memory_space<smem>>
    %137 = vector.broadcast %136 : f32 to vector<32x256xf32>
    %138 = arith.mulf %137, %91 : vector<32x256xf32>
    %c5_44 = arith.constant 5 : index
    %139 = memref.load %arg2[%c5_44] : memref<8xf32, #tpu.memory_space<smem>>
    %140 = vector.broadcast %139 : f32 to vector<32x256xf32>
    %141 = arith.addf %138, %140 : vector<32x256xf32>
    %142 = arith.select %135, %141, %133 : vector<32x256xi1>, vector<32x256xf32>
    %cst_45 = arith.constant 1.500000e+00 : f32
    %143 = vector.broadcast %cst_45 : f32 to vector<32x256xf32>
    %144 = arith.cmpf oge, %91, %143 : vector<32x256xf32>
    %c6_46 = arith.constant 6 : index
    %145 = memref.load %arg1[%c6_46] : memref<8xf32, #tpu.memory_space<smem>>
    %146 = vector.broadcast %145 : f32 to vector<32x256xf32>
    %147 = arith.mulf %146, %91 : vector<32x256xf32>
    %c6_47 = arith.constant 6 : index
    %148 = memref.load %arg2[%c6_47] : memref<8xf32, #tpu.memory_space<smem>>
    %149 = vector.broadcast %148 : f32 to vector<32x256xf32>
    %150 = arith.addf %147, %149 : vector<32x256xf32>
    %151 = arith.select %144, %150, %142 : vector<32x256xi1>, vector<32x256xf32>
    %cst_48 = arith.constant 2.250000e+00 : f32
    %152 = vector.broadcast %cst_48 : f32 to vector<32x256xf32>
    %153 = arith.cmpf oge, %91, %152 : vector<32x256xf32>
    %c7_49 = arith.constant 7 : index
    %154 = memref.load %arg1[%c7_49] : memref<8xf32, #tpu.memory_space<smem>>
    %155 = vector.broadcast %154 : f32 to vector<32x256xf32>
    %156 = arith.mulf %155, %91 : vector<32x256xf32>
    %c7_50 = arith.constant 7 : index
    %157 = memref.load %arg2[%c7_50] : memref<8xf32, #tpu.memory_space<smem>>
    %158 = vector.broadcast %157 : f32 to vector<32x256xf32>
    %159 = arith.addf %156, %158 : vector<32x256xf32>
    %160 = arith.select %153, %159, %151 : vector<32x256xi1>, vector<32x256xf32>
    %161 = arith.addf %91, %160 : vector<32x256xf32>
    %cst_51 = arith.constant -3.000000e+00 : f32
    %cst_52 = arith.constant 3.000000e+00 : f32
    %162 = vector.broadcast %cst_51 : f32 to vector<32x256xf32>
    %163 = arith.maximumf %162, %161 : vector<32x256xf32>
    %164 = vector.broadcast %cst_52 : f32 to vector<32x256xf32>
    %165 = arith.minimumf %164, %163 : vector<32x256xf32>
    %c0_53 = arith.constant 0 : index
    %166 = memref.load %arg1[%c0_53] : memref<8xf32, #tpu.memory_space<smem>>
    %167 = vector.broadcast %166 : f32 to vector<32x256xf32>
    %168 = arith.mulf %167, %165 : vector<32x256xf32>
    %c0_54 = arith.constant 0 : index
    %169 = memref.load %arg2[%c0_54] : memref<8xf32, #tpu.memory_space<smem>>
    %170 = vector.broadcast %169 : f32 to vector<32x256xf32>
    %171 = arith.addf %168, %170 : vector<32x256xf32>
    %cst_55 = arith.constant -2.250000e+00 : f32
    %172 = vector.broadcast %cst_55 : f32 to vector<32x256xf32>
    %173 = arith.cmpf oge, %165, %172 : vector<32x256xf32>
    %c1_56 = arith.constant 1 : index
    %174 = memref.load %arg1[%c1_56] : memref<8xf32, #tpu.memory_space<smem>>
    %175 = vector.broadcast %174 : f32 to vector<32x256xf32>
    %176 = arith.mulf %175, %165 : vector<32x256xf32>
    %c1_57 = arith.constant 1 : index
    %177 = memref.load %arg2[%c1_57] : memref<8xf32, #tpu.memory_space<smem>>
    %178 = vector.broadcast %177 : f32 to vector<32x256xf32>
    %179 = arith.addf %176, %178 : vector<32x256xf32>
    %180 = arith.select %173, %179, %171 : vector<32x256xi1>, vector<32x256xf32>
    %cst_58 = arith.constant -1.500000e+00 : f32
    %181 = vector.broadcast %cst_58 : f32 to vector<32x256xf32>
    %182 = arith.cmpf oge, %165, %181 : vector<32x256xf32>
    %c2_59 = arith.constant 2 : index
    %183 = memref.load %arg1[%c2_59] : memref<8xf32, #tpu.memory_space<smem>>
    %184 = vector.broadcast %183 : f32 to vector<32x256xf32>
    %185 = arith.mulf %184, %165 : vector<32x256xf32>
    %c2_60 = arith.constant 2 : index
    %186 = memref.load %arg2[%c2_60] : memref<8xf32, #tpu.memory_space<smem>>
    %187 = vector.broadcast %186 : f32 to vector<32x256xf32>
    %188 = arith.addf %185, %187 : vector<32x256xf32>
    %189 = arith.select %182, %188, %180 : vector<32x256xi1>, vector<32x256xf32>
    %cst_61 = arith.constant -7.500000e-01 : f32
    %190 = vector.broadcast %cst_61 : f32 to vector<32x256xf32>
    %191 = arith.cmpf oge, %165, %190 : vector<32x256xf32>
    %c3_62 = arith.constant 3 : index
    %192 = memref.load %arg1[%c3_62] : memref<8xf32, #tpu.memory_space<smem>>
    %193 = vector.broadcast %192 : f32 to vector<32x256xf32>
    %194 = arith.mulf %193, %165 : vector<32x256xf32>
    %c3_63 = arith.constant 3 : index
    %195 = memref.load %arg2[%c3_63] : memref<8xf32, #tpu.memory_space<smem>>
    %196 = vector.broadcast %195 : f32 to vector<32x256xf32>
    %197 = arith.addf %194, %196 : vector<32x256xf32>
    %198 = arith.select %191, %197, %189 : vector<32x256xi1>, vector<32x256xf32>
    %cst_64 = arith.constant 0.000000e+00 : f32
    %199 = vector.broadcast %cst_64 : f32 to vector<32x256xf32>
    %200 = arith.cmpf oge, %165, %199 : vector<32x256xf32>
    %c4_65 = arith.constant 4 : index
    %201 = memref.load %arg1[%c4_65] : memref<8xf32, #tpu.memory_space<smem>>
    %202 = vector.broadcast %201 : f32 to vector<32x256xf32>
    %203 = arith.mulf %202, %165 : vector<32x256xf32>
    %c4_66 = arith.constant 4 : index
    %204 = memref.load %arg2[%c4_66] : memref<8xf32, #tpu.memory_space<smem>>
    %205 = vector.broadcast %204 : f32 to vector<32x256xf32>
    %206 = arith.addf %203, %205 : vector<32x256xf32>
    %207 = arith.select %200, %206, %198 : vector<32x256xi1>, vector<32x256xf32>
    %cst_67 = arith.constant 7.500000e-01 : f32
    %208 = vector.broadcast %cst_67 : f32 to vector<32x256xf32>
    %209 = arith.cmpf oge, %165, %208 : vector<32x256xf32>
    %c5_68 = arith.constant 5 : index
    %210 = memref.load %arg1[%c5_68] : memref<8xf32, #tpu.memory_space<smem>>
    %211 = vector.broadcast %210 : f32 to vector<32x256xf32>
    %212 = arith.mulf %211, %165 : vector<32x256xf32>
    %c5_69 = arith.constant 5 : index
    %213 = memref.load %arg2[%c5_69] : memref<8xf32, #tpu.memory_space<smem>>
    %214 = vector.broadcast %213 : f32 to vector<32x256xf32>
    %215 = arith.addf %212, %214 : vector<32x256xf32>
    %216 = arith.select %209, %215, %207 : vector<32x256xi1>, vector<32x256xf32>
    %cst_70 = arith.constant 1.500000e+00 : f32
    %217 = vector.broadcast %cst_70 : f32 to vector<32x256xf32>
    %218 = arith.cmpf oge, %165, %217 : vector<32x256xf32>
    %c6_71 = arith.constant 6 : index
    %219 = memref.load %arg1[%c6_71] : memref<8xf32, #tpu.memory_space<smem>>
    %220 = vector.broadcast %219 : f32 to vector<32x256xf32>
    %221 = arith.mulf %220, %165 : vector<32x256xf32>
    %c6_72 = arith.constant 6 : index
    %222 = memref.load %arg2[%c6_72] : memref<8xf32, #tpu.memory_space<smem>>
    %223 = vector.broadcast %222 : f32 to vector<32x256xf32>
    %224 = arith.addf %221, %223 : vector<32x256xf32>
    %225 = arith.select %218, %224, %216 : vector<32x256xi1>, vector<32x256xf32>
    %cst_73 = arith.constant 2.250000e+00 : f32
    %226 = vector.broadcast %cst_73 : f32 to vector<32x256xf32>
    %227 = arith.cmpf oge, %165, %226 : vector<32x256xf32>
    %c7_74 = arith.constant 7 : index
    %228 = memref.load %arg1[%c7_74] : memref<8xf32, #tpu.memory_space<smem>>
    %229 = vector.broadcast %228 : f32 to vector<32x256xf32>
    %230 = arith.mulf %229, %165 : vector<32x256xf32>
    %c7_75 = arith.constant 7 : index
    %231 = memref.load %arg2[%c7_75] : memref<8xf32, #tpu.memory_space<smem>>
    %232 = vector.broadcast %231 : f32 to vector<32x256xf32>
    %233 = arith.addf %230, %232 : vector<32x256xf32>
    %234 = arith.select %227, %233, %225 : vector<32x256xi1>, vector<32x256xf32>
    %235 = arith.addf %165, %234 : vector<32x256xf32>
    %cst_76 = arith.constant -3.000000e+00 : f32
    %cst_77 = arith.constant 3.000000e+00 : f32
    %236 = vector.broadcast %cst_76 : f32 to vector<32x256xf32>
    %237 = arith.maximumf %236, %235 : vector<32x256xf32>
    %238 = vector.broadcast %cst_77 : f32 to vector<32x256xf32>
    %239 = arith.minimumf %238, %237 : vector<32x256xf32>
    %c0_78 = arith.constant 0 : index
    %240 = memref.load %arg1[%c0_78] : memref<8xf32, #tpu.memory_space<smem>>
    %241 = vector.broadcast %240 : f32 to vector<32x256xf32>
    %242 = arith.mulf %241, %239 : vector<32x256xf32>
    %c0_79 = arith.constant 0 : index
    %243 = memref.load %arg2[%c0_79] : memref<8xf32, #tpu.memory_space<smem>>
    %244 = vector.broadcast %243 : f32 to vector<32x256xf32>
    %245 = arith.addf %242, %244 : vector<32x256xf32>
    %cst_80 = arith.constant -2.250000e+00 : f32
    %246 = vector.broadcast %cst_80 : f32 to vector<32x256xf32>
    %247 = arith.cmpf oge, %239, %246 : vector<32x256xf32>
    %c1_81 = arith.constant 1 : index
    %248 = memref.load %arg1[%c1_81] : memref<8xf32, #tpu.memory_space<smem>>
    %249 = vector.broadcast %248 : f32 to vector<32x256xf32>
    %250 = arith.mulf %249, %239 : vector<32x256xf32>
    %c1_82 = arith.constant 1 : index
    %251 = memref.load %arg2[%c1_82] : memref<8xf32, #tpu.memory_space<smem>>
    %252 = vector.broadcast %251 : f32 to vector<32x256xf32>
    %253 = arith.addf %250, %252 : vector<32x256xf32>
    %254 = arith.select %247, %253, %245 : vector<32x256xi1>, vector<32x256xf32>
    %cst_83 = arith.constant -1.500000e+00 : f32
    %255 = vector.broadcast %cst_83 : f32 to vector<32x256xf32>
    %256 = arith.cmpf oge, %239, %255 : vector<32x256xf32>
    %c2_84 = arith.constant 2 : index
    %257 = memref.load %arg1[%c2_84] : memref<8xf32, #tpu.memory_space<smem>>
    %258 = vector.broadcast %257 : f32 to vector<32x256xf32>
    %259 = arith.mulf %258, %239 : vector<32x256xf32>
    %c2_85 = arith.constant 2 : index
    %260 = memref.load %arg2[%c2_85] : memref<8xf32, #tpu.memory_space<smem>>
    %261 = vector.broadcast %260 : f32 to vector<32x256xf32>
    %262 = arith.addf %259, %261 : vector<32x256xf32>
    %263 = arith.select %256, %262, %254 : vector<32x256xi1>, vector<32x256xf32>
    %cst_86 = arith.constant -7.500000e-01 : f32
    %264 = vector.broadcast %cst_86 : f32 to vector<32x256xf32>
    %265 = arith.cmpf oge, %239, %264 : vector<32x256xf32>
    %c3_87 = arith.constant 3 : index
    %266 = memref.load %arg1[%c3_87] : memref<8xf32, #tpu.memory_space<smem>>
    %267 = vector.broadcast %266 : f32 to vector<32x256xf32>
    %268 = arith.mulf %267, %239 : vector<32x256xf32>
    %c3_88 = arith.constant 3 : index
    %269 = memref.load %arg2[%c3_88] : memref<8xf32, #tpu.memory_space<smem>>
    %270 = vector.broadcast %269 : f32 to vector<32x256xf32>
    %271 = arith.addf %268, %270 : vector<32x256xf32>
    %272 = arith.select %265, %271, %263 : vector<32x256xi1>, vector<32x256xf32>
    %cst_89 = arith.constant 0.000000e+00 : f32
    %273 = vector.broadcast %cst_89 : f32 to vector<32x256xf32>
    %274 = arith.cmpf oge, %239, %273 : vector<32x256xf32>
    %c4_90 = arith.constant 4 : index
    %275 = memref.load %arg1[%c4_90] : memref<8xf32, #tpu.memory_space<smem>>
    %276 = vector.broadcast %275 : f32 to vector<32x256xf32>
    %277 = arith.mulf %276, %239 : vector<32x256xf32>
    %c4_91 = arith.constant 4 : index
    %278 = memref.load %arg2[%c4_91] : memref<8xf32, #tpu.memory_space<smem>>
    %279 = vector.broadcast %278 : f32 to vector<32x256xf32>
    %280 = arith.addf %277, %279 : vector<32x256xf32>
    %281 = arith.select %274, %280, %272 : vector<32x256xi1>, vector<32x256xf32>
    %cst_92 = arith.constant 7.500000e-01 : f32
    %282 = vector.broadcast %cst_92 : f32 to vector<32x256xf32>
    %283 = arith.cmpf oge, %239, %282 : vector<32x256xf32>
    %c5_93 = arith.constant 5 : index
    %284 = memref.load %arg1[%c5_93] : memref<8xf32, #tpu.memory_space<smem>>
    %285 = vector.broadcast %284 : f32 to vector<32x256xf32>
    %286 = arith.mulf %285, %239 : vector<32x256xf32>
    %c5_94 = arith.constant 5 : index
    %287 = memref.load %arg2[%c5_94] : memref<8xf32, #tpu.memory_space<smem>>
    %288 = vector.broadcast %287 : f32 to vector<32x256xf32>
    %289 = arith.addf %286, %288 : vector<32x256xf32>
    %290 = arith.select %283, %289, %281 : vector<32x256xi1>, vector<32x256xf32>
    %cst_95 = arith.constant 1.500000e+00 : f32
    %291 = vector.broadcast %cst_95 : f32 to vector<32x256xf32>
    %292 = arith.cmpf oge, %239, %291 : vector<32x256xf32>
    %c6_96 = arith.constant 6 : index
    %293 = memref.load %arg1[%c6_96] : memref<8xf32, #tpu.memory_space<smem>>
    %294 = vector.broadcast %293 : f32 to vector<32x256xf32>
    %295 = arith.mulf %294, %239 : vector<32x256xf32>
    %c6_97 = arith.constant 6 : index
    %296 = memref.load %arg2[%c6_97] : memref<8xf32, #tpu.memory_space<smem>>
    %297 = vector.broadcast %296 : f32 to vector<32x256xf32>
    %298 = arith.addf %295, %297 : vector<32x256xf32>
    %299 = arith.select %292, %298, %290 : vector<32x256xi1>, vector<32x256xf32>
    %cst_98 = arith.constant 2.250000e+00 : f32
    %300 = vector.broadcast %cst_98 : f32 to vector<32x256xf32>
    %301 = arith.cmpf oge, %239, %300 : vector<32x256xf32>
    %c7_99 = arith.constant 7 : index
    %302 = memref.load %arg1[%c7_99] : memref<8xf32, #tpu.memory_space<smem>>
    %303 = vector.broadcast %302 : f32 to vector<32x256xf32>
    %304 = arith.mulf %303, %239 : vector<32x256xf32>
    %c7_100 = arith.constant 7 : index
    %305 = memref.load %arg2[%c7_100] : memref<8xf32, #tpu.memory_space<smem>>
    %306 = vector.broadcast %305 : f32 to vector<32x256xf32>
    %307 = arith.addf %304, %306 : vector<32x256xf32>
    %308 = arith.select %301, %307, %299 : vector<32x256xi1>, vector<32x256xf32>
    %309 = arith.addf %239, %308 : vector<32x256xf32>
    %cst_101 = arith.constant -3.000000e+00 : f32
    %cst_102 = arith.constant 3.000000e+00 : f32
    %310 = vector.broadcast %cst_101 : f32 to vector<32x256xf32>
    %311 = arith.maximumf %310, %309 : vector<32x256xf32>
    %312 = vector.broadcast %cst_102 : f32 to vector<32x256xf32>
    %313 = arith.minimumf %312, %311 : vector<32x256xf32>
    %c0_103 = arith.constant 0 : index
    %314 = memref.load %arg1[%c0_103] : memref<8xf32, #tpu.memory_space<smem>>
    %315 = vector.broadcast %314 : f32 to vector<32x256xf32>
    %316 = arith.mulf %315, %313 : vector<32x256xf32>
    %c0_104 = arith.constant 0 : index
    %317 = memref.load %arg2[%c0_104] : memref<8xf32, #tpu.memory_space<smem>>
    %318 = vector.broadcast %317 : f32 to vector<32x256xf32>
    %319 = arith.addf %316, %318 : vector<32x256xf32>
    %cst_105 = arith.constant -2.250000e+00 : f32
    %320 = vector.broadcast %cst_105 : f32 to vector<32x256xf32>
    %321 = arith.cmpf oge, %313, %320 : vector<32x256xf32>
    %c1_106 = arith.constant 1 : index
    %322 = memref.load %arg1[%c1_106] : memref<8xf32, #tpu.memory_space<smem>>
    %323 = vector.broadcast %322 : f32 to vector<32x256xf32>
    %324 = arith.mulf %323, %313 : vector<32x256xf32>
    %c1_107 = arith.constant 1 : index
    %325 = memref.load %arg2[%c1_107] : memref<8xf32, #tpu.memory_space<smem>>
    %326 = vector.broadcast %325 : f32 to vector<32x256xf32>
    %327 = arith.addf %324, %326 : vector<32x256xf32>
    %328 = arith.select %321, %327, %319 : vector<32x256xi1>, vector<32x256xf32>
    %cst_108 = arith.constant -1.500000e+00 : f32
    %329 = vector.broadcast %cst_108 : f32 to vector<32x256xf32>
    %330 = arith.cmpf oge, %313, %329 : vector<32x256xf32>
    %c2_109 = arith.constant 2 : index
    %331 = memref.load %arg1[%c2_109] : memref<8xf32, #tpu.memory_space<smem>>
    %332 = vector.broadcast %331 : f32 to vector<32x256xf32>
    %333 = arith.mulf %332, %313 : vector<32x256xf32>
    %c2_110 = arith.constant 2 : index
    %334 = memref.load %arg2[%c2_110] : memref<8xf32, #tpu.memory_space<smem>>
    %335 = vector.broadcast %334 : f32 to vector<32x256xf32>
    %336 = arith.addf %333, %335 : vector<32x256xf32>
    %337 = arith.select %330, %336, %328 : vector<32x256xi1>, vector<32x256xf32>
    %cst_111 = arith.constant -7.500000e-01 : f32
    %338 = vector.broadcast %cst_111 : f32 to vector<32x256xf32>
    %339 = arith.cmpf oge, %313, %338 : vector<32x256xf32>
    %c3_112 = arith.constant 3 : index
    %340 = memref.load %arg1[%c3_112] : memref<8xf32, #tpu.memory_space<smem>>
    %341 = vector.broadcast %340 : f32 to vector<32x256xf32>
    %342 = arith.mulf %341, %313 : vector<32x256xf32>
    %c3_113 = arith.constant 3 : index
    %343 = memref.load %arg2[%c3_113] : memref<8xf32, #tpu.memory_space<smem>>
    %344 = vector.broadcast %343 : f32 to vector<32x256xf32>
    %345 = arith.addf %342, %344 : vector<32x256xf32>
    %346 = arith.select %339, %345, %337 : vector<32x256xi1>, vector<32x256xf32>
    %cst_114 = arith.constant 0.000000e+00 : f32
    %347 = vector.broadcast %cst_114 : f32 to vector<32x256xf32>
    %348 = arith.cmpf oge, %313, %347 : vector<32x256xf32>
    %c4_115 = arith.constant 4 : index
    %349 = memref.load %arg1[%c4_115] : memref<8xf32, #tpu.memory_space<smem>>
    %350 = vector.broadcast %349 : f32 to vector<32x256xf32>
    %351 = arith.mulf %350, %313 : vector<32x256xf32>
    %c4_116 = arith.constant 4 : index
    %352 = memref.load %arg2[%c4_116] : memref<8xf32, #tpu.memory_space<smem>>
    %353 = vector.broadcast %352 : f32 to vector<32x256xf32>
    %354 = arith.addf %351, %353 : vector<32x256xf32>
    %355 = arith.select %348, %354, %346 : vector<32x256xi1>, vector<32x256xf32>
    %cst_117 = arith.constant 7.500000e-01 : f32
    %356 = vector.broadcast %cst_117 : f32 to vector<32x256xf32>
    %357 = arith.cmpf oge, %313, %356 : vector<32x256xf32>
    %c5_118 = arith.constant 5 : index
    %358 = memref.load %arg1[%c5_118] : memref<8xf32, #tpu.memory_space<smem>>
    %359 = vector.broadcast %358 : f32 to vector<32x256xf32>
    %360 = arith.mulf %359, %313 : vector<32x256xf32>
    %c5_119 = arith.constant 5 : index
    %361 = memref.load %arg2[%c5_119] : memref<8xf32, #tpu.memory_space<smem>>
    %362 = vector.broadcast %361 : f32 to vector<32x256xf32>
    %363 = arith.addf %360, %362 : vector<32x256xf32>
    %364 = arith.select %357, %363, %355 : vector<32x256xi1>, vector<32x256xf32>
    %cst_120 = arith.constant 1.500000e+00 : f32
    %365 = vector.broadcast %cst_120 : f32 to vector<32x256xf32>
    %366 = arith.cmpf oge, %313, %365 : vector<32x256xf32>
    %c6_121 = arith.constant 6 : index
    %367 = memref.load %arg1[%c6_121] : memref<8xf32, #tpu.memory_space<smem>>
    %368 = vector.broadcast %367 : f32 to vector<32x256xf32>
    %369 = arith.mulf %368, %313 : vector<32x256xf32>
    %c6_122 = arith.constant 6 : index
    %370 = memref.load %arg2[%c6_122] : memref<8xf32, #tpu.memory_space<smem>>
    %371 = vector.broadcast %370 : f32 to vector<32x256xf32>
    %372 = arith.addf %369, %371 : vector<32x256xf32>
    %373 = arith.select %366, %372, %364 : vector<32x256xi1>, vector<32x256xf32>
    %cst_123 = arith.constant 2.250000e+00 : f32
    %374 = vector.broadcast %cst_123 : f32 to vector<32x256xf32>
    %375 = arith.cmpf oge, %313, %374 : vector<32x256xf32>
    %c7_124 = arith.constant 7 : index
    %376 = memref.load %arg1[%c7_124] : memref<8xf32, #tpu.memory_space<smem>>
    %377 = vector.broadcast %376 : f32 to vector<32x256xf32>
    %378 = arith.mulf %377, %313 : vector<32x256xf32>
    %c7_125 = arith.constant 7 : index
    %379 = memref.load %arg2[%c7_125] : memref<8xf32, #tpu.memory_space<smem>>
    %380 = vector.broadcast %379 : f32 to vector<32x256xf32>
    %381 = arith.addf %378, %380 : vector<32x256xf32>
    %382 = arith.select %375, %381, %373 : vector<32x256xi1>, vector<32x256xf32>
    %383 = arith.addf %313, %382 : vector<32x256xf32>
    %cst_126 = arith.constant -3.000000e+00 : f32
    %cst_127 = arith.constant 3.000000e+00 : f32
    %384 = vector.broadcast %cst_126 : f32 to vector<32x256xf32>
    %385 = arith.maximumf %384, %383 : vector<32x256xf32>
    %386 = vector.broadcast %cst_127 : f32 to vector<32x256xf32>
    %387 = arith.minimumf %386, %385 : vector<32x256xf32>
    %c0_128 = arith.constant 0 : index
    %388 = memref.load %arg1[%c0_128] : memref<8xf32, #tpu.memory_space<smem>>
    %389 = vector.broadcast %388 : f32 to vector<32x256xf32>
    %390 = arith.mulf %389, %387 : vector<32x256xf32>
    %c0_129 = arith.constant 0 : index
    %391 = memref.load %arg2[%c0_129] : memref<8xf32, #tpu.memory_space<smem>>
    %392 = vector.broadcast %391 : f32 to vector<32x256xf32>
    %393 = arith.addf %390, %392 : vector<32x256xf32>
    %cst_130 = arith.constant -2.250000e+00 : f32
    %394 = vector.broadcast %cst_130 : f32 to vector<32x256xf32>
    %395 = arith.cmpf oge, %387, %394 : vector<32x256xf32>
    %c1_131 = arith.constant 1 : index
    %396 = memref.load %arg1[%c1_131] : memref<8xf32, #tpu.memory_space<smem>>
    %397 = vector.broadcast %396 : f32 to vector<32x256xf32>
    %398 = arith.mulf %397, %387 : vector<32x256xf32>
    %c1_132 = arith.constant 1 : index
    %399 = memref.load %arg2[%c1_132] : memref<8xf32, #tpu.memory_space<smem>>
    %400 = vector.broadcast %399 : f32 to vector<32x256xf32>
    %401 = arith.addf %398, %400 : vector<32x256xf32>
    %402 = arith.select %395, %401, %393 : vector<32x256xi1>, vector<32x256xf32>
    %cst_133 = arith.constant -1.500000e+00 : f32
    %403 = vector.broadcast %cst_133 : f32 to vector<32x256xf32>
    %404 = arith.cmpf oge, %387, %403 : vector<32x256xf32>
    %c2_134 = arith.constant 2 : index
    %405 = memref.load %arg1[%c2_134] : memref<8xf32, #tpu.memory_space<smem>>
    %406 = vector.broadcast %405 : f32 to vector<32x256xf32>
    %407 = arith.mulf %406, %387 : vector<32x256xf32>
    %c2_135 = arith.constant 2 : index
    %408 = memref.load %arg2[%c2_135] : memref<8xf32, #tpu.memory_space<smem>>
    %409 = vector.broadcast %408 : f32 to vector<32x256xf32>
    %410 = arith.addf %407, %409 : vector<32x256xf32>
    %411 = arith.select %404, %410, %402 : vector<32x256xi1>, vector<32x256xf32>
    %cst_136 = arith.constant -7.500000e-01 : f32
    %412 = vector.broadcast %cst_136 : f32 to vector<32x256xf32>
    %413 = arith.cmpf oge, %387, %412 : vector<32x256xf32>
    %c3_137 = arith.constant 3 : index
    %414 = memref.load %arg1[%c3_137] : memref<8xf32, #tpu.memory_space<smem>>
    %415 = vector.broadcast %414 : f32 to vector<32x256xf32>
    %416 = arith.mulf %415, %387 : vector<32x256xf32>
    %c3_138 = arith.constant 3 : index
    %417 = memref.load %arg2[%c3_138] : memref<8xf32, #tpu.memory_space<smem>>
    %418 = vector.broadcast %417 : f32 to vector<32x256xf32>
    %419 = arith.addf %416, %418 : vector<32x256xf32>
    %420 = arith.select %413, %419, %411 : vector<32x256xi1>, vector<32x256xf32>
    %cst_139 = arith.constant 0.000000e+00 : f32
    %421 = vector.broadcast %cst_139 : f32 to vector<32x256xf32>
    %422 = arith.cmpf oge, %387, %421 : vector<32x256xf32>
    %c4_140 = arith.constant 4 : index
    %423 = memref.load %arg1[%c4_140] : memref<8xf32, #tpu.memory_space<smem>>
    %424 = vector.broadcast %423 : f32 to vector<32x256xf32>
    %425 = arith.mulf %424, %387 : vector<32x256xf32>
    %c4_141 = arith.constant 4 : index
    %426 = memref.load %arg2[%c4_141] : memref<8xf32, #tpu.memory_space<smem>>
    %427 = vector.broadcast %426 : f32 to vector<32x256xf32>
    %428 = arith.addf %425, %427 : vector<32x256xf32>
    %429 = arith.select %422, %428, %420 : vector<32x256xi1>, vector<32x256xf32>
    %cst_142 = arith.constant 7.500000e-01 : f32
    %430 = vector.broadcast %cst_142 : f32 to vector<32x256xf32>
    %431 = arith.cmpf oge, %387, %430 : vector<32x256xf32>
    %c5_143 = arith.constant 5 : index
    %432 = memref.load %arg1[%c5_143] : memref<8xf32, #tpu.memory_space<smem>>
    %433 = vector.broadcast %432 : f32 to vector<32x256xf32>
    %434 = arith.mulf %433, %387 : vector<32x256xf32>
    %c5_144 = arith.constant 5 : index
    %435 = memref.load %arg2[%c5_144] : memref<8xf32, #tpu.memory_space<smem>>
    %436 = vector.broadcast %435 : f32 to vector<32x256xf32>
    %437 = arith.addf %434, %436 : vector<32x256xf32>
    %438 = arith.select %431, %437, %429 : vector<32x256xi1>, vector<32x256xf32>
    %cst_145 = arith.constant 1.500000e+00 : f32
    %439 = vector.broadcast %cst_145 : f32 to vector<32x256xf32>
    %440 = arith.cmpf oge, %387, %439 : vector<32x256xf32>
    %c6_146 = arith.constant 6 : index
    %441 = memref.load %arg1[%c6_146] : memref<8xf32, #tpu.memory_space<smem>>
    %442 = vector.broadcast %441 : f32 to vector<32x256xf32>
    %443 = arith.mulf %442, %387 : vector<32x256xf32>
    %c6_147 = arith.constant 6 : index
    %444 = memref.load %arg2[%c6_147] : memref<8xf32, #tpu.memory_space<smem>>
    %445 = vector.broadcast %444 : f32 to vector<32x256xf32>
    %446 = arith.addf %443, %445 : vector<32x256xf32>
    %447 = arith.select %440, %446, %438 : vector<32x256xi1>, vector<32x256xf32>
    %cst_148 = arith.constant 2.250000e+00 : f32
    %448 = vector.broadcast %cst_148 : f32 to vector<32x256xf32>
    %449 = arith.cmpf oge, %387, %448 : vector<32x256xf32>
    %c7_149 = arith.constant 7 : index
    %450 = memref.load %arg1[%c7_149] : memref<8xf32, #tpu.memory_space<smem>>
    %451 = vector.broadcast %450 : f32 to vector<32x256xf32>
    %452 = arith.mulf %451, %387 : vector<32x256xf32>
    %c7_150 = arith.constant 7 : index
    %453 = memref.load %arg2[%c7_150] : memref<8xf32, #tpu.memory_space<smem>>
    %454 = vector.broadcast %453 : f32 to vector<32x256xf32>
    %455 = arith.addf %452, %454 : vector<32x256xf32>
    %456 = arith.select %449, %455, %447 : vector<32x256xi1>, vector<32x256xf32>
    %457 = arith.addf %387, %456 : vector<32x256xf32>
    %cst_151 = arith.constant -3.000000e+00 : f32
    %cst_152 = arith.constant 3.000000e+00 : f32
    %458 = vector.broadcast %cst_151 : f32 to vector<32x256xf32>
    %459 = arith.maximumf %458, %457 : vector<32x256xf32>
    %460 = vector.broadcast %cst_152 : f32 to vector<32x256xf32>
    %461 = arith.minimumf %460, %459 : vector<32x256xf32>
    %c0_153 = arith.constant 0 : index
    %462 = memref.load %arg1[%c0_153] : memref<8xf32, #tpu.memory_space<smem>>
    %463 = vector.broadcast %462 : f32 to vector<32x256xf32>
    %464 = arith.mulf %463, %461 : vector<32x256xf32>
    %c0_154 = arith.constant 0 : index
    %465 = memref.load %arg2[%c0_154] : memref<8xf32, #tpu.memory_space<smem>>
    %466 = vector.broadcast %465 : f32 to vector<32x256xf32>
    %467 = arith.addf %464, %466 : vector<32x256xf32>
    %cst_155 = arith.constant -2.250000e+00 : f32
    %468 = vector.broadcast %cst_155 : f32 to vector<32x256xf32>
    %469 = arith.cmpf oge, %461, %468 : vector<32x256xf32>
    %c1_156 = arith.constant 1 : index
    %470 = memref.load %arg1[%c1_156] : memref<8xf32, #tpu.memory_space<smem>>
    %471 = vector.broadcast %470 : f32 to vector<32x256xf32>
    %472 = arith.mulf %471, %461 : vector<32x256xf32>
    %c1_157 = arith.constant 1 : index
    %473 = memref.load %arg2[%c1_157] : memref<8xf32, #tpu.memory_space<smem>>
    %474 = vector.broadcast %473 : f32 to vector<32x256xf32>
    %475 = arith.addf %472, %474 : vector<32x256xf32>
    %476 = arith.select %469, %475, %467 : vector<32x256xi1>, vector<32x256xf32>
    %cst_158 = arith.constant -1.500000e+00 : f32
    %477 = vector.broadcast %cst_158 : f32 to vector<32x256xf32>
    %478 = arith.cmpf oge, %461, %477 : vector<32x256xf32>
    %c2_159 = arith.constant 2 : index
    %479 = memref.load %arg1[%c2_159] : memref<8xf32, #tpu.memory_space<smem>>
    %480 = vector.broadcast %479 : f32 to vector<32x256xf32>
    %481 = arith.mulf %480, %461 : vector<32x256xf32>
    %c2_160 = arith.constant 2 : index
    %482 = memref.load %arg2[%c2_160] : memref<8xf32, #tpu.memory_space<smem>>
    %483 = vector.broadcast %482 : f32 to vector<32x256xf32>
    %484 = arith.addf %481, %483 : vector<32x256xf32>
    %485 = arith.select %478, %484, %476 : vector<32x256xi1>, vector<32x256xf32>
    %cst_161 = arith.constant -7.500000e-01 : f32
    %486 = vector.broadcast %cst_161 : f32 to vector<32x256xf32>
    %487 = arith.cmpf oge, %461, %486 : vector<32x256xf32>
    %c3_162 = arith.constant 3 : index
    %488 = memref.load %arg1[%c3_162] : memref<8xf32, #tpu.memory_space<smem>>
    %489 = vector.broadcast %488 : f32 to vector<32x256xf32>
    %490 = arith.mulf %489, %461 : vector<32x256xf32>
    %c3_163 = arith.constant 3 : index
    %491 = memref.load %arg2[%c3_163] : memref<8xf32, #tpu.memory_space<smem>>
    %492 = vector.broadcast %491 : f32 to vector<32x256xf32>
    %493 = arith.addf %490, %492 : vector<32x256xf32>
    %494 = arith.select %487, %493, %485 : vector<32x256xi1>, vector<32x256xf32>
    %cst_164 = arith.constant 0.000000e+00 : f32
    %495 = vector.broadcast %cst_164 : f32 to vector<32x256xf32>
    %496 = arith.cmpf oge, %461, %495 : vector<32x256xf32>
    %c4_165 = arith.constant 4 : index
    %497 = memref.load %arg1[%c4_165] : memref<8xf32, #tpu.memory_space<smem>>
    %498 = vector.broadcast %497 : f32 to vector<32x256xf32>
    %499 = arith.mulf %498, %461 : vector<32x256xf32>
    %c4_166 = arith.constant 4 : index
    %500 = memref.load %arg2[%c4_166] : memref<8xf32, #tpu.memory_space<smem>>
    %501 = vector.broadcast %500 : f32 to vector<32x256xf32>
    %502 = arith.addf %499, %501 : vector<32x256xf32>
    %503 = arith.select %496, %502, %494 : vector<32x256xi1>, vector<32x256xf32>
    %cst_167 = arith.constant 7.500000e-01 : f32
    %504 = vector.broadcast %cst_167 : f32 to vector<32x256xf32>
    %505 = arith.cmpf oge, %461, %504 : vector<32x256xf32>
    %c5_168 = arith.constant 5 : index
    %506 = memref.load %arg1[%c5_168] : memref<8xf32, #tpu.memory_space<smem>>
    %507 = vector.broadcast %506 : f32 to vector<32x256xf32>
    %508 = arith.mulf %507, %461 : vector<32x256xf32>
    %c5_169 = arith.constant 5 : index
    %509 = memref.load %arg2[%c5_169] : memref<8xf32, #tpu.memory_space<smem>>
    %510 = vector.broadcast %509 : f32 to vector<32x256xf32>
    %511 = arith.addf %508, %510 : vector<32x256xf32>
    %512 = arith.select %505, %511, %503 : vector<32x256xi1>, vector<32x256xf32>
    %cst_170 = arith.constant 1.500000e+00 : f32
    %513 = vector.broadcast %cst_170 : f32 to vector<32x256xf32>
    %514 = arith.cmpf oge, %461, %513 : vector<32x256xf32>
    %c6_171 = arith.constant 6 : index
    %515 = memref.load %arg1[%c6_171] : memref<8xf32, #tpu.memory_space<smem>>
    %516 = vector.broadcast %515 : f32 to vector<32x256xf32>
    %517 = arith.mulf %516, %461 : vector<32x256xf32>
    %c6_172 = arith.constant 6 : index
    %518 = memref.load %arg2[%c6_172] : memref<8xf32, #tpu.memory_space<smem>>
    %519 = vector.broadcast %518 : f32 to vector<32x256xf32>
    %520 = arith.addf %517, %519 : vector<32x256xf32>
    %521 = arith.select %514, %520, %512 : vector<32x256xi1>, vector<32x256xf32>
    %cst_173 = arith.constant 2.250000e+00 : f32
    %522 = vector.broadcast %cst_173 : f32 to vector<32x256xf32>
    %523 = arith.cmpf oge, %461, %522 : vector<32x256xf32>
    %c7_174 = arith.constant 7 : index
    %524 = memref.load %arg1[%c7_174] : memref<8xf32, #tpu.memory_space<smem>>
    %525 = vector.broadcast %524 : f32 to vector<32x256xf32>
    %526 = arith.mulf %525, %461 : vector<32x256xf32>
    %c7_175 = arith.constant 7 : index
    %527 = memref.load %arg2[%c7_175] : memref<8xf32, #tpu.memory_space<smem>>
    %528 = vector.broadcast %527 : f32 to vector<32x256xf32>
    %529 = arith.addf %526, %528 : vector<32x256xf32>
    %530 = arith.select %523, %529, %521 : vector<32x256xi1>, vector<32x256xf32>
    %531 = arith.addf %461, %530 : vector<32x256xf32>
    %cst_176 = arith.constant -3.000000e+00 : f32
    %cst_177 = arith.constant 3.000000e+00 : f32
    %532 = vector.broadcast %cst_176 : f32 to vector<32x256xf32>
    %533 = arith.maximumf %532, %531 : vector<32x256xf32>
    %534 = vector.broadcast %cst_177 : f32 to vector<32x256xf32>
    %535 = arith.minimumf %534, %533 : vector<32x256xf32>
    %c0_178 = arith.constant 0 : index
    %536 = memref.load %arg1[%c0_178] : memref<8xf32, #tpu.memory_space<smem>>
    %537 = vector.broadcast %536 : f32 to vector<32x256xf32>
    %538 = arith.mulf %537, %535 : vector<32x256xf32>
    %c0_179 = arith.constant 0 : index
    %539 = memref.load %arg2[%c0_179] : memref<8xf32, #tpu.memory_space<smem>>
    %540 = vector.broadcast %539 : f32 to vector<32x256xf32>
    %541 = arith.addf %538, %540 : vector<32x256xf32>
    %cst_180 = arith.constant -2.250000e+00 : f32
    %542 = vector.broadcast %cst_180 : f32 to vector<32x256xf32>
    %543 = arith.cmpf oge, %535, %542 : vector<32x256xf32>
    %c1_181 = arith.constant 1 : index
    %544 = memref.load %arg1[%c1_181] : memref<8xf32, #tpu.memory_space<smem>>
    %545 = vector.broadcast %544 : f32 to vector<32x256xf32>
    %546 = arith.mulf %545, %535 : vector<32x256xf32>
    %c1_182 = arith.constant 1 : index
    %547 = memref.load %arg2[%c1_182] : memref<8xf32, #tpu.memory_space<smem>>
    %548 = vector.broadcast %547 : f32 to vector<32x256xf32>
    %549 = arith.addf %546, %548 : vector<32x256xf32>
    %550 = arith.select %543, %549, %541 : vector<32x256xi1>, vector<32x256xf32>
    %cst_183 = arith.constant -1.500000e+00 : f32
    %551 = vector.broadcast %cst_183 : f32 to vector<32x256xf32>
    %552 = arith.cmpf oge, %535, %551 : vector<32x256xf32>
    %c2_184 = arith.constant 2 : index
    %553 = memref.load %arg1[%c2_184] : memref<8xf32, #tpu.memory_space<smem>>
    %554 = vector.broadcast %553 : f32 to vector<32x256xf32>
    %555 = arith.mulf %554, %535 : vector<32x256xf32>
    %c2_185 = arith.constant 2 : index
    %556 = memref.load %arg2[%c2_185] : memref<8xf32, #tpu.memory_space<smem>>
    %557 = vector.broadcast %556 : f32 to vector<32x256xf32>
    %558 = arith.addf %555, %557 : vector<32x256xf32>
    %559 = arith.select %552, %558, %550 : vector<32x256xi1>, vector<32x256xf32>
    %cst_186 = arith.constant -7.500000e-01 : f32
    %560 = vector.broadcast %cst_186 : f32 to vector<32x256xf32>
    %561 = arith.cmpf oge, %535, %560 : vector<32x256xf32>
    %c3_187 = arith.constant 3 : index
    %562 = memref.load %arg1[%c3_187] : memref<8xf32, #tpu.memory_space<smem>>
    %563 = vector.broadcast %562 : f32 to vector<32x256xf32>
    %564 = arith.mulf %563, %535 : vector<32x256xf32>
    %c3_188 = arith.constant 3 : index
    %565 = memref.load %arg2[%c3_188] : memref<8xf32, #tpu.memory_space<smem>>
    %566 = vector.broadcast %565 : f32 to vector<32x256xf32>
    %567 = arith.addf %564, %566 : vector<32x256xf32>
    %568 = arith.select %561, %567, %559 : vector<32x256xi1>, vector<32x256xf32>
    %cst_189 = arith.constant 0.000000e+00 : f32
    %569 = vector.broadcast %cst_189 : f32 to vector<32x256xf32>
    %570 = arith.cmpf oge, %535, %569 : vector<32x256xf32>
    %c4_190 = arith.constant 4 : index
    %571 = memref.load %arg1[%c4_190] : memref<8xf32, #tpu.memory_space<smem>>
    %572 = vector.broadcast %571 : f32 to vector<32x256xf32>
    %573 = arith.mulf %572, %535 : vector<32x256xf32>
    %c4_191 = arith.constant 4 : index
    %574 = memref.load %arg2[%c4_191] : memref<8xf32, #tpu.memory_space<smem>>
    %575 = vector.broadcast %574 : f32 to vector<32x256xf32>
    %576 = arith.addf %573, %575 : vector<32x256xf32>
    %577 = arith.select %570, %576, %568 : vector<32x256xi1>, vector<32x256xf32>
    %cst_192 = arith.constant 7.500000e-01 : f32
    %578 = vector.broadcast %cst_192 : f32 to vector<32x256xf32>
    %579 = arith.cmpf oge, %535, %578 : vector<32x256xf32>
    %c5_193 = arith.constant 5 : index
    %580 = memref.load %arg1[%c5_193] : memref<8xf32, #tpu.memory_space<smem>>
    %581 = vector.broadcast %580 : f32 to vector<32x256xf32>
    %582 = arith.mulf %581, %535 : vector<32x256xf32>
    %c5_194 = arith.constant 5 : index
    %583 = memref.load %arg2[%c5_194] : memref<8xf32, #tpu.memory_space<smem>>
    %584 = vector.broadcast %583 : f32 to vector<32x256xf32>
    %585 = arith.addf %582, %584 : vector<32x256xf32>
    %586 = arith.select %579, %585, %577 : vector<32x256xi1>, vector<32x256xf32>
    %cst_195 = arith.constant 1.500000e+00 : f32
    %587 = vector.broadcast %cst_195 : f32 to vector<32x256xf32>
    %588 = arith.cmpf oge, %535, %587 : vector<32x256xf32>
    %c6_196 = arith.constant 6 : index
    %589 = memref.load %arg1[%c6_196] : memref<8xf32, #tpu.memory_space<smem>>
    %590 = vector.broadcast %589 : f32 to vector<32x256xf32>
    %591 = arith.mulf %590, %535 : vector<32x256xf32>
    %c6_197 = arith.constant 6 : index
    %592 = memref.load %arg2[%c6_197] : memref<8xf32, #tpu.memory_space<smem>>
    %593 = vector.broadcast %592 : f32 to vector<32x256xf32>
    %594 = arith.addf %591, %593 : vector<32x256xf32>
    %595 = arith.select %588, %594, %586 : vector<32x256xi1>, vector<32x256xf32>
    %cst_198 = arith.constant 2.250000e+00 : f32
    %596 = vector.broadcast %cst_198 : f32 to vector<32x256xf32>
    %597 = arith.cmpf oge, %535, %596 : vector<32x256xf32>
    %c7_199 = arith.constant 7 : index
    %598 = memref.load %arg1[%c7_199] : memref<8xf32, #tpu.memory_space<smem>>
    %599 = vector.broadcast %598 : f32 to vector<32x256xf32>
    %600 = arith.mulf %599, %535 : vector<32x256xf32>
    %c7_200 = arith.constant 7 : index
    %601 = memref.load %arg2[%c7_200] : memref<8xf32, #tpu.memory_space<smem>>
    %602 = vector.broadcast %601 : f32 to vector<32x256xf32>
    %603 = arith.addf %600, %602 : vector<32x256xf32>
    %604 = arith.select %597, %603, %595 : vector<32x256xi1>, vector<32x256xf32>
    %605 = arith.addf %535, %604 : vector<32x256xf32>
    %cst_201 = arith.constant -3.000000e+00 : f32
    %cst_202 = arith.constant 3.000000e+00 : f32
    %606 = vector.broadcast %cst_201 : f32 to vector<32x256xf32>
    %607 = arith.maximumf %606, %605 : vector<32x256xf32>
    %608 = vector.broadcast %cst_202 : f32 to vector<32x256xf32>
    %609 = arith.minimumf %608, %607 : vector<32x256xf32>
    %cst_203 = arith.constant -3.000000e+00 : f32
    %610 = vector.broadcast %cst_203 : f32 to vector<32x256xf32>
    %611 = arith.cmpf oge, %13, %610 : vector<32x256xf32>
    %cst_204 = arith.constant 3.000000e+00 : f32
    %612 = vector.broadcast %cst_204 : f32 to vector<32x256xf32>
    %613 = arith.cmpf ole, %13, %612 : vector<32x256xf32>
    %614 = arith.andi %611, %613 : vector<32x256xi1>
    %615 = arith.select %614, %609, %13 : vector<32x256xi1>, vector<32x256xf32>
    %c0_205 = arith.constant 0 : index
    %c0_206 = arith.constant 0 : index
    %616 = vector.load %arg9[%c0_205, %c0_206] : memref<32x32xf32, #tpu.memory_space<vmem>>, vector<32x32xf32>
    %cst_207 = arith.constant dense<0.000000e+00> : vector<32x256xf32>
    %617 = tpu.matmul %616, %615, %cst_207 {dimension_numbers = #tpu.dot_dimension_numbers<[1], [0], [0], [1], [0, 0, 1, 1], [], []>} : vector<32x32xf32>, vector<32x256xf32>, vector<32x256xf32> -> vector<32x256xf32>
    %c0_208 = arith.constant 0 : index
    %c0_209 = arith.constant 0 : index
    %618 = vector.load %arg10[%c0_208, %c0_209] : memref<32x1xf32, #tpu.memory_space<vmem>>, vector<32x1xf32>
    %619 = vector.broadcast %618 : vector<32x1xf32> to vector<32x256xf32>
    %620 = arith.addf %617, %619 : vector<32x256xf32>
    %cst_210 = arith.constant -3.000000e+00 : f32
    %cst_211 = arith.constant 3.000000e+00 : f32
    %621 = vector.broadcast %cst_210 : f32 to vector<32x256xf32>
    %622 = arith.maximumf %621, %620 : vector<32x256xf32>
    %623 = vector.broadcast %cst_211 : f32 to vector<32x256xf32>
    %624 = arith.minimumf %623, %622 : vector<32x256xf32>
    %c0_212 = arith.constant 0 : index
    %625 = memref.load %arg3[%c0_212] : memref<8xf32, #tpu.memory_space<smem>>
    %626 = vector.broadcast %625 : f32 to vector<32x256xf32>
    %627 = arith.mulf %626, %624 : vector<32x256xf32>
    %c0_213 = arith.constant 0 : index
    %628 = memref.load %arg4[%c0_213] : memref<8xf32, #tpu.memory_space<smem>>
    %629 = vector.broadcast %628 : f32 to vector<32x256xf32>
    %630 = arith.addf %627, %629 : vector<32x256xf32>
    %cst_214 = arith.constant -2.250000e+00 : f32
    %631 = vector.broadcast %cst_214 : f32 to vector<32x256xf32>
    %632 = arith.cmpf oge, %624, %631 : vector<32x256xf32>
    %c1_215 = arith.constant 1 : index
    %633 = memref.load %arg3[%c1_215] : memref<8xf32, #tpu.memory_space<smem>>
    %634 = vector.broadcast %633 : f32 to vector<32x256xf32>
    %635 = arith.mulf %634, %624 : vector<32x256xf32>
    %c1_216 = arith.constant 1 : index
    %636 = memref.load %arg4[%c1_216] : memref<8xf32, #tpu.memory_space<smem>>
    %637 = vector.broadcast %636 : f32 to vector<32x256xf32>
    %638 = arith.addf %635, %637 : vector<32x256xf32>
    %639 = arith.select %632, %638, %630 : vector<32x256xi1>, vector<32x256xf32>
    %cst_217 = arith.constant -1.500000e+00 : f32
    %640 = vector.broadcast %cst_217 : f32 to vector<32x256xf32>
    %641 = arith.cmpf oge, %624, %640 : vector<32x256xf32>
    %c2_218 = arith.constant 2 : index
    %642 = memref.load %arg3[%c2_218] : memref<8xf32, #tpu.memory_space<smem>>
    %643 = vector.broadcast %642 : f32 to vector<32x256xf32>
    %644 = arith.mulf %643, %624 : vector<32x256xf32>
    %c2_219 = arith.constant 2 : index
    %645 = memref.load %arg4[%c2_219] : memref<8xf32, #tpu.memory_space<smem>>
    %646 = vector.broadcast %645 : f32 to vector<32x256xf32>
    %647 = arith.addf %644, %646 : vector<32x256xf32>
    %648 = arith.select %641, %647, %639 : vector<32x256xi1>, vector<32x256xf32>
    %cst_220 = arith.constant -7.500000e-01 : f32
    %649 = vector.broadcast %cst_220 : f32 to vector<32x256xf32>
    %650 = arith.cmpf oge, %624, %649 : vector<32x256xf32>
    %c3_221 = arith.constant 3 : index
    %651 = memref.load %arg3[%c3_221] : memref<8xf32, #tpu.memory_space<smem>>
    %652 = vector.broadcast %651 : f32 to vector<32x256xf32>
    %653 = arith.mulf %652, %624 : vector<32x256xf32>
    %c3_222 = arith.constant 3 : index
    %654 = memref.load %arg4[%c3_222] : memref<8xf32, #tpu.memory_space<smem>>
    %655 = vector.broadcast %654 : f32 to vector<32x256xf32>
    %656 = arith.addf %653, %655 : vector<32x256xf32>
    %657 = arith.select %650, %656, %648 : vector<32x256xi1>, vector<32x256xf32>
    %cst_223 = arith.constant 0.000000e+00 : f32
    %658 = vector.broadcast %cst_223 : f32 to vector<32x256xf32>
    %659 = arith.cmpf oge, %624, %658 : vector<32x256xf32>
    %c4_224 = arith.constant 4 : index
    %660 = memref.load %arg3[%c4_224] : memref<8xf32, #tpu.memory_space<smem>>
    %661 = vector.broadcast %660 : f32 to vector<32x256xf32>
    %662 = arith.mulf %661, %624 : vector<32x256xf32>
    %c4_225 = arith.constant 4 : index
    %663 = memref.load %arg4[%c4_225] : memref<8xf32, #tpu.memory_space<smem>>
    %664 = vector.broadcast %663 : f32 to vector<32x256xf32>
    %665 = arith.addf %662, %664 : vector<32x256xf32>
    %666 = arith.select %659, %665, %657 : vector<32x256xi1>, vector<32x256xf32>
    %cst_226 = arith.constant 7.500000e-01 : f32
    %667 = vector.broadcast %cst_226 : f32 to vector<32x256xf32>
    %668 = arith.cmpf oge, %624, %667 : vector<32x256xf32>
    %c5_227 = arith.constant 5 : index
    %669 = memref.load %arg3[%c5_227] : memref<8xf32, #tpu.memory_space<smem>>
    %670 = vector.broadcast %669 : f32 to vector<32x256xf32>
    %671 = arith.mulf %670, %624 : vector<32x256xf32>
    %c5_228 = arith.constant 5 : index
    %672 = memref.load %arg4[%c5_228] : memref<8xf32, #tpu.memory_space<smem>>
    %673 = vector.broadcast %672 : f32 to vector<32x256xf32>
    %674 = arith.addf %671, %673 : vector<32x256xf32>
    %675 = arith.select %668, %674, %666 : vector<32x256xi1>, vector<32x256xf32>
    %cst_229 = arith.constant 1.500000e+00 : f32
    %676 = vector.broadcast %cst_229 : f32 to vector<32x256xf32>
    %677 = arith.cmpf oge, %624, %676 : vector<32x256xf32>
    %c6_230 = arith.constant 6 : index
    %678 = memref.load %arg3[%c6_230] : memref<8xf32, #tpu.memory_space<smem>>
    %679 = vector.broadcast %678 : f32 to vector<32x256xf32>
    %680 = arith.mulf %679, %624 : vector<32x256xf32>
    %c6_231 = arith.constant 6 : index
    %681 = memref.load %arg4[%c6_231] : memref<8xf32, #tpu.memory_space<smem>>
    %682 = vector.broadcast %681 : f32 to vector<32x256xf32>
    %683 = arith.addf %680, %682 : vector<32x256xf32>
    %684 = arith.select %677, %683, %675 : vector<32x256xi1>, vector<32x256xf32>
    %cst_232 = arith.constant 2.250000e+00 : f32
    %685 = vector.broadcast %cst_232 : f32 to vector<32x256xf32>
    %686 = arith.cmpf oge, %624, %685 : vector<32x256xf32>
    %c7_233 = arith.constant 7 : index
    %687 = memref.load %arg3[%c7_233] : memref<8xf32, #tpu.memory_space<smem>>
    %688 = vector.broadcast %687 : f32 to vector<32x256xf32>
    %689 = arith.mulf %688, %624 : vector<32x256xf32>
    %c7_234 = arith.constant 7 : index
    %690 = memref.load %arg4[%c7_234] : memref<8xf32, #tpu.memory_space<smem>>
    %691 = vector.broadcast %690 : f32 to vector<32x256xf32>
    %692 = arith.addf %689, %691 : vector<32x256xf32>
    %693 = arith.select %686, %692, %684 : vector<32x256xi1>, vector<32x256xf32>
    %694 = arith.addf %624, %693 : vector<32x256xf32>
    %cst_235 = arith.constant -3.000000e+00 : f32
    %cst_236 = arith.constant 3.000000e+00 : f32
    %695 = vector.broadcast %cst_235 : f32 to vector<32x256xf32>
    %696 = arith.maximumf %695, %694 : vector<32x256xf32>
    %697 = vector.broadcast %cst_236 : f32 to vector<32x256xf32>
    %698 = arith.minimumf %697, %696 : vector<32x256xf32>
    %c0_237 = arith.constant 0 : index
    %699 = memref.load %arg3[%c0_237] : memref<8xf32, #tpu.memory_space<smem>>
    %700 = vector.broadcast %699 : f32 to vector<32x256xf32>
    %701 = arith.mulf %700, %698 : vector<32x256xf32>
    %c0_238 = arith.constant 0 : index
    %702 = memref.load %arg4[%c0_238] : memref<8xf32, #tpu.memory_space<smem>>
    %703 = vector.broadcast %702 : f32 to vector<32x256xf32>
    %704 = arith.addf %701, %703 : vector<32x256xf32>
    %cst_239 = arith.constant -2.250000e+00 : f32
    %705 = vector.broadcast %cst_239 : f32 to vector<32x256xf32>
    %706 = arith.cmpf oge, %698, %705 : vector<32x256xf32>
    %c1_240 = arith.constant 1 : index
    %707 = memref.load %arg3[%c1_240] : memref<8xf32, #tpu.memory_space<smem>>
    %708 = vector.broadcast %707 : f32 to vector<32x256xf32>
    %709 = arith.mulf %708, %698 : vector<32x256xf32>
    %c1_241 = arith.constant 1 : index
    %710 = memref.load %arg4[%c1_241] : memref<8xf32, #tpu.memory_space<smem>>
    %711 = vector.broadcast %710 : f32 to vector<32x256xf32>
    %712 = arith.addf %709, %711 : vector<32x256xf32>
    %713 = arith.select %706, %712, %704 : vector<32x256xi1>, vector<32x256xf32>
    %cst_242 = arith.constant -1.500000e+00 : f32
    %714 = vector.broadcast %cst_242 : f32 to vector<32x256xf32>
    %715 = arith.cmpf oge, %698, %714 : vector<32x256xf32>
    %c2_243 = arith.constant 2 : index
    %716 = memref.load %arg3[%c2_243] : memref<8xf32, #tpu.memory_space<smem>>
    %717 = vector.broadcast %716 : f32 to vector<32x256xf32>
    %718 = arith.mulf %717, %698 : vector<32x256xf32>
    %c2_244 = arith.constant 2 : index
    %719 = memref.load %arg4[%c2_244] : memref<8xf32, #tpu.memory_space<smem>>
    %720 = vector.broadcast %719 : f32 to vector<32x256xf32>
    %721 = arith.addf %718, %720 : vector<32x256xf32>
    %722 = arith.select %715, %721, %713 : vector<32x256xi1>, vector<32x256xf32>
    %cst_245 = arith.constant -7.500000e-01 : f32
    %723 = vector.broadcast %cst_245 : f32 to vector<32x256xf32>
    %724 = arith.cmpf oge, %698, %723 : vector<32x256xf32>
    %c3_246 = arith.constant 3 : index
    %725 = memref.load %arg3[%c3_246] : memref<8xf32, #tpu.memory_space<smem>>
    %726 = vector.broadcast %725 : f32 to vector<32x256xf32>
    %727 = arith.mulf %726, %698 : vector<32x256xf32>
    %c3_247 = arith.constant 3 : index
    %728 = memref.load %arg4[%c3_247] : memref<8xf32, #tpu.memory_space<smem>>
    %729 = vector.broadcast %728 : f32 to vector<32x256xf32>
    %730 = arith.addf %727, %729 : vector<32x256xf32>
    %731 = arith.select %724, %730, %722 : vector<32x256xi1>, vector<32x256xf32>
    %cst_248 = arith.constant 0.000000e+00 : f32
    %732 = vector.broadcast %cst_248 : f32 to vector<32x256xf32>
    %733 = arith.cmpf oge, %698, %732 : vector<32x256xf32>
    %c4_249 = arith.constant 4 : index
    %734 = memref.load %arg3[%c4_249] : memref<8xf32, #tpu.memory_space<smem>>
    %735 = vector.broadcast %734 : f32 to vector<32x256xf32>
    %736 = arith.mulf %735, %698 : vector<32x256xf32>
    %c4_250 = arith.constant 4 : index
    %737 = memref.load %arg4[%c4_250] : memref<8xf32, #tpu.memory_space<smem>>
    %738 = vector.broadcast %737 : f32 to vector<32x256xf32>
    %739 = arith.addf %736, %738 : vector<32x256xf32>
    %740 = arith.select %733, %739, %731 : vector<32x256xi1>, vector<32x256xf32>
    %cst_251 = arith.constant 7.500000e-01 : f32
    %741 = vector.broadcast %cst_251 : f32 to vector<32x256xf32>
    %742 = arith.cmpf oge, %698, %741 : vector<32x256xf32>
    %c5_252 = arith.constant 5 : index
    %743 = memref.load %arg3[%c5_252] : memref<8xf32, #tpu.memory_space<smem>>
    %744 = vector.broadcast %743 : f32 to vector<32x256xf32>
    %745 = arith.mulf %744, %698 : vector<32x256xf32>
    %c5_253 = arith.constant 5 : index
    %746 = memref.load %arg4[%c5_253] : memref<8xf32, #tpu.memory_space<smem>>
    %747 = vector.broadcast %746 : f32 to vector<32x256xf32>
    %748 = arith.addf %745, %747 : vector<32x256xf32>
    %749 = arith.select %742, %748, %740 : vector<32x256xi1>, vector<32x256xf32>
    %cst_254 = arith.constant 1.500000e+00 : f32
    %750 = vector.broadcast %cst_254 : f32 to vector<32x256xf32>
    %751 = arith.cmpf oge, %698, %750 : vector<32x256xf32>
    %c6_255 = arith.constant 6 : index
    %752 = memref.load %arg3[%c6_255] : memref<8xf32, #tpu.memory_space<smem>>
    %753 = vector.broadcast %752 : f32 to vector<32x256xf32>
    %754 = arith.mulf %753, %698 : vector<32x256xf32>
    %c6_256 = arith.constant 6 : index
    %755 = memref.load %arg4[%c6_256] : memref<8xf32, #tpu.memory_space<smem>>
    %756 = vector.broadcast %755 : f32 to vector<32x256xf32>
    %757 = arith.addf %754, %756 : vector<32x256xf32>
    %758 = arith.select %751, %757, %749 : vector<32x256xi1>, vector<32x256xf32>
    %cst_257 = arith.constant 2.250000e+00 : f32
    %759 = vector.broadcast %cst_257 : f32 to vector<32x256xf32>
    %760 = arith.cmpf oge, %698, %759 : vector<32x256xf32>
    %c7_258 = arith.constant 7 : index
    %761 = memref.load %arg3[%c7_258] : memref<8xf32, #tpu.memory_space<smem>>
    %762 = vector.broadcast %761 : f32 to vector<32x256xf32>
    %763 = arith.mulf %762, %698 : vector<32x256xf32>
    %c7_259 = arith.constant 7 : index
    %764 = memref.load %arg4[%c7_259] : memref<8xf32, #tpu.memory_space<smem>>
    %765 = vector.broadcast %764 : f32 to vector<32x256xf32>
    %766 = arith.addf %763, %765 : vector<32x256xf32>
    %767 = arith.select %760, %766, %758 : vector<32x256xi1>, vector<32x256xf32>
    %768 = arith.addf %698, %767 : vector<32x256xf32>
    %cst_260 = arith.constant -3.000000e+00 : f32
    %cst_261 = arith.constant 3.000000e+00 : f32
    %769 = vector.broadcast %cst_260 : f32 to vector<32x256xf32>
    %770 = arith.maximumf %769, %768 : vector<32x256xf32>
    %771 = vector.broadcast %cst_261 : f32 to vector<32x256xf32>
    %772 = arith.minimumf %771, %770 : vector<32x256xf32>
    %c0_262 = arith.constant 0 : index
    %773 = memref.load %arg3[%c0_262] : memref<8xf32, #tpu.memory_space<smem>>
    %774 = vector.broadcast %773 : f32 to vector<32x256xf32>
    %775 = arith.mulf %774, %772 : vector<32x256xf32>
    %c0_263 = arith.constant 0 : index
    %776 = memref.load %arg4[%c0_263] : memref<8xf32, #tpu.memory_space<smem>>
    %777 = vector.broadcast %776 : f32 to vector<32x256xf32>
    %778 = arith.addf %775, %777 : vector<32x256xf32>
    %cst_264 = arith.constant -2.250000e+00 : f32
    %779 = vector.broadcast %cst_264 : f32 to vector<32x256xf32>
    %780 = arith.cmpf oge, %772, %779 : vector<32x256xf32>
    %c1_265 = arith.constant 1 : index
    %781 = memref.load %arg3[%c1_265] : memref<8xf32, #tpu.memory_space<smem>>
    %782 = vector.broadcast %781 : f32 to vector<32x256xf32>
    %783 = arith.mulf %782, %772 : vector<32x256xf32>
    %c1_266 = arith.constant 1 : index
    %784 = memref.load %arg4[%c1_266] : memref<8xf32, #tpu.memory_space<smem>>
    %785 = vector.broadcast %784 : f32 to vector<32x256xf32>
    %786 = arith.addf %783, %785 : vector<32x256xf32>
    %787 = arith.select %780, %786, %778 : vector<32x256xi1>, vector<32x256xf32>
    %cst_267 = arith.constant -1.500000e+00 : f32
    %788 = vector.broadcast %cst_267 : f32 to vector<32x256xf32>
    %789 = arith.cmpf oge, %772, %788 : vector<32x256xf32>
    %c2_268 = arith.constant 2 : index
    %790 = memref.load %arg3[%c2_268] : memref<8xf32, #tpu.memory_space<smem>>
    %791 = vector.broadcast %790 : f32 to vector<32x256xf32>
    %792 = arith.mulf %791, %772 : vector<32x256xf32>
    %c2_269 = arith.constant 2 : index
    %793 = memref.load %arg4[%c2_269] : memref<8xf32, #tpu.memory_space<smem>>
    %794 = vector.broadcast %793 : f32 to vector<32x256xf32>
    %795 = arith.addf %792, %794 : vector<32x256xf32>
    %796 = arith.select %789, %795, %787 : vector<32x256xi1>, vector<32x256xf32>
    %cst_270 = arith.constant -7.500000e-01 : f32
    %797 = vector.broadcast %cst_270 : f32 to vector<32x256xf32>
    %798 = arith.cmpf oge, %772, %797 : vector<32x256xf32>
    %c3_271 = arith.constant 3 : index
    %799 = memref.load %arg3[%c3_271] : memref<8xf32, #tpu.memory_space<smem>>
    %800 = vector.broadcast %799 : f32 to vector<32x256xf32>
    %801 = arith.mulf %800, %772 : vector<32x256xf32>
    %c3_272 = arith.constant 3 : index
    %802 = memref.load %arg4[%c3_272] : memref<8xf32, #tpu.memory_space<smem>>
    %803 = vector.broadcast %802 : f32 to vector<32x256xf32>
    %804 = arith.addf %801, %803 : vector<32x256xf32>
    %805 = arith.select %798, %804, %796 : vector<32x256xi1>, vector<32x256xf32>
    %cst_273 = arith.constant 0.000000e+00 : f32
    %806 = vector.broadcast %cst_273 : f32 to vector<32x256xf32>
    %807 = arith.cmpf oge, %772, %806 : vector<32x256xf32>
    %c4_274 = arith.constant 4 : index
    %808 = memref.load %arg3[%c4_274] : memref<8xf32, #tpu.memory_space<smem>>
    %809 = vector.broadcast %808 : f32 to vector<32x256xf32>
    %810 = arith.mulf %809, %772 : vector<32x256xf32>
    %c4_275 = arith.constant 4 : index
    %811 = memref.load %arg4[%c4_275] : memref<8xf32, #tpu.memory_space<smem>>
    %812 = vector.broadcast %811 : f32 to vector<32x256xf32>
    %813 = arith.addf %810, %812 : vector<32x256xf32>
    %814 = arith.select %807, %813, %805 : vector<32x256xi1>, vector<32x256xf32>
    %cst_276 = arith.constant 7.500000e-01 : f32
    %815 = vector.broadcast %cst_276 : f32 to vector<32x256xf32>
    %816 = arith.cmpf oge, %772, %815 : vector<32x256xf32>
    %c5_277 = arith.constant 5 : index
    %817 = memref.load %arg3[%c5_277] : memref<8xf32, #tpu.memory_space<smem>>
    %818 = vector.broadcast %817 : f32 to vector<32x256xf32>
    %819 = arith.mulf %818, %772 : vector<32x256xf32>
    %c5_278 = arith.constant 5 : index
    %820 = memref.load %arg4[%c5_278] : memref<8xf32, #tpu.memory_space<smem>>
    %821 = vector.broadcast %820 : f32 to vector<32x256xf32>
    %822 = arith.addf %819, %821 : vector<32x256xf32>
    %823 = arith.select %816, %822, %814 : vector<32x256xi1>, vector<32x256xf32>
    %cst_279 = arith.constant 1.500000e+00 : f32
    %824 = vector.broadcast %cst_279 : f32 to vector<32x256xf32>
    %825 = arith.cmpf oge, %772, %824 : vector<32x256xf32>
    %c6_280 = arith.constant 6 : index
    %826 = memref.load %arg3[%c6_280] : memref<8xf32, #tpu.memory_space<smem>>
    %827 = vector.broadcast %826 : f32 to vector<32x256xf32>
    %828 = arith.mulf %827, %772 : vector<32x256xf32>
    %c6_281 = arith.constant 6 : index
    %829 = memref.load %arg4[%c6_281] : memref<8xf32, #tpu.memory_space<smem>>
    %830 = vector.broadcast %829 : f32 to vector<32x256xf32>
    %831 = arith.addf %828, %830 : vector<32x256xf32>
    %832 = arith.select %825, %831, %823 : vector<32x256xi1>, vector<32x256xf32>
    %cst_282 = arith.constant 2.250000e+00 : f32
    %833 = vector.broadcast %cst_282 : f32 to vector<32x256xf32>
    %834 = arith.cmpf oge, %772, %833 : vector<32x256xf32>
    %c7_283 = arith.constant 7 : index
    %835 = memref.load %arg3[%c7_283] : memref<8xf32, #tpu.memory_space<smem>>
    %836 = vector.broadcast %835 : f32 to vector<32x256xf32>
    %837 = arith.mulf %836, %772 : vector<32x256xf32>
    %c7_284 = arith.constant 7 : index
    %838 = memref.load %arg4[%c7_284] : memref<8xf32, #tpu.memory_space<smem>>
    %839 = vector.broadcast %838 : f32 to vector<32x256xf32>
    %840 = arith.addf %837, %839 : vector<32x256xf32>
    %841 = arith.select %834, %840, %832 : vector<32x256xi1>, vector<32x256xf32>
    %842 = arith.addf %772, %841 : vector<32x256xf32>
    %cst_285 = arith.constant -3.000000e+00 : f32
    %cst_286 = arith.constant 3.000000e+00 : f32
    %843 = vector.broadcast %cst_285 : f32 to vector<32x256xf32>
    %844 = arith.maximumf %843, %842 : vector<32x256xf32>
    %845 = vector.broadcast %cst_286 : f32 to vector<32x256xf32>
    %846 = arith.minimumf %845, %844 : vector<32x256xf32>
    %c0_287 = arith.constant 0 : index
    %847 = memref.load %arg3[%c0_287] : memref<8xf32, #tpu.memory_space<smem>>
    %848 = vector.broadcast %847 : f32 to vector<32x256xf32>
    %849 = arith.mulf %848, %846 : vector<32x256xf32>
    %c0_288 = arith.constant 0 : index
    %850 = memref.load %arg4[%c0_288] : memref<8xf32, #tpu.memory_space<smem>>
    %851 = vector.broadcast %850 : f32 to vector<32x256xf32>
    %852 = arith.addf %849, %851 : vector<32x256xf32>
    %cst_289 = arith.constant -2.250000e+00 : f32
    %853 = vector.broadcast %cst_289 : f32 to vector<32x256xf32>
    %854 = arith.cmpf oge, %846, %853 : vector<32x256xf32>
    %c1_290 = arith.constant 1 : index
    %855 = memref.load %arg3[%c1_290] : memref<8xf32, #tpu.memory_space<smem>>
    %856 = vector.broadcast %855 : f32 to vector<32x256xf32>
    %857 = arith.mulf %856, %846 : vector<32x256xf32>
    %c1_291 = arith.constant 1 : index
    %858 = memref.load %arg4[%c1_291] : memref<8xf32, #tpu.memory_space<smem>>
    %859 = vector.broadcast %858 : f32 to vector<32x256xf32>
    %860 = arith.addf %857, %859 : vector<32x256xf32>
    %861 = arith.select %854, %860, %852 : vector<32x256xi1>, vector<32x256xf32>
    %cst_292 = arith.constant -1.500000e+00 : f32
    %862 = vector.broadcast %cst_292 : f32 to vector<32x256xf32>
    %863 = arith.cmpf oge, %846, %862 : vector<32x256xf32>
    %c2_293 = arith.constant 2 : index
    %864 = memref.load %arg3[%c2_293] : memref<8xf32, #tpu.memory_space<smem>>
    %865 = vector.broadcast %864 : f32 to vector<32x256xf32>
    %866 = arith.mulf %865, %846 : vector<32x256xf32>
    %c2_294 = arith.constant 2 : index
    %867 = memref.load %arg4[%c2_294] : memref<8xf32, #tpu.memory_space<smem>>
    %868 = vector.broadcast %867 : f32 to vector<32x256xf32>
    %869 = arith.addf %866, %868 : vector<32x256xf32>
    %870 = arith.select %863, %869, %861 : vector<32x256xi1>, vector<32x256xf32>
    %cst_295 = arith.constant -7.500000e-01 : f32
    %871 = vector.broadcast %cst_295 : f32 to vector<32x256xf32>
    %872 = arith.cmpf oge, %846, %871 : vector<32x256xf32>
    %c3_296 = arith.constant 3 : index
    %873 = memref.load %arg3[%c3_296] : memref<8xf32, #tpu.memory_space<smem>>
    %874 = vector.broadcast %873 : f32 to vector<32x256xf32>
    %875 = arith.mulf %874, %846 : vector<32x256xf32>
    %c3_297 = arith.constant 3 : index
    %876 = memref.load %arg4[%c3_297] : memref<8xf32, #tpu.memory_space<smem>>
    %877 = vector.broadcast %876 : f32 to vector<32x256xf32>
    %878 = arith.addf %875, %877 : vector<32x256xf32>
    %879 = arith.select %872, %878, %870 : vector<32x256xi1>, vector<32x256xf32>
    %cst_298 = arith.constant 0.000000e+00 : f32
    %880 = vector.broadcast %cst_298 : f32 to vector<32x256xf32>
    %881 = arith.cmpf oge, %846, %880 : vector<32x256xf32>
    %c4_299 = arith.constant 4 : index
    %882 = memref.load %arg3[%c4_299] : memref<8xf32, #tpu.memory_space<smem>>
    %883 = vector.broadcast %882 : f32 to vector<32x256xf32>
    %884 = arith.mulf %883, %846 : vector<32x256xf32>
    %c4_300 = arith.constant 4 : index
    %885 = memref.load %arg4[%c4_300] : memref<8xf32, #tpu.memory_space<smem>>
    %886 = vector.broadcast %885 : f32 to vector<32x256xf32>
    %887 = arith.addf %884, %886 : vector<32x256xf32>
    %888 = arith.select %881, %887, %879 : vector<32x256xi1>, vector<32x256xf32>
    %cst_301 = arith.constant 7.500000e-01 : f32
    %889 = vector.broadcast %cst_301 : f32 to vector<32x256xf32>
    %890 = arith.cmpf oge, %846, %889 : vector<32x256xf32>
    %c5_302 = arith.constant 5 : index
    %891 = memref.load %arg3[%c5_302] : memref<8xf32, #tpu.memory_space<smem>>
    %892 = vector.broadcast %891 : f32 to vector<32x256xf32>
    %893 = arith.mulf %892, %846 : vector<32x256xf32>
    %c5_303 = arith.constant 5 : index
    %894 = memref.load %arg4[%c5_303] : memref<8xf32, #tpu.memory_space<smem>>
    %895 = vector.broadcast %894 : f32 to vector<32x256xf32>
    %896 = arith.addf %893, %895 : vector<32x256xf32>
    %897 = arith.select %890, %896, %888 : vector<32x256xi1>, vector<32x256xf32>
    %cst_304 = arith.constant 1.500000e+00 : f32
    %898 = vector.broadcast %cst_304 : f32 to vector<32x256xf32>
    %899 = arith.cmpf oge, %846, %898 : vector<32x256xf32>
    %c6_305 = arith.constant 6 : index
    %900 = memref.load %arg3[%c6_305] : memref<8xf32, #tpu.memory_space<smem>>
    %901 = vector.broadcast %900 : f32 to vector<32x256xf32>
    %902 = arith.mulf %901, %846 : vector<32x256xf32>
    %c6_306 = arith.constant 6 : index
    %903 = memref.load %arg4[%c6_306] : memref<8xf32, #tpu.memory_space<smem>>
    %904 = vector.broadcast %903 : f32 to vector<32x256xf32>
    %905 = arith.addf %902, %904 : vector<32x256xf32>
    %906 = arith.select %899, %905, %897 : vector<32x256xi1>, vector<32x256xf32>
    %cst_307 = arith.constant 2.250000e+00 : f32
    %907 = vector.broadcast %cst_307 : f32 to vector<32x256xf32>
    %908 = arith.cmpf oge, %846, %907 : vector<32x256xf32>
    %c7_308 = arith.constant 7 : index
    %909 = memref.load %arg3[%c7_308] : memref<8xf32, #tpu.memory_space<smem>>
    %910 = vector.broadcast %909 : f32 to vector<32x256xf32>
    %911 = arith.mulf %910, %846 : vector<32x256xf32>
    %c7_309 = arith.constant 7 : index
    %912 = memref.load %arg4[%c7_309] : memref<8xf32, #tpu.memory_space<smem>>
    %913 = vector.broadcast %912 : f32 to vector<32x256xf32>
    %914 = arith.addf %911, %913 : vector<32x256xf32>
    %915 = arith.select %908, %914, %906 : vector<32x256xi1>, vector<32x256xf32>
    %916 = arith.addf %846, %915 : vector<32x256xf32>
    %cst_310 = arith.constant -3.000000e+00 : f32
    %cst_311 = arith.constant 3.000000e+00 : f32
    %917 = vector.broadcast %cst_310 : f32 to vector<32x256xf32>
    %918 = arith.maximumf %917, %916 : vector<32x256xf32>
    %919 = vector.broadcast %cst_311 : f32 to vector<32x256xf32>
    %920 = arith.minimumf %919, %918 : vector<32x256xf32>
    %c0_312 = arith.constant 0 : index
    %921 = memref.load %arg3[%c0_312] : memref<8xf32, #tpu.memory_space<smem>>
    %922 = vector.broadcast %921 : f32 to vector<32x256xf32>
    %923 = arith.mulf %922, %920 : vector<32x256xf32>
    %c0_313 = arith.constant 0 : index
    %924 = memref.load %arg4[%c0_313] : memref<8xf32, #tpu.memory_space<smem>>
    %925 = vector.broadcast %924 : f32 to vector<32x256xf32>
    %926 = arith.addf %923, %925 : vector<32x256xf32>
    %cst_314 = arith.constant -2.250000e+00 : f32
    %927 = vector.broadcast %cst_314 : f32 to vector<32x256xf32>
    %928 = arith.cmpf oge, %920, %927 : vector<32x256xf32>
    %c1_315 = arith.constant 1 : index
    %929 = memref.load %arg3[%c1_315] : memref<8xf32, #tpu.memory_space<smem>>
    %930 = vector.broadcast %929 : f32 to vector<32x256xf32>
    %931 = arith.mulf %930, %920 : vector<32x256xf32>
    %c1_316 = arith.constant 1 : index
    %932 = memref.load %arg4[%c1_316] : memref<8xf32, #tpu.memory_space<smem>>
    %933 = vector.broadcast %932 : f32 to vector<32x256xf32>
    %934 = arith.addf %931, %933 : vector<32x256xf32>
    %935 = arith.select %928, %934, %926 : vector<32x256xi1>, vector<32x256xf32>
    %cst_317 = arith.constant -1.500000e+00 : f32
    %936 = vector.broadcast %cst_317 : f32 to vector<32x256xf32>
    %937 = arith.cmpf oge, %920, %936 : vector<32x256xf32>
    %c2_318 = arith.constant 2 : index
    %938 = memref.load %arg3[%c2_318] : memref<8xf32, #tpu.memory_space<smem>>
    %939 = vector.broadcast %938 : f32 to vector<32x256xf32>
    %940 = arith.mulf %939, %920 : vector<32x256xf32>
    %c2_319 = arith.constant 2 : index
    %941 = memref.load %arg4[%c2_319] : memref<8xf32, #tpu.memory_space<smem>>
    %942 = vector.broadcast %941 : f32 to vector<32x256xf32>
    %943 = arith.addf %940, %942 : vector<32x256xf32>
    %944 = arith.select %937, %943, %935 : vector<32x256xi1>, vector<32x256xf32>
    %cst_320 = arith.constant -7.500000e-01 : f32
    %945 = vector.broadcast %cst_320 : f32 to vector<32x256xf32>
    %946 = arith.cmpf oge, %920, %945 : vector<32x256xf32>
    %c3_321 = arith.constant 3 : index
    %947 = memref.load %arg3[%c3_321] : memref<8xf32, #tpu.memory_space<smem>>
    %948 = vector.broadcast %947 : f32 to vector<32x256xf32>
    %949 = arith.mulf %948, %920 : vector<32x256xf32>
    %c3_322 = arith.constant 3 : index
    %950 = memref.load %arg4[%c3_322] : memref<8xf32, #tpu.memory_space<smem>>
    %951 = vector.broadcast %950 : f32 to vector<32x256xf32>
    %952 = arith.addf %949, %951 : vector<32x256xf32>
    %953 = arith.select %946, %952, %944 : vector<32x256xi1>, vector<32x256xf32>
    %cst_323 = arith.constant 0.000000e+00 : f32
    %954 = vector.broadcast %cst_323 : f32 to vector<32x256xf32>
    %955 = arith.cmpf oge, %920, %954 : vector<32x256xf32>
    %c4_324 = arith.constant 4 : index
    %956 = memref.load %arg3[%c4_324] : memref<8xf32, #tpu.memory_space<smem>>
    %957 = vector.broadcast %956 : f32 to vector<32x256xf32>
    %958 = arith.mulf %957, %920 : vector<32x256xf32>
    %c4_325 = arith.constant 4 : index
    %959 = memref.load %arg4[%c4_325] : memref<8xf32, #tpu.memory_space<smem>>
    %960 = vector.broadcast %959 : f32 to vector<32x256xf32>
    %961 = arith.addf %958, %960 : vector<32x256xf32>
    %962 = arith.select %955, %961, %953 : vector<32x256xi1>, vector<32x256xf32>
    %cst_326 = arith.constant 7.500000e-01 : f32
    %963 = vector.broadcast %cst_326 : f32 to vector<32x256xf32>
    %964 = arith.cmpf oge, %920, %963 : vector<32x256xf32>
    %c5_327 = arith.constant 5 : index
    %965 = memref.load %arg3[%c5_327] : memref<8xf32, #tpu.memory_space<smem>>
    %966 = vector.broadcast %965 : f32 to vector<32x256xf32>
    %967 = arith.mulf %966, %920 : vector<32x256xf32>
    %c5_328 = arith.constant 5 : index
    %968 = memref.load %arg4[%c5_328] : memref<8xf32, #tpu.memory_space<smem>>
    %969 = vector.broadcast %968 : f32 to vector<32x256xf32>
    %970 = arith.addf %967, %969 : vector<32x256xf32>
    %971 = arith.select %964, %970, %962 : vector<32x256xi1>, vector<32x256xf32>
    %cst_329 = arith.constant 1.500000e+00 : f32
    %972 = vector.broadcast %cst_329 : f32 to vector<32x256xf32>
    %973 = arith.cmpf oge, %920, %972 : vector<32x256xf32>
    %c6_330 = arith.constant 6 : index
    %974 = memref.load %arg3[%c6_330] : memref<8xf32, #tpu.memory_space<smem>>
    %975 = vector.broadcast %974 : f32 to vector<32x256xf32>
    %976 = arith.mulf %975, %920 : vector<32x256xf32>
    %c6_331 = arith.constant 6 : index
    %977 = memref.load %arg4[%c6_331] : memref<8xf32, #tpu.memory_space<smem>>
    %978 = vector.broadcast %977 : f32 to vector<32x256xf32>
    %979 = arith.addf %976, %978 : vector<32x256xf32>
    %980 = arith.select %973, %979, %971 : vector<32x256xi1>, vector<32x256xf32>
    %cst_332 = arith.constant 2.250000e+00 : f32
    %981 = vector.broadcast %cst_332 : f32 to vector<32x256xf32>
    %982 = arith.cmpf oge, %920, %981 : vector<32x256xf32>
    %c7_333 = arith.constant 7 : index
    %983 = memref.load %arg3[%c7_333] : memref<8xf32, #tpu.memory_space<smem>>
    %984 = vector.broadcast %983 : f32 to vector<32x256xf32>
    %985 = arith.mulf %984, %920 : vector<32x256xf32>
    %c7_334 = arith.constant 7 : index
    %986 = memref.load %arg4[%c7_334] : memref<8xf32, #tpu.memory_space<smem>>
    %987 = vector.broadcast %986 : f32 to vector<32x256xf32>
    %988 = arith.addf %985, %987 : vector<32x256xf32>
    %989 = arith.select %982, %988, %980 : vector<32x256xi1>, vector<32x256xf32>
    %990 = arith.addf %920, %989 : vector<32x256xf32>
    %cst_335 = arith.constant -3.000000e+00 : f32
    %cst_336 = arith.constant 3.000000e+00 : f32
    %991 = vector.broadcast %cst_335 : f32 to vector<32x256xf32>
    %992 = arith.maximumf %991, %990 : vector<32x256xf32>
    %993 = vector.broadcast %cst_336 : f32 to vector<32x256xf32>
    %994 = arith.minimumf %993, %992 : vector<32x256xf32>
    %c0_337 = arith.constant 0 : index
    %995 = memref.load %arg3[%c0_337] : memref<8xf32, #tpu.memory_space<smem>>
    %996 = vector.broadcast %995 : f32 to vector<32x256xf32>
    %997 = arith.mulf %996, %994 : vector<32x256xf32>
    %c0_338 = arith.constant 0 : index
    %998 = memref.load %arg4[%c0_338] : memref<8xf32, #tpu.memory_space<smem>>
    %999 = vector.broadcast %998 : f32 to vector<32x256xf32>
    %1000 = arith.addf %997, %999 : vector<32x256xf32>
    %cst_339 = arith.constant -2.250000e+00 : f32
    %1001 = vector.broadcast %cst_339 : f32 to vector<32x256xf32>
    %1002 = arith.cmpf oge, %994, %1001 : vector<32x256xf32>
    %c1_340 = arith.constant 1 : index
    %1003 = memref.load %arg3[%c1_340] : memref<8xf32, #tpu.memory_space<smem>>
    %1004 = vector.broadcast %1003 : f32 to vector<32x256xf32>
    %1005 = arith.mulf %1004, %994 : vector<32x256xf32>
    %c1_341 = arith.constant 1 : index
    %1006 = memref.load %arg4[%c1_341] : memref<8xf32, #tpu.memory_space<smem>>
    %1007 = vector.broadcast %1006 : f32 to vector<32x256xf32>
    %1008 = arith.addf %1005, %1007 : vector<32x256xf32>
    %1009 = arith.select %1002, %1008, %1000 : vector<32x256xi1>, vector<32x256xf32>
    %cst_342 = arith.constant -1.500000e+00 : f32
    %1010 = vector.broadcast %cst_342 : f32 to vector<32x256xf32>
    %1011 = arith.cmpf oge, %994, %1010 : vector<32x256xf32>
    %c2_343 = arith.constant 2 : index
    %1012 = memref.load %arg3[%c2_343] : memref<8xf32, #tpu.memory_space<smem>>
    %1013 = vector.broadcast %1012 : f32 to vector<32x256xf32>
    %1014 = arith.mulf %1013, %994 : vector<32x256xf32>
    %c2_344 = arith.constant 2 : index
    %1015 = memref.load %arg4[%c2_344] : memref<8xf32, #tpu.memory_space<smem>>
    %1016 = vector.broadcast %1015 : f32 to vector<32x256xf32>
    %1017 = arith.addf %1014, %1016 : vector<32x256xf32>
    %1018 = arith.select %1011, %1017, %1009 : vector<32x256xi1>, vector<32x256xf32>
    %cst_345 = arith.constant -7.500000e-01 : f32
    %1019 = vector.broadcast %cst_345 : f32 to vector<32x256xf32>
    %1020 = arith.cmpf oge, %994, %1019 : vector<32x256xf32>
    %c3_346 = arith.constant 3 : index
    %1021 = memref.load %arg3[%c3_346] : memref<8xf32, #tpu.memory_space<smem>>
    %1022 = vector.broadcast %1021 : f32 to vector<32x256xf32>
    %1023 = arith.mulf %1022, %994 : vector<32x256xf32>
    %c3_347 = arith.constant 3 : index
    %1024 = memref.load %arg4[%c3_347] : memref<8xf32, #tpu.memory_space<smem>>
    %1025 = vector.broadcast %1024 : f32 to vector<32x256xf32>
    %1026 = arith.addf %1023, %1025 : vector<32x256xf32>
    %1027 = arith.select %1020, %1026, %1018 : vector<32x256xi1>, vector<32x256xf32>
    %cst_348 = arith.constant 0.000000e+00 : f32
    %1028 = vector.broadcast %cst_348 : f32 to vector<32x256xf32>
    %1029 = arith.cmpf oge, %994, %1028 : vector<32x256xf32>
    %c4_349 = arith.constant 4 : index
    %1030 = memref.load %arg3[%c4_349] : memref<8xf32, #tpu.memory_space<smem>>
    %1031 = vector.broadcast %1030 : f32 to vector<32x256xf32>
    %1032 = arith.mulf %1031, %994 : vector<32x256xf32>
    %c4_350 = arith.constant 4 : index
    %1033 = memref.load %arg4[%c4_350] : memref<8xf32, #tpu.memory_space<smem>>
    %1034 = vector.broadcast %1033 : f32 to vector<32x256xf32>
    %1035 = arith.addf %1032, %1034 : vector<32x256xf32>
    %1036 = arith.select %1029, %1035, %1027 : vector<32x256xi1>, vector<32x256xf32>
    %cst_351 = arith.constant 7.500000e-01 : f32
    %1037 = vector.broadcast %cst_351 : f32 to vector<32x256xf32>
    %1038 = arith.cmpf oge, %994, %1037 : vector<32x256xf32>
    %c5_352 = arith.constant 5 : index
    %1039 = memref.load %arg3[%c5_352] : memref<8xf32, #tpu.memory_space<smem>>
    %1040 = vector.broadcast %1039 : f32 to vector<32x256xf32>
    %1041 = arith.mulf %1040, %994 : vector<32x256xf32>
    %c5_353 = arith.constant 5 : index
    %1042 = memref.load %arg4[%c5_353] : memref<8xf32, #tpu.memory_space<smem>>
    %1043 = vector.broadcast %1042 : f32 to vector<32x256xf32>
    %1044 = arith.addf %1041, %1043 : vector<32x256xf32>
    %1045 = arith.select %1038, %1044, %1036 : vector<32x256xi1>, vector<32x256xf32>
    %cst_354 = arith.constant 1.500000e+00 : f32
    %1046 = vector.broadcast %cst_354 : f32 to vector<32x256xf32>
    %1047 = arith.cmpf oge, %994, %1046 : vector<32x256xf32>
    %c6_355 = arith.constant 6 : index
    %1048 = memref.load %arg3[%c6_355] : memref<8xf32, #tpu.memory_space<smem>>
    %1049 = vector.broadcast %1048 : f32 to vector<32x256xf32>
    %1050 = arith.mulf %1049, %994 : vector<32x256xf32>
    %c6_356 = arith.constant 6 : index
    %1051 = memref.load %arg4[%c6_356] : memref<8xf32, #tpu.memory_space<smem>>
    %1052 = vector.broadcast %1051 : f32 to vector<32x256xf32>
    %1053 = arith.addf %1050, %1052 : vector<32x256xf32>
    %1054 = arith.select %1047, %1053, %1045 : vector<32x256xi1>, vector<32x256xf32>
    %cst_357 = arith.constant 2.250000e+00 : f32
    %1055 = vector.broadcast %cst_357 : f32 to vector<32x256xf32>
    %1056 = arith.cmpf oge, %994, %1055 : vector<32x256xf32>
    %c7_358 = arith.constant 7 : index
    %1057 = memref.load %arg3[%c7_358] : memref<8xf32, #tpu.memory_space<smem>>
    %1058 = vector.broadcast %1057 : f32 to vector<32x256xf32>
    %1059 = arith.mulf %1058, %994 : vector<32x256xf32>
    %c7_359 = arith.constant 7 : index
    %1060 = memref.load %arg4[%c7_359] : memref<8xf32, #tpu.memory_space<smem>>
    %1061 = vector.broadcast %1060 : f32 to vector<32x256xf32>
    %1062 = arith.addf %1059, %1061 : vector<32x256xf32>
    %1063 = arith.select %1056, %1062, %1054 : vector<32x256xi1>, vector<32x256xf32>
    %1064 = arith.addf %994, %1063 : vector<32x256xf32>
    %cst_360 = arith.constant -3.000000e+00 : f32
    %cst_361 = arith.constant 3.000000e+00 : f32
    %1065 = vector.broadcast %cst_360 : f32 to vector<32x256xf32>
    %1066 = arith.maximumf %1065, %1064 : vector<32x256xf32>
    %1067 = vector.broadcast %cst_361 : f32 to vector<32x256xf32>
    %1068 = arith.minimumf %1067, %1066 : vector<32x256xf32>
    %c0_362 = arith.constant 0 : index
    %1069 = memref.load %arg3[%c0_362] : memref<8xf32, #tpu.memory_space<smem>>
    %1070 = vector.broadcast %1069 : f32 to vector<32x256xf32>
    %1071 = arith.mulf %1070, %1068 : vector<32x256xf32>
    %c0_363 = arith.constant 0 : index
    %1072 = memref.load %arg4[%c0_363] : memref<8xf32, #tpu.memory_space<smem>>
    %1073 = vector.broadcast %1072 : f32 to vector<32x256xf32>
    %1074 = arith.addf %1071, %1073 : vector<32x256xf32>
    %cst_364 = arith.constant -2.250000e+00 : f32
    %1075 = vector.broadcast %cst_364 : f32 to vector<32x256xf32>
    %1076 = arith.cmpf oge, %1068, %1075 : vector<32x256xf32>
    %c1_365 = arith.constant 1 : index
    %1077 = memref.load %arg3[%c1_365] : memref<8xf32, #tpu.memory_space<smem>>
    %1078 = vector.broadcast %1077 : f32 to vector<32x256xf32>
    %1079 = arith.mulf %1078, %1068 : vector<32x256xf32>
    %c1_366 = arith.constant 1 : index
    %1080 = memref.load %arg4[%c1_366] : memref<8xf32, #tpu.memory_space<smem>>
    %1081 = vector.broadcast %1080 : f32 to vector<32x256xf32>
    %1082 = arith.addf %1079, %1081 : vector<32x256xf32>
    %1083 = arith.select %1076, %1082, %1074 : vector<32x256xi1>, vector<32x256xf32>
    %cst_367 = arith.constant -1.500000e+00 : f32
    %1084 = vector.broadcast %cst_367 : f32 to vector<32x256xf32>
    %1085 = arith.cmpf oge, %1068, %1084 : vector<32x256xf32>
    %c2_368 = arith.constant 2 : index
    %1086 = memref.load %arg3[%c2_368] : memref<8xf32, #tpu.memory_space<smem>>
    %1087 = vector.broadcast %1086 : f32 to vector<32x256xf32>
    %1088 = arith.mulf %1087, %1068 : vector<32x256xf32>
    %c2_369 = arith.constant 2 : index
    %1089 = memref.load %arg4[%c2_369] : memref<8xf32, #tpu.memory_space<smem>>
    %1090 = vector.broadcast %1089 : f32 to vector<32x256xf32>
    %1091 = arith.addf %1088, %1090 : vector<32x256xf32>
    %1092 = arith.select %1085, %1091, %1083 : vector<32x256xi1>, vector<32x256xf32>
    %cst_370 = arith.constant -7.500000e-01 : f32
    %1093 = vector.broadcast %cst_370 : f32 to vector<32x256xf32>
    %1094 = arith.cmpf oge, %1068, %1093 : vector<32x256xf32>
    %c3_371 = arith.constant 3 : index
    %1095 = memref.load %arg3[%c3_371] : memref<8xf32, #tpu.memory_space<smem>>
    %1096 = vector.broadcast %1095 : f32 to vector<32x256xf32>
    %1097 = arith.mulf %1096, %1068 : vector<32x256xf32>
    %c3_372 = arith.constant 3 : index
    %1098 = memref.load %arg4[%c3_372] : memref<8xf32, #tpu.memory_space<smem>>
    %1099 = vector.broadcast %1098 : f32 to vector<32x256xf32>
    %1100 = arith.addf %1097, %1099 : vector<32x256xf32>
    %1101 = arith.select %1094, %1100, %1092 : vector<32x256xi1>, vector<32x256xf32>
    %cst_373 = arith.constant 0.000000e+00 : f32
    %1102 = vector.broadcast %cst_373 : f32 to vector<32x256xf32>
    %1103 = arith.cmpf oge, %1068, %1102 : vector<32x256xf32>
    %c4_374 = arith.constant 4 : index
    %1104 = memref.load %arg3[%c4_374] : memref<8xf32, #tpu.memory_space<smem>>
    %1105 = vector.broadcast %1104 : f32 to vector<32x256xf32>
    %1106 = arith.mulf %1105, %1068 : vector<32x256xf32>
    %c4_375 = arith.constant 4 : index
    %1107 = memref.load %arg4[%c4_375] : memref<8xf32, #tpu.memory_space<smem>>
    %1108 = vector.broadcast %1107 : f32 to vector<32x256xf32>
    %1109 = arith.addf %1106, %1108 : vector<32x256xf32>
    %1110 = arith.select %1103, %1109, %1101 : vector<32x256xi1>, vector<32x256xf32>
    %cst_376 = arith.constant 7.500000e-01 : f32
    %1111 = vector.broadcast %cst_376 : f32 to vector<32x256xf32>
    %1112 = arith.cmpf oge, %1068, %1111 : vector<32x256xf32>
    %c5_377 = arith.constant 5 : index
    %1113 = memref.load %arg3[%c5_377] : memref<8xf32, #tpu.memory_space<smem>>
    %1114 = vector.broadcast %1113 : f32 to vector<32x256xf32>
    %1115 = arith.mulf %1114, %1068 : vector<32x256xf32>
    %c5_378 = arith.constant 5 : index
    %1116 = memref.load %arg4[%c5_378] : memref<8xf32, #tpu.memory_space<smem>>
    %1117 = vector.broadcast %1116 : f32 to vector<32x256xf32>
    %1118 = arith.addf %1115, %1117 : vector<32x256xf32>
    %1119 = arith.select %1112, %1118, %1110 : vector<32x256xi1>, vector<32x256xf32>
    %cst_379 = arith.constant 1.500000e+00 : f32
    %1120 = vector.broadcast %cst_379 : f32 to vector<32x256xf32>
    %1121 = arith.cmpf oge, %1068, %1120 : vector<32x256xf32>
    %c6_380 = arith.constant 6 : index
    %1122 = memref.load %arg3[%c6_380] : memref<8xf32, #tpu.memory_space<smem>>
    %1123 = vector.broadcast %1122 : f32 to vector<32x256xf32>
    %1124 = arith.mulf %1123, %1068 : vector<32x256xf32>
    %c6_381 = arith.constant 6 : index
    %1125 = memref.load %arg4[%c6_381] : memref<8xf32, #tpu.memory_space<smem>>
    %1126 = vector.broadcast %1125 : f32 to vector<32x256xf32>
    %1127 = arith.addf %1124, %1126 : vector<32x256xf32>
    %1128 = arith.select %1121, %1127, %1119 : vector<32x256xi1>, vector<32x256xf32>
    %cst_382 = arith.constant 2.250000e+00 : f32
    %1129 = vector.broadcast %cst_382 : f32 to vector<32x256xf32>
    %1130 = arith.cmpf oge, %1068, %1129 : vector<32x256xf32>
    %c7_383 = arith.constant 7 : index
    %1131 = memref.load %arg3[%c7_383] : memref<8xf32, #tpu.memory_space<smem>>
    %1132 = vector.broadcast %1131 : f32 to vector<32x256xf32>
    %1133 = arith.mulf %1132, %1068 : vector<32x256xf32>
    %c7_384 = arith.constant 7 : index
    %1134 = memref.load %arg4[%c7_384] : memref<8xf32, #tpu.memory_space<smem>>
    %1135 = vector.broadcast %1134 : f32 to vector<32x256xf32>
    %1136 = arith.addf %1133, %1135 : vector<32x256xf32>
    %1137 = arith.select %1130, %1136, %1128 : vector<32x256xi1>, vector<32x256xf32>
    %1138 = arith.addf %1068, %1137 : vector<32x256xf32>
    %cst_385 = arith.constant -3.000000e+00 : f32
    %cst_386 = arith.constant 3.000000e+00 : f32
    %1139 = vector.broadcast %cst_385 : f32 to vector<32x256xf32>
    %1140 = arith.maximumf %1139, %1138 : vector<32x256xf32>
    %1141 = vector.broadcast %cst_386 : f32 to vector<32x256xf32>
    %1142 = arith.minimumf %1141, %1140 : vector<32x256xf32>
    %c0_387 = arith.constant 0 : index
    %1143 = memref.load %arg3[%c0_387] : memref<8xf32, #tpu.memory_space<smem>>
    %1144 = vector.broadcast %1143 : f32 to vector<32x256xf32>
    %1145 = arith.mulf %1144, %1142 : vector<32x256xf32>
    %c0_388 = arith.constant 0 : index
    %1146 = memref.load %arg4[%c0_388] : memref<8xf32, #tpu.memory_space<smem>>
    %1147 = vector.broadcast %1146 : f32 to vector<32x256xf32>
    %1148 = arith.addf %1145, %1147 : vector<32x256xf32>
    %cst_389 = arith.constant -2.250000e+00 : f32
    %1149 = vector.broadcast %cst_389 : f32 to vector<32x256xf32>
    %1150 = arith.cmpf oge, %1142, %1149 : vector<32x256xf32>
    %c1_390 = arith.constant 1 : index
    %1151 = memref.load %arg3[%c1_390] : memref<8xf32, #tpu.memory_space<smem>>
    %1152 = vector.broadcast %1151 : f32 to vector<32x256xf32>
    %1153 = arith.mulf %1152, %1142 : vector<32x256xf32>
    %c1_391 = arith.constant 1 : index
    %1154 = memref.load %arg4[%c1_391] : memref<8xf32, #tpu.memory_space<smem>>
    %1155 = vector.broadcast %1154 : f32 to vector<32x256xf32>
    %1156 = arith.addf %1153, %1155 : vector<32x256xf32>
    %1157 = arith.select %1150, %1156, %1148 : vector<32x256xi1>, vector<32x256xf32>
    %cst_392 = arith.constant -1.500000e+00 : f32
    %1158 = vector.broadcast %cst_392 : f32 to vector<32x256xf32>
    %1159 = arith.cmpf oge, %1142, %1158 : vector<32x256xf32>
    %c2_393 = arith.constant 2 : index
    %1160 = memref.load %arg3[%c2_393] : memref<8xf32, #tpu.memory_space<smem>>
    %1161 = vector.broadcast %1160 : f32 to vector<32x256xf32>
    %1162 = arith.mulf %1161, %1142 : vector<32x256xf32>
    %c2_394 = arith.constant 2 : index
    %1163 = memref.load %arg4[%c2_394] : memref<8xf32, #tpu.memory_space<smem>>
    %1164 = vector.broadcast %1163 : f32 to vector<32x256xf32>
    %1165 = arith.addf %1162, %1164 : vector<32x256xf32>
    %1166 = arith.select %1159, %1165, %1157 : vector<32x256xi1>, vector<32x256xf32>
    %cst_395 = arith.constant -7.500000e-01 : f32
    %1167 = vector.broadcast %cst_395 : f32 to vector<32x256xf32>
    %1168 = arith.cmpf oge, %1142, %1167 : vector<32x256xf32>
    %c3_396 = arith.constant 3 : index
    %1169 = memref.load %arg3[%c3_396] : memref<8xf32, #tpu.memory_space<smem>>
    %1170 = vector.broadcast %1169 : f32 to vector<32x256xf32>
    %1171 = arith.mulf %1170, %1142 : vector<32x256xf32>
    %c3_397 = arith.constant 3 : index
    %1172 = memref.load %arg4[%c3_397] : memref<8xf32, #tpu.memory_space<smem>>
    %1173 = vector.broadcast %1172 : f32 to vector<32x256xf32>
    %1174 = arith.addf %1171, %1173 : vector<32x256xf32>
    %1175 = arith.select %1168, %1174, %1166 : vector<32x256xi1>, vector<32x256xf32>
    %cst_398 = arith.constant 0.000000e+00 : f32
    %1176 = vector.broadcast %cst_398 : f32 to vector<32x256xf32>
    %1177 = arith.cmpf oge, %1142, %1176 : vector<32x256xf32>
    %c4_399 = arith.constant 4 : index
    %1178 = memref.load %arg3[%c4_399] : memref<8xf32, #tpu.memory_space<smem>>
    %1179 = vector.broadcast %1178 : f32 to vector<32x256xf32>
    %1180 = arith.mulf %1179, %1142 : vector<32x256xf32>
    %c4_400 = arith.constant 4 : index
    %1181 = memref.load %arg4[%c4_400] : memref<8xf32, #tpu.memory_space<smem>>
    %1182 = vector.broadcast %1181 : f32 to vector<32x256xf32>
    %1183 = arith.addf %1180, %1182 : vector<32x256xf32>
    %1184 = arith.select %1177, %1183, %1175 : vector<32x256xi1>, vector<32x256xf32>
    %cst_401 = arith.constant 7.500000e-01 : f32
    %1185 = vector.broadcast %cst_401 : f32 to vector<32x256xf32>
    %1186 = arith.cmpf oge, %1142, %1185 : vector<32x256xf32>
    %c5_402 = arith.constant 5 : index
    %1187 = memref.load %arg3[%c5_402] : memref<8xf32, #tpu.memory_space<smem>>
    %1188 = vector.broadcast %1187 : f32 to vector<32x256xf32>
    %1189 = arith.mulf %1188, %1142 : vector<32x256xf32>
    %c5_403 = arith.constant 5 : index
    %1190 = memref.load %arg4[%c5_403] : memref<8xf32, #tpu.memory_space<smem>>
    %1191 = vector.broadcast %1190 : f32 to vector<32x256xf32>
    %1192 = arith.addf %1189, %1191 : vector<32x256xf32>
    %1193 = arith.select %1186, %1192, %1184 : vector<32x256xi1>, vector<32x256xf32>
    %cst_404 = arith.constant 1.500000e+00 : f32
    %1194 = vector.broadcast %cst_404 : f32 to vector<32x256xf32>
    %1195 = arith.cmpf oge, %1142, %1194 : vector<32x256xf32>
    %c6_405 = arith.constant 6 : index
    %1196 = memref.load %arg3[%c6_405] : memref<8xf32, #tpu.memory_space<smem>>
    %1197 = vector.broadcast %1196 : f32 to vector<32x256xf32>
    %1198 = arith.mulf %1197, %1142 : vector<32x256xf32>
    %c6_406 = arith.constant 6 : index
    %1199 = memref.load %arg4[%c6_406] : memref<8xf32, #tpu.memory_space<smem>>
    %1200 = vector.broadcast %1199 : f32 to vector<32x256xf32>
    %1201 = arith.addf %1198, %1200 : vector<32x256xf32>
    %1202 = arith.select %1195, %1201, %1193 : vector<32x256xi1>, vector<32x256xf32>
    %cst_407 = arith.constant 2.250000e+00 : f32
    %1203 = vector.broadcast %cst_407 : f32 to vector<32x256xf32>
    %1204 = arith.cmpf oge, %1142, %1203 : vector<32x256xf32>
    %c7_408 = arith.constant 7 : index
    %1205 = memref.load %arg3[%c7_408] : memref<8xf32, #tpu.memory_space<smem>>
    %1206 = vector.broadcast %1205 : f32 to vector<32x256xf32>
    %1207 = arith.mulf %1206, %1142 : vector<32x256xf32>
    %c7_409 = arith.constant 7 : index
    %1208 = memref.load %arg4[%c7_409] : memref<8xf32, #tpu.memory_space<smem>>
    %1209 = vector.broadcast %1208 : f32 to vector<32x256xf32>
    %1210 = arith.addf %1207, %1209 : vector<32x256xf32>
    %1211 = arith.select %1204, %1210, %1202 : vector<32x256xi1>, vector<32x256xf32>
    %1212 = arith.addf %1142, %1211 : vector<32x256xf32>
    %cst_410 = arith.constant -3.000000e+00 : f32
    %cst_411 = arith.constant 3.000000e+00 : f32
    %1213 = vector.broadcast %cst_410 : f32 to vector<32x256xf32>
    %1214 = arith.maximumf %1213, %1212 : vector<32x256xf32>
    %1215 = vector.broadcast %cst_411 : f32 to vector<32x256xf32>
    %1216 = arith.minimumf %1215, %1214 : vector<32x256xf32>
    %cst_412 = arith.constant -3.000000e+00 : f32
    %1217 = vector.broadcast %cst_412 : f32 to vector<32x256xf32>
    %1218 = arith.cmpf oge, %620, %1217 : vector<32x256xf32>
    %cst_413 = arith.constant 3.000000e+00 : f32
    %1219 = vector.broadcast %cst_413 : f32 to vector<32x256xf32>
    %1220 = arith.cmpf ole, %620, %1219 : vector<32x256xf32>
    %1221 = arith.andi %1218, %1220 : vector<32x256xi1>
    %1222 = arith.select %1221, %1216, %620 : vector<32x256xi1>, vector<32x256xf32>
    %c0_414 = arith.constant 0 : index
    %c0_415 = arith.constant 0 : index
    %1223 = vector.load %arg11[%c0_414, %c0_415] : memref<32x1xf32, #tpu.memory_space<vmem>>, vector<32x1xf32>
    %1224 = vector.broadcast %1223 : vector<32x1xf32> to vector<32x256xf32>
    %1225 = arith.mulf %1224, %1222 : vector<32x256xf32>
    %cst_416 = arith.constant dense<0.000000e+00> : vector<256xf32>
    %1226 = vector.multi_reduction <add>, %1225, %cst_416 [0] : vector<32x256xf32> to vector<256xf32>
    %1227 = vector.shape_cast %1226 : vector<256xf32> to vector<1x256xf32>
    %c0_417 = arith.constant 0 : index
    %1228 = memref.load %arg5[%c0_417] : memref<1xf32, #tpu.memory_space<smem>>
    %1229 = vector.broadcast %1228 : f32 to vector<1x256xf32>
    %1230 = arith.addf %1227, %1229 : vector<1x256xf32>
    %c0_418 = arith.constant 0 : index
    %c0_419 = arith.constant 0 : index
    %1231 = vector.load %arg12[%c0_418, %c0_419] : memref<1x256xf32, #tpu.memory_space<vmem>>, vector<1x256xf32>
    tpu.vector_store %arg12[%c0_418, %c0_419], %1230 {strides = array<i32>} : memref<1x256xf32, #tpu.memory_space<vmem>>, vector<1x256xf32>,
    return
  }
  func.func @transform_0(%arg0: i32) -> i32 {
    %c0_i32 = arith.constant 0 : i32
    %c0_i32_0 = arith.constant 0 : i32
    return %c0_i32 : i32
  }
  func.func @transform_1(%arg0: i32) -> i32 {
    %c0_i32 = arith.constant 0 : i32
    %c0_i32_0 = arith.constant 0 : i32
    return %c0_i32 : i32
  }
  func.func @transform_2(%arg0: i32) -> i32 {
    %c0_i32 = arith.constant 0 : i32
    %c0_i32_0 = arith.constant 0 : i32
    return %c0_i32 : i32
  }
  func.func @transform_3(%arg0: i32) -> i32 {
    %c0_i32 = arith.constant 0 : i32
    %c0_i32_0 = arith.constant 0 : i32
    return %c0_i32 : i32
  }
  func.func @transform_4(%arg0: i32) -> i32 {
    %c0_i32 = arith.constant 0 : i32
    %c0_i32_0 = arith.constant 0 : i32
    return %c0_i32 : i32
  }
  func.func @transform_5(%arg0: i32) -> (i32, i32) {
    %c0_i32 = arith.constant 0 : i32
    %c0_i32_0 = arith.constant 0 : i32
    return %c0_i32, %arg0 : i32, i32
  }
  func.func @transform_6(%arg0: i32) -> (i32, i32) {
    %c0_i32 = arith.constant 0 : i32
    %c0_i32_0 = arith.constant 0 : i32
    %c0_i32_1 = arith.constant 0 : i32
    return %c0_i32, %c0_i32_0 : i32, i32
  }
  func.func @transform_7(%arg0: i32) -> (i32, i32) {
    %c0_i32 = arith.constant 0 : i32
    %c0_i32_0 = arith.constant 0 : i32
    %c0_i32_1 = arith.constant 0 : i32
    return %c0_i32, %c0_i32_0 : i32, i32
  }
  func.func @transform_8(%arg0: i32) -> (i32, i32) {
    %c0_i32 = arith.constant 0 : i32
    %c0_i32_0 = arith.constant 0 : i32
    %c0_i32_1 = arith.constant 0 : i32
    return %c0_i32, %c0_i32_0 : i32, i32
  }
  func.func @transform_9(%arg0: i32) -> (i32, i32) {
    %c0_i32 = arith.constant 0 : i32
    %c0_i32_0 = arith.constant 0 : i32
    %c0_i32_1 = arith.constant 0 : i32
    return %c0_i32, %c0_i32_0 : i32, i32
  }
  func.func @transform_10(%arg0: i32) -> (i32, i32) {
    %c0_i32 = arith.constant 0 : i32
    %c0_i32_0 = arith.constant 0 : i32
    %c0_i32_1 = arith.constant 0 : i32
    return %c0_i32, %c0_i32_0 : i32, i32
  }
  func.func @transform_11(%arg0: i32) -> (i32, i32) {
    %c0_i32 = arith.constant 0 : i32
    %c0_i32_0 = arith.constant 0 : i32
    return %c0_i32, %arg0 : i32, i32
  }
}

</mosaic_0001>

<llo_original>
// kernel: tpu_custom_call.1
$region0: #{tpu_custom_call.1}
  #allocation0 [shape = 'u32[]', space=smem, size = 0x4, offset = 0x4, fixed_abs, tag = 'smem constant byte address 0x4 - core index']
  #allocation1 [shape = 'u32[144,128]{1,0:T(1,128)}', space=vmem, size = 0x12000, scoped, tag = 'internal scratch']
  #allocation2 [shape = 'f32[1]{0:T(128)S(6)}', space=smem, size = 0x200, scoped, tag = 'scoped memory for tpu_custom_call.1']
  %s0 = inlined_call_operand.vmem [shape: f32[8], index: 0, kind: input, shape index: {}]
  %s1 = inlined_call_operand.vmem [shape: f32[8], index: 1, kind: input, shape index: {}]
  %s2 = inlined_call_operand.vmem [shape: f32[8], index: 2, kind: input, shape index: {}]
  %s3 = inlined_call_operand.vmem [shape: f32[8], index: 3, kind: input, shape index: {}]
  %s4 = inlined_call_operand.<no memory space> [shape: f32[1], index: 4, kind: input, shape index: {}]
  %s5 = inlined_call_operand.vmem [shape: f32[2,256], index: 5, kind: input, shape index: {}]
  %s6 = inlined_call_operand.vmem [shape: f32[32,2], index: 6, kind: input, shape index: {}]
  %s7 = inlined_call_operand.vmem [shape: f32[32,1], index: 7, kind: input, shape index: {}]
  %s8 = inlined_call_operand.vmem [shape: f32[32,32], index: 8, kind: input, shape index: {}]
  %s9 = inlined_call_operand.vmem [shape: f32[32,1], index: 9, kind: input, shape index: {}]
  %s10 = inlined_call_operand.vmem [shape: f32[32,1], index: 10, kind: input, shape index: {}]
  %s11 = inlined_call_operand.hbm [shape: f32[1,256], index: 11, kind: output, shape index: {}]
  %s12 = sld [smem:[#allocation0]]
  $region70: #{tpu_custom_call.1} parent=0
    _
  %s14 = ssub.s32 1, %s12
  %s15 = scalar_select 0, %s14, %s12
  %16 = sst [smem:[#allocation2]] %s4
  $region1: #{tpu_custom_call.1} parent=0
    #allocation3 [shape = 'u8[512]{0}', space=smem, size = 0x200, scoped, tag = 'input window, operand 0, single buffered']
    #allocation4 [shape = 's32[1]{0}', space=sflag, size = 0x4, scoped, tag = 'scoped memory for tpu_custom_call.1']
    #allocation5 [shape = 's32[1]{0}', space=sflag, size = 0x4, scoped, tag = 'scoped memory for tpu_custom_call.1']
    #allocation6 [shape = 'u8[512]{0}', space=smem, size = 0x200, scoped, tag = 'input window, operand 1, single buffered']
    #allocation7 [shape = 's32[1]{0}', space=sflag, size = 0x4, scoped, tag = 'scoped memory for tpu_custom_call.1']
    #allocation8 [shape = 'u8[512]{0}', space=smem, size = 0x200, scoped, tag = 'input window, operand 2, single buffered']
    #allocation9 [shape = 'u8[512]{0}', space=smem, size = 0x200, scoped, tag = 'input window, operand 3, single buffered']
    #allocation10 [shape = 's32[1]{0}', space=sflag, size = 0x4, scoped, tag = 'scoped memory for tpu_custom_call.1']
    #allocation11 [shape = 'u8[1024]{0}', space=vmem, size = 0x400, scoped, tag = 'output window, operand 0, single buffered']
    %17 = vsyncpa [#allocation5], 0
    %18 = vsyncpa [#allocation7], 0
    %19 = vsyncpa [#allocation10], 0
    %20 = vsyncpa [#allocation4], 0
    // Predicated region
    $region2: #{tpu_custom_call.1} parent=1 // pred_check
      _
    $region3: #{tpu_custom_call.1} parent=1 // pred_check_branch
      %22 = sbr.rel (0) target = $region5
    $region4: #{tpu_custom_call.1} parent=1 // pred_region
      %s24 = ssub.s32 16, 16
      %25 = vsyncadd [#allocation5], %s24
      %s27 = sshll.u32 %s0, 4
      %s28 = int_to_ptr.vmem [resolvable:$true] %s27
      %30 = dma.vmem_to_smem %s28, 16, [#allocation3], [#allocation5]
    $region5: #{tpu_custom_call.1} parent=1 // pred_fallthru
      _
    // Predicated region
    $region6: #{tpu_custom_call.1} parent=1 // pred_check
      _
    $region7: #{tpu_custom_call.1} parent=1 // pred_check_branch
      %32 = sbr.rel (0) target = $region9
    $region8: #{tpu_custom_call.1} parent=1 // pred_region
      %s34 = ssub.s32 16, 16
      %35 = vsyncadd [#allocation7], %s34
      %s37 = sshll.u32 %s1, 4
      %s38 = int_to_ptr.vmem [resolvable:$true] %s37
      %40 = dma.vmem_to_smem %s38, 16, [#allocation6], [#allocation7]
    $region9: #{tpu_custom_call.1} parent=1 // pred_fallthru
      _
    // Predicated region
    $region10: #{tpu_custom_call.1} parent=1 // pred_check
      _
    $region11: #{tpu_custom_call.1} parent=1 // pred_check_branch
      %42 = sbr.rel (0) target = $region13
    $region12: #{tpu_custom_call.1} parent=1 // pred_region
      %s44 = ssub.s32 16, 16
      %45 = vsyncadd [#allocation7], %s44
      %s47 = sshll.u32 %s2, 4
      %s48 = int_to_ptr.vmem [resolvable:$true] %s47
      %50 = dma.vmem_to_smem %s48, 16, [#allocation8], [#allocation7]
    $region13: #{tpu_custom_call.1} parent=1 // pred_fallthru
      _
    // Predicated region
    $region14: #{tpu_custom_call.1} parent=1 // pred_check
      _
    $region15: #{tpu_custom_call.1} parent=1 // pred_check_branch
      %52 = sbr.rel (0) target = $region17
    $region16: #{tpu_custom_call.1} parent=1 // pred_region
      %s54 = ssub.s32 16, 16
      %55 = vsyncadd [#allocation10], %s54
      %s57 = sshll.u32 %s3, 4
      %s58 = int_to_ptr.vmem [resolvable:$true] %s57
      %60 = dma.vmem_to_smem %s58, 16, [#allocation9], [#allocation10]
    $region17: #{tpu_custom_call.1} parent=1 // pred_fallthru
      _
    // Predicated region
    $region18: #{tpu_custom_call.1} parent=1 // pred_check
      _
    $region19: #{tpu_custom_call.1} parent=1 // pred_check_branch
      %62 = sbr.rel (0) target = $region21
    $region20: #{tpu_custom_call.1} parent=1 // pred_region
      _
    $region21: #{tpu_custom_call.1} parent=1 // pred_fallthru
      _
    // Predicated region
    $region22: #{tpu_custom_call.1} parent=1 // pred_check
      _
    $region23: #{tpu_custom_call.1} parent=1 // pred_check_branch
      %64 = sbr.rel (0) target = $region25
    $region24: #{tpu_custom_call.1} parent=1 // pred_region
      _
    $region25: #{tpu_custom_call.1} parent=1 // pred_fallthru
      _
    // Predicated region
    $region26: #{tpu_custom_call.1} parent=1 // pred_check
      _
    $region27: #{tpu_custom_call.1} parent=1 // pred_check_branch
      %66 = sbr.rel (0) target = $region29
    $region28: #{tpu_custom_call.1} parent=1 // pred_region
      _
    $region29: #{tpu_custom_call.1} parent=1 // pred_fallthru
      _
    // Predicated region
    $region30: #{tpu_custom_call.1} parent=1 // pred_check
      _
    $region31: #{tpu_custom_call.1} parent=1 // pred_check_branch
      %68 = sbr.rel (0) target = $region33
    $region32: #{tpu_custom_call.1} parent=1 // pred_region
      _
    $region33: #{tpu_custom_call.1} parent=1 // pred_fallthru
      _
    // Predicated region
    $region34: #{tpu_custom_call.1} parent=1 // pred_check
      _
    $region35: #{tpu_custom_call.1} parent=1 // pred_check_branch
      %70 = sbr.rel (0) target = $region37
    $region36: #{tpu_custom_call.1} parent=1 // pred_region
      _
    $region37: #{tpu_custom_call.1} parent=1 // pred_fallthru
      _
    // Predicated region
    $region38: #{tpu_custom_call.1} parent=1 // pred_check
      _
    $region39: #{tpu_custom_call.1} parent=1 // pred_check_branch
      %72 = sbr.rel (0) target = $region41
    $region40: #{tpu_custom_call.1} parent=1 // pred_region
      _
    $region41: #{tpu_custom_call.1} parent=1 // pred_fallthru
      _
    // Predicated region
    $region42: #{tpu_custom_call.1} parent=1 // pred_check
      _
    $region43: #{tpu_custom_call.1} parent=1 // pred_check_branch
      %74 = sbr.rel (0) target = $region45
    $region44: #{tpu_custom_call.1} parent=1 // pred_region
      _
    $region45: #{tpu_custom_call.1} parent=1 // pred_fallthru
      _
    // Predicated region
    $region46: #{tpu_custom_call.1} parent=1 // pred_check
      _
    $region47: #{tpu_custom_call.1} parent=1 // pred_check_branch
      %76 = sbr.rel (0) target = $region49
    $region48: #{tpu_custom_call.1} parent=1 // pred_region
      %77 = dma.done [#allocation5], 16
    $region49: #{tpu_custom_call.1} parent=1 // pred_fallthru
      _
    // Predicated region
    $region50: #{tpu_custom_call.1} parent=1 // pred_check
      _
    $region51: #{tpu_custom_call.1} parent=1 // pred_check_branch
      %79 = sbr.rel (0) target = $region53
    $region52: #{tpu_custom_call.1} parent=1 // pred_region
      %80 = dma.done [#allocation7], 16
    $region53: #{tpu_custom_call.1} parent=1 // pred_fallthru
      _
    // Predicated region
    $region54: #{tpu_custom_call.1} parent=1 // pred_check
      _
    $region55: #{tpu_custom_call.1} parent=1 // pred_check_branch
      %82 = sbr.rel (0) target = $region57
    $region56: #{tpu_custom_call.1} parent=1 // pred_region
      %83 = dma.done [#allocation7], 16
    $region57: #{tpu_custom_call.1} parent=1 // pred_fallthru
      _
    // Predicated region
    $region58: #{tpu_custom_call.1} parent=1 // pred_check
      _
    $region59: #{tpu_custom_call.1} parent=1 // pred_check_branch
      %85 = sbr.rel (0) target = $region61
    $region60: #{tpu_custom_call.1} parent=1 // pred_region
      %86 = dma.done [#allocation10], 16
    $region61: #{tpu_custom_call.1} parent=1 // pred_fallthru
      _
    %87 = sfence
    %v88 = vld [vmem:[%s5] ss:$2 sm:$0x3]
    %s89 = scalar_lea.vmem %s5, 1
    %v90 = vld [vmem:[%s89] ss:$2 sm:$0x3]
    %v91 = vld [vmem:[%s6] sm:$0xff]
    %v92 = vld [vmem:[%s6 + $0x8] sm:$0xff]
    %v93 = vld [vmem:[%s6 + $0x10] sm:$0xff]
    %v94 = vld [vmem:[%s6 + $0x18] sm:$0xff]
    %96 = vset.pattern.permute.xlu0 0
    %97 = vperm.xlu0 %96, %v91
    %v98 = vpop.permute.xlu0 %97
    %101 = vset.pattern.permute.xlu0 0
    %102 = vperm.xlu0 %101, %v92
    %v103 = vpop.permute.xlu0 %102
    %106 = vset.pattern.permute.xlu0 0
    %107 = vperm.xlu0 %106, %v93
    %v108 = vpop.permute.xlu0 %107
    %111 = vset.pattern.permute.xlu0 0
    %112 = vperm.xlu0 %111, %v94
    %v113 = vpop.permute.xlu0 %112
    %v116 = vlaneseq
    %v117 = vshrl.u32 %v116, 7
    %v118 = vsub.s32 0, %v117
    %v119 = vrot.slane %v88, %v118
    %v120 = vlaneseq
    %v121 = vshrl.u32 %v120, 7
    %v122 = vsub.s32 1, %v121
    %v123 = vrot.slane %v88, %v122
    %v126 = vmul.f32 %v98, %v119
    %v127 = vmul.f32 %v98, %v123
    %v128 = vmul.f32 %v103, %v119
    %v129 = vmul.f32 %v103, %v123
    %v130 = vmul.f32 %v108, %v119
    %v131 = vmul.f32 %v108, %v123
    %v132 = vmul.f32 %v113, %v119
    %v133 = vmul.f32 %v113, %v123
    %134 = vset.pattern.permute.xlu0 1
    %135 = vperm.xlu0 %134, %v91
    %v136 = vpop.permute.xlu0 %135
    %138 = vset.pattern.permute.xlu0 1
    %139 = vperm.xlu0 %138, %v92
    %v140 = vpop.permute.xlu0 %139
    %142 = vset.pattern.permute.xlu0 1
    %143 = vperm.xlu0 %142, %v93
    %v144 = vpop.permute.xlu0 %143
    %146 = vset.pattern.permute.xlu0 1
    %147 = vperm.xlu0 %146, %v94
    %v148 = vpop.permute.xlu0 %147
    %v151 = vlaneseq
    %v152 = vshrl.u32 %v151, 7
    %v153 = vsub.s32 0, %v152
    %v154 = vrot.slane %v90, %v153
    %v155 = vlaneseq
    %v156 = vshrl.u32 %v155, 7
    %v157 = vsub.s32 1, %v156
    %v158 = vrot.slane %v90, %v157
    %v161 = vmul.f32 %v136, %v154
    %v162 = vmul.f32 %v136, %v158
    %v163 = vmul.f32 %v140, %v154
    %v164 = vmul.f32 %v140, %v158
    %v165 = vmul.f32 %v144, %v154
    %v166 = vmul.f32 %v144, %v158
    %v167 = vmul.f32 %v148, %v154
    %v168 = vmul.f32 %v148, %v158
    %v169 = vadd.f32 %v126, %v161
    %v170 = vadd.f32 %v127, %v162
    %v171 = vadd.f32 %v128, %v163
    %v172 = vadd.f32 %v129, %v164
    %v173 = vadd.f32 %v130, %v165
    %v174 = vadd.f32 %v131, %v166
    %v175 = vadd.f32 %v132, %v167
    %v176 = vadd.f32 %v133, %v168
    %v177 = vld [vmem:[%s7] sm:$0xff]
    %v178 = vld [vmem:[%s7 + $0x8] sm:$0xff]
    %v179 = vld [vmem:[%s7 + $0x10] sm:$0xff]
    %v180 = vld [vmem:[%s7 + $0x18] sm:$0xff]
    %182 = vset.pattern.permute.xlu0 0
    %183 = vperm.xlu0 %182, %v177
    %v184 = vpop.permute.xlu0 %183
    %187 = vset.pattern.permute.xlu0 0
    %188 = vperm.xlu0 %187, %v178
    %v189 = vpop.permute.xlu0 %188
    %192 = vset.pattern.permute.xlu0 0
    %193 = vperm.xlu0 %192, %v179
    %v194 = vpop.permute.xlu0 %193
    %197 = vset.pattern.permute.xlu0 0
    %198 = vperm.xlu0 %197, %v180
    %v199 = vpop.permute.xlu0 %198
    %v201 = vadd.f32 %v169, %v184
    %v202 = vadd.f32 %v170, %v184
    %v203 = vadd.f32 %v171, %v189
    %v204 = vadd.f32 %v172, %v189
    %v205 = vadd.f32 %v173, %v194
    %v206 = vadd.f32 %v174, %v194
    %v207 = vadd.f32 %v175, %v199
    %v208 = vadd.f32 %v176, %v199
    %v209 = vmax.f32 %v201, -3.0
    %v210 = vmax.f32 %v202, -3.0
    %v211 = vmax.f32 %v203, -3.0
    %v212 = vmax.f32 %v204, -3.0
    %v213 = vmax.f32 %v205, -3.0
    %v214 = vmax.f32 %v206, -3.0
    %v215 = vmax.f32 %v207, -3.0
    %v216 = vmax.f32 %v208, -3.0
    %v217 = vmin.f32 %v209, 3.0
    %v218 = vmin.f32 %v210, 3.0
    %v219 = vmin.f32 %v211, 3.0
    %v220 = vmin.f32 %v212, 3.0
    %v221 = vmin.f32 %v213, 3.0
    %v222 = vmin.f32 %v214, 3.0
    %v223 = vmin.f32 %v215, 3.0
    %v224 = vmin.f32 %v216, 3.0
    %s225 = sld [smem:[#allocation3]]
    %v226 = vstv %s225
    %v227 = vmul.f32 %v226, %v217
    %v228 = vmul.f32 %v226, %v218
    %v229 = vmul.f32 %v226, %v219
    %v230 = vmul.f32 %v226, %v220
    %v231 = vmul.f32 %v226, %v221
    %v232 = vmul.f32 %v226, %v222
    %v233 = vmul.f32 %v226, %v223
    %v234 = vmul.f32 %v226, %v224
    %s235 = sld [smem:[#allocation6]]
    %v236 = vstv %s235
    %v237 = vadd.f32 %v227, %v236
    %v238 = vadd.f32 %v228, %v236
    %v239 = vadd.f32 %v229, %v236
    %v240 = vadd.f32 %v230, %v236
    %v241 = vadd.f32 %v231, %v236
    %v242 = vadd.f32 %v232, %v236
    %v243 = vadd.f32 %v233, %v236
    %v244 = vadd.f32 %v234, %v236
    %vm245 = vcmp.ge.f32.partialorder %v217, -2.25
    %vm246 = vcmp.ge.f32.partialorder %v218, -2.25
    %vm247 = vcmp.ge.f32.partialorder %v219, -2.25
    %vm248 = vcmp.ge.f32.partialorder %v220, -2.25
    %vm249 = vcmp.ge.f32.partialorder %v221, -2.25
    %vm250 = vcmp.ge.f32.partialorder %v222, -2.25
    %vm251 = vcmp.ge.f32.partialorder %v223, -2.25
    %vm252 = vcmp.ge.f32.partialorder %v224, -2.25
    %s253 = sld [smem:[#allocation3 + $0x1]]
    %v254 = vstv %s253
    %v255 = vmul.f32 %v254, %v217
    %v256 = vmul.f32 %v254, %v218
    %v257 = vmul.f32 %v254, %v219
    %v258 = vmul.f32 %v254, %v220
    %v259 = vmul.f32 %v254, %v221
    %v260 = vmul.f32 %v254, %v222
    %v261 = vmul.f32 %v254, %v223
    %v262 = vmul.f32 %v254, %v224
    %s263 = sld [smem:[#allocation6 + $0x1]]
    %v264 = vstv %s263
    %v265 = vadd.f32 %v255, %v264
    %v266 = vadd.f32 %v256, %v264
    %v267 = vadd.f32 %v257, %v264
    %v268 = vadd.f32 %v258, %v264
    %v269 = vadd.f32 %v259, %v264
    %v270 = vadd.f32 %v260, %v264
    %v271 = vadd.f32 %v261, %v264
    %v272 = vadd.f32 %v262, %v264
    %v273 = vsel %vm245, %v265, %v237
    %v274 = vsel %vm246, %v266, %v238
    %v275 = vsel %vm247, %v267, %v239
    %v276 = vsel %vm248, %v268, %v240
    %v277 = vsel %vm249, %v269, %v241
    %v278 = vsel %vm250, %v270, %v242
    %v279 = vsel %vm251, %v271, %v243
    %v280 = vsel %vm252, %v272, %v244
    %vm281 = vcmp.ge.f32.partialorder %v217, -1.5
    %vm282 = vcmp.ge.f32.partialorder %v218, -1.5
    %vm283 = vcmp.ge.f32.partialorder %v219, -1.5
    %vm284 = vcmp.ge.f32.partialorder %v220, -1.5
    %vm285 = vcmp.ge.f32.partialorder %v221, -1.5
    %vm286 = vcmp.ge.f32.partialorder %v222, -1.5
    %vm287 = vcmp.ge.f32.partialorder %v223, -1.5
    %vm288 = vcmp.ge.f32.partialorder %v224, -1.5
    %s289 = sld [smem:[#allocation3 + $0x2]]
    %v290 = vstv %s289
    %v291 = vmul.f32 %v290, %v217
    %v292 = vmul.f32 %v290, %v218
    %v293 = vmul.f32 %v290, %v219
    %v294 = vmul.f32 %v290, %v220
    %v295 = vmul.f32 %v290, %v221
    %v296 = vmul.f32 %v290, %v222
    %v297 = vmul.f32 %v290, %v223
    %v298 = vmul.f32 %v290, %v224
    %s299 = sld [smem:[#allocation6 + $0x2]]
    %v300 = vstv %s299
    %v301 = vadd.f32 %v291, %v300
    %v302 = vadd.f32 %v292, %v300
    %v303 = vadd.f32 %v293, %v300
    %v304 = vadd.f32 %v294, %v300
    %v305 = vadd.f32 %v295, %v300
    %v306 = vadd.f32 %v296, %v300
    %v307 = vadd.f32 %v297, %v300
    %v308 = vadd.f32 %v298, %v300
    %v309 = vsel %vm281, %v301, %v273
    %v310 = vsel %vm282, %v302, %v274
    %v311 = vsel %vm283, %v303, %v275
    %v312 = vsel %vm284, %v304, %v276
    %v313 = vsel %vm285, %v305, %v277
    %v314 = vsel %vm286, %v306, %v278
    %v315 = vsel %vm287, %v307, %v279
    %v316 = vsel %vm288, %v308, %v280
    %vm317 = vcmp.ge.f32.partialorder %v217, -0.75
    %vm318 = vcmp.ge.f32.partialorder %v218, -0.75
    %vm319 = vcmp.ge.f32.partialorder %v219, -0.75
    %vm320 = vcmp.ge.f32.partialorder %v220, -0.75
    %vm321 = vcmp.ge.f32.partialorder %v221, -0.75
    %vm322 = vcmp.ge.f32.partialorder %v222, -0.75
    %vm323 = vcmp.ge.f32.partialorder %v223, -0.75
    %vm324 = vcmp.ge.f32.partialorder %v224, -0.75
    %s325 = sld [smem:[#allocation3 + $0x3]]
    %v326 = vstv %s325
    %v327 = vmul.f32 %v326, %v217
    %v328 = vmul.f32 %v326, %v218
    %v329 = vmul.f32 %v326, %v219
    %v330 = vmul.f32 %v326, %v220
    %v331 = vmul.f32 %v326, %v221
    %v332 = vmul.f32 %v326, %v222
    %v333 = vmul.f32 %v326, %v223
    %v334 = vmul.f32 %v326, %v224
    %s335 = sld [smem:[#allocation6 + $0x3]]
    %v336 = vstv %s335
    %v337 = vadd.f32 %v327, %v336
    %v338 = vadd.f32 %v328, %v336
    %v339 = vadd.f32 %v329, %v336
    %v340 = vadd.f32 %v330, %v336
    %v341 = vadd.f32 %v331, %v336
    %v342 = vadd.f32 %v332, %v336
    %v343 = vadd.f32 %v333, %v336
    %v344 = vadd.f32 %v334, %v336
    %v345 = vsel %vm317, %v337, %v309
    %v346 = vsel %vm318, %v338, %v310
    %v347 = vsel %vm319, %v339, %v311
    %v348 = vsel %vm320, %v340, %v312
    %v349 = vsel %vm321, %v341, %v313
    %v350 = vsel %vm322, %v342, %v314
    %v351 = vsel %vm323, %v343, %v315
    %v352 = vsel %vm324, %v344, %v316
    %vm353 = vcmp.ge.f32.partialorder %v217, 0.0
    %vm354 = vcmp.ge.f32.partialorder %v218, 0.0
    %vm355 = vcmp.ge.f32.partialorder %v219, 0.0
    %vm356 = vcmp.ge.f32.partialorder %v220, 0.0
    %vm357 = vcmp.ge.f32.partialorder %v221, 0.0
    %vm358 = vcmp.ge.f32.partialorder %v222, 0.0
    %vm359 = vcmp.ge.f32.partialorder %v223, 0.0
    %vm360 = vcmp.ge.f32.partialorder %v224, 0.0
    %s361 = sld [smem:[#allocation3 + $0x4]]
    %v362 = vstv %s361
    %v363 = vmul.f32 %v362, %v217
    %v364 = vmul.f32 %v362, %v218
    %v365 = vmul.f32 %v362, %v219
    %v366 = vmul.f32 %v362, %v220
    %v367 = vmul.f32 %v362, %v221
    %v368 = vmul.f32 %v362, %v222
    %v369 = vmul.f32 %v362, %v223
    %v370 = vmul.f32 %v362, %v224
    %s371 = sld [smem:[#allocation6 + $0x4]]
    %v372 = vstv %s371
    %v373 = vadd.f32 %v363, %v372
    %v374 = vadd.f32 %v364, %v372
    %v375 = vadd.f32 %v365, %v372
    %v376 = vadd.f32 %v366, %v372
    %v377 = vadd.f32 %v367, %v372
    %v378 = vadd.f32 %v368, %v372
    %v379 = vadd.f32 %v369, %v372
    %v380 = vadd.f32 %v370, %v372
    %v381 = vsel %vm353, %v373, %v345
    %v382 = vsel %vm354, %v374, %v346
    %v383 = vsel %vm355, %v375, %v347
    %v384 = vsel %vm356, %v376, %v348
    %v385 = vsel %vm357, %v377, %v349
    %v386 = vsel %vm358, %v378, %v350
    %v387 = vsel %vm359, %v379, %v351
    %v388 = vsel %vm360, %v380, %v352
    %vm389 = vcmp.ge.f32.partialorder %v217, 0.75
    %vm390 = vcmp.ge.f32.partialorder %v218, 0.75
    %vm391 = vcmp.ge.f32.partialorder %v219, 0.75
    %vm392 = vcmp.ge.f32.partialorder %v220, 0.75
    %vm393 = vcmp.ge.f32.partialorder %v221, 0.75
    %vm394 = vcmp.ge.f32.partialorder %v222, 0.75
    %vm395 = vcmp.ge.f32.partialorder %v223, 0.75
    %vm396 = vcmp.ge.f32.partialorder %v224, 0.75
    %s397 = sld [smem:[#allocation3 + $0x5]]
    %v398 = vstv %s397
    %v399 = vmul.f32 %v398, %v217
    %v400 = vmul.f32 %v398, %v218
    %v401 = vmul.f32 %v398, %v219
    %v402 = vmul.f32 %v398, %v220
    %v403 = vmul.f32 %v398, %v221
    %v404 = vmul.f32 %v398, %v222
    %v405 = vmul.f32 %v398, %v223
    %v406 = vmul.f32 %v398, %v224
    %s407 = sld [smem:[#allocation6 + $0x5]]
    %v408 = vstv %s407
    %v409 = vadd.f32 %v399, %v408
    %v410 = vadd.f32 %v400, %v408
    %v411 = vadd.f32 %v401, %v408
    %v412 = vadd.f32 %v402, %v408
    %v413 = vadd.f32 %v403, %v408
    %v414 = vadd.f32 %v404, %v408
    %v415 = vadd.f32 %v405, %v408
    %v416 = vadd.f32 %v406, %v408
    %v417 = vsel %vm389, %v409, %v381
    %v418 = vsel %vm390, %v410, %v382
    %v419 = vsel %vm391, %v411, %v383
    %v420 = vsel %vm392, %v412, %v384
    %v421 = vsel %vm393, %v413, %v385
    %v422 = vsel %vm394, %v414, %v386
    %v423 = vsel %vm395, %v415, %v387
    %v424 = vsel %vm396, %v416, %v388
    %vm425 = vcmp.ge.f32.partialorder %v217, 1.5
    %vm426 = vcmp.ge.f32.partialorder %v218, 1.5
    %vm427 = vcmp.ge.f32.partialorder %v219, 1.5
    %vm428 = vcmp.ge.f32.partialorder %v220, 1.5
    %vm429 = vcmp.ge.f32.partialorder %v221, 1.5
    %vm430 = vcmp.ge.f32.partialorder %v222, 1.5
    %vm431 = vcmp.ge.f32.partialorder %v223, 1.5
    %vm432 = vcmp.ge.f32.partialorder %v224, 1.5
    %s433 = sld [smem:[#allocation3 + $0x6]]
    %v434 = vstv %s433
    %v435 = vmul.f32 %v434, %v217
    %v436 = vmul.f32 %v434, %v218
    %v437 = vmul.f32 %v434, %v219
    %v438 = vmul.f32 %v434, %v220
    %v439 = vmul.f32 %v434, %v221
    %v440 = vmul.f32 %v434, %v222
    %v441 = vmul.f32 %v434, %v223
    %v442 = vmul.f32 %v434, %v224
    %s443 = sld [smem:[#allocation6 + $0x6]]
    %v444 = vstv %s443
    %v445 = vadd.f32 %v435, %v444
    %v446 = vadd.f32 %v436, %v444
    %v447 = vadd.f32 %v437, %v444
    %v448 = vadd.f32 %v438, %v444
    %v449 = vadd.f32 %v439, %v444
    %v450 = vadd.f32 %v440, %v444
    %v451 = vadd.f32 %v441, %v444
    %v452 = vadd.f32 %v442, %v444
    %v453 = vsel %vm425, %v445, %v417
    %v454 = vsel %vm426, %v446, %v418
    %v455 = vsel %vm427, %v447, %v419
    %v456 = vsel %vm428, %v448, %v420
    %v457 = vsel %vm429, %v449, %v421
    %v458 = vsel %vm430, %v450, %v422
    %v459 = vsel %vm431, %v451, %v423
    %v460 = vsel %vm432, %v452, %v424
    %vm461 = vcmp.ge.f32.partialorder %v217, 2.25
    %vm462 = vcmp.ge.f32.partialorder %v218, 2.25
    %vm463 = vcmp.ge.f32.partialorder %v219, 2.25
    %vm464 = vcmp.ge.f32.partialorder %v220, 2.25
    %vm465 = vcmp.ge.f32.partialorder %v221, 2.25
    %vm466 = vcmp.ge.f32.partialorder %v222, 2.25
    %vm467 = vcmp.ge.f32.partialorder %v223, 2.25
    %vm468 = vcmp.ge.f32.partialorder %v224, 2.25
    %s469 = sld [smem:[#allocation3 + $0x7]]
    %v470 = vstv %s469
    %v471 = vmul.f32 %v470, %v217
    %v472 = vmul.f32 %v470, %v218
    %v473 = vmul.f32 %v470, %v219
    %v474 = vmul.f32 %v470, %v220
    %v475 = vmul.f32 %v470, %v221
    %v476 = vmul.f32 %v470, %v222
    %v477 = vmul.f32 %v470, %v223
    %v478 = vmul.f32 %v470, %v224
    %s479 = sld [smem:[#allocation6 + $0x7]]
    %v480 = vstv %s479
    %v481 = vadd.f32 %v471, %v480
    %v482 = vadd.f32 %v472, %v480
    %v483 = vadd.f32 %v473, %v480
    %v484 = vadd.f32 %v474, %v480
    %v485 = vadd.f32 %v475, %v480
    %v486 = vadd.f32 %v476, %v480
    %v487 = vadd.f32 %v477, %v480
    %v488 = vadd.f32 %v478, %v480
    %v489 = vsel %vm461, %v481, %v453
    %v490 = vsel %vm462, %v482, %v454
    %v491 = vsel %vm463, %v483, %v455
    %v492 = vsel %vm464, %v484, %v456
    %v493 = vsel %vm465, %v485, %v457
    %v494 = vsel %vm466, %v486, %v458
    %v495 = vsel %vm467, %v487, %v459
    %v496 = vsel %vm468, %v488, %v460
    %v497 = vadd.f32 %v217, %v489
    %v498 = vadd.f32 %v218, %v490
    %v499 = vadd.f32 %v219, %v491
    %v500 = vadd.f32 %v220, %v492
    %v501 = vadd.f32 %v221, %v493
    %v502 = vadd.f32 %v222, %v494
    %v503 = vadd.f32 %v223, %v495
    %v504 = vadd.f32 %v224, %v496
    %v505 = vmax.f32 %v497, -3.0
    %v506 = vmax.f32 %v498, -3.0
    %v507 = vmax.f32 %v499, -3.0
    %v508 = vmax.f32 %v500, -3.0
    %v509 = vmax.f32 %v501, -3.0
    %v510 = vmax.f32 %v502, -3.0
    %v511 = vmax.f32 %v503, -3.0
    %v512 = vmax.f32 %v504, -3.0
    %v513 = vmin.f32 %v505, 3.0
    %v514 = vmin.f32 %v506, 3.0
    %v515 = vmin.f32 %v507, 3.0
    %v516 = vmin.f32 %v508, 3.0
    %v517 = vmin.f32 %v509, 3.0
    %v518 = vmin.f32 %v510, 3.0
    %v519 = vmin.f32 %v511, 3.0
    %v520 = vmin.f32 %v512, 3.0
    %v521 = vmul.f32 %v226, %v513
    %v522 = vmul.f32 %v226, %v514
    %v523 = vmul.f32 %v226, %v515
    %v524 = vmul.f32 %v226, %v516
    %v525 = vmul.f32 %v226, %v517
    %v526 = vmul.f32 %v226, %v518
    %v527 = vmul.f32 %v226, %v519
    %v528 = vmul.f32 %v226, %v520
    %v529 = vadd.f32 %v521, %v236
    %v530 = vadd.f32 %v522, %v236
    %v531 = vadd.f32 %v523, %v236
    %v532 = vadd.f32 %v524, %v236
    %v533 = vadd.f32 %v525, %v236
    %v534 = vadd.f32 %v526, %v236
    %v535 = vadd.f32 %v527, %v236
    %v536 = vadd.f32 %v528, %v236
    %vm537 = vcmp.ge.f32.partialorder %v513, -2.25
    %vm538 = vcmp.ge.f32.partialorder %v514, -2.25
    %vm539 = vcmp.ge.f32.partialorder %v515, -2.25
    %vm540 = vcmp.ge.f32.partialorder %v516, -2.25
    %vm541 = vcmp.ge.f32.partialorder %v517, -2.25
    %vm542 = vcmp.ge.f32.partialorder %v518, -2.25
    %vm543 = vcmp.ge.f32.partialorder %v519, -2.25
    %vm544 = vcmp.ge.f32.partialorder %v520, -2.25
    %v545 = vmul.f32 %v254, %v513
    %v546 = vmul.f32 %v254, %v514
    %v547 = vmul.f32 %v254, %v515
    %v548 = vmul.f32 %v254, %v516
    %v549 = vmul.f32 %v254, %v517
    %v550 = vmul.f32 %v254, %v518
    %v551 = vmul.f32 %v254, %v519
    %v552 = vmul.f32 %v254, %v520
    %v553 = vadd.f32 %v545, %v264
    %v554 = vadd.f32 %v546, %v264
    %v555 = vadd.f32 %v547, %v264
    %v556 = vadd.f32 %v548, %v264
    %v557 = vadd.f32 %v549, %v264
    %v558 = vadd.f32 %v550, %v264
    %v559 = vadd.f32 %v551, %v264
    %v560 = vadd.f32 %v552, %v264
    %v561 = vsel %vm537, %v553, %v529
    %v562 = vsel %vm538, %v554, %v530
    %v563 = vsel %vm539, %v555, %v531
    %v564 = vsel %vm540, %v556, %v532
    %v565 = vsel %vm541, %v557, %v533
    %v566 = vsel %vm542, %v558, %v534
    %v567 = vsel %vm543, %v559, %v535
    %v568 = vsel %vm544, %v560, %v536
    %vm569 = vcmp.ge.f32.partialorder %v513, -1.5
    %vm570 = vcmp.ge.f32.partialorder %v514, -1.5
    %vm571 = vcmp.ge.f32.partialorder %v515, -1.5
    %vm572 = vcmp.ge.f32.partialorder %v516, -1.5
    %vm573 = vcmp.ge.f32.partialorder %v517, -1.5
    %vm574 = vcmp.ge.f32.partialorder %v518, -1.5
    %vm575 = vcmp.ge.f32.partialorder %v519, -1.5
    %vm576 = vcmp.ge.f32.partialorder %v520, -1.5
    %v577 = vmul.f32 %v290, %v513
    %v578 = vmul.f32 %v290, %v514
    %v579 = vmul.f32 %v290, %v515
    %v580 = vmul.f32 %v290, %v516
    %v581 = vmul.f32 %v290, %v517
    %v582 = vmul.f32 %v290, %v518
    %v583 = vmul.f32 %v290, %v519
    %v584 = vmul.f32 %v290, %v520
    %v585 = vadd.f32 %v577, %v300
    %v586 = vadd.f32 %v578, %v300
    %v587 = vadd.f32 %v579, %v300
    %v588 = vadd.f32 %v580, %v300
    %v589 = vadd.f32 %v581, %v300
    %v590 = vadd.f32 %v582, %v300
    %v591 = vadd.f32 %v583, %v300
    %v592 = vadd.f32 %v584, %v300
    %v593 = vsel %vm569, %v585, %v561
    %v594 = vsel %vm570, %v586, %v562
    %v595 = vsel %vm571, %v587, %v563
    %v596 = vsel %vm572, %v588, %v564
    %v597 = vsel %vm573, %v589, %v565
    %v598 = vsel %vm574, %v590, %v566
    %v599 = vsel %vm575, %v591, %v567
    %v600 = vsel %vm576, %v592, %v568
    %vm601 = vcmp.ge.f32.partialorder %v513, -0.75
    %vm602 = vcmp.ge.f32.partialorder %v514, -0.75
    %vm603 = vcmp.ge.f32.partialorder %v515, -0.75
    %vm604 = vcmp.ge.f32.partialorder %v516, -0.75
    %vm605 = vcmp.ge.f32.partialorder %v517, -0.75
    %vm606 = vcmp.ge.f32.partialorder %v518, -0.75
    %vm607 = vcmp.ge.f32.partialorder %v519, -0.75
    %vm608 = vcmp.ge.f32.partialorder %v520, -0.75
    %v609 = vmul.f32 %v326, %v513
    %v610 = vmul.f32 %v326, %v514
    %v611 = vmul.f32 %v326, %v515
    %v612 = vmul.f32 %v326, %v516
    %v613 = vmul.f32 %v326, %v517
    %v614 = vmul.f32 %v326, %v518
    %v615 = vmul.f32 %v326, %v519
    %v616 = vmul.f32 %v326, %v520
    %v617 = vadd.f32 %v609, %v336
    %v618 = vadd.f32 %v610, %v336
    %v619 = vadd.f32 %v611, %v336
    %v620 = vadd.f32 %v612, %v336
    %v621 = vadd.f32 %v613, %v336
    %v622 = vadd.f32 %v614, %v336
    %v623 = vadd.f32 %v615, %v336
    %v624 = vadd.f32 %v616, %v336
    %v625 = vsel %vm601, %v617, %v593
    %v626 = vsel %vm602, %v618, %v594
    %v627 = vsel %vm603, %v619, %v595
    %v628 = vsel %vm604, %v620, %v596
    %v629 = vsel %vm605, %v621, %v597
    %v630 = vsel %vm606, %v622, %v598
    %v631 = vsel %vm607, %v623, %v599
    %v632 = vsel %vm608, %v624, %v600
    %vm633 = vcmp.ge.f32.partialorder %v513, 0.0
    %vm634 = vcmp.ge.f32.partialorder %v514, 0.0
    %vm635 = vcmp.ge.f32.partialorder %v515, 0.0
    %vm636 = vcmp.ge.f32.partialorder %v516, 0.0
    %vm637 = vcmp.ge.f32.partialorder %v517, 0.0
    %vm638 = vcmp.ge.f32.partialorder %v518, 0.0
    %vm639 = vcmp.ge.f32.partialorder %v519, 0.0
    %vm640 = vcmp.ge.f32.partialorder %v520, 0.0
    %v641 = vmul.f32 %v362, %v513
    %v642 = vmul.f32 %v362, %v514
    %v643 = vmul.f32 %v362, %v515
    %v644 = vmul.f32 %v362, %v516
    %v645 = vmul.f32 %v362, %v517
    %v646 = vmul.f32 %v362, %v518
    %v647 = vmul.f32 %v362, %v519
    %v648 = vmul.f32 %v362, %v520
    %v649 = vadd.f32 %v641, %v372
    %v650 = vadd.f32 %v642, %v372
    %v651 = vadd.f32 %v643, %v372
    %v652 = vadd.f32 %v644, %v372
    %v653 = vadd.f32 %v645, %v372
    %v654 = vadd.f32 %v646, %v372
    %v655 = vadd.f32 %v647, %v372
    %v656 = vadd.f32 %v648, %v372
    %v657 = vsel %vm633, %v649, %v625
    %v658 = vsel %vm634, %v650, %v626
    %v659 = vsel %vm635, %v651, %v627
    %v660 = vsel %vm636, %v652, %v628
    %v661 = vsel %vm637, %v653, %v629
    %v662 = vsel %vm638, %v654, %v630
    %v663 = vsel %vm639, %v655, %v631
    %v664 = vsel %vm640, %v656, %v632
    %vm665 = vcmp.ge.f32.partialorder %v513, 0.75
    %vm666 = vcmp.ge.f32.partialorder %v514, 0.75
    %vm667 = vcmp.ge.f32.partialorder %v515, 0.75
    %vm668 = vcmp.ge.f32.partialorder %v516, 0.75
    %vm669 = vcmp.ge.f32.partialorder %v517, 0.75
    %vm670 = vcmp.ge.f32.partialorder %v518, 0.75
    %vm671 = vcmp.ge.f32.partialorder %v519, 0.75
    %vm672 = vcmp.ge.f32.partialorder %v520, 0.75
    %v673 = vmul.f32 %v398, %v513
    %v674 = vmul.f32 %v398, %v514
    %v675 = vmul.f32 %v398, %v515
    %v676 = vmul.f32 %v398, %v516
    %v677 = vmul.f32 %v398, %v517
    %v678 = vmul.f32 %v398, %v518
    %v679 = vmul.f32 %v398, %v519
    %v680 = vmul.f32 %v398, %v520
    %v681 = vadd.f32 %v673, %v408
    %v682 = vadd.f32 %v674, %v408
    %v683 = vadd.f32 %v675, %v408
    %v684 = vadd.f32 %v676, %v408
    %v685 = vadd.f32 %v677, %v408
    %v686 = vadd.f32 %v678, %v408
    %v687 = vadd.f32 %v679, %v408
    %v688 = vadd.f32 %v680, %v408
    %v689 = vsel %vm665, %v681, %v657
    %v690 = vsel %vm666, %v682, %v658
    %v691 = vsel %vm667, %v683, %v659
    %v692 = vsel %vm668, %v684, %v660
    %v693 = vsel %vm669, %v685, %v661
    %v694 = vsel %vm670, %v686, %v662
    %v695 = vsel %vm671, %v687, %v663
    %v696 = vsel %vm672, %v688, %v664
    %vm697 = vcmp.ge.f32.partialorder %v513, 1.5
    %vm698 = vcmp.ge.f32.partialorder %v514, 1.5
    %vm699 = vcmp.ge.f32.partialorder %v515, 1.5
    %vm700 = vcmp.ge.f32.partialorder %v516, 1.5
    %vm701 = vcmp.ge.f32.partialorder %v517, 1.5
    %vm702 = vcmp.ge.f32.partialorder %v518, 1.5
    %vm703 = vcmp.ge.f32.partialorder %v519, 1.5
    %vm704 = vcmp.ge.f32.partialorder %v520, 1.5
    %v705 = vmul.f32 %v434, %v513
    %v706 = vmul.f32 %v434, %v514
    %v707 = vmul.f32 %v434, %v515
    %v708 = vmul.f32 %v434, %v516
    %v709 = vmul.f32 %v434, %v517
    %v710 = vmul.f32 %v434, %v518
    %v711 = vmul.f32 %v434, %v519
    %v712 = vmul.f32 %v434, %v520
    %v713 = vadd.f32 %v705, %v444
    %v714 = vadd.f32 %v706, %v444
    %v715 = vadd.f32 %v707, %v444
    %v716 = vadd.f32 %v708, %v444
    %v717 = vadd.f32 %v709, %v444
    %v718 = vadd.f32 %v710, %v444
    %v719 = vadd.f32 %v711, %v444
    %v720 = vadd.f32 %v712, %v444
    %v721 = vsel %vm697, %v713, %v689
    %v722 = vsel %vm698, %v714, %v690
    %v723 = vsel %vm699, %v715, %v691
    %v724 = vsel %vm700, %v716, %v692
    %v725 = vsel %vm701, %v717, %v693
    %v726 = vsel %vm702, %v718, %v694
    %v727 = vsel %vm703, %v719, %v695
    %v728 = vsel %vm704, %v720, %v696
    %vm729 = vcmp.ge.f32.partialorder %v513, 2.25
    %vm730 = vcmp.ge.f32.partialorder %v514, 2.25
    %vm731 = vcmp.ge.f32.partialorder %v515, 2.25
    %vm732 = vcmp.ge.f32.partialorder %v516, 2.25
    %vm733 = vcmp.ge.f32.partialorder %v517, 2.25
    %vm734 = vcmp.ge.f32.partialorder %v518, 2.25
    %vm735 = vcmp.ge.f32.partialorder %v519, 2.25
    %vm736 = vcmp.ge.f32.partialorder %v520, 2.25
    %v737 = vmul.f32 %v470, %v513
    %v738 = vmul.f32 %v470, %v514
    %v739 = vmul.f32 %v470, %v515
    %v740 = vmul.f32 %v470, %v516
    %v741 = vmul.f32 %v470, %v517
    %v742 = vmul.f32 %v470, %v518
    %v743 = vmul.f32 %v470, %v519
    %v744 = vmul.f32 %v470, %v520
    %v745 = vadd.f32 %v737, %v480
    %v746 = vadd.f32 %v738, %v480
    %v747 = vadd.f32 %v739, %v480
    %v748 = vadd.f32 %v740, %v480
    %v749 = vadd.f32 %v741, %v480
    %v750 = vadd.f32 %v742, %v480
    %v751 = vadd.f32 %v743, %v480
    %v752 = vadd.f32 %v744, %v480
    %v753 = vsel %vm729, %v745, %v721
    %v754 = vsel %vm730, %v746, %v722
    %v755 = vsel %vm731, %v747, %v723
    %v756 = vsel %vm732, %v748, %v724
    %v757 = vsel %vm733, %v749, %v725
    %v758 = vsel %vm734, %v750, %v726
    %v759 = vsel %vm735, %v751, %v727
    %v760 = vsel %vm736, %v752, %v728
    %v761 = vadd.f32 %v513, %v753
    %v762 = vadd.f32 %v514, %v754
    %v763 = vadd.f32 %v515, %v755
    %v764 = vadd.f32 %v516, %v756
    %v765 = vadd.f32 %v517, %v757
    %v766 = vadd.f32 %v518, %v758
    %v767 = vadd.f32 %v519, %v759
    %v768 = vadd.f32 %v520, %v760
    %v769 = vmax.f32 %v761, -3.0
    %v770 = vmax.f32 %v762, -3.0
    %v771 = vmax.f32 %v763, -3.0
    %v772 = vmax.f32 %v764, -3.0
    %v773 = vmax.f32 %v765, -3.0
    %v774 = vmax.f32 %v766, -3.0
    %v775 = vmax.f32 %v767, -3.0
    %v776 = vmax.f32 %v768, -3.0
    %v777 = vmin.f32 %v769, 3.0
    %v778 = vmin.f32 %v770, 3.0
    %v779 = vmin.f32 %v771, 3.0
    %v780 = vmin.f32 %v772, 3.0
    %v781 = vmin.f32 %v773, 3.0
    %v782 = vmin.f32 %v774, 3.0
    %v783 = vmin.f32 %v775, 3.0
    %v784 = vmin.f32 %v776, 3.0
    %v785 = vmul.f32 %v226, %v777
    %v786 = vmul.f32 %v226, %v778
    %v787 = vmul.f32 %v226, %v779
    %v788 = vmul.f32 %v226, %v780
    %v789 = vmul.f32 %v226, %v781
    %v790 = vmul.f32 %v226, %v782
    %v791 = vmul.f32 %v226, %v783
    %v792 = vmul.f32 %v226, %v784
    %v793 = vadd.f32 %v785, %v236
    %v794 = vadd.f32 %v786, %v236
    %v795 = vadd.f32 %v787, %v236
    %v796 = vadd.f32 %v788, %v236
    %v797 = vadd.f32 %v789, %v236
    %v798 = vadd.f32 %v790, %v236
    %v799 = vadd.f32 %v791, %v236
    %v800 = vadd.f32 %v792, %v236
    %vm801 = vcmp.ge.f32.partialorder %v777, -2.25
    %vm802 = vcmp.ge.f32.partialorder %v778, -2.25
    %vm803 = vcmp.ge.f32.partialorder %v779, -2.25
    %vm804 = vcmp.ge.f32.partialorder %v780, -2.25
    %vm805 = vcmp.ge.f32.partialorder %v781, -2.25
    %vm806 = vcmp.ge.f32.partialorder %v782, -2.25
    %vm807 = vcmp.ge.f32.partialorder %v783, -2.25
    %vm808 = vcmp.ge.f32.partialorder %v784, -2.25
    %v809 = vmul.f32 %v254, %v777
    %v810 = vmul.f32 %v254, %v778
    %v811 = vmul.f32 %v254, %v779
    %v812 = vmul.f32 %v254, %v780
    %v813 = vmul.f32 %v254, %v781
    %v814 = vmul.f32 %v254, %v782
    %v815 = vmul.f32 %v254, %v783
    %v816 = vmul.f32 %v254, %v784
    %v817 = vadd.f32 %v809, %v264
    %v818 = vadd.f32 %v810, %v264
    %v819 = vadd.f32 %v811, %v264
    %v820 = vadd.f32 %v812, %v264
    %v821 = vadd.f32 %v813, %v264
    %v822 = vadd.f32 %v814, %v264
    %v823 = vadd.f32 %v815, %v264
    %v824 = vadd.f32 %v816, %v264
    %v825 = vsel %vm801, %v817, %v793
    %v826 = vsel %vm802, %v818, %v794
    %v827 = vsel %vm803, %v819, %v795
    %v828 = vsel %vm804, %v820, %v796
    %v829 = vsel %vm805, %v821, %v797
    %v830 = vsel %vm806, %v822, %v798
    %v831 = vsel %vm807, %v823, %v799
    %v832 = vsel %vm808, %v824, %v800
    %vm833 = vcmp.ge.f32.partialorder %v777, -1.5
    %vm834 = vcmp.ge.f32.partialorder %v778, -1.5
    %vm835 = vcmp.ge.f32.partialorder %v779, -1.5
    %vm836 = vcmp.ge.f32.partialorder %v780, -1.5
    %vm837 = vcmp.ge.f32.partialorder %v781, -1.5
    %vm838 = vcmp.ge.f32.partialorder %v782, -1.5
    %vm839 = vcmp.ge.f32.partialorder %v783, -1.5
    %vm840 = vcmp.ge.f32.partialorder %v784, -1.5
    %v841 = vmul.f32 %v290, %v777
    %v842 = vmul.f32 %v290, %v778
    %v843 = vmul.f32 %v290, %v779
    %v844 = vmul.f32 %v290, %v780
    %v845 = vmul.f32 %v290, %v781
    %v846 = vmul.f32 %v290, %v782
    %v847 = vmul.f32 %v290, %v783
    %v848 = vmul.f32 %v290, %v784
    %v849 = vadd.f32 %v841, %v300
    %v850 = vadd.f32 %v842, %v300
    %v851 = vadd.f32 %v843, %v300
    %v852 = vadd.f32 %v844, %v300
    %v853 = vadd.f32 %v845, %v300
    %v854 = vadd.f32 %v846, %v300
    %v855 = vadd.f32 %v847, %v300
    %v856 = vadd.f32 %v848, %v300
    %v857 = vsel %vm833, %v849, %v825
    %v858 = vsel %vm834, %v850, %v826
    %v859 = vsel %vm835, %v851, %v827
    %v860 = vsel %vm836, %v852, %v828
    %v861 = vsel %vm837, %v853, %v829
    %v862 = vsel %vm838, %v854, %v830
    %v863 = vsel %vm839, %v855, %v831
    %v864 = vsel %vm840, %v856, %v832
    %vm865 = vcmp.ge.f32.partialorder %v777, -0.75
    %vm866 = vcmp.ge.f32.partialorder %v778, -0.75
    %vm867 = vcmp.ge.f32.partialorder %v779, -0.75
    %vm868 = vcmp.ge.f32.partialorder %v780, -0.75
    %vm869 = vcmp.ge.f32.partialorder %v781, -0.75
    %vm870 = vcmp.ge.f32.partialorder %v782, -0.75
    %vm871 = vcmp.ge.f32.partialorder %v783, -0.75
    %vm872 = vcmp.ge.f32.partialorder %v784, -0.75
    %v873 = vmul.f32 %v326, %v777
    %v874 = vmul.f32 %v326, %v778
    %v875 = vmul.f32 %v326, %v779
    %v876 = vmul.f32 %v326, %v780
    %v877 = vmul.f32 %v326, %v781
    %v878 = vmul.f32 %v326, %v782
    %v879 = vmul.f32 %v326, %v783
    %v880 = vmul.f32 %v326, %v784
    %v881 = vadd.f32 %v873, %v336
    %v882 = vadd.f32 %v874, %v336
    %v883 = vadd.f32 %v875, %v336
    %v884 = vadd.f32 %v876, %v336
    %v885 = vadd.f32 %v877, %v336
    %v886 = vadd.f32 %v878, %v336
    %v887 = vadd.f32 %v879, %v336
    %v888 = vadd.f32 %v880, %v336
    %v889 = vsel %vm865, %v881, %v857
    %v890 = vsel %vm866, %v882, %v858
    %v891 = vsel %vm867, %v883, %v859
    %v892 = vsel %vm868, %v884, %v860
    %v893 = vsel %vm869, %v885, %v861
    %v894 = vsel %vm870, %v886, %v862
    %v895 = vsel %vm871, %v887, %v863
    %v896 = vsel %vm872, %v888, %v864
    %vm897 = vcmp.ge.f32.partialorder %v777, 0.0
    %vm898 = vcmp.ge.f32.partialorder %v778, 0.0
    %vm899 = vcmp.ge.f32.partialorder %v779, 0.0
    %vm900 = vcmp.ge.f32.partialorder %v780, 0.0
    %vm901 = vcmp.ge.f32.partialorder %v781, 0.0
    %vm902 = vcmp.ge.f32.partialorder %v782, 0.0
    %vm903 = vcmp.ge.f32.partialorder %v783, 0.0
    %vm904 = vcmp.ge.f32.partialorder %v784, 0.0
    %v905 = vmul.f32 %v362, %v777
    %v906 = vmul.f32 %v362, %v778
    %v907 = vmul.f32 %v362, %v779
    %v908 = vmul.f32 %v362, %v780
    %v909 = vmul.f32 %v362, %v781
    %v910 = vmul.f32 %v362, %v782
    %v911 = vmul.f32 %v362, %v783
    %v912 = vmul.f32 %v362, %v784
    %v913 = vadd.f32 %v905, %v372
    %v914 = vadd.f32 %v906, %v372
    %v915 = vadd.f32 %v907, %v372
    %v916 = vadd.f32 %v908, %v372
    %v917 = vadd.f32 %v909, %v372
    %v918 = vadd.f32 %v910, %v372
    %v919 = vadd.f32 %v911, %v372
    %v920 = vadd.f32 %v912, %v372
    %v921 = vsel %vm897, %v913, %v889
    %v922 = vsel %vm898, %v914, %v890
    %v923 = vsel %vm899, %v915, %v891
    %v924 = vsel %vm900, %v916, %v892
    %v925 = vsel %vm901, %v917, %v893
    %v926 = vsel %vm902, %v918, %v894
    %v927 = vsel %vm903, %v919, %v895
    %v928 = vsel %vm904, %v920, %v896
    %vm929 = vcmp.ge.f32.partialorder %v777, 0.75
    %vm930 = vcmp.ge.f32.partialorder %v778, 0.75
    %vm931 = vcmp.ge.f32.partialorder %v779, 0.75
    %vm932 = vcmp.ge.f32.partialorder %v780, 0.75
    %vm933 = vcmp.ge.f32.partialorder %v781, 0.75
    %vm934 = vcmp.ge.f32.partialorder %v782, 0.75
    %vm935 = vcmp.ge.f32.partialorder %v783, 0.75
    %vm936 = vcmp.ge.f32.partialorder %v784, 0.75
    %v937 = vmul.f32 %v398, %v777
    %v938 = vmul.f32 %v398, %v778
    %v939 = vmul.f32 %v398, %v779
    %v940 = vmul.f32 %v398, %v780
    %v941 = vmul.f32 %v398, %v781
    %v942 = vmul.f32 %v398, %v782
    %v943 = vmul.f32 %v398, %v783
    %v944 = vmul.f32 %v398, %v784
    %v945 = vadd.f32 %v937, %v408
    %v946 = vadd.f32 %v938, %v408
    %v947 = vadd.f32 %v939, %v408
    %v948 = vadd.f32 %v940, %v408
    %v949 = vadd.f32 %v941, %v408
    %v950 = vadd.f32 %v942, %v408
    %v951 = vadd.f32 %v943, %v408
    %v952 = vadd.f32 %v944, %v408
    %v953 = vsel %vm929, %v945, %v921
    %v954 = vsel %vm930, %v946, %v922
    %v955 = vsel %vm931, %v947, %v923
    %v956 = vsel %vm932, %v948, %v924
    %v957 = vsel %vm933, %v949, %v925
    %v958 = vsel %vm934, %v950, %v926
    %v959 = vsel %vm935, %v951, %v927
    %v960 = vsel %vm936, %v952, %v928
    %vm961 = vcmp.ge.f32.partialorder %v777, 1.5
    %vm962 = vcmp.ge.f32.partialorder %v778, 1.5
    %vm963 = vcmp.ge.f32.partialorder %v779, 1.5
    %vm964 = vcmp.ge.f32.partialorder %v780, 1.5
    %vm965 = vcmp.ge.f32.partialorder %v781, 1.5
    %vm966 = vcmp.ge.f32.partialorder %v782, 1.5
    %vm967 = vcmp.ge.f32.partialorder %v783, 1.5
    %vm968 = vcmp.ge.f32.partialorder %v784, 1.5
    %v969 = vmul.f32 %v434, %v777
    %v970 = vmul.f32 %v434, %v778
    %v971 = vmul.f32 %v434, %v779
    %v972 = vmul.f32 %v434, %v780
    %v973 = vmul.f32 %v434, %v781
    %v974 = vmul.f32 %v434, %v782
    %v975 = vmul.f32 %v434, %v783
    %v976 = vmul.f32 %v434, %v784
    %v977 = vadd.f32 %v969, %v444
    %v978 = vadd.f32 %v970, %v444
    %v979 = vadd.f32 %v971, %v444
    %v980 = vadd.f32 %v972, %v444
    %v981 = vadd.f32 %v973, %v444
    %v982 = vadd.f32 %v974, %v444
    %v983 = vadd.f32 %v975, %v444
    %v984 = vadd.f32 %v976, %v444
    %v985 = vsel %vm961, %v977, %v953
    %v986 = vsel %vm962, %v978, %v954
    %v987 = vsel %vm963, %v979, %v955
    %v988 = vsel %vm964, %v980, %v956
    %v989 = vsel %vm965, %v981, %v957
    %v990 = vsel %vm966, %v982, %v958
    %v991 = vsel %vm967, %v983, %v959
    %v992 = vsel %vm968, %v984, %v960
    %vm993 = vcmp.ge.f32.partialorder %v777, 2.25
    %vm994 = vcmp.ge.f32.partialorder %v778, 2.25
    %vm995 = vcmp.ge.f32.partialorder %v779, 2.25
    %vm996 = vcmp.ge.f32.partialorder %v780, 2.25
    %vm997 = vcmp.ge.f32.partialorder %v781, 2.25
    %vm998 = vcmp.ge.f32.partialorder %v782, 2.25
    %vm999 = vcmp.ge.f32.partialorder %v783, 2.25
    %vm1000 = vcmp.ge.f32.partialorder %v784, 2.25
    %v1001 = vmul.f32 %v470, %v777
    %v1002 = vmul.f32 %v470, %v778
    %v1003 = vmul.f32 %v470, %v779
    %v1004 = vmul.f32 %v470, %v780
    %v1005 = vmul.f32 %v470, %v781
    %v1006 = vmul.f32 %v470, %v782
    %v1007 = vmul.f32 %v470, %v783
    %v1008 = vmul.f32 %v470, %v784
    %v1009 = vadd.f32 %v1001, %v480
    %v1010 = vadd.f32 %v1002, %v480
    %v1011 = vadd.f32 %v1003, %v480
    %v1012 = vadd.f32 %v1004, %v480
    %v1013 = vadd.f32 %v1005, %v480
    %v1014 = vadd.f32 %v1006, %v480
    %v1015 = vadd.f32 %v1007, %v480
    %v1016 = vadd.f32 %v1008, %v480
    %v1017 = vsel %vm993, %v1009, %v985
    %v1018 = vsel %vm994, %v1010, %v986
    %v1019 = vsel %vm995, %v1011, %v987
    %v1020 = vsel %vm996, %v1012, %v988
    %v1021 = vsel %vm997, %v1013, %v989
    %v1022 = vsel %vm998, %v1014, %v990
    %v1023 = vsel %vm999, %v1015, %v991
    %v1024 = vsel %vm1000, %v1016, %v992
    %v1025 = vadd.f32 %v777, %v1017
    %v1026 = vadd.f32 %v778, %v1018
    %v1027 = vadd.f32 %v779, %v1019
    %v1028 = vadd.f32 %v780, %v1020
    %v1029 = vadd.f32 %v781, %v1021
    %v1030 = vadd.f32 %v782, %v1022
    %v1031 = vadd.f32 %v783, %v1023
    %v1032 = vadd.f32 %v784, %v1024
    %v1033 = vmax.f32 %v1025, -3.0
    %v1034 = vmax.f32 %v1026, -3.0
    %v1035 = vmax.f32 %v1027, -3.0
    %v1036 = vmax.f32 %v1028, -3.0
    %v1037 = vmax.f32 %v1029, -3.0
    %v1038 = vmax.f32 %v1030, -3.0
    %v1039 = vmax.f32 %v1031, -3.0
    %v1040 = vmax.f32 %v1032, -3.0
    %v1041 = vmin.f32 %v1033, 3.0
    %v1042 = vmin.f32 %v1034, 3.0
    %v1043 = vmin.f32 %v1035, 3.0
    %v1044 = vmin.f32 %v1036, 3.0
    %v1045 = vmin.f32 %v1037, 3.0
    %v1046 = vmin.f32 %v1038, 3.0
    %v1047 = vmin.f32 %v1039, 3.0
    %v1048 = vmin.f32 %v1040, 3.0
    %v1049 = vmul.f32 %v226, %v1041
    %v1050 = vmul.f32 %v226, %v1042
    %v1051 = vmul.f32 %v226, %v1043
    %v1052 = vmul.f32 %v226, %v1044
    %v1053 = vmul.f32 %v226, %v1045
    %v1054 = vmul.f32 %v226, %v1046
    %v1055 = vmul.f32 %v226, %v1047
    %v1056 = vmul.f32 %v226, %v1048
    %v1057 = vadd.f32 %v1049, %v236
    %v1058 = vadd.f32 %v1050, %v236
    %v1059 = vadd.f32 %v1051, %v236
    %v1060 = vadd.f32 %v1052, %v236
    %v1061 = vadd.f32 %v1053, %v236
    %v1062 = vadd.f32 %v1054, %v236
    %v1063 = vadd.f32 %v1055, %v236
    %v1064 = vadd.f32 %v1056, %v236
    %vm1065 = vcmp.ge.f32.partialorder %v1041, -2.25
    %vm1066 = vcmp.ge.f32.partialorder %v1042, -2.25
    %vm1067 = vcmp.ge.f32.partialorder %v1043, -2.25
    %vm1068 = vcmp.ge.f32.partialorder %v1044, -2.25
    %vm1069 = vcmp.ge.f32.partialorder %v1045, -2.25
    %vm1070 = vcmp.ge.f32.partialorder %v1046, -2.25
    %vm1071 = vcmp.ge.f32.partialorder %v1047, -2.25
    %vm1072 = vcmp.ge.f32.partialorder %v1048, -2.25
    %v1073 = vmul.f32 %v254, %v1041
    %v1074 = vmul.f32 %v254, %v1042
    %v1075 = vmul.f32 %v254, %v1043
    %v1076 = vmul.f32 %v254, %v1044
    %v1077 = vmul.f32 %v254, %v1045
    %v1078 = vmul.f32 %v254, %v1046
    %v1079 = vmul.f32 %v254, %v1047
    %v1080 = vmul.f32 %v254, %v1048
    %v1081 = vadd.f32 %v1073, %v264
    %v1082 = vadd.f32 %v1074, %v264
    %v1083 = vadd.f32 %v1075, %v264
    %v1084 = vadd.f32 %v1076, %v264
    %v1085 = vadd.f32 %v1077, %v264
    %v1086 = vadd.f32 %v1078, %v264
    %v1087 = vadd.f32 %v1079, %v264
    %v1088 = vadd.f32 %v1080, %v264
    %v1089 = vsel %vm1065, %v1081, %v1057
    %v1090 = vsel %vm1066, %v1082, %v1058
    %v1091 = vsel %vm1067, %v1083, %v1059
    %v1092 = vsel %vm1068, %v1084, %v1060
    %v1093 = vsel %vm1069, %v1085, %v1061
    %v1094 = vsel %vm1070, %v1086, %v1062
    %v1095 = vsel %vm1071, %v1087, %v1063
    %v1096 = vsel %vm1072, %v1088, %v1064
    %vm1097 = vcmp.ge.f32.partialorder %v1041, -1.5
    %vm1098 = vcmp.ge.f32.partialorder %v1042, -1.5
    %vm1099 = vcmp.ge.f32.partialorder %v1043, -1.5
    %vm1100 = vcmp.ge.f32.partialorder %v1044, -1.5
    %vm1101 = vcmp.ge.f32.partialorder %v1045, -1.5
    %vm1102 = vcmp.ge.f32.partialorder %v1046, -1.5
    %vm1103 = vcmp.ge.f32.partialorder %v1047, -1.5
    %vm1104 = vcmp.ge.f32.partialorder %v1048, -1.5
    %v1105 = vmul.f32 %v290, %v1041
    %v1106 = vmul.f32 %v290, %v1042
    %v1107 = vmul.f32 %v290, %v1043
    %v1108 = vmul.f32 %v290, %v1044
    %v1109 = vmul.f32 %v290, %v1045
    %v1110 = vmul.f32 %v290, %v1046
    %v1111 = vmul.f32 %v290, %v1047
    %v1112 = vmul.f32 %v290, %v1048
    %v1113 = vadd.f32 %v1105, %v300
    %v1114 = vadd.f32 %v1106, %v300
    %v1115 = vadd.f32 %v1107, %v300
    %v1116 = vadd.f32 %v1108, %v300
    %v1117 = vadd.f32 %v1109, %v300
    %v1118 = vadd.f32 %v1110, %v300
    %v1119 = vadd.f32 %v1111, %v300
    %v1120 = vadd.f32 %v1112, %v300
    %v1121 = vsel %vm1097, %v1113, %v1089
    %v1122 = vsel %vm1098, %v1114, %v1090
    %v1123 = vsel %vm1099, %v1115, %v1091
    %v1124 = vsel %vm1100, %v1116, %v1092
    %v1125 = vsel %vm1101, %v1117, %v1093
    %v1126 = vsel %vm1102, %v1118, %v1094
    %v1127 = vsel %vm1103, %v1119, %v1095
    %v1128 = vsel %vm1104, %v1120, %v1096
    %vm1129 = vcmp.ge.f32.partialorder %v1041, -0.75
    %vm1130 = vcmp.ge.f32.partialorder %v1042, -0.75
    %vm1131 = vcmp.ge.f32.partialorder %v1043, -0.75
    %vm1132 = vcmp.ge.f32.partialorder %v1044, -0.75
    %vm1133 = vcmp.ge.f32.partialorder %v1045, -0.75
    %vm1134 = vcmp.ge.f32.partialorder %v1046, -0.75
    %vm1135 = vcmp.ge.f32.partialorder %v1047, -0.75
    %vm1136 = vcmp.ge.f32.partialorder %v1048, -0.75
    %v1137 = vmul.f32 %v326, %v1041
    %v1138 = vmul.f32 %v326, %v1042
    %v1139 = vmul.f32 %v326, %v1043
    %v1140 = vmul.f32 %v326, %v1044
    %v1141 = vmul.f32 %v326, %v1045
    %v1142 = vmul.f32 %v326, %v1046
    %v1143 = vmul.f32 %v326, %v1047
    %v1144 = vmul.f32 %v326, %v1048
    %v1145 = vadd.f32 %v1137, %v336
    %v1146 = vadd.f32 %v1138, %v336
    %v1147 = vadd.f32 %v1139, %v336
    %v1148 = vadd.f32 %v1140, %v336
    %v1149 = vadd.f32 %v1141, %v336
    %v1150 = vadd.f32 %v1142, %v336
    %v1151 = vadd.f32 %v1143, %v336
    %v1152 = vadd.f32 %v1144, %v336
    %v1153 = vsel %vm1129, %v1145, %v1121
    %v1154 = vsel %vm1130, %v1146, %v1122
    %v1155 = vsel %vm1131, %v1147, %v1123
    %v1156 = vsel %vm1132, %v1148, %v1124
    %v1157 = vsel %vm1133, %v1149, %v1125
    %v1158 = vsel %vm1134, %v1150, %v1126
    %v1159 = vsel %vm1135, %v1151, %v1127
    %v1160 = vsel %vm1136, %v1152, %v1128
    %vm1161 = vcmp.ge.f32.partialorder %v1041, 0.0
    %vm1162 = vcmp.ge.f32.partialorder %v1042, 0.0
    %vm1163 = vcmp.ge.f32.partialorder %v1043, 0.0
    %vm1164 = vcmp.ge.f32.partialorder %v1044, 0.0
    %vm1165 = vcmp.ge.f32.partialorder %v1045, 0.0
    %vm1166 = vcmp.ge.f32.partialorder %v1046, 0.0
    %vm1167 = vcmp.ge.f32.partialorder %v1047, 0.0
    %vm1168 = vcmp.ge.f32.partialorder %v1048, 0.0
    %v1169 = vmul.f32 %v362, %v1041
    %v1170 = vmul.f32 %v362, %v1042
    %v1171 = vmul.f32 %v362, %v1043
    %v1172 = vmul.f32 %v362, %v1044
    %v1173 = vmul.f32 %v362, %v1045
    %v1174 = vmul.f32 %v362, %v1046
    %v1175 = vmul.f32 %v362, %v1047
    %v1176 = vmul.f32 %v362, %v1048
    %v1177 = vadd.f32 %v1169, %v372
    %v1178 = vadd.f32 %v1170, %v372
    %v1179 = vadd.f32 %v1171, %v372
    %v1180 = vadd.f32 %v1172, %v372
    %v1181 = vadd.f32 %v1173, %v372
    %v1182 = vadd.f32 %v1174, %v372
    %v1183 = vadd.f32 %v1175, %v372
    %v1184 = vadd.f32 %v1176, %v372
    %v1185 = vsel %vm1161, %v1177, %v1153
    %v1186 = vsel %vm1162, %v1178, %v1154
    %v1187 = vsel %vm1163, %v1179, %v1155
    %v1188 = vsel %vm1164, %v1180, %v1156
    %v1189 = vsel %vm1165, %v1181, %v1157
    %v1190 = vsel %vm1166, %v1182, %v1158
    %v1191 = vsel %vm1167, %v1183, %v1159
    %v1192 = vsel %vm1168, %v1184, %v1160
    %vm1193 = vcmp.ge.f32.partialorder %v1041, 0.75
    %vm1194 = vcmp.ge.f32.partialorder %v1042, 0.75
    %vm1195 = vcmp.ge.f32.partialorder %v1043, 0.75
    %vm1196 = vcmp.ge.f32.partialorder %v1044, 0.75
    %vm1197 = vcmp.ge.f32.partialorder %v1045, 0.75
    %vm1198 = vcmp.ge.f32.partialorder %v1046, 0.75
    %vm1199 = vcmp.ge.f32.partialorder %v1047, 0.75
    %vm1200 = vcmp.ge.f32.partialorder %v1048, 0.75
    %v1201 = vmul.f32 %v398, %v1041
    %v1202 = vmul.f32 %v398, %v1042
    %v1203 = vmul.f32 %v398, %v1043
    %v1204 = vmul.f32 %v398, %v1044
    %v1205 = vmul.f32 %v398, %v1045
    %v1206 = vmul.f32 %v398, %v1046
    %v1207 = vmul.f32 %v398, %v1047
    %v1208 = vmul.f32 %v398, %v1048
    %v1209 = vadd.f32 %v1201, %v408
    %v1210 = vadd.f32 %v1202, %v408
    %v1211 = vadd.f32 %v1203, %v408
    %v1212 = vadd.f32 %v1204, %v408
    %v1213 = vadd.f32 %v1205, %v408
    %v1214 = vadd.f32 %v1206, %v408
    %v1215 = vadd.f32 %v1207, %v408
    %v1216 = vadd.f32 %v1208, %v408
    %v1217 = vsel %vm1193, %v1209, %v1185
    %v1218 = vsel %vm1194, %v1210, %v1186
    %v1219 = vsel %vm1195, %v1211, %v1187
    %v1220 = vsel %vm1196, %v1212, %v1188
    %v1221 = vsel %vm1197, %v1213, %v1189
    %v1222 = vsel %vm1198, %v1214, %v1190
    %v1223 = vsel %vm1199, %v1215, %v1191
    %v1224 = vsel %vm1200, %v1216, %v1192
    %vm1225 = vcmp.ge.f32.partialorder %v1041, 1.5
    %vm1226 = vcmp.ge.f32.partialorder %v1042, 1.5
    %vm1227 = vcmp.ge.f32.partialorder %v1043, 1.5
    %vm1228 = vcmp.ge.f32.partialorder %v1044, 1.5
    %vm1229 = vcmp.ge.f32.partialorder %v1045, 1.5
    %vm1230 = vcmp.ge.f32.partialorder %v1046, 1.5
    %vm1231 = vcmp.ge.f32.partialorder %v1047, 1.5
    %vm1232 = vcmp.ge.f32.partialorder %v1048, 1.5
    %v1233 = vmul.f32 %v434, %v1041
    %v1234 = vmul.f32 %v434, %v1042
    %v1235 = vmul.f32 %v434, %v1043
    %v1236 = vmul.f32 %v434, %v1044
    %v1237 = vmul.f32 %v434, %v1045
    %v1238 = vmul.f32 %v434, %v1046
    %v1239 = vmul.f32 %v434, %v1047
    %v1240 = vmul.f32 %v434, %v1048
    %v1241 = vadd.f32 %v1233, %v444
    %v1242 = vadd.f32 %v1234, %v444
    %v1243 = vadd.f32 %v1235, %v444
    %v1244 = vadd.f32 %v1236, %v444
    %v1245 = vadd.f32 %v1237, %v444
    %v1246 = vadd.f32 %v1238, %v444
    %v1247 = vadd.f32 %v1239, %v444
    %v1248 = vadd.f32 %v1240, %v444
    %v1249 = vsel %vm1225, %v1241, %v1217
    %v1250 = vsel %vm1226, %v1242, %v1218
    %v1251 = vsel %vm1227, %v1243, %v1219
    %v1252 = vsel %vm1228, %v1244, %v1220
    %v1253 = vsel %vm1229, %v1245, %v1221
    %v1254 = vsel %vm1230, %v1246, %v1222
    %v1255 = vsel %vm1231, %v1247, %v1223
    %v1256 = vsel %vm1232, %v1248, %v1224
    %vm1257 = vcmp.ge.f32.partialorder %v1041, 2.25
    %vm1258 = vcmp.ge.f32.partialorder %v1042, 2.25
    %vm1259 = vcmp.ge.f32.partialorder %v1043, 2.25
    %vm1260 = vcmp.ge.f32.partialorder %v1044, 2.25
    %vm1261 = vcmp.ge.f32.partialorder %v1045, 2.25
    %vm1262 = vcmp.ge.f32.partialorder %v1046, 2.25
    %vm1263 = vcmp.ge.f32.partialorder %v1047, 2.25
    %vm1264 = vcmp.ge.f32.partialorder %v1048, 2.25
    %v1265 = vmul.f32 %v470, %v1041
    %v1266 = vmul.f32 %v470, %v1042
    %v1267 = vmul.f32 %v470, %v1043
    %v1268 = vmul.f32 %v470, %v1044
    %v1269 = vmul.f32 %v470, %v1045
    %v1270 = vmul.f32 %v470, %v1046
    %v1271 = vmul.f32 %v470, %v1047
    %v1272 = vmul.f32 %v470, %v1048
    %v1273 = vadd.f32 %v1265, %v480
    %v1274 = vadd.f32 %v1266, %v480
    %v1275 = vadd.f32 %v1267, %v480
    %v1276 = vadd.f32 %v1268, %v480
    %v1277 = vadd.f32 %v1269, %v480
    %v1278 = vadd.f32 %v1270, %v480
    %v1279 = vadd.f32 %v1271, %v480
    %v1280 = vadd.f32 %v1272, %v480
    %v1281 = vsel %vm1257, %v1273, %v1249
    %v1282 = vsel %vm1258, %v1274, %v1250
    %v1283 = vsel %vm1259, %v1275, %v1251
    %v1284 = vsel %vm1260, %v1276, %v1252
    %v1285 = vsel %vm1261, %v1277, %v1253
    %v1286 = vsel %vm1262, %v1278, %v1254
    %v1287 = vsel %vm1263, %v1279, %v1255
    %v1288 = vsel %vm1264, %v1280, %v1256
    %v1289 = vadd.f32 %v1041, %v1281
    %v1290 = vadd.f32 %v1042, %v1282
    %v1291 = vadd.f32 %v1043, %v1283
    %v1292 = vadd.f32 %v1044, %v1284
    %v1293 = vadd.f32 %v1045, %v1285
    %v1294 = vadd.f32 %v1046, %v1286
    %v1295 = vadd.f32 %v1047, %v1287
    %v1296 = vadd.f32 %v1048, %v1288
    %v1297 = vmax.f32 %v1289, -3.0
    %v1298 = vmax.f32 %v1290, -3.0
    %v1299 = vmax.f32 %v1291, -3.0
    %v1300 = vmax.f32 %v1292, -3.0
    %v1301 = vmax.f32 %v1293, -3.0
    %v1302 = vmax.f32 %v1294, -3.0
    %v1303 = vmax.f32 %v1295, -3.0
    %v1304 = vmax.f32 %v1296, -3.0
    %v1305 = vmin.f32 %v1297, 3.0
    %v1306 = vmin.f32 %v1298, 3.0
    %v1307 = vmin.f32 %v1299, 3.0
    %v1308 = vmin.f32 %v1300, 3.0
    %v1309 = vmin.f32 %v1301, 3.0
    %v1310 = vmin.f32 %v1302, 3.0
    %v1311 = vmin.f32 %v1303, 3.0
    %v1312 = vmin.f32 %v1304, 3.0
    %v1313 = vmul.f32 %v226, %v1305
    %v1314 = vmul.f32 %v226, %v1306
    %v1315 = vmul.f32 %v226, %v1307
    %v1316 = vmul.f32 %v226, %v1308
    %v1317 = vmul.f32 %v226, %v1309
    %v1318 = vmul.f32 %v226, %v1310
    %v1319 = vmul.f32 %v226, %v1311
    %v1320 = vmul.f32 %v226, %v1312
    %v1321 = vadd.f32 %v1313, %v236
    %v1322 = vadd.f32 %v1314, %v236
    %v1323 = vadd.f32 %v1315, %v236
    %v1324 = vadd.f32 %v1316, %v236
    %v1325 = vadd.f32 %v1317, %v236
    %v1326 = vadd.f32 %v1318, %v236
    %v1327 = vadd.f32 %v1319, %v236
    %v1328 = vadd.f32 %v1320, %v236
    %vm1329 = vcmp.ge.f32.partialorder %v1305, -2.25
    %vm1330 = vcmp.ge.f32.partialorder %v1306, -2.25
    %vm1331 = vcmp.ge.f32.partialorder %v1307, -2.25
    %vm1332 = vcmp.ge.f32.partialorder %v1308, -2.25
    %vm1333 = vcmp.ge.f32.partialorder %v1309, -2.25
    %vm1334 = vcmp.ge.f32.partialorder %v1310, -2.25
    %vm1335 = vcmp.ge.f32.partialorder %v1311, -2.25
    %vm1336 = vcmp.ge.f32.partialorder %v1312, -2.25
    %v1337 = vmul.f32 %v254, %v1305
    %v1338 = vmul.f32 %v254, %v1306
    %v1339 = vmul.f32 %v254, %v1307
    %v1340 = vmul.f32 %v254, %v1308
    %v1341 = vmul.f32 %v254, %v1309
    %v1342 = vmul.f32 %v254, %v1310
    %v1343 = vmul.f32 %v254, %v1311
    %v1344 = vmul.f32 %v254, %v1312
    %v1345 = vadd.f32 %v1337, %v264
    %v1346 = vadd.f32 %v1338, %v264
    %v1347 = vadd.f32 %v1339, %v264
    %v1348 = vadd.f32 %v1340, %v264
    %v1349 = vadd.f32 %v1341, %v264
    %v1350 = vadd.f32 %v1342, %v264
    %v1351 = vadd.f32 %v1343, %v264
    %v1352 = vadd.f32 %v1344, %v264
    %v1353 = vsel %vm1329, %v1345, %v1321
    %v1354 = vsel %vm1330, %v1346, %v1322
    %v1355 = vsel %vm1331, %v1347, %v1323
    %v1356 = vsel %vm1332, %v1348, %v1324
    %v1357 = vsel %vm1333, %v1349, %v1325
    %v1358 = vsel %vm1334, %v1350, %v1326
    %v1359 = vsel %vm1335, %v1351, %v1327
    %v1360 = vsel %vm1336, %v1352, %v1328
    %vm1361 = vcmp.ge.f32.partialorder %v1305, -1.5
    %vm1362 = vcmp.ge.f32.partialorder %v1306, -1.5
    %vm1363 = vcmp.ge.f32.partialorder %v1307, -1.5
    %vm1364 = vcmp.ge.f32.partialorder %v1308, -1.5
    %vm1365 = vcmp.ge.f32.partialorder %v1309, -1.5
    %vm1366 = vcmp.ge.f32.partialorder %v1310, -1.5
    %vm1367 = vcmp.ge.f32.partialorder %v1311, -1.5
    %vm1368 = vcmp.ge.f32.partialorder %v1312, -1.5
    %v1369 = vmul.f32 %v290, %v1305
    %v1370 = vmul.f32 %v290, %v1306
    %v1371 = vmul.f32 %v290, %v1307
    %v1372 = vmul.f32 %v290, %v1308
    %v1373 = vmul.f32 %v290, %v1309
    %v1374 = vmul.f32 %v290, %v1310
    %v1375 = vmul.f32 %v290, %v1311
    %v1376 = vmul.f32 %v290, %v1312
    %v1377 = vadd.f32 %v1369, %v300
    %v1378 = vadd.f32 %v1370, %v300
    %v1379 = vadd.f32 %v1371, %v300
    %v1380 = vadd.f32 %v1372, %v300
    %v1381 = vadd.f32 %v1373, %v300
    %v1382 = vadd.f32 %v1374, %v300
    %v1383 = vadd.f32 %v1375, %v300
    %v1384 = vadd.f32 %v1376, %v300
    %v1385 = vsel %vm1361, %v1377, %v1353
    %v1386 = vsel %vm1362, %v1378, %v1354
    %v1387 = vsel %vm1363, %v1379, %v1355
    %v1388 = vsel %vm1364, %v1380, %v1356
    %v1389 = vsel %vm1365, %v1381, %v1357
    %v1390 = vsel %vm1366, %v1382, %v1358
    %v1391 = vsel %vm1367, %v1383, %v1359
    %v1392 = vsel %vm1368, %v1384, %v1360
    %vm1393 = vcmp.ge.f32.partialorder %v1305, -0.75
    %vm1394 = vcmp.ge.f32.partialorder %v1306, -0.75
    %vm1395 = vcmp.ge.f32.partialorder %v1307, -0.75
    %vm1396 = vcmp.ge.f32.partialorder %v1308, -0.75
    %vm1397 = vcmp.ge.f32.partialorder %v1309, -0.75
    %vm1398 = vcmp.ge.f32.partialorder %v1310, -0.75
    %vm1399 = vcmp.ge.f32.partialorder %v1311, -0.75
    %vm1400 = vcmp.ge.f32.partialorder %v1312, -0.75
    %v1401 = vmul.f32 %v326, %v1305
    %v1402 = vmul.f32 %v326, %v1306
    %v1403 = vmul.f32 %v326, %v1307
    %v1404 = vmul.f32 %v326, %v1308
    %v1405 = vmul.f32 %v326, %v1309
    %v1406 = vmul.f32 %v326, %v1310
    %v1407 = vmul.f32 %v326, %v1311
    %v1408 = vmul.f32 %v326, %v1312
    %v1409 = vadd.f32 %v1401, %v336
    %v1410 = vadd.f32 %v1402, %v336
    %v1411 = vadd.f32 %v1403, %v336
    %v1412 = vadd.f32 %v1404, %v336
    %v1413 = vadd.f32 %v1405, %v336
    %v1414 = vadd.f32 %v1406, %v336
    %v1415 = vadd.f32 %v1407, %v336
    %v1416 = vadd.f32 %v1408, %v336
    %v1417 = vsel %vm1393, %v1409, %v1385
    %v1418 = vsel %vm1394, %v1410, %v1386
    %v1419 = vsel %vm1395, %v1411, %v1387
    %v1420 = vsel %vm1396, %v1412, %v1388
    %v1421 = vsel %vm1397, %v1413, %v1389
    %v1422 = vsel %vm1398, %v1414, %v1390
    %v1423 = vsel %vm1399, %v1415, %v1391
    %v1424 = vsel %vm1400, %v1416, %v1392
    %vm1425 = vcmp.ge.f32.partialorder %v1305, 0.0
    %vm1426 = vcmp.ge.f32.partialorder %v1306, 0.0
    %vm1427 = vcmp.ge.f32.partialorder %v1307, 0.0
    %vm1428 = vcmp.ge.f32.partialorder %v1308, 0.0
    %vm1429 = vcmp.ge.f32.partialorder %v1309, 0.0
    %vm1430 = vcmp.ge.f32.partialorder %v1310, 0.0
    %vm1431 = vcmp.ge.f32.partialorder %v1311, 0.0
    %vm1432 = vcmp.ge.f32.partialorder %v1312, 0.0
    %v1433 = vmul.f32 %v362, %v1305
    %v1434 = vmul.f32 %v362, %v1306
    %v1435 = vmul.f32 %v362, %v1307
    %v1436 = vmul.f32 %v362, %v1308
    %v1437 = vmul.f32 %v362, %v1309
    %v1438 = vmul.f32 %v362, %v1310
    %v1439 = vmul.f32 %v362, %v1311
    %v1440 = vmul.f32 %v362, %v1312
    %v1441 = vadd.f32 %v1433, %v372
    %v1442 = vadd.f32 %v1434, %v372
    %v1443 = vadd.f32 %v1435, %v372
    %v1444 = vadd.f32 %v1436, %v372
    %v1445 = vadd.f32 %v1437, %v372
    %v1446 = vadd.f32 %v1438, %v372
    %v1447 = vadd.f32 %v1439, %v372
    %v1448 = vadd.f32 %v1440, %v372
    %v1449 = vsel %vm1425, %v1441, %v1417
    %v1450 = vsel %vm1426, %v1442, %v1418
    %v1451 = vsel %vm1427, %v1443, %v1419
    %v1452 = vsel %vm1428, %v1444, %v1420
    %v1453 = vsel %vm1429, %v1445, %v1421
    %v1454 = vsel %vm1430, %v1446, %v1422
    %v1455 = vsel %vm1431, %v1447, %v1423
    %v1456 = vsel %vm1432, %v1448, %v1424
    %vm1457 = vcmp.ge.f32.partialorder %v1305, 0.75
    %vm1458 = vcmp.ge.f32.partialorder %v1306, 0.75
    %vm1459 = vcmp.ge.f32.partialorder %v1307, 0.75
    %vm1460 = vcmp.ge.f32.partialorder %v1308, 0.75
    %vm1461 = vcmp.ge.f32.partialorder %v1309, 0.75
    %vm1462 = vcmp.ge.f32.partialorder %v1310, 0.75
    %vm1463 = vcmp.ge.f32.partialorder %v1311, 0.75
    %vm1464 = vcmp.ge.f32.partialorder %v1312, 0.75
    %v1465 = vmul.f32 %v398, %v1305
    %v1466 = vmul.f32 %v398, %v1306
    %v1467 = vmul.f32 %v398, %v1307
    %v1468 = vmul.f32 %v398, %v1308
    %v1469 = vmul.f32 %v398, %v1309
    %v1470 = vmul.f32 %v398, %v1310
    %v1471 = vmul.f32 %v398, %v1311
    %v1472 = vmul.f32 %v398, %v1312
    %v1473 = vadd.f32 %v1465, %v408
    %v1474 = vadd.f32 %v1466, %v408
    %v1475 = vadd.f32 %v1467, %v408
    %v1476 = vadd.f32 %v1468, %v408
    %v1477 = vadd.f32 %v1469, %v408
    %v1478 = vadd.f32 %v1470, %v408
    %v1479 = vadd.f32 %v1471, %v408
    %v1480 = vadd.f32 %v1472, %v408
    %v1481 = vsel %vm1457, %v1473, %v1449
    %v1482 = vsel %vm1458, %v1474, %v1450
    %v1483 = vsel %vm1459, %v1475, %v1451
    %v1484 = vsel %vm1460, %v1476, %v1452
    %v1485 = vsel %vm1461, %v1477, %v1453
    %v1486 = vsel %vm1462, %v1478, %v1454
    %v1487 = vsel %vm1463, %v1479, %v1455
    %v1488 = vsel %vm1464, %v1480, %v1456
    %vm1489 = vcmp.ge.f32.partialorder %v1305, 1.5
    %vm1490 = vcmp.ge.f32.partialorder %v1306, 1.5
    %vm1491 = vcmp.ge.f32.partialorder %v1307, 1.5
    %vm1492 = vcmp.ge.f32.partialorder %v1308, 1.5
    %vm1493 = vcmp.ge.f32.partialorder %v1309, 1.5
    %vm1494 = vcmp.ge.f32.partialorder %v1310, 1.5
    %vm1495 = vcmp.ge.f32.partialorder %v1311, 1.5
    %vm1496 = vcmp.ge.f32.partialorder %v1312, 1.5
    %v1497 = vmul.f32 %v434, %v1305
    %v1498 = vmul.f32 %v434, %v1306
    %v1499 = vmul.f32 %v434, %v1307
    %v1500 = vmul.f32 %v434, %v1308
    %v1501 = vmul.f32 %v434, %v1309
    %v1502 = vmul.f32 %v434, %v1310
    %v1503 = vmul.f32 %v434, %v1311
    %v1504 = vmul.f32 %v434, %v1312
    %v1505 = vadd.f32 %v1497, %v444
    %v1506 = vadd.f32 %v1498, %v444
    %v1507 = vadd.f32 %v1499, %v444
    %v1508 = vadd.f32 %v1500, %v444
    %v1509 = vadd.f32 %v1501, %v444
    %v1510 = vadd.f32 %v1502, %v444
    %v1511 = vadd.f32 %v1503, %v444
    %v1512 = vadd.f32 %v1504, %v444
    %v1513 = vsel %vm1489, %v1505, %v1481
    %v1514 = vsel %vm1490, %v1506, %v1482
    %v1515 = vsel %vm1491, %v1507, %v1483
    %v1516 = vsel %vm1492, %v1508, %v1484
    %v1517 = vsel %vm1493, %v1509, %v1485
    %v1518 = vsel %vm1494, %v1510, %v1486
    %v1519 = vsel %vm1495, %v1511, %v1487
    %v1520 = vsel %vm1496, %v1512, %v1488
    %vm1521 = vcmp.ge.f32.partialorder %v1305, 2.25
    %vm1522 = vcmp.ge.f32.partialorder %v1306, 2.25
    %vm1523 = vcmp.ge.f32.partialorder %v1307, 2.25
    %vm1524 = vcmp.ge.f32.partialorder %v1308, 2.25
    %vm1525 = vcmp.ge.f32.partialorder %v1309, 2.25
    %vm1526 = vcmp.ge.f32.partialorder %v1310, 2.25
    %vm1527 = vcmp.ge.f32.partialorder %v1311, 2.25
    %vm1528 = vcmp.ge.f32.partialorder %v1312, 2.25
    %v1529 = vmul.f32 %v470, %v1305
    %v1530 = vmul.f32 %v470, %v1306
    %v1531 = vmul.f32 %v470, %v1307
    %v1532 = vmul.f32 %v470, %v1308
    %v1533 = vmul.f32 %v470, %v1309
    %v1534 = vmul.f32 %v470, %v1310
    %v1535 = vmul.f32 %v470, %v1311
    %v1536 = vmul.f32 %v470, %v1312
    %v1537 = vadd.f32 %v1529, %v480
    %v1538 = vadd.f32 %v1530, %v480
    %v1539 = vadd.f32 %v1531, %v480
    %v1540 = vadd.f32 %v1532, %v480
    %v1541 = vadd.f32 %v1533, %v480
    %v1542 = vadd.f32 %v1534, %v480
    %v1543 = vadd.f32 %v1535, %v480
    %v1544 = vadd.f32 %v1536, %v480
    %v1545 = vsel %vm1521, %v1537, %v1513
    %v1546 = vsel %vm1522, %v1538, %v1514
    %v1547 = vsel %vm1523, %v1539, %v1515
    %v1548 = vsel %vm1524, %v1540, %v1516
    %v1549 = vsel %vm1525, %v1541, %v1517
    %v1550 = vsel %vm1526, %v1542, %v1518
    %v1551 = vsel %vm1527, %v1543, %v1519
    %v1552 = vsel %vm1528, %v1544, %v1520
    %v1553 = vadd.f32 %v1305, %v1545
    %v1554 = vadd.f32 %v1306, %v1546
    %v1555 = vadd.f32 %v1307, %v1547
    %v1556 = vadd.f32 %v1308, %v1548
    %v1557 = vadd.f32 %v1309, %v1549
    %v1558 = vadd.f32 %v1310, %v1550
    %v1559 = vadd.f32 %v1311, %v1551
    %v1560 = vadd.f32 %v1312, %v1552
    %v1561 = vmax.f32 %v1553, -3.0
    %v1562 = vmax.f32 %v1554, -3.0
    %v1563 = vmax.f32 %v1555, -3.0
    %v1564 = vmax.f32 %v1556, -3.0
    %v1565 = vmax.f32 %v1557, -3.0
    %v1566 = vmax.f32 %v1558, -3.0
    %v1567 = vmax.f32 %v1559, -3.0
    %v1568 = vmax.f32 %v1560, -3.0
    %v1569 = vmin.f32 %v1561, 3.0
    %v1570 = vmin.f32 %v1562, 3.0
    %v1571 = vmin.f32 %v1563, 3.0
    %v1572 = vmin.f32 %v1564, 3.0
    %v1573 = vmin.f32 %v1565, 3.0
    %v1574 = vmin.f32 %v1566, 3.0
    %v1575 = vmin.f32 %v1567, 3.0
    %v1576 = vmin.f32 %v1568, 3.0
    %v1577 = vmul.f32 %v226, %v1569
    %v1578 = vmul.f32 %v226, %v1570
    %v1579 = vmul.f32 %v226, %v1571
    %v1580 = vmul.f32 %v226, %v1572
    %v1581 = vmul.f32 %v226, %v1573
    %v1582 = vmul.f32 %v226, %v1574
    %v1583 = vmul.f32 %v226, %v1575
    %v1584 = vmul.f32 %v226, %v1576
    %v1585 = vadd.f32 %v1577, %v236
    %v1586 = vadd.f32 %v1578, %v236
    %v1587 = vadd.f32 %v1579, %v236
    %v1588 = vadd.f32 %v1580, %v236
    %v1589 = vadd.f32 %v1581, %v236
    %v1590 = vadd.f32 %v1582, %v236
    %v1591 = vadd.f32 %v1583, %v236
    %v1592 = vadd.f32 %v1584, %v236
    %vm1593 = vcmp.ge.f32.partialorder %v1569, -2.25
    %vm1594 = vcmp.ge.f32.partialorder %v1570, -2.25
    %vm1595 = vcmp.ge.f32.partialorder %v1571, -2.25
    %vm1596 = vcmp.ge.f32.partialorder %v1572, -2.25
    %vm1597 = vcmp.ge.f32.partialorder %v1573, -2.25
    %vm1598 = vcmp.ge.f32.partialorder %v1574, -2.25
    %vm1599 = vcmp.ge.f32.partialorder %v1575, -2.25
    %vm1600 = vcmp.ge.f32.partialorder %v1576, -2.25
    %v1601 = vmul.f32 %v254, %v1569
    %v1602 = vmul.f32 %v254, %v1570
    %v1603 = vmul.f32 %v254, %v1571
    %v1604 = vmul.f32 %v254, %v1572
    %v1605 = vmul.f32 %v254, %v1573
    %v1606 = vmul.f32 %v254, %v1574
    %v1607 = vmul.f32 %v254, %v1575
    %v1608 = vmul.f32 %v254, %v1576
    %v1609 = vadd.f32 %v1601, %v264
    %v1610 = vadd.f32 %v1602, %v264
    %v1611 = vadd.f32 %v1603, %v264
    %v1612 = vadd.f32 %v1604, %v264
    %v1613 = vadd.f32 %v1605, %v264
    %v1614 = vadd.f32 %v1606, %v264
    %v1615 = vadd.f32 %v1607, %v264
    %v1616 = vadd.f32 %v1608, %v264
    %v1617 = vsel %vm1593, %v1609, %v1585
    %v1618 = vsel %vm1594, %v1610, %v1586
    %v1619 = vsel %vm1595, %v1611, %v1587
    %v1620 = vsel %vm1596, %v1612, %v1588
    %v1621 = vsel %vm1597, %v1613, %v1589
    %v1622 = vsel %vm1598, %v1614, %v1590
    %v1623 = vsel %vm1599, %v1615, %v1591
    %v1624 = vsel %vm1600, %v1616, %v1592
    %vm1625 = vcmp.ge.f32.partialorder %v1569, -1.5
    %vm1626 = vcmp.ge.f32.partialorder %v1570, -1.5
    %vm1627 = vcmp.ge.f32.partialorder %v1571, -1.5
    %vm1628 = vcmp.ge.f32.partialorder %v1572, -1.5
    %vm1629 = vcmp.ge.f32.partialorder %v1573, -1.5
    %vm1630 = vcmp.ge.f32.partialorder %v1574, -1.5
    %vm1631 = vcmp.ge.f32.partialorder %v1575, -1.5
    %vm1632 = vcmp.ge.f32.partialorder %v1576, -1.5
    %v1633 = vmul.f32 %v290, %v1569
    %v1634 = vmul.f32 %v290, %v1570
    %v1635 = vmul.f32 %v290, %v1571
    %v1636 = vmul.f32 %v290, %v1572
    %v1637 = vmul.f32 %v290, %v1573
    %v1638 = vmul.f32 %v290, %v1574
    %v1639 = vmul.f32 %v290, %v1575
    %v1640 = vmul.f32 %v290, %v1576
    %v1641 = vadd.f32 %v1633, %v300
    %v1642 = vadd.f32 %v1634, %v300
    %v1643 = vadd.f32 %v1635, %v300
    %v1644 = vadd.f32 %v1636, %v300
    %v1645 = vadd.f32 %v1637, %v300
    %v1646 = vadd.f32 %v1638, %v300
    %v1647 = vadd.f32 %v1639, %v300
    %v1648 = vadd.f32 %v1640, %v300
    %v1649 = vsel %vm1625, %v1641, %v1617
    %v1650 = vsel %vm1626, %v1642, %v1618
    %v1651 = vsel %vm1627, %v1643, %v1619
    %v1652 = vsel %vm1628, %v1644, %v1620
    %v1653 = vsel %vm1629, %v1645, %v1621
    %v1654 = vsel %vm1630, %v1646, %v1622
    %v1655 = vsel %vm1631, %v1647, %v1623
    %v1656 = vsel %vm1632, %v1648, %v1624
    %vm1657 = vcmp.ge.f32.partialorder %v1569, -0.75
    %vm1658 = vcmp.ge.f32.partialorder %v1570, -0.75
    %vm1659 = vcmp.ge.f32.partialorder %v1571, -0.75
    %vm1660 = vcmp.ge.f32.partialorder %v1572, -0.75
    %vm1661 = vcmp.ge.f32.partialorder %v1573, -0.75
    %vm1662 = vcmp.ge.f32.partialorder %v1574, -0.75
    %vm1663 = vcmp.ge.f32.partialorder %v1575, -0.75
    %vm1664 = vcmp.ge.f32.partialorder %v1576, -0.75
    %v1665 = vmul.f32 %v326, %v1569
    %v1666 = vmul.f32 %v326, %v1570
    %v1667 = vmul.f32 %v326, %v1571
    %v1668 = vmul.f32 %v326, %v1572
    %v1669 = vmul.f32 %v326, %v1573
    %v1670 = vmul.f32 %v326, %v1574
    %v1671 = vmul.f32 %v326, %v1575
    %v1672 = vmul.f32 %v326, %v1576
    %v1673 = vadd.f32 %v1665, %v336
    %v1674 = vadd.f32 %v1666, %v336
    %v1675 = vadd.f32 %v1667, %v336
    %v1676 = vadd.f32 %v1668, %v336
    %v1677 = vadd.f32 %v1669, %v336
    %v1678 = vadd.f32 %v1670, %v336
    %v1679 = vadd.f32 %v1671, %v336
    %v1680 = vadd.f32 %v1672, %v336
    %v1681 = vsel %vm1657, %v1673, %v1649
    %v1682 = vsel %vm1658, %v1674, %v1650
    %v1683 = vsel %vm1659, %v1675, %v1651
    %v1684 = vsel %vm1660, %v1676, %v1652
    %v1685 = vsel %vm1661, %v1677, %v1653
    %v1686 = vsel %vm1662, %v1678, %v1654
    %v1687 = vsel %vm1663, %v1679, %v1655
    %v1688 = vsel %vm1664, %v1680, %v1656
    %vm1689 = vcmp.ge.f32.partialorder %v1569, 0.0
    %vm1690 = vcmp.ge.f32.partialorder %v1570, 0.0
    %vm1691 = vcmp.ge.f32.partialorder %v1571, 0.0
    %vm1692 = vcmp.ge.f32.partialorder %v1572, 0.0
    %vm1693 = vcmp.ge.f32.partialorder %v1573, 0.0
    %vm1694 = vcmp.ge.f32.partialorder %v1574, 0.0
    %vm1695 = vcmp.ge.f32.partialorder %v1575, 0.0
    %vm1696 = vcmp.ge.f32.partialorder %v1576, 0.0
    %v1697 = vmul.f32 %v362, %v1569
    %v1698 = vmul.f32 %v362, %v1570
    %v1699 = vmul.f32 %v362, %v1571
    %v1700 = vmul.f32 %v362, %v1572
    %v1701 = vmul.f32 %v362, %v1573
    %v1702 = vmul.f32 %v362, %v1574
    %v1703 = vmul.f32 %v362, %v1575
    %v1704 = vmul.f32 %v362, %v1576
    %v1705 = vadd.f32 %v1697, %v372
    %v1706 = vadd.f32 %v1698, %v372
    %v1707 = vadd.f32 %v1699, %v372
    %v1708 = vadd.f32 %v1700, %v372
    %v1709 = vadd.f32 %v1701, %v372
    %v1710 = vadd.f32 %v1702, %v372
    %v1711 = vadd.f32 %v1703, %v372
    %v1712 = vadd.f32 %v1704, %v372
    %v1713 = vsel %vm1689, %v1705, %v1681
    %v1714 = vsel %vm1690, %v1706, %v1682
    %v1715 = vsel %vm1691, %v1707, %v1683
    %v1716 = vsel %vm1692, %v1708, %v1684
    %v1717 = vsel %vm1693, %v1709, %v1685
    %v1718 = vsel %vm1694, %v1710, %v1686
    %v1719 = vsel %vm1695, %v1711, %v1687
    %v1720 = vsel %vm1696, %v1712, %v1688
    %vm1721 = vcmp.ge.f32.partialorder %v1569, 0.75
    %vm1722 = vcmp.ge.f32.partialorder %v1570, 0.75
    %vm1723 = vcmp.ge.f32.partialorder %v1571, 0.75
    %vm1724 = vcmp.ge.f32.partialorder %v1572, 0.75
    %vm1725 = vcmp.ge.f32.partialorder %v1573, 0.75
    %vm1726 = vcmp.ge.f32.partialorder %v1574, 0.75
    %vm1727 = vcmp.ge.f32.partialorder %v1575, 0.75
    %vm1728 = vcmp.ge.f32.partialorder %v1576, 0.75
    %v1729 = vmul.f32 %v398, %v1569
    %v1730 = vmul.f32 %v398, %v1570
    %v1731 = vmul.f32 %v398, %v1571
    %v1732 = vmul.f32 %v398, %v1572
    %v1733 = vmul.f32 %v398, %v1573
    %v1734 = vmul.f32 %v398, %v1574
    %v1735 = vmul.f32 %v398, %v1575
    %v1736 = vmul.f32 %v398, %v1576
    %v1737 = vadd.f32 %v1729, %v408
    %v1738 = vadd.f32 %v1730, %v408
    %v1739 = vadd.f32 %v1731, %v408
    %v1740 = vadd.f32 %v1732, %v408
    %v1741 = vadd.f32 %v1733, %v408
    %v1742 = vadd.f32 %v1734, %v408
    %v1743 = vadd.f32 %v1735, %v408
    %v1744 = vadd.f32 %v1736, %v408
    %v1745 = vsel %vm1721, %v1737, %v1713
    %v1746 = vsel %vm1722, %v1738, %v1714
    %v1747 = vsel %vm1723, %v1739, %v1715
    %v1748 = vsel %vm1724, %v1740, %v1716
    %v1749 = vsel %vm1725, %v1741, %v1717
    %v1750 = vsel %vm1726, %v1742, %v1718
    %v1751 = vsel %vm1727, %v1743, %v1719
    %v1752 = vsel %vm1728, %v1744, %v1720
    %vm1753 = vcmp.ge.f32.partialorder %v1569, 1.5
    %vm1754 = vcmp.ge.f32.partialorder %v1570, 1.5
    %vm1755 = vcmp.ge.f32.partialorder %v1571, 1.5
    %vm1756 = vcmp.ge.f32.partialorder %v1572, 1.5
    %vm1757 = vcmp.ge.f32.partialorder %v1573, 1.5
    %vm1758 = vcmp.ge.f32.partialorder %v1574, 1.5
    %vm1759 = vcmp.ge.f32.partialorder %v1575, 1.5
    %vm1760 = vcmp.ge.f32.partialorder %v1576, 1.5
    %v1761 = vmul.f32 %v434, %v1569
    %v1762 = vmul.f32 %v434, %v1570
    %v1763 = vmul.f32 %v434, %v1571
    %v1764 = vmul.f32 %v434, %v1572
    %v1765 = vmul.f32 %v434, %v1573
    %v1766 = vmul.f32 %v434, %v1574
    %v1767 = vmul.f32 %v434, %v1575
    %v1768 = vmul.f32 %v434, %v1576
    %v1769 = vadd.f32 %v1761, %v444
    %v1770 = vadd.f32 %v1762, %v444
    %v1771 = vadd.f32 %v1763, %v444
    %v1772 = vadd.f32 %v1764, %v444
    %v1773 = vadd.f32 %v1765, %v444
    %v1774 = vadd.f32 %v1766, %v444
    %v1775 = vadd.f32 %v1767, %v444
    %v1776 = vadd.f32 %v1768, %v444
    %v1777 = vsel %vm1753, %v1769, %v1745
    %v1778 = vsel %vm1754, %v1770, %v1746
    %v1779 = vsel %vm1755, %v1771, %v1747
    %v1780 = vsel %vm1756, %v1772, %v1748
    %v1781 = vsel %vm1757, %v1773, %v1749
    %v1782 = vsel %vm1758, %v1774, %v1750
    %v1783 = vsel %vm1759, %v1775, %v1751
    %v1784 = vsel %vm1760, %v1776, %v1752
    %vm1785 = vcmp.ge.f32.partialorder %v1569, 2.25
    %vm1786 = vcmp.ge.f32.partialorder %v1570, 2.25
    %vm1787 = vcmp.ge.f32.partialorder %v1571, 2.25
    %vm1788 = vcmp.ge.f32.partialorder %v1572, 2.25
    %vm1789 = vcmp.ge.f32.partialorder %v1573, 2.25
    %vm1790 = vcmp.ge.f32.partialorder %v1574, 2.25
    %vm1791 = vcmp.ge.f32.partialorder %v1575, 2.25
    %vm1792 = vcmp.ge.f32.partialorder %v1576, 2.25
    %v1793 = vmul.f32 %v470, %v1569
    %v1794 = vmul.f32 %v470, %v1570
    %v1795 = vmul.f32 %v470, %v1571
    %v1796 = vmul.f32 %v470, %v1572
    %v1797 = vmul.f32 %v470, %v1573
    %v1798 = vmul.f32 %v470, %v1574
    %v1799 = vmul.f32 %v470, %v1575
    %v1800 = vmul.f32 %v470, %v1576
    %v1801 = vadd.f32 %v1793, %v480
    %v1802 = vadd.f32 %v1794, %v480
    %v1803 = vadd.f32 %v1795, %v480
    %v1804 = vadd.f32 %v1796, %v480
    %v1805 = vadd.f32 %v1797, %v480
    %v1806 = vadd.f32 %v1798, %v480
    %v1807 = vadd.f32 %v1799, %v480
    %v1808 = vadd.f32 %v1800, %v480
    %v1809 = vsel %vm1785, %v1801, %v1777
    %v1810 = vsel %vm1786, %v1802, %v1778
    %v1811 = vsel %vm1787, %v1803, %v1779
    %v1812 = vsel %vm1788, %v1804, %v1780
    %v1813 = vsel %vm1789, %v1805, %v1781
    %v1814 = vsel %vm1790, %v1806, %v1782
    %v1815 = vsel %vm1791, %v1807, %v1783
    %v1816 = vsel %vm1792, %v1808, %v1784
    %v1817 = vadd.f32 %v1569, %v1809
    %v1818 = vadd.f32 %v1570, %v1810
    %v1819 = vadd.f32 %v1571, %v1811
    %v1820 = vadd.f32 %v1572, %v1812
    %v1821 = vadd.f32 %v1573, %v1813
    %v1822 = vadd.f32 %v1574, %v1814
    %v1823 = vadd.f32 %v1575, %v1815
    %v1824 = vadd.f32 %v1576, %v1816
    %v1825 = vmax.f32 %v1817, -3.0
    %v1826 = vmax.f32 %v1818, -3.0
    %v1827 = vmax.f32 %v1819, -3.0
    %v1828 = vmax.f32 %v1820, -3.0
    %v1829 = vmax.f32 %v1821, -3.0
    %v1830 = vmax.f32 %v1822, -3.0
    %v1831 = vmax.f32 %v1823, -3.0
    %v1832 = vmax.f32 %v1824, -3.0
    %v1833 = vmin.f32 %v1825, 3.0
    %v1834 = vmin.f32 %v1826, 3.0
    %v1835 = vmin.f32 %v1827, 3.0
    %v1836 = vmin.f32 %v1828, 3.0
    %v1837 = vmin.f32 %v1829, 3.0
    %v1838 = vmin.f32 %v1830, 3.0
    %v1839 = vmin.f32 %v1831, 3.0
    %v1840 = vmin.f32 %v1832, 3.0
    %v1841 = vmul.f32 %v226, %v1833
    %v1842 = vmul.f32 %v226, %v1834
    %v1843 = vmul.f32 %v226, %v1835
    %v1844 = vmul.f32 %v226, %v1836
    %v1845 = vmul.f32 %v226, %v1837
    %v1846 = vmul.f32 %v226, %v1838
    %v1847 = vmul.f32 %v226, %v1839
    %v1848 = vmul.f32 %v226, %v1840
    %v1849 = vadd.f32 %v1841, %v236
    %v1850 = vadd.f32 %v1842, %v236
    %v1851 = vadd.f32 %v1843, %v236
    %v1852 = vadd.f32 %v1844, %v236
    %v1853 = vadd.f32 %v1845, %v236
    %v1854 = vadd.f32 %v1846, %v236
    %v1855 = vadd.f32 %v1847, %v236
    %v1856 = vadd.f32 %v1848, %v236
    %vm1857 = vcmp.ge.f32.partialorder %v1833, -2.25
    %vm1858 = vcmp.ge.f32.partialorder %v1834, -2.25
    %vm1859 = vcmp.ge.f32.partialorder %v1835, -2.25
    %vm1860 = vcmp.ge.f32.partialorder %v1836, -2.25
    %vm1861 = vcmp.ge.f32.partialorder %v1837, -2.25
    %vm1862 = vcmp.ge.f32.partialorder %v1838, -2.25
    %vm1863 = vcmp.ge.f32.partialorder %v1839, -2.25
    %vm1864 = vcmp.ge.f32.partialorder %v1840, -2.25
    %v1865 = vmul.f32 %v254, %v1833
    %v1866 = vmul.f32 %v254, %v1834
    %v1867 = vmul.f32 %v254, %v1835
    %v1868 = vmul.f32 %v254, %v1836
    %v1869 = vmul.f32 %v254, %v1837
    %v1870 = vmul.f32 %v254, %v1838
    %v1871 = vmul.f32 %v254, %v1839
    %v1872 = vmul.f32 %v254, %v1840
    %v1873 = vadd.f32 %v1865, %v264
    %v1874 = vadd.f32 %v1866, %v264
    %v1875 = vadd.f32 %v1867, %v264
    %v1876 = vadd.f32 %v1868, %v264
    %v1877 = vadd.f32 %v1869, %v264
    %v1878 = vadd.f32 %v1870, %v264
    %v1879 = vadd.f32 %v1871, %v264
    %v1880 = vadd.f32 %v1872, %v264
    %v1881 = vsel %vm1857, %v1873, %v1849
    %v1882 = vsel %vm1858, %v1874, %v1850
    %v1883 = vsel %vm1859, %v1875, %v1851
    %v1884 = vsel %vm1860, %v1876, %v1852
    %v1885 = vsel %vm1861, %v1877, %v1853
    %v1886 = vsel %vm1862, %v1878, %v1854
    %v1887 = vsel %vm1863, %v1879, %v1855
    %v1888 = vsel %vm1864, %v1880, %v1856
    %vm1889 = vcmp.ge.f32.partialorder %v1833, -1.5
    %vm1890 = vcmp.ge.f32.partialorder %v1834, -1.5
    %vm1891 = vcmp.ge.f32.partialorder %v1835, -1.5
    %vm1892 = vcmp.ge.f32.partialorder %v1836, -1.5
    %vm1893 = vcmp.ge.f32.partialorder %v1837, -1.5
    %vm1894 = vcmp.ge.f32.partialorder %v1838, -1.5
    %vm1895 = vcmp.ge.f32.partialorder %v1839, -1.5
    %vm1896 = vcmp.ge.f32.partialorder %v1840, -1.5
    %v1897 = vmul.f32 %v290, %v1833
    %v1898 = vmul.f32 %v290, %v1834
    %v1899 = vmul.f32 %v290, %v1835
    %v1900 = vmul.f32 %v290, %v1836
    %v1901 = vmul.f32 %v290, %v1837
    %v1902 = vmul.f32 %v290, %v1838
    %v1903 = vmul.f32 %v290, %v1839
    %v1904 = vmul.f32 %v290, %v1840
    %v1905 = vadd.f32 %v1897, %v300
    %v1906 = vadd.f32 %v1898, %v300
    %v1907 = vadd.f32 %v1899, %v300
    %v1908 = vadd.f32 %v1900, %v300
    %v1909 = vadd.f32 %v1901, %v300
    %v1910 = vadd.f32 %v1902, %v300
    %v1911 = vadd.f32 %v1903, %v300
    %v1912 = vadd.f32 %v1904, %v300
    %v1913 = vsel %vm1889, %v1905, %v1881
    %v1914 = vsel %vm1890, %v1906, %v1882
    %v1915 = vsel %vm1891, %v1907, %v1883
    %v1916 = vsel %vm1892, %v1908, %v1884
    %v1917 = vsel %vm1893, %v1909, %v1885
    %v1918 = vsel %vm1894, %v1910, %v1886
    %v1919 = vsel %vm1895, %v1911, %v1887
    %v1920 = vsel %vm1896, %v1912, %v1888
    %vm1921 = vcmp.ge.f32.partialorder %v1833, -0.75
    %vm1922 = vcmp.ge.f32.partialorder %v1834, -0.75
    %vm1923 = vcmp.ge.f32.partialorder %v1835, -0.75
    %vm1924 = vcmp.ge.f32.partialorder %v1836, -0.75
    %vm1925 = vcmp.ge.f32.partialorder %v1837, -0.75
    %vm1926 = vcmp.ge.f32.partialorder %v1838, -0.75
    %vm1927 = vcmp.ge.f32.partialorder %v1839, -0.75
    %vm1928 = vcmp.ge.f32.partialorder %v1840, -0.75
    %v1929 = vmul.f32 %v326, %v1833
    %v1930 = vmul.f32 %v326, %v1834
    %v1931 = vmul.f32 %v326, %v1835
    %v1932 = vmul.f32 %v326, %v1836
    %v1933 = vmul.f32 %v326, %v1837
    %v1934 = vmul.f32 %v326, %v1838
    %v1935 = vmul.f32 %v326, %v1839
    %v1936 = vmul.f32 %v326, %v1840
    %v1937 = vadd.f32 %v1929, %v336
    %v1938 = vadd.f32 %v1930, %v336
    %v1939 = vadd.f32 %v1931, %v336
    %v1940 = vadd.f32 %v1932, %v336
    %v1941 = vadd.f32 %v1933, %v336
    %v1942 = vadd.f32 %v1934, %v336
    %v1943 = vadd.f32 %v1935, %v336
    %v1944 = vadd.f32 %v1936, %v336
    %v1945 = vsel %vm1921, %v1937, %v1913
    %v1946 = vsel %vm1922, %v1938, %v1914
    %v1947 = vsel %vm1923, %v1939, %v1915
    %v1948 = vsel %vm1924, %v1940, %v1916
    %v1949 = vsel %vm1925, %v1941, %v1917
    %v1950 = vsel %vm1926, %v1942, %v1918
    %v1951 = vsel %vm1927, %v1943, %v1919
    %v1952 = vsel %vm1928, %v1944, %v1920
    %vm1953 = vcmp.ge.f32.partialorder %v1833, 0.0
    %vm1954 = vcmp.ge.f32.partialorder %v1834, 0.0
    %vm1955 = vcmp.ge.f32.partialorder %v1835, 0.0
    %vm1956 = vcmp.ge.f32.partialorder %v1836, 0.0
    %vm1957 = vcmp.ge.f32.partialorder %v1837, 0.0
    %vm1958 = vcmp.ge.f32.partialorder %v1838, 0.0
    %vm1959 = vcmp.ge.f32.partialorder %v1839, 0.0
    %vm1960 = vcmp.ge.f32.partialorder %v1840, 0.0
    %v1961 = vmul.f32 %v362, %v1833
    %v1962 = vmul.f32 %v362, %v1834
    %v1963 = vmul.f32 %v362, %v1835
    %v1964 = vmul.f32 %v362, %v1836
    %v1965 = vmul.f32 %v362, %v1837
    %v1966 = vmul.f32 %v362, %v1838
    %v1967 = vmul.f32 %v362, %v1839
    %v1968 = vmul.f32 %v362, %v1840
    %v1969 = vadd.f32 %v1961, %v372
    %v1970 = vadd.f32 %v1962, %v372
    %v1971 = vadd.f32 %v1963, %v372
    %v1972 = vadd.f32 %v1964, %v372
    %v1973 = vadd.f32 %v1965, %v372
    %v1974 = vadd.f32 %v1966, %v372
    %v1975 = vadd.f32 %v1967, %v372
    %v1976 = vadd.f32 %v1968, %v372
    %v1977 = vsel %vm1953, %v1969, %v1945
    %v1978 = vsel %vm1954, %v1970, %v1946
    %v1979 = vsel %vm1955, %v1971, %v1947
    %v1980 = vsel %vm1956, %v1972, %v1948
    %v1981 = vsel %vm1957, %v1973, %v1949
    %v1982 = vsel %vm1958, %v1974, %v1950
    %v1983 = vsel %vm1959, %v1975, %v1951
    %v1984 = vsel %vm1960, %v1976, %v1952
    %vm1985 = vcmp.ge.f32.partialorder %v1833, 0.75
    %vm1986 = vcmp.ge.f32.partialorder %v1834, 0.75
    %vm1987 = vcmp.ge.f32.partialorder %v1835, 0.75
    %vm1988 = vcmp.ge.f32.partialorder %v1836, 0.75
    %vm1989 = vcmp.ge.f32.partialorder %v1837, 0.75
    %vm1990 = vcmp.ge.f32.partialorder %v1838, 0.75
    %vm1991 = vcmp.ge.f32.partialorder %v1839, 0.75
    %vm1992 = vcmp.ge.f32.partialorder %v1840, 0.75
    %v1993 = vmul.f32 %v398, %v1833
    %v1994 = vmul.f32 %v398, %v1834
    %v1995 = vmul.f32 %v398, %v1835
    %v1996 = vmul.f32 %v398, %v1836
    %v1997 = vmul.f32 %v398, %v1837
    %v1998 = vmul.f32 %v398, %v1838
    %v1999 = vmul.f32 %v398, %v1839
    %v2000 = vmul.f32 %v398, %v1840
    %v2001 = vadd.f32 %v1993, %v408
    %v2002 = vadd.f32 %v1994, %v408
    %v2003 = vadd.f32 %v1995, %v408
    %v2004 = vadd.f32 %v1996, %v408
    %v2005 = vadd.f32 %v1997, %v408
    %v2006 = vadd.f32 %v1998, %v408
    %v2007 = vadd.f32 %v1999, %v408
    %v2008 = vadd.f32 %v2000, %v408
    %v2009 = vsel %vm1985, %v2001, %v1977
    %v2010 = vsel %vm1986, %v2002, %v1978
    %v2011 = vsel %vm1987, %v2003, %v1979
    %v2012 = vsel %vm1988, %v2004, %v1980
    %v2013 = vsel %vm1989, %v2005, %v1981
    %v2014 = vsel %vm1990, %v2006, %v1982
    %v2015 = vsel %vm1991, %v2007, %v1983
    %v2016 = vsel %vm1992, %v2008, %v1984
    %vm2017 = vcmp.ge.f32.partialorder %v1833, 1.5
    %vm2018 = vcmp.ge.f32.partialorder %v1834, 1.5
    %vm2019 = vcmp.ge.f32.partialorder %v1835, 1.5
    %vm2020 = vcmp.ge.f32.partialorder %v1836, 1.5
    %vm2021 = vcmp.ge.f32.partialorder %v1837, 1.5
    %vm2022 = vcmp.ge.f32.partialorder %v1838, 1.5
    %vm2023 = vcmp.ge.f32.partialorder %v1839, 1.5
    %vm2024 = vcmp.ge.f32.partialorder %v1840, 1.5
    %v2025 = vmul.f32 %v434, %v1833
    %v2026 = vmul.f32 %v434, %v1834
    %v2027 = vmul.f32 %v434, %v1835
    %v2028 = vmul.f32 %v434, %v1836
    %v2029 = vmul.f32 %v434, %v1837
    %v2030 = vmul.f32 %v434, %v1838
    %v2031 = vmul.f32 %v434, %v1839
    %v2032 = vmul.f32 %v434, %v1840
    %v2033 = vadd.f32 %v2025, %v444
    %v2034 = vadd.f32 %v2026, %v444
    %v2035 = vadd.f32 %v2027, %v444
    %v2036 = vadd.f32 %v2028, %v444
    %v2037 = vadd.f32 %v2029, %v444
    %v2038 = vadd.f32 %v2030, %v444
    %v2039 = vadd.f32 %v2031, %v444
    %v2040 = vadd.f32 %v2032, %v444
    %v2041 = vsel %vm2017, %v2033, %v2009
    %v2042 = vsel %vm2018, %v2034, %v2010
    %v2043 = vsel %vm2019, %v2035, %v2011
    %v2044 = vsel %vm2020, %v2036, %v2012
    %v2045 = vsel %vm2021, %v2037, %v2013
    %v2046 = vsel %vm2022, %v2038, %v2014
    %v2047 = vsel %vm2023, %v2039, %v2015
    %v2048 = vsel %vm2024, %v2040, %v2016
    %vm2049 = vcmp.ge.f32.partialorder %v1833, 2.25
    %vm2050 = vcmp.ge.f32.partialorder %v1834, 2.25
    %vm2051 = vcmp.ge.f32.partialorder %v1835, 2.25
    %vm2052 = vcmp.ge.f32.partialorder %v1836, 2.25
    %vm2053 = vcmp.ge.f32.partialorder %v1837, 2.25
    %vm2054 = vcmp.ge.f32.partialorder %v1838, 2.25
    %vm2055 = vcmp.ge.f32.partialorder %v1839, 2.25
    %vm2056 = vcmp.ge.f32.partialorder %v1840, 2.25
    %v2057 = vmul.f32 %v470, %v1833
    %v2058 = vmul.f32 %v470, %v1834
    %v2059 = vmul.f32 %v470, %v1835
    %v2060 = vmul.f32 %v470, %v1836
    %v2061 = vmul.f32 %v470, %v1837
    %v2062 = vmul.f32 %v470, %v1838
    %v2063 = vmul.f32 %v470, %v1839
    %v2064 = vmul.f32 %v470, %v1840
    %v2065 = vadd.f32 %v2057, %v480
    %v2066 = vadd.f32 %v2058, %v480
    %v2067 = vadd.f32 %v2059, %v480
    %v2068 = vadd.f32 %v2060, %v480
    %v2069 = vadd.f32 %v2061, %v480
    %v2070 = vadd.f32 %v2062, %v480
    %v2071 = vadd.f32 %v2063, %v480
    %v2072 = vadd.f32 %v2064, %v480
    %v2073 = vsel %vm2049, %v2065, %v2041
    %v2074 = vsel %vm2050, %v2066, %v2042
    %v2075 = vsel %vm2051, %v2067, %v2043
    %v2076 = vsel %vm2052, %v2068, %v2044
    %v2077 = vsel %vm2053, %v2069, %v2045
    %v2078 = vsel %vm2054, %v2070, %v2046
    %v2079 = vsel %vm2055, %v2071, %v2047
    %v2080 = vsel %vm2056, %v2072, %v2048
    %v2081 = vadd.f32 %v1833, %v2073
    %v2082 = vadd.f32 %v1834, %v2074
    %v2083 = vadd.f32 %v1835, %v2075
    %v2084 = vadd.f32 %v1836, %v2076
    %v2085 = vadd.f32 %v1837, %v2077
    %v2086 = vadd.f32 %v1838, %v2078
    %v2087 = vadd.f32 %v1839, %v2079
    %v2088 = vadd.f32 %v1840, %v2080
    %v2089 = vmax.f32 %v2081, -3.0
    %v2090 = vmax.f32 %v2082, -3.0
    %v2091 = vmax.f32 %v2083, -3.0
    %v2092 = vmax.f32 %v2084, -3.0
    %v2093 = vmax.f32 %v2085, -3.0
    %v2094 = vmax.f32 %v2086, -3.0
    %v2095 = vmax.f32 %v2087, -3.0
    %v2096 = vmax.f32 %v2088, -3.0
    %v2097 = vmin.f32 %v2089, 3.0
    %v2098 = vmin.f32 %v2090, 3.0
    %v2099 = vmin.f32 %v2091, 3.0
    %v2100 = vmin.f32 %v2092, 3.0
    %v2101 = vmin.f32 %v2093, 3.0
    %v2102 = vmin.f32 %v2094, 3.0
    %v2103 = vmin.f32 %v2095, 3.0
    %v2104 = vmin.f32 %v2096, 3.0
    %v2105 = vmul.f32 %v226, %v2097
    %v2106 = vmul.f32 %v226, %v2098
    %v2107 = vmul.f32 %v226, %v2099
    %v2108 = vmul.f32 %v226, %v2100
    %v2109 = vmul.f32 %v226, %v2101
    %v2110 = vmul.f32 %v226, %v2102
    %v2111 = vmul.f32 %v226, %v2103
    %v2112 = vmul.f32 %v226, %v2104
    %v2113 = vadd.f32 %v2105, %v236
    %v2114 = vadd.f32 %v2106, %v236
    %v2115 = vadd.f32 %v2107, %v236
    %v2116 = vadd.f32 %v2108, %v236
    %v2117 = vadd.f32 %v2109, %v236
    %v2118 = vadd.f32 %v2110, %v236
    %v2119 = vadd.f32 %v2111, %v236
    %v2120 = vadd.f32 %v2112, %v236
    %vm2121 = vcmp.ge.f32.partialorder %v2097, -2.25
    %vm2122 = vcmp.ge.f32.partialorder %v2098, -2.25
    %vm2123 = vcmp.ge.f32.partialorder %v2099, -2.25
    %vm2124 = vcmp.ge.f32.partialorder %v2100, -2.25
    %vm2125 = vcmp.ge.f32.partialorder %v2101, -2.25
    %vm2126 = vcmp.ge.f32.partialorder %v2102, -2.25
    %vm2127 = vcmp.ge.f32.partialorder %v2103, -2.25
    %vm2128 = vcmp.ge.f32.partialorder %v2104, -2.25
    %v2129 = vmul.f32 %v254, %v2097
    %v2130 = vmul.f32 %v254, %v2098
    %v2131 = vmul.f32 %v254, %v2099
    %v2132 = vmul.f32 %v254, %v2100
    %v2133 = vmul.f32 %v254, %v2101
    %v2134 = vmul.f32 %v254, %v2102
    %v2135 = vmul.f32 %v254, %v2103
    %v2136 = vmul.f32 %v254, %v2104
    %v2137 = vadd.f32 %v2129, %v264
    %v2138 = vadd.f32 %v2130, %v264
    %v2139 = vadd.f32 %v2131, %v264
    %v2140 = vadd.f32 %v2132, %v264
    %v2141 = vadd.f32 %v2133, %v264
    %v2142 = vadd.f32 %v2134, %v264
    %v2143 = vadd.f32 %v2135, %v264
    %v2144 = vadd.f32 %v2136, %v264
    %v2145 = vsel %vm2121, %v2137, %v2113
    %v2146 = vsel %vm2122, %v2138, %v2114
    %v2147 = vsel %vm2123, %v2139, %v2115
    %v2148 = vsel %vm2124, %v2140, %v2116
    %v2149 = vsel %vm2125, %v2141, %v2117
    %v2150 = vsel %vm2126, %v2142, %v2118
    %v2151 = vsel %vm2127, %v2143, %v2119
    %v2152 = vsel %vm2128, %v2144, %v2120
    %vm2153 = vcmp.ge.f32.partialorder %v2097, -1.5
    %vm2154 = vcmp.ge.f32.partialorder %v2098, -1.5
    %vm2155 = vcmp.ge.f32.partialorder %v2099, -1.5
    %vm2156 = vcmp.ge.f32.partialorder %v2100, -1.5
    %vm2157 = vcmp.ge.f32.partialorder %v2101, -1.5
    %vm2158 = vcmp.ge.f32.partialorder %v2102, -1.5
    %vm2159 = vcmp.ge.f32.partialorder %v2103, -1.5
    %vm2160 = vcmp.ge.f32.partialorder %v2104, -1.5
    %v2161 = vmul.f32 %v290, %v2097
    %v2162 = vmul.f32 %v290, %v2098
    %v2163 = vmul.f32 %v290, %v2099
    %v2164 = vmul.f32 %v290, %v2100
    %v2165 = vmul.f32 %v290, %v2101
    %v2166 = vmul.f32 %v290, %v2102
    %v2167 = vmul.f32 %v290, %v2103
    %v2168 = vmul.f32 %v290, %v2104
    %v2169 = vadd.f32 %v2161, %v300
    %v2170 = vadd.f32 %v2162, %v300
    %v2171 = vadd.f32 %v2163, %v300
    %v2172 = vadd.f32 %v2164, %v300
    %v2173 = vadd.f32 %v2165, %v300
    %v2174 = vadd.f32 %v2166, %v300
    %v2175 = vadd.f32 %v2167, %v300
    %v2176 = vadd.f32 %v2168, %v300
    %v2177 = vsel %vm2153, %v2169, %v2145
    %v2178 = vsel %vm2154, %v2170, %v2146
    %v2179 = vsel %vm2155, %v2171, %v2147
    %v2180 = vsel %vm2156, %v2172, %v2148
    %v2181 = vsel %vm2157, %v2173, %v2149
    %v2182 = vsel %vm2158, %v2174, %v2150
    %v2183 = vsel %vm2159, %v2175, %v2151
    %v2184 = vsel %vm2160, %v2176, %v2152
    %vm2185 = vcmp.ge.f32.partialorder %v2097, -0.75
    %vm2186 = vcmp.ge.f32.partialorder %v2098, -0.75
    %vm2187 = vcmp.ge.f32.partialorder %v2099, -0.75
    %vm2188 = vcmp.ge.f32.partialorder %v2100, -0.75
    %vm2189 = vcmp.ge.f32.partialorder %v2101, -0.75
    %vm2190 = vcmp.ge.f32.partialorder %v2102, -0.75
    %vm2191 = vcmp.ge.f32.partialorder %v2103, -0.75
    %vm2192 = vcmp.ge.f32.partialorder %v2104, -0.75
    %v2193 = vmul.f32 %v326, %v2097
    %v2194 = vmul.f32 %v326, %v2098
    %v2195 = vmul.f32 %v326, %v2099
    %v2196 = vmul.f32 %v326, %v2100
    %v2197 = vmul.f32 %v326, %v2101
    %v2198 = vmul.f32 %v326, %v2102
    %v2199 = vmul.f32 %v326, %v2103
    %v2200 = vmul.f32 %v326, %v2104
    %v2201 = vadd.f32 %v2193, %v336
    %v2202 = vadd.f32 %v2194, %v336
    %v2203 = vadd.f32 %v2195, %v336
    %v2204 = vadd.f32 %v2196, %v336
    %v2205 = vadd.f32 %v2197, %v336
    %v2206 = vadd.f32 %v2198, %v336
    %v2207 = vadd.f32 %v2199, %v336
    %v2208 = vadd.f32 %v2200, %v336
    %v2209 = vsel %vm2185, %v2201, %v2177
    %v2210 = vsel %vm2186, %v2202, %v2178
    %v2211 = vsel %vm2187, %v2203, %v2179
    %v2212 = vsel %vm2188, %v2204, %v2180
    %v2213 = vsel %vm2189, %v2205, %v2181
    %v2214 = vsel %vm2190, %v2206, %v2182
    %v2215 = vsel %vm2191, %v2207, %v2183
    %v2216 = vsel %vm2192, %v2208, %v2184
    %vm2217 = vcmp.ge.f32.partialorder %v2097, 0.0
    %vm2218 = vcmp.ge.f32.partialorder %v2098, 0.0
    %vm2219 = vcmp.ge.f32.partialorder %v2099, 0.0
    %vm2220 = vcmp.ge.f32.partialorder %v2100, 0.0
    %vm2221 = vcmp.ge.f32.partialorder %v2101, 0.0
    %vm2222 = vcmp.ge.f32.partialorder %v2102, 0.0
    %vm2223 = vcmp.ge.f32.partialorder %v2103, 0.0
    %vm2224 = vcmp.ge.f32.partialorder %v2104, 0.0
    %v2225 = vmul.f32 %v362, %v2097
    %v2226 = vmul.f32 %v362, %v2098
    %v2227 = vmul.f32 %v362, %v2099
    %v2228 = vmul.f32 %v362, %v2100
    %v2229 = vmul.f32 %v362, %v2101
    %v2230 = vmul.f32 %v362, %v2102
    %v2231 = vmul.f32 %v362, %v2103
    %v2232 = vmul.f32 %v362, %v2104
    %v2233 = vadd.f32 %v2225, %v372
    %v2234 = vadd.f32 %v2226, %v372
    %v2235 = vadd.f32 %v2227, %v372
    %v2236 = vadd.f32 %v2228, %v372
    %v2237 = vadd.f32 %v2229, %v372
    %v2238 = vadd.f32 %v2230, %v372
    %v2239 = vadd.f32 %v2231, %v372
    %v2240 = vadd.f32 %v2232, %v372
    %v2241 = vsel %vm2217, %v2233, %v2209
    %v2242 = vsel %vm2218, %v2234, %v2210
    %v2243 = vsel %vm2219, %v2235, %v2211
    %v2244 = vsel %vm2220, %v2236, %v2212
    %v2245 = vsel %vm2221, %v2237, %v2213
    %v2246 = vsel %vm2222, %v2238, %v2214
    %v2247 = vsel %vm2223, %v2239, %v2215
    %v2248 = vsel %vm2224, %v2240, %v2216
    %vm2249 = vcmp.ge.f32.partialorder %v2097, 0.75
    %vm2250 = vcmp.ge.f32.partialorder %v2098, 0.75
    %vm2251 = vcmp.ge.f32.partialorder %v2099, 0.75
    %vm2252 = vcmp.ge.f32.partialorder %v2100, 0.75
    %vm2253 = vcmp.ge.f32.partialorder %v2101, 0.75
    %vm2254 = vcmp.ge.f32.partialorder %v2102, 0.75
    %vm2255 = vcmp.ge.f32.partialorder %v2103, 0.75
    %vm2256 = vcmp.ge.f32.partialorder %v2104, 0.75
    %v2257 = vmul.f32 %v398, %v2097
    %v2258 = vmul.f32 %v398, %v2098
    %v2259 = vmul.f32 %v398, %v2099
    %v2260 = vmul.f32 %v398, %v2100
    %v2261 = vmul.f32 %v398, %v2101
    %v2262 = vmul.f32 %v398, %v2102
    %v2263 = vmul.f32 %v398, %v2103
    %v2264 = vmul.f32 %v398, %v2104
    %v2265 = vadd.f32 %v2257, %v408
    %v2266 = vadd.f32 %v2258, %v408
    %v2267 = vadd.f32 %v2259, %v408
    %v2268 = vadd.f32 %v2260, %v408
    %v2269 = vadd.f32 %v2261, %v408
    %v2270 = vadd.f32 %v2262, %v408
    %v2271 = vadd.f32 %v2263, %v408
    %v2272 = vadd.f32 %v2264, %v408
    %v2273 = vsel %vm2249, %v2265, %v2241
    %v2274 = vsel %vm2250, %v2266, %v2242
    %v2275 = vsel %vm2251, %v2267, %v2243
    %v2276 = vsel %vm2252, %v2268, %v2244
    %v2277 = vsel %vm2253, %v2269, %v2245
    %v2278 = vsel %vm2254, %v2270, %v2246
    %v2279 = vsel %vm2255, %v2271, %v2247
    %v2280 = vsel %vm2256, %v2272, %v2248
    %vm2281 = vcmp.ge.f32.partialorder %v2097, 1.5
    %vm2282 = vcmp.ge.f32.partialorder %v2098, 1.5
    %vm2283 = vcmp.ge.f32.partialorder %v2099, 1.5
    %vm2284 = vcmp.ge.f32.partialorder %v2100, 1.5
    %vm2285 = vcmp.ge.f32.partialorder %v2101, 1.5
    %vm2286 = vcmp.ge.f32.partialorder %v2102, 1.5
    %vm2287 = vcmp.ge.f32.partialorder %v2103, 1.5
    %vm2288 = vcmp.ge.f32.partialorder %v2104, 1.5
    %v2289 = vmul.f32 %v434, %v2097
    %v2290 = vmul.f32 %v434, %v2098
    %v2291 = vmul.f32 %v434, %v2099
    %v2292 = vmul.f32 %v434, %v2100
    %v2293 = vmul.f32 %v434, %v2101
    %v2294 = vmul.f32 %v434, %v2102
    %v2295 = vmul.f32 %v434, %v2103
    %v2296 = vmul.f32 %v434, %v2104
    %v2297 = vadd.f32 %v2289, %v444
    %v2298 = vadd.f32 %v2290, %v444
    %v2299 = vadd.f32 %v2291, %v444
    %v2300 = vadd.f32 %v2292, %v444
    %v2301 = vadd.f32 %v2293, %v444
    %v2302 = vadd.f32 %v2294, %v444
    %v2303 = vadd.f32 %v2295, %v444
    %v2304 = vadd.f32 %v2296, %v444
    %v2305 = vsel %vm2281, %v2297, %v2273
    %v2306 = vsel %vm2282, %v2298, %v2274
    %v2307 = vsel %vm2283, %v2299, %v2275
    %v2308 = vsel %vm2284, %v2300, %v2276
    %v2309 = vsel %vm2285, %v2301, %v2277
    %v2310 = vsel %vm2286, %v2302, %v2278
    %v2311 = vsel %vm2287, %v2303, %v2279
    %v2312 = vsel %vm2288, %v2304, %v2280
    %vm2313 = vcmp.ge.f32.partialorder %v2097, 2.25
    %vm2314 = vcmp.ge.f32.partialorder %v2098, 2.25
    %vm2315 = vcmp.ge.f32.partialorder %v2099, 2.25
    %vm2316 = vcmp.ge.f32.partialorder %v2100, 2.25
    %vm2317 = vcmp.ge.f32.partialorder %v2101, 2.25
    %vm2318 = vcmp.ge.f32.partialorder %v2102, 2.25
    %vm2319 = vcmp.ge.f32.partialorder %v2103, 2.25
    %vm2320 = vcmp.ge.f32.partialorder %v2104, 2.25
    %v2321 = vmul.f32 %v470, %v2097
    %v2322 = vmul.f32 %v470, %v2098
    %v2323 = vmul.f32 %v470, %v2099
    %v2324 = vmul.f32 %v470, %v2100
    %v2325 = vmul.f32 %v470, %v2101
    %v2326 = vmul.f32 %v470, %v2102
    %v2327 = vmul.f32 %v470, %v2103
    %v2328 = vmul.f32 %v470, %v2104
    %v2329 = vadd.f32 %v2321, %v480
    %v2330 = vadd.f32 %v2322, %v480
    %v2331 = vadd.f32 %v2323, %v480
    %v2332 = vadd.f32 %v2324, %v480
    %v2333 = vadd.f32 %v2325, %v480
    %v2334 = vadd.f32 %v2326, %v480
    %v2335 = vadd.f32 %v2327, %v480
    %v2336 = vadd.f32 %v2328, %v480
    %v2337 = vsel %vm2313, %v2329, %v2305
    %v2338 = vsel %vm2314, %v2330, %v2306
    %v2339 = vsel %vm2315, %v2331, %v2307
    %v2340 = vsel %vm2316, %v2332, %v2308
    %v2341 = vsel %vm2317, %v2333, %v2309
    %v2342 = vsel %vm2318, %v2334, %v2310
    %v2343 = vsel %vm2319, %v2335, %v2311
    %v2344 = vsel %vm2320, %v2336, %v2312
    %v2345 = vadd.f32 %v2097, %v2337
    %v2346 = vadd.f32 %v2098, %v2338
    %v2347 = vadd.f32 %v2099, %v2339
    %v2348 = vadd.f32 %v2100, %v2340
    %v2349 = vadd.f32 %v2101, %v2341
    %v2350 = vadd.f32 %v2102, %v2342
    %v2351 = vadd.f32 %v2103, %v2343
    %v2352 = vadd.f32 %v2104, %v2344
    %v2353 = vmax.f32 %v2345, -3.0
    %v2354 = vmax.f32 %v2346, -3.0
    %v2355 = vmax.f32 %v2347, -3.0
    %v2356 = vmax.f32 %v2348, -3.0
    %v2357 = vmax.f32 %v2349, -3.0
    %v2358 = vmax.f32 %v2350, -3.0
    %v2359 = vmax.f32 %v2351, -3.0
    %v2360 = vmax.f32 %v2352, -3.0
    %v2361 = vmin.f32 %v2353, 3.0
    %v2362 = vmin.f32 %v2354, 3.0
    %v2363 = vmin.f32 %v2355, 3.0
    %v2364 = vmin.f32 %v2356, 3.0
    %v2365 = vmin.f32 %v2357, 3.0
    %v2366 = vmin.f32 %v2358, 3.0
    %v2367 = vmin.f32 %v2359, 3.0
    %v2368 = vmin.f32 %v2360, 3.0
    %vm2369 = vcmp.ge.f32.partialorder %v201, -3.0
    %vm2370 = vcmp.ge.f32.partialorder %v202, -3.0
    %vm2371 = vcmp.ge.f32.partialorder %v203, -3.0
    %vm2372 = vcmp.ge.f32.partialorder %v204, -3.0
    %vm2373 = vcmp.ge.f32.partialorder %v205, -3.0
    %vm2374 = vcmp.ge.f32.partialorder %v206, -3.0
    %vm2375 = vcmp.ge.f32.partialorder %v207, -3.0
    %vm2376 = vcmp.ge.f32.partialorder %v208, -3.0
    %vm2377 = vcmp.le.f32.partialorder %v201, 3.0
    %vm2378 = vcmp.le.f32.partialorder %v202, 3.0
    %vm2379 = vcmp.le.f32.partialorder %v203, 3.0
    %vm2380 = vcmp.le.f32.partialorder %v204, 3.0
    %vm2381 = vcmp.le.f32.partialorder %v205, 3.0
    %vm2382 = vcmp.le.f32.partialorder %v206, 3.0
    %vm2383 = vcmp.le.f32.partialorder %v207, 3.0
    %vm2384 = vcmp.le.f32.partialorder %v208, 3.0
    %vm2385 = vmand %vm2369, %vm2377
    %vm2386 = vmand %vm2370, %vm2378
    %vm2387 = vmand %vm2371, %vm2379
    %vm2388 = vmand %vm2372, %vm2380
    %vm2389 = vmand %vm2373, %vm2381
    %vm2390 = vmand %vm2374, %vm2382
    %vm2391 = vmand %vm2375, %vm2383
    %vm2392 = vmand %vm2376, %vm2384
    %v2393 = vsel %vm2385, %v2361, %v201
    %v2394 = vsel %vm2386, %v2362, %v202
    %v2395 = vsel %vm2387, %v2363, %v203
    %v2396 = vsel %vm2388, %v2364, %v204
    %v2397 = vsel %vm2389, %v2365, %v205
    %v2398 = vsel %vm2390, %v2366, %v206
    %v2399 = vsel %vm2391, %v2367, %v207
    %v2400 = vsel %vm2392, %v2368, %v208
    %v2401 = vld [vmem:[%s8] sm:$0xff]
    %v2402 = vld [vmem:[%s8 + $0x8] sm:$0xff]
    %v2403 = vld [vmem:[%s8 + $0x10] sm:$0xff]
    %v2404 = vld [vmem:[%s8 + $0x18] sm:$0xff]
    %v2405 = vld [vmem:[%s9] sm:$0xff]
    %v2406 = vld [vmem:[%s9 + $0x8] sm:$0xff]
    %v2407 = vld [vmem:[%s9 + $0x10] sm:$0xff]
    %v2408 = vld [vmem:[%s9 + $0x18] sm:$0xff]
    %2410 = vset.pattern.permute.xlu0 0
    %2411 = vperm.xlu0 %2410, %v2405
    %v2412 = vpop.permute.xlu0 %2411
    %2415 = vset.pattern.permute.xlu0 0
    %2416 = vperm.xlu0 %2415, %v2406
    %v2417 = vpop.permute.xlu0 %2416
    %2420 = vset.pattern.permute.xlu0 0
    %2421 = vperm.xlu0 %2420, %v2407
    %v2422 = vpop.permute.xlu0 %2421
    %2425 = vset.pattern.permute.xlu0 0
    %2426 = vperm.xlu0 %2425, %v2408
    %v2427 = vpop.permute.xlu0 %2426
    %vm2429 = vcmask 261120
    %v2431 = vsel %vm2429, %v2401, 0
    %v2434 = vsel %vm2429, %v2402, 0
    %v2437 = vsel %vm2429, %v2403, 0
    %v2440 = vsel %vm2429, %v2404, 0
    %2442 = vmatprep.subr.mxu0 %v2394
    %2443 = vmatpush1.msra.mxu0 %v2393
    %2444 = vmatprep.subr.mxu0 %v2396
    %2445 = vmatpush1.msra.mxu0 %v2395
    %2446 = vmatprep.subr.mxu0 %v2398
    %2447 = vmatpush1.msra.mxu0 %v2397
    %2448 = vmatprep.subr.mxu0 %v2400
    %2449 = vmatpush1.msra.mxu0 %v2399
    %2450 = vmatprep.subr.mxu0 0.0
    %2451 = vmatpush1.msra.mxu0 0.0
    %2452 = vmatprep.subr.mxu0 0.0
    %2453 = vmatpush1.msra.mxu0 0.0
    %2454 = vmatprep.subr.mxu0 0.0
    %2455 = vmatpush1.msra.mxu0 0.0
    %2456 = vmatprep.subr.mxu0 0.0
    %2457 = vmatpush1.msra.mxu0 0.0
    %2458 = vmatprep.subr.mxu0 0.0
    %2459 = vmatpush1.msra.mxu0 0.0
    %2460 = vmatprep.subr.mxu0 0.0
    %2461 = vmatpush1.msra.mxu0 0.0
    %2462 = vmatprep.subr.mxu0 0.0
    %2463 = vmatpush1.msra.mxu0 0.0
    %2464 = vmatprep.subr.mxu0 0.0
    %2465 = vmatpush1.msra.mxu0 0.0
    %2466 = vmatprep.subr.mxu0 0.0
    %2467 = vmatpush1.msra.mxu0 0.0
    %2468 = vmatprep.subr.mxu0 0.0
    %2469 = vmatpush1.msra.mxu0 0.0
    %2470 = vmatprep.subr.mxu0 0.0
    %2471 = vmatpush1.msra.mxu0 0.0
    %2472 = vmatprep.subr.mxu0 0.0
    %2473 = vmatpush1.msra.mxu0 0.0
    %2474 = vmatprep.subr.mxu0 0.0
    %2475 = vmatpush1.msra.mxu0 0.0
    %2476 = vmatprep.subr.mxu0 0.0
    %2477 = vmatpush1.msra.mxu0 0.0
    %2478 = vmatprep.subr.mxu0 0.0
    %2479 = vmatpush1.msra.mxu0 0.0
    %2480 = vmatprep.subr.mxu0 0.0
    %2481 = vmatpush1.msra.mxu0 0.0
    %2482 = vmatprep.subr.mxu0 0.0
    %2483 = vmatpush1.msra.mxu0 0.0
    %2484 = vmatprep.subr.mxu0 0.0
    %2485 = vmatpush1.msra.mxu0 0.0
    %2486 = vmatprep.subr.mxu0 0.0
    %2487 = vmatpush1.msra.mxu0 0.0
    %2488 = vmatprep.subr.mxu0 0.0
    %2489 = vmatpush1.msra.mxu0 0.0
    %2490 = vmatprep.subr.mxu0 0.0
    %2491 = vmatpush1.msra.mxu0 0.0
    %2492 = vmatprep.subr.mxu0 0.0
    %2493 = vmatpush1.msra.mxu0 0.0
    %2494 = vmatprep.subr.mxu0 0.0
    %2495 = vmatpush1.msra.mxu0 0.0
    %2496 = vmatprep.subr.mxu0 0.0
    %2497 = vmatpush1.msra.mxu0 0.0
    %2498 = vmatprep.subr.mxu0 0.0
    %2499 = vmatpush1.msra.mxu0 0.0
    %2500 = vmatprep.subr.mxu0 0.0
    %2501 = vmatpush1.msra.mxu0 0.0
    %2502 = vmatprep.subr.mxu0 0.0
    %2503 = vmatpush1.msra.mxu0 0.0
    %2504 = vmatprep.subr.mxu0 0.0
    %2505 = vmatpush1.msra.mxu0 0.0
    %2506 = vmatprep.mubr.f32.mxu0 0.0
    %2507 = vmatmul.mubr.f32.gmra.mrb[0].mxu0 %v2431
    %v2508 = vpop.f32.mrb[0].mxu0
    %v2509 = vadd.f32 %v2412, %v2508
    %v2510 = vpop.f32.mrb[0].mxu0
    %v2511 = vadd.f32 %v2412, %v2510
    %2512 = vmatprep.mubr.f32.mxu0 0.0
    %2513 = vmatmul.mubr.f32.gmra.mrb[0].mxu0 %v2434
    %v2514 = vpop.f32.mrb[0].mxu0
    %v2515 = vadd.f32 %v2417, %v2514
    %v2516 = vpop.f32.mrb[0].mxu0
    %v2517 = vadd.f32 %v2417, %v2516
    %2518 = vmatprep.mubr.f32.mxu0 0.0
    %2519 = vmatmul.mubr.f32.gmra.mrb[0].mxu0 %v2437
    %v2520 = vpop.f32.mrb[0].mxu0
    %v2521 = vadd.f32 %v2422, %v2520
    %v2522 = vpop.f32.mrb[0].mxu0
    %v2523 = vadd.f32 %v2422, %v2522
    %2524 = vmatprep.mubr.f32.mxu0 0.0
    %2525 = vmatmul.mubr.f32.gmra.mrb[0].mxu0 %v2440
    %v2526 = vpop.f32.mrb[0].mxu0
    %v2527 = vadd.f32 %v2427, %v2526
    %v2528 = vpop.f32.mrb[0].mxu0
    %v2529 = vadd.f32 %v2427, %v2528
    %2530 = vdwg.mxu0
    %v2531 = vmax.f32 %v2509, -3.0
    %v2532 = vmax.f32 %v2511, -3.0
    %v2533 = vmax.f32 %v2515, -3.0
    %v2534 = vmax.f32 %v2517, -3.0
    %v2535 = vmax.f32 %v2521, -3.0
    %v2536 = vmax.f32 %v2523, -3.0
    %v2537 = vmax.f32 %v2527, -3.0
    %v2538 = vmax.f32 %v2529, -3.0
    %v2539 = vmin.f32 %v2531, 3.0
    %v2540 = vmin.f32 %v2532, 3.0
    %v2541 = vmin.f32 %v2533, 3.0
    %v2542 = vmin.f32 %v2534, 3.0
    %v2543 = vmin.f32 %v2535, 3.0
    %v2544 = vmin.f32 %v2536, 3.0
    %v2545 = vmin.f32 %v2537, 3.0
    %v2546 = vmin.f32 %v2538, 3.0
    %s2547 = sld [smem:[#allocation8]]
    %v2548 = vstv %s2547
    %v2549 = vmul.f32 %v2548, %v2539
    %v2550 = vmul.f32 %v2548, %v2540
    %v2551 = vmul.f32 %v2548, %v2541
    %v2552 = vmul.f32 %v2548, %v2542
    %v2553 = vmul.f32 %v2548, %v2543
    %v2554 = vmul.f32 %v2548, %v2544
    %v2555 = vmul.f32 %v2548, %v2545
    %v2556 = vmul.f32 %v2548, %v2546
    %s2557 = sld [smem:[#allocation9]]
    %v2558 = vstv %s2557
    %v2559 = vadd.f32 %v2549, %v2558
    %v2560 = vadd.f32 %v2550, %v2558
    %v2561 = vadd.f32 %v2551, %v2558
    %v2562 = vadd.f32 %v2552, %v2558
    %v2563 = vadd.f32 %v2553, %v2558
    %v2564 = vadd.f32 %v2554, %v2558
    %v2565 = vadd.f32 %v2555, %v2558
    %v2566 = vadd.f32 %v2556, %v2558
    %vm2567 = vcmp.ge.f32.partialorder %v2539, -2.25
    %vm2568 = vcmp.ge.f32.partialorder %v2540, -2.25
    %vm2569 = vcmp.ge.f32.partialorder %v2541, -2.25
    %vm2570 = vcmp.ge.f32.partialorder %v2542, -2.25
    %vm2571 = vcmp.ge.f32.partialorder %v2543, -2.25
    %vm2572 = vcmp.ge.f32.partialorder %v2544, -2.25
    %vm2573 = vcmp.ge.f32.partialorder %v2545, -2.25
    %vm2574 = vcmp.ge.f32.partialorder %v2546, -2.25
    %s2575 = sld [smem:[#allocation8 + $0x1]]
    %v2576 = vstv %s2575
    %v2577 = vmul.f32 %v2576, %v2539
    %v2578 = vmul.f32 %v2576, %v2540
    %v2579 = vmul.f32 %v2576, %v2541
    %v2580 = vmul.f32 %v2576, %v2542
    %v2581 = vmul.f32 %v2576, %v2543
    %v2582 = vmul.f32 %v2576, %v2544
    %v2583 = vmul.f32 %v2576, %v2545
    %v2584 = vmul.f32 %v2576, %v2546
    %s2585 = sld [smem:[#allocation9 + $0x1]]
    %v2586 = vstv %s2585
    %v2587 = vadd.f32 %v2577, %v2586
    %v2588 = vadd.f32 %v2578, %v2586
    %v2589 = vadd.f32 %v2579, %v2586
    %v2590 = vadd.f32 %v2580, %v2586
    %v2591 = vadd.f32 %v2581, %v2586
    %v2592 = vadd.f32 %v2582, %v2586
    %v2593 = vadd.f32 %v2583, %v2586
    %v2594 = vadd.f32 %v2584, %v2586
    %v2595 = vsel %vm2567, %v2587, %v2559
    %v2596 = vsel %vm2568, %v2588, %v2560
    %v2597 = vsel %vm2569, %v2589, %v2561
    %v2598 = vsel %vm2570, %v2590, %v2562
    %v2599 = vsel %vm2571, %v2591, %v2563
    %v2600 = vsel %vm2572, %v2592, %v2564
    %v2601 = vsel %vm2573, %v2593, %v2565
    %v2602 = vsel %vm2574, %v2594, %v2566
    %vm2603 = vcmp.ge.f32.partialorder %v2539, -1.5
    %vm2604 = vcmp.ge.f32.partialorder %v2540, -1.5
    %vm2605 = vcmp.ge.f32.partialorder %v2541, -1.5
    %vm2606 = vcmp.ge.f32.partialorder %v2542, -1.5
    %vm2607 = vcmp.ge.f32.partialorder %v2543, -1.5
    %vm2608 = vcmp.ge.f32.partialorder %v2544, -1.5
    %vm2609 = vcmp.ge.f32.partialorder %v2545, -1.5
    %vm2610 = vcmp.ge.f32.partialorder %v2546, -1.5
    %s2611 = sld [smem:[#allocation8 + $0x2]]
    %v2612 = vstv %s2611
    %v2613 = vmul.f32 %v2612, %v2539
    %v2614 = vmul.f32 %v2612, %v2540
    %v2615 = vmul.f32 %v2612, %v2541
    %v2616 = vmul.f32 %v2612, %v2542
    %v2617 = vmul.f32 %v2612, %v2543
    %v2618 = vmul.f32 %v2612, %v2544
    %v2619 = vmul.f32 %v2612, %v2545
    %v2620 = vmul.f32 %v2612, %v2546
    %s2621 = sld [smem:[#allocation9 + $0x2]]
    %v2622 = vstv %s2621
    %v2623 = vadd.f32 %v2613, %v2622
    %v2624 = vadd.f32 %v2614, %v2622
    %v2625 = vadd.f32 %v2615, %v2622
    %v2626 = vadd.f32 %v2616, %v2622
    %v2627 = vadd.f32 %v2617, %v2622
    %v2628 = vadd.f32 %v2618, %v2622
    %v2629 = vadd.f32 %v2619, %v2622
    %v2630 = vadd.f32 %v2620, %v2622
    %v2631 = vsel %vm2603, %v2623, %v2595
    %v2632 = vsel %vm2604, %v2624, %v2596
    %v2633 = vsel %vm2605, %v2625, %v2597
    %v2634 = vsel %vm2606, %v2626, %v2598
    %v2635 = vsel %vm2607, %v2627, %v2599
    %v2636 = vsel %vm2608, %v2628, %v2600
    %v2637 = vsel %vm2609, %v2629, %v2601
    %v2638 = vsel %vm2610, %v2630, %v2602
    %vm2639 = vcmp.ge.f32.partialorder %v2539, -0.75
    %vm2640 = vcmp.ge.f32.partialorder %v2540, -0.75
    %vm2641 = vcmp.ge.f32.partialorder %v2541, -0.75
    %vm2642 = vcmp.ge.f32.partialorder %v2542, -0.75
    %vm2643 = vcmp.ge.f32.partialorder %v2543, -0.75
    %vm2644 = vcmp.ge.f32.partialorder %v2544, -0.75
    %vm2645 = vcmp.ge.f32.partialorder %v2545, -0.75
    %vm2646 = vcmp.ge.f32.partialorder %v2546, -0.75
    %s2647 = sld [smem:[#allocation8 + $0x3]]
    %v2648 = vstv %s2647
    %v2649 = vmul.f32 %v2648, %v2539
    %v2650 = vmul.f32 %v2648, %v2540
    %v2651 = vmul.f32 %v2648, %v2541
    %v2652 = vmul.f32 %v2648, %v2542
    %v2653 = vmul.f32 %v2648, %v2543
    %v2654 = vmul.f32 %v2648, %v2544
    %v2655 = vmul.f32 %v2648, %v2545
    %v2656 = vmul.f32 %v2648, %v2546
    %s2657 = sld [smem:[#allocation9 + $0x3]]
    %v2658 = vstv %s2657
    %v2659 = vadd.f32 %v2649, %v2658
    %v2660 = vadd.f32 %v2650, %v2658
    %v2661 = vadd.f32 %v2651, %v2658
    %v2662 = vadd.f32 %v2652, %v2658
    %v2663 = vadd.f32 %v2653, %v2658
    %v2664 = vadd.f32 %v2654, %v2658
    %v2665 = vadd.f32 %v2655, %v2658
    %v2666 = vadd.f32 %v2656, %v2658
    %v2667 = vsel %vm2639, %v2659, %v2631
    %v2668 = vsel %vm2640, %v2660, %v2632
    %v2669 = vsel %vm2641, %v2661, %v2633
    %v2670 = vsel %vm2642, %v2662, %v2634
    %v2671 = vsel %vm2643, %v2663, %v2635
    %v2672 = vsel %vm2644, %v2664, %v2636
    %v2673 = vsel %vm2645, %v2665, %v2637
    %v2674 = vsel %vm2646, %v2666, %v2638
    %vm2675 = vcmp.ge.f32.partialorder %v2539, 0.0
    %vm2676 = vcmp.ge.f32.partialorder %v2540, 0.0
    %vm2677 = vcmp.ge.f32.partialorder %v2541, 0.0
    %vm2678 = vcmp.ge.f32.partialorder %v2542, 0.0
    %vm2679 = vcmp.ge.f32.partialorder %v2543, 0.0
    %vm2680 = vcmp.ge.f32.partialorder %v2544, 0.0
    %vm2681 = vcmp.ge.f32.partialorder %v2545, 0.0
    %vm2682 = vcmp.ge.f32.partialorder %v2546, 0.0
    %s2683 = sld [smem:[#allocation8 + $0x4]]
    %v2684 = vstv %s2683
    %v2685 = vmul.f32 %v2684, %v2539
    %v2686 = vmul.f32 %v2684, %v2540
    %v2687 = vmul.f32 %v2684, %v2541
    %v2688 = vmul.f32 %v2684, %v2542
    %v2689 = vmul.f32 %v2684, %v2543
    %v2690 = vmul.f32 %v2684, %v2544
    %v2691 = vmul.f32 %v2684, %v2545
    %v2692 = vmul.f32 %v2684, %v2546
    %s2693 = sld [smem:[#allocation9 + $0x4]]
    %v2694 = vstv %s2693
    %v2695 = vadd.f32 %v2685, %v2694
    %v2696 = vadd.f32 %v2686, %v2694
    %v2697 = vadd.f32 %v2687, %v2694
    %v2698 = vadd.f32 %v2688, %v2694
    %v2699 = vadd.f32 %v2689, %v2694
    %v2700 = vadd.f32 %v2690, %v2694
    %v2701 = vadd.f32 %v2691, %v2694
    %v2702 = vadd.f32 %v2692, %v2694
    %v2703 = vsel %vm2675, %v2695, %v2667
    %v2704 = vsel %vm2676, %v2696, %v2668
    %v2705 = vsel %vm2677, %v2697, %v2669
    %v2706 = vsel %vm2678, %v2698, %v2670
    %v2707 = vsel %vm2679, %v2699, %v2671
    %v2708 = vsel %vm2680, %v2700, %v2672
    %v2709 = vsel %vm2681, %v2701, %v2673
    %v2710 = vsel %vm2682, %v2702, %v2674
    %vm2711 = vcmp.ge.f32.partialorder %v2539, 0.75
    %vm2712 = vcmp.ge.f32.partialorder %v2540, 0.75
    %vm2713 = vcmp.ge.f32.partialorder %v2541, 0.75
    %vm2714 = vcmp.ge.f32.partialorder %v2542, 0.75
    %vm2715 = vcmp.ge.f32.partialorder %v2543, 0.75
    %vm2716 = vcmp.ge.f32.partialorder %v2544, 0.75
    %vm2717 = vcmp.ge.f32.partialorder %v2545, 0.75
    %vm2718 = vcmp.ge.f32.partialorder %v2546, 0.75
    %s2719 = sld [smem:[#allocation8 + $0x5]]
    %v2720 = vstv %s2719
    %v2721 = vmul.f32 %v2720, %v2539
    %v2722 = vmul.f32 %v2720, %v2540
    %v2723 = vmul.f32 %v2720, %v2541
    %v2724 = vmul.f32 %v2720, %v2542
    %v2725 = vmul.f32 %v2720, %v2543
    %v2726 = vmul.f32 %v2720, %v2544
    %v2727 = vmul.f32 %v2720, %v2545
    %v2728 = vmul.f32 %v2720, %v2546
    %s2729 = sld [smem:[#allocation9 + $0x5]]
    %v2730 = vstv %s2729
    %v2731 = vadd.f32 %v2721, %v2730
    %v2732 = vadd.f32 %v2722, %v2730
    %v2733 = vadd.f32 %v2723, %v2730
    %v2734 = vadd.f32 %v2724, %v2730
    %v2735 = vadd.f32 %v2725, %v2730
    %v2736 = vadd.f32 %v2726, %v2730
    %v2737 = vadd.f32 %v2727, %v2730
    %v2738 = vadd.f32 %v2728, %v2730
    %v2739 = vsel %vm2711, %v2731, %v2703
    %v2740 = vsel %vm2712, %v2732, %v2704
    %v2741 = vsel %vm2713, %v2733, %v2705
    %v2742 = vsel %vm2714, %v2734, %v2706
    %v2743 = vsel %vm2715, %v2735, %v2707
    %v2744 = vsel %vm2716, %v2736, %v2708
    %v2745 = vsel %vm2717, %v2737, %v2709
    %v2746 = vsel %vm2718, %v2738, %v2710
    %vm2747 = vcmp.ge.f32.partialorder %v2539, 1.5
    %vm2748 = vcmp.ge.f32.partialorder %v2540, 1.5
    %vm2749 = vcmp.ge.f32.partialorder %v2541, 1.5
    %vm2750 = vcmp.ge.f32.partialorder %v2542, 1.5
    %vm2751 = vcmp.ge.f32.partialorder %v2543, 1.5
    %vm2752 = vcmp.ge.f32.partialorder %v2544, 1.5
    %vm2753 = vcmp.ge.f32.partialorder %v2545, 1.5
    %vm2754 = vcmp.ge.f32.partialorder %v2546, 1.5
    %s2755 = sld [smem:[#allocation8 + $0x6]]
    %v2756 = vstv %s2755
    %v2757 = vmul.f32 %v2756, %v2539
    %v2758 = vmul.f32 %v2756, %v2540
    %v2759 = vmul.f32 %v2756, %v2541
    %v2760 = vmul.f32 %v2756, %v2542
    %v2761 = vmul.f32 %v2756, %v2543
    %v2762 = vmul.f32 %v2756, %v2544
    %v2763 = vmul.f32 %v2756, %v2545
    %v2764 = vmul.f32 %v2756, %v2546
    %s2765 = sld [smem:[#allocation9 + $0x6]]
    %v2766 = vstv %s2765
    %v2767 = vadd.f32 %v2757, %v2766
    %v2768 = vadd.f32 %v2758, %v2766
    %v2769 = vadd.f32 %v2759, %v2766
    %v2770 = vadd.f32 %v2760, %v2766
    %v2771 = vadd.f32 %v2761, %v2766
    %v2772 = vadd.f32 %v2762, %v2766
    %v2773 = vadd.f32 %v2763, %v2766
    %v2774 = vadd.f32 %v2764, %v2766
    %v2775 = vsel %vm2747, %v2767, %v2739
    %v2776 = vsel %vm2748, %v2768, %v2740
    %v2777 = vsel %vm2749, %v2769, %v2741
    %v2778 = vsel %vm2750, %v2770, %v2742
    %v2779 = vsel %vm2751, %v2771, %v2743
    %v2780 = vsel %vm2752, %v2772, %v2744
    %v2781 = vsel %vm2753, %v2773, %v2745
    %v2782 = vsel %vm2754, %v2774, %v2746
    %vm2783 = vcmp.ge.f32.partialorder %v2539, 2.25
    %vm2784 = vcmp.ge.f32.partialorder %v2540, 2.25
    %vm2785 = vcmp.ge.f32.partialorder %v2541, 2.25
    %vm2786 = vcmp.ge.f32.partialorder %v2542, 2.25
    %vm2787 = vcmp.ge.f32.partialorder %v2543, 2.25
    %vm2788 = vcmp.ge.f32.partialorder %v2544, 2.25
    %vm2789 = vcmp.ge.f32.partialorder %v2545, 2.25
    %vm2790 = vcmp.ge.f32.partialorder %v2546, 2.25
    %s2791 = sld [smem:[#allocation8 + $0x7]]
    %v2792 = vstv %s2791
    %v2793 = vmul.f32 %v2792, %v2539
    %v2794 = vmul.f32 %v2792, %v2540
    %v2795 = vmul.f32 %v2792, %v2541
    %v2796 = vmul.f32 %v2792, %v2542
    %v2797 = vmul.f32 %v2792, %v2543
    %v2798 = vmul.f32 %v2792, %v2544
    %v2799 = vmul.f32 %v2792, %v2545
    %v2800 = vmul.f32 %v2792, %v2546
    %s2801 = sld [smem:[#allocation9 + $0x7]]
    %v2802 = vstv %s2801
    %v2803 = vadd.f32 %v2793, %v2802
    %v2804 = vadd.f32 %v2794, %v2802
    %v2805 = vadd.f32 %v2795, %v2802
    %v2806 = vadd.f32 %v2796, %v2802
    %v2807 = vadd.f32 %v2797, %v2802
    %v2808 = vadd.f32 %v2798, %v2802
    %v2809 = vadd.f32 %v2799, %v2802
    %v2810 = vadd.f32 %v2800, %v2802
    %v2811 = vsel %vm2783, %v2803, %v2775
    %v2812 = vsel %vm2784, %v2804, %v2776
    %v2813 = vsel %vm2785, %v2805, %v2777
    %v2814 = vsel %vm2786, %v2806, %v2778
    %v2815 = vsel %vm2787, %v2807, %v2779
    %v2816 = vsel %vm2788, %v2808, %v2780
    %v2817 = vsel %vm2789, %v2809, %v2781
    %v2818 = vsel %vm2790, %v2810, %v2782
    %v2819 = vadd.f32 %v2539, %v2811
    %v2820 = vadd.f32 %v2540, %v2812
    %v2821 = vadd.f32 %v2541, %v2813
    %v2822 = vadd.f32 %v2542, %v2814
    %v2823 = vadd.f32 %v2543, %v2815
    %v2824 = vadd.f32 %v2544, %v2816
    %v2825 = vadd.f32 %v2545, %v2817
    %v2826 = vadd.f32 %v2546, %v2818
    %v2827 = vmax.f32 %v2819, -3.0
    %v2828 = vmax.f32 %v2820, -3.0
    %v2829 = vmax.f32 %v2821, -3.0
    %v2830 = vmax.f32 %v2822, -3.0
    %v2831 = vmax.f32 %v2823, -3.0
    %v2832 = vmax.f32 %v2824, -3.0
    %v2833 = vmax.f32 %v2825, -3.0
    %v2834 = vmax.f32 %v2826, -3.0
    %v2835 = vmin.f32 %v2827, 3.0
    %v2836 = vmin.f32 %v2828, 3.0
    %v2837 = vmin.f32 %v2829, 3.0
    %v2838 = vmin.f32 %v2830, 3.0
    %v2839 = vmin.f32 %v2831, 3.0
    %v2840 = vmin.f32 %v2832, 3.0
    %v2841 = vmin.f32 %v2833, 3.0
    %v2842 = vmin.f32 %v2834, 3.0
    %v2843 = vmul.f32 %v2548, %v2835
    %v2844 = vmul.f32 %v2548, %v2836
    %v2845 = vmul.f32 %v2548, %v2837
    %v2846 = vmul.f32 %v2548, %v2838
    %v2847 = vmul.f32 %v2548, %v2839
    %v2848 = vmul.f32 %v2548, %v2840
    %v2849 = vmul.f32 %v2548, %v2841
    %v2850 = vmul.f32 %v2548, %v2842
    %v2851 = vadd.f32 %v2843, %v2558
    %v2852 = vadd.f32 %v2844, %v2558
    %v2853 = vadd.f32 %v2845, %v2558
    %v2854 = vadd.f32 %v2846, %v2558
    %v2855 = vadd.f32 %v2847, %v2558
    %v2856 = vadd.f32 %v2848, %v2558
    %v2857 = vadd.f32 %v2849, %v2558
    %v2858 = vadd.f32 %v2850, %v2558
    %vm2859 = vcmp.ge.f32.partialorder %v2835, -2.25
    %vm2860 = vcmp.ge.f32.partialorder %v2836, -2.25
    %vm2861 = vcmp.ge.f32.partialorder %v2837, -2.25
    %vm2862 = vcmp.ge.f32.partialorder %v2838, -2.25
    %vm2863 = vcmp.ge.f32.partialorder %v2839, -2.25
    %vm2864 = vcmp.ge.f32.partialorder %v2840, -2.25
    %vm2865 = vcmp.ge.f32.partialorder %v2841, -2.25
    %vm2866 = vcmp.ge.f32.partialorder %v2842, -2.25
    %v2867 = vmul.f32 %v2576, %v2835
    %v2868 = vmul.f32 %v2576, %v2836
    %v2869 = vmul.f32 %v2576, %v2837
    %v2870 = vmul.f32 %v2576, %v2838
    %v2871 = vmul.f32 %v2576, %v2839
    %v2872 = vmul.f32 %v2576, %v2840
    %v2873 = vmul.f32 %v2576, %v2841
    %v2874 = vmul.f32 %v2576, %v2842
    %v2875 = vadd.f32 %v2867, %v2586
    %v2876 = vadd.f32 %v2868, %v2586
    %v2877 = vadd.f32 %v2869, %v2586
    %v2878 = vadd.f32 %v2870, %v2586
    %v2879 = vadd.f32 %v2871, %v2586
    %v2880 = vadd.f32 %v2872, %v2586
    %v2881 = vadd.f32 %v2873, %v2586
    %v2882 = vadd.f32 %v2874, %v2586
    %v2883 = vsel %vm2859, %v2875, %v2851
    %v2884 = vsel %vm2860, %v2876, %v2852
    %v2885 = vsel %vm2861, %v2877, %v2853
    %v2886 = vsel %vm2862, %v2878, %v2854
    %v2887 = vsel %vm2863, %v2879, %v2855
    %v2888 = vsel %vm2864, %v2880, %v2856
    %v2889 = vsel %vm2865, %v2881, %v2857
    %v2890 = vsel %vm2866, %v2882, %v2858
    %vm2891 = vcmp.ge.f32.partialorder %v2835, -1.5
    %vm2892 = vcmp.ge.f32.partialorder %v2836, -1.5
    %vm2893 = vcmp.ge.f32.partialorder %v2837, -1.5
    %vm2894 = vcmp.ge.f32.partialorder %v2838, -1.5
    %vm2895 = vcmp.ge.f32.partialorder %v2839, -1.5
    %vm2896 = vcmp.ge.f32.partialorder %v2840, -1.5
    %vm2897 = vcmp.ge.f32.partialorder %v2841, -1.5
    %vm2898 = vcmp.ge.f32.partialorder %v2842, -1.5
    %v2899 = vmul.f32 %v2612, %v2835
    %v2900 = vmul.f32 %v2612, %v2836
    %v2901 = vmul.f32 %v2612, %v2837
    %v2902 = vmul.f32 %v2612, %v2838
    %v2903 = vmul.f32 %v2612, %v2839
    %v2904 = vmul.f32 %v2612, %v2840
    %v2905 = vmul.f32 %v2612, %v2841
    %v2906 = vmul.f32 %v2612, %v2842
    %v2907 = vadd.f32 %v2899, %v2622
    %v2908 = vadd.f32 %v2900, %v2622
    %v2909 = vadd.f32 %v2901, %v2622
    %v2910 = vadd.f32 %v2902, %v2622
    %v2911 = vadd.f32 %v2903, %v2622
    %v2912 = vadd.f32 %v2904, %v2622
    %v2913 = vadd.f32 %v2905, %v2622
    %v2914 = vadd.f32 %v2906, %v2622
    %v2915 = vsel %vm2891, %v2907, %v2883
    %v2916 = vsel %vm2892, %v2908, %v2884
    %v2917 = vsel %vm2893, %v2909, %v2885
    %v2918 = vsel %vm2894, %v2910, %v2886
    %v2919 = vsel %vm2895, %v2911, %v2887
    %v2920 = vsel %vm2896, %v2912, %v2888
    %v2921 = vsel %vm2897, %v2913, %v2889
    %v2922 = vsel %vm2898, %v2914, %v2890
    %vm2923 = vcmp.ge.f32.partialorder %v2835, -0.75
    %vm2924 = vcmp.ge.f32.partialorder %v2836, -0.75
    %vm2925 = vcmp.ge.f32.partialorder %v2837, -0.75
    %vm2926 = vcmp.ge.f32.partialorder %v2838, -0.75
    %vm2927 = vcmp.ge.f32.partialorder %v2839, -0.75
    %vm2928 = vcmp.ge.f32.partialorder %v2840, -0.75
    %vm2929 = vcmp.ge.f32.partialorder %v2841, -0.75
    %vm2930 = vcmp.ge.f32.partialorder %v2842, -0.75
    %v2931 = vmul.f32 %v2648, %v2835
    %v2932 = vmul.f32 %v2648, %v2836
    %v2933 = vmul.f32 %v2648, %v2837
    %v2934 = vmul.f32 %v2648, %v2838
    %v2935 = vmul.f32 %v2648, %v2839
    %v2936 = vmul.f32 %v2648, %v2840
    %v2937 = vmul.f32 %v2648, %v2841
    %v2938 = vmul.f32 %v2648, %v2842
    %v2939 = vadd.f32 %v2931, %v2658
    %v2940 = vadd.f32 %v2932, %v2658
    %v2941 = vadd.f32 %v2933, %v2658
    %v2942 = vadd.f32 %v2934, %v2658
    %v2943 = vadd.f32 %v2935, %v2658
    %v2944 = vadd.f32 %v2936, %v2658
    %v2945 = vadd.f32 %v2937, %v2658
    %v2946 = vadd.f32 %v2938, %v2658
    %v2947 = vsel %vm2923, %v2939, %v2915
    %v2948 = vsel %vm2924, %v2940, %v2916
    %v2949 = vsel %vm2925, %v2941, %v2917
    %v2950 = vsel %vm2926, %v2942, %v2918
    %v2951 = vsel %vm2927, %v2943, %v2919
    %v2952 = vsel %vm2928, %v2944, %v2920
    %v2953 = vsel %vm2929, %v2945, %v2921
    %v2954 = vsel %vm2930, %v2946, %v2922
    %vm2955 = vcmp.ge.f32.partialorder %v2835, 0.0
    %vm2956 = vcmp.ge.f32.partialorder %v2836, 0.0
    %vm2957 = vcmp.ge.f32.partialorder %v2837, 0.0
    %vm2958 = vcmp.ge.f32.partialorder %v2838, 0.0
    %vm2959 = vcmp.ge.f32.partialorder %v2839, 0.0
    %vm2960 = vcmp.ge.f32.partialorder %v2840, 0.0
    %vm2961 = vcmp.ge.f32.partialorder %v2841, 0.0
    %vm2962 = vcmp.ge.f32.partialorder %v2842, 0.0
    %v2963 = vmul.f32 %v2684, %v2835
    %v2964 = vmul.f32 %v2684, %v2836
    %v2965 = vmul.f32 %v2684, %v2837
    %v2966 = vmul.f32 %v2684, %v2838
    %v2967 = vmul.f32 %v2684, %v2839
    %v2968 = vmul.f32 %v2684, %v2840
    %v2969 = vmul.f32 %v2684, %v2841
    %v2970 = vmul.f32 %v2684, %v2842
    %v2971 = vadd.f32 %v2963, %v2694
    %v2972 = vadd.f32 %v2964, %v2694
    %v2973 = vadd.f32 %v2965, %v2694
    %v2974 = vadd.f32 %v2966, %v2694
    %v2975 = vadd.f32 %v2967, %v2694
    %v2976 = vadd.f32 %v2968, %v2694
    %v2977 = vadd.f32 %v2969, %v2694
    %v2978 = vadd.f32 %v2970, %v2694
    %v2979 = vsel %vm2955, %v2971, %v2947
    %v2980 = vsel %vm2956, %v2972, %v2948
    %v2981 = vsel %vm2957, %v2973, %v2949
    %v2982 = vsel %vm2958, %v2974, %v2950
    %v2983 = vsel %vm2959, %v2975, %v2951
    %v2984 = vsel %vm2960, %v2976, %v2952
    %v2985 = vsel %vm2961, %v2977, %v2953
    %v2986 = vsel %vm2962, %v2978, %v2954
    %vm2987 = vcmp.ge.f32.partialorder %v2835, 0.75
    %vm2988 = vcmp.ge.f32.partialorder %v2836, 0.75
    %vm2989 = vcmp.ge.f32.partialorder %v2837, 0.75
    %vm2990 = vcmp.ge.f32.partialorder %v2838, 0.75
    %vm2991 = vcmp.ge.f32.partialorder %v2839, 0.75
    %vm2992 = vcmp.ge.f32.partialorder %v2840, 0.75
    %vm2993 = vcmp.ge.f32.partialorder %v2841, 0.75
    %vm2994 = vcmp.ge.f32.partialorder %v2842, 0.75
    %v2995 = vmul.f32 %v2720, %v2835
    %v2996 = vmul.f32 %v2720, %v2836
    %v2997 = vmul.f32 %v2720, %v2837
    %v2998 = vmul.f32 %v2720, %v2838
    %v2999 = vmul.f32 %v2720, %v2839
    %v3000 = vmul.f32 %v2720, %v2840
    %v3001 = vmul.f32 %v2720, %v2841
    %v3002 = vmul.f32 %v2720, %v2842
    %v3003 = vadd.f32 %v2995, %v2730
    %v3004 = vadd.f32 %v2996, %v2730
    %v3005 = vadd.f32 %v2997, %v2730
    %v3006 = vadd.f32 %v2998, %v2730
    %v3007 = vadd.f32 %v2999, %v2730
    %v3008 = vadd.f32 %v3000, %v2730
    %v3009 = vadd.f32 %v3001, %v2730
    %v3010 = vadd.f32 %v3002, %v2730
    %v3011 = vsel %vm2987, %v3003, %v2979
    %v3012 = vsel %vm2988, %v3004, %v2980
    %v3013 = vsel %vm2989, %v3005, %v2981
    %v3014 = vsel %vm2990, %v3006, %v2982
    %v3015 = vsel %vm2991, %v3007, %v2983
    %v3016 = vsel %vm2992, %v3008, %v2984
    %v3017 = vsel %vm2993, %v3009, %v2985
    %v3018 = vsel %vm2994, %v3010, %v2986
    %vm3019 = vcmp.ge.f32.partialorder %v2835, 1.5
    %vm3020 = vcmp.ge.f32.partialorder %v2836, 1.5
    %vm3021 = vcmp.ge.f32.partialorder %v2837, 1.5
    %vm3022 = vcmp.ge.f32.partialorder %v2838, 1.5
    %vm3023 = vcmp.ge.f32.partialorder %v2839, 1.5
    %vm3024 = vcmp.ge.f32.partialorder %v2840, 1.5
    %vm3025 = vcmp.ge.f32.partialorder %v2841, 1.5
    %vm3026 = vcmp.ge.f32.partialorder %v2842, 1.5
    %v3027 = vmul.f32 %v2756, %v2835
    %v3028 = vmul.f32 %v2756, %v2836
    %v3029 = vmul.f32 %v2756, %v2837
    %v3030 = vmul.f32 %v2756, %v2838
    %v3031 = vmul.f32 %v2756, %v2839
    %v3032 = vmul.f32 %v2756, %v2840
    %v3033 = vmul.f32 %v2756, %v2841
    %v3034 = vmul.f32 %v2756, %v2842
    %v3035 = vadd.f32 %v3027, %v2766
    %v3036 = vadd.f32 %v3028, %v2766
    %v3037 = vadd.f32 %v3029, %v2766
    %v3038 = vadd.f32 %v3030, %v2766
    %v3039 = vadd.f32 %v3031, %v2766
    %v3040 = vadd.f32 %v3032, %v2766
    %v3041 = vadd.f32 %v3033, %v2766
    %v3042 = vadd.f32 %v3034, %v2766
    %v3043 = vsel %vm3019, %v3035, %v3011
    %v3044 = vsel %vm3020, %v3036, %v3012
    %v3045 = vsel %vm3021, %v3037, %v3013
    %v3046 = vsel %vm3022, %v3038, %v3014
    %v3047 = vsel %vm3023, %v3039, %v3015
    %v3048 = vsel %vm3024, %v3040, %v3016
    %v3049 = vsel %vm3025, %v3041, %v3017
    %v3050 = vsel %vm3026, %v3042, %v3018
    %vm3051 = vcmp.ge.f32.partialorder %v2835, 2.25
    %vm3052 = vcmp.ge.f32.partialorder %v2836, 2.25
    %vm3053 = vcmp.ge.f32.partialorder %v2837, 2.25
    %vm3054 = vcmp.ge.f32.partialorder %v2838, 2.25
    %vm3055 = vcmp.ge.f32.partialorder %v2839, 2.25
    %vm3056 = vcmp.ge.f32.partialorder %v2840, 2.25
    %vm3057 = vcmp.ge.f32.partialorder %v2841, 2.25
    %vm3058 = vcmp.ge.f32.partialorder %v2842, 2.25
    %v3059 = vmul.f32 %v2792, %v2835
    %v3060 = vmul.f32 %v2792, %v2836
    %v3061 = vmul.f32 %v2792, %v2837
    %v3062 = vmul.f32 %v2792, %v2838
    %v3063 = vmul.f32 %v2792, %v2839
    %v3064 = vmul.f32 %v2792, %v2840
    %v3065 = vmul.f32 %v2792, %v2841
    %v3066 = vmul.f32 %v2792, %v2842
    %v3067 = vadd.f32 %v3059, %v2802
    %v3068 = vadd.f32 %v3060, %v2802
    %v3069 = vadd.f32 %v3061, %v2802
    %v3070 = vadd.f32 %v3062, %v2802
    %v3071 = vadd.f32 %v3063, %v2802
    %v3072 = vadd.f32 %v3064, %v2802
    %v3073 = vadd.f32 %v3065, %v2802
    %v3074 = vadd.f32 %v3066, %v2802
    %v3075 = vsel %vm3051, %v3067, %v3043
    %v3076 = vsel %vm3052, %v3068, %v3044
    %v3077 = vsel %vm3053, %v3069, %v3045
    %v3078 = vsel %vm3054, %v3070, %v3046
    %v3079 = vsel %vm3055, %v3071, %v3047
    %v3080 = vsel %vm3056, %v3072, %v3048
    %v3081 = vsel %vm3057, %v3073, %v3049
    %v3082 = vsel %vm3058, %v3074, %v3050
    %v3083 = vadd.f32 %v2835, %v3075
    %v3084 = vadd.f32 %v2836, %v3076
    %v3085 = vadd.f32 %v2837, %v3077
    %v3086 = vadd.f32 %v2838, %v3078
    %v3087 = vadd.f32 %v2839, %v3079
    %v3088 = vadd.f32 %v2840, %v3080
    %v3089 = vadd.f32 %v2841, %v3081
    %v3090 = vadd.f32 %v2842, %v3082
    %v3091 = vmax.f32 %v3083, -3.0
    %v3092 = vmax.f32 %v3084, -3.0
    %v3093 = vmax.f32 %v3085, -3.0
    %v3094 = vmax.f32 %v3086, -3.0
    %v3095 = vmax.f32 %v3087, -3.0
    %v3096 = vmax.f32 %v3088, -3.0
    %v3097 = vmax.f32 %v3089, -3.0
    %v3098 = vmax.f32 %v3090, -3.0
    %v3099 = vmin.f32 %v3091, 3.0
    %v3100 = vmin.f32 %v3092, 3.0
    %v3101 = vmin.f32 %v3093, 3.0
    %v3102 = vmin.f32 %v3094, 3.0
    %v3103 = vmin.f32 %v3095, 3.0
    %v3104 = vmin.f32 %v3096, 3.0
    %v3105 = vmin.f32 %v3097, 3.0
    %v3106 = vmin.f32 %v3098, 3.0
    %v3107 = vmul.f32 %v2548, %v3099
    %v3108 = vmul.f32 %v2548, %v3100
    %v3109 = vmul.f32 %v2548, %v3101
    %v3110 = vmul.f32 %v2548, %v3102
    %v3111 = vmul.f32 %v2548, %v3103
    %v3112 = vmul.f32 %v2548, %v3104
    %v3113 = vmul.f32 %v2548, %v3105
    %v3114 = vmul.f32 %v2548, %v3106
    %v3115 = vadd.f32 %v3107, %v2558
    %v3116 = vadd.f32 %v3108, %v2558
    %v3117 = vadd.f32 %v3109, %v2558
    %v3118 = vadd.f32 %v3110, %v2558
    %v3119 = vadd.f32 %v3111, %v2558
    %v3120 = vadd.f32 %v3112, %v2558
    %v3121 = vadd.f32 %v3113, %v2558
    %v3122 = vadd.f32 %v3114, %v2558
    %vm3123 = vcmp.ge.f32.partialorder %v3099, -2.25
    %vm3124 = vcmp.ge.f32.partialorder %v3100, -2.25
    %vm3125 = vcmp.ge.f32.partialorder %v3101, -2.25
    %vm3126 = vcmp.ge.f32.partialorder %v3102, -2.25
    %vm3127 = vcmp.ge.f32.partialorder %v3103, -2.25
    %vm3128 = vcmp.ge.f32.partialorder %v3104, -2.25
    %vm3129 = vcmp.ge.f32.partialorder %v3105, -2.25
    %vm3130 = vcmp.ge.f32.partialorder %v3106, -2.25
    %v3131 = vmul.f32 %v2576, %v3099
    %v3132 = vmul.f32 %v2576, %v3100
    %v3133 = vmul.f32 %v2576, %v3101
    %v3134 = vmul.f32 %v2576, %v3102
    %v3135 = vmul.f32 %v2576, %v3103
    %v3136 = vmul.f32 %v2576, %v3104
    %v3137 = vmul.f32 %v2576, %v3105
    %v3138 = vmul.f32 %v2576, %v3106
    %v3139 = vadd.f32 %v3131, %v2586
    %v3140 = vadd.f32 %v3132, %v2586
    %v3141 = vadd.f32 %v3133, %v2586
    %v3142 = vadd.f32 %v3134, %v2586
    %v3143 = vadd.f32 %v3135, %v2586
    %v3144 = vadd.f32 %v3136, %v2586
    %v3145 = vadd.f32 %v3137, %v2586
    %v3146 = vadd.f32 %v3138, %v2586
    %v3147 = vsel %vm3123, %v3139, %v3115
    %v3148 = vsel %vm3124, %v3140, %v3116
    %v3149 = vsel %vm3125, %v3141, %v3117
    %v3150 = vsel %vm3126, %v3142, %v3118
    %v3151 = vsel %vm3127, %v3143, %v3119
    %v3152 = vsel %vm3128, %v3144, %v3120
    %v3153 = vsel %vm3129, %v3145, %v3121
    %v3154 = vsel %vm3130, %v3146, %v3122
    %vm3155 = vcmp.ge.f32.partialorder %v3099, -1.5
    %vm3156 = vcmp.ge.f32.partialorder %v3100, -1.5
    %vm3157 = vcmp.ge.f32.partialorder %v3101, -1.5
    %vm3158 = vcmp.ge.f32.partialorder %v3102, -1.5
    %vm3159 = vcmp.ge.f32.partialorder %v3103, -1.5
    %vm3160 = vcmp.ge.f32.partialorder %v3104, -1.5
    %vm3161 = vcmp.ge.f32.partialorder %v3105, -1.5
    %vm3162 = vcmp.ge.f32.partialorder %v3106, -1.5
    %v3163 = vmul.f32 %v2612, %v3099
    %v3164 = vmul.f32 %v2612, %v3100
    %v3165 = vmul.f32 %v2612, %v3101
    %v3166 = vmul.f32 %v2612, %v3102
    %v3167 = vmul.f32 %v2612, %v3103
    %v3168 = vmul.f32 %v2612, %v3104
    %v3169 = vmul.f32 %v2612, %v3105
    %v3170 = vmul.f32 %v2612, %v3106
    %v3171 = vadd.f32 %v3163, %v2622
    %v3172 = vadd.f32 %v3164, %v2622
    %v3173 = vadd.f32 %v3165, %v2622
    %v3174 = vadd.f32 %v3166, %v2622
    %v3175 = vadd.f32 %v3167, %v2622
    %v3176 = vadd.f32 %v3168, %v2622
    %v3177 = vadd.f32 %v3169, %v2622
    %v3178 = vadd.f32 %v3170, %v2622
    %v3179 = vsel %vm3155, %v3171, %v3147
    %v3180 = vsel %vm3156, %v3172, %v3148
    %v3181 = vsel %vm3157, %v3173, %v3149
    %v3182 = vsel %vm3158, %v3174, %v3150
    %v3183 = vsel %vm3159, %v3175, %v3151
    %v3184 = vsel %vm3160, %v3176, %v3152
    %v3185 = vsel %vm3161, %v3177, %v3153
    %v3186 = vsel %vm3162, %v3178, %v3154
    %vm3187 = vcmp.ge.f32.partialorder %v3099, -0.75
    %vm3188 = vcmp.ge.f32.partialorder %v3100, -0.75
    %vm3189 = vcmp.ge.f32.partialorder %v3101, -0.75
    %vm3190 = vcmp.ge.f32.partialorder %v3102, -0.75
    %vm3191 = vcmp.ge.f32.partialorder %v3103, -0.75
    %vm3192 = vcmp.ge.f32.partialorder %v3104, -0.75
    %vm3193 = vcmp.ge.f32.partialorder %v3105, -0.75
    %vm3194 = vcmp.ge.f32.partialorder %v3106, -0.75
    %v3195 = vmul.f32 %v2648, %v3099
    %v3196 = vmul.f32 %v2648, %v3100
    %v3197 = vmul.f32 %v2648, %v3101
    %v3198 = vmul.f32 %v2648, %v3102
    %v3199 = vmul.f32 %v2648, %v3103
    %v3200 = vmul.f32 %v2648, %v3104
    %v3201 = vmul.f32 %v2648, %v3105
    %v3202 = vmul.f32 %v2648, %v3106
    %v3203 = vadd.f32 %v3195, %v2658
    %v3204 = vadd.f32 %v3196, %v2658
    %v3205 = vadd.f32 %v3197, %v2658
    %v3206 = vadd.f32 %v3198, %v2658
    %v3207 = vadd.f32 %v3199, %v2658
    %v3208 = vadd.f32 %v3200, %v2658
    %v3209 = vadd.f32 %v3201, %v2658
    %v3210 = vadd.f32 %v3202, %v2658
    %v3211 = vsel %vm3187, %v3203, %v3179
    %v3212 = vsel %vm3188, %v3204, %v3180
    %v3213 = vsel %vm3189, %v3205, %v3181
    %v3214 = vsel %vm3190, %v3206, %v3182
    %v3215 = vsel %vm3191, %v3207, %v3183
    %v3216 = vsel %vm3192, %v3208, %v3184
    %v3217 = vsel %vm3193, %v3209, %v3185
    %v3218 = vsel %vm3194, %v3210, %v3186
    %vm3219 = vcmp.ge.f32.partialorder %v3099, 0.0
    %vm3220 = vcmp.ge.f32.partialorder %v3100, 0.0
    %vm3221 = vcmp.ge.f32.partialorder %v3101, 0.0
    %vm3222 = vcmp.ge.f32.partialorder %v3102, 0.0
    %vm3223 = vcmp.ge.f32.partialorder %v3103, 0.0
    %vm3224 = vcmp.ge.f32.partialorder %v3104, 0.0
    %vm3225 = vcmp.ge.f32.partialorder %v3105, 0.0
    %vm3226 = vcmp.ge.f32.partialorder %v3106, 0.0
    %v3227 = vmul.f32 %v2684, %v3099
    %v3228 = vmul.f32 %v2684, %v3100
    %v3229 = vmul.f32 %v2684, %v3101
    %v3230 = vmul.f32 %v2684, %v3102
    %v3231 = vmul.f32 %v2684, %v3103
    %v3232 = vmul.f32 %v2684, %v3104
    %v3233 = vmul.f32 %v2684, %v3105
    %v3234 = vmul.f32 %v2684, %v3106
    %v3235 = vadd.f32 %v3227, %v2694
    %v3236 = vadd.f32 %v3228, %v2694
    %v3237 = vadd.f32 %v3229, %v2694
    %v3238 = vadd.f32 %v3230, %v2694
    %v3239 = vadd.f32 %v3231, %v2694
    %v3240 = vadd.f32 %v3232, %v2694
    %v3241 = vadd.f32 %v3233, %v2694
    %v3242 = vadd.f32 %v3234, %v2694
    %v3243 = vsel %vm3219, %v3235, %v3211
    %v3244 = vsel %vm3220, %v3236, %v3212
    %v3245 = vsel %vm3221, %v3237, %v3213
    %v3246 = vsel %vm3222, %v3238, %v3214
    %v3247 = vsel %vm3223, %v3239, %v3215
    %v3248 = vsel %vm3224, %v3240, %v3216
    %v3249 = vsel %vm3225, %v3241, %v3217
    %v3250 = vsel %vm3226, %v3242, %v3218
    %vm3251 = vcmp.ge.f32.partialorder %v3099, 0.75
    %vm3252 = vcmp.ge.f32.partialorder %v3100, 0.75
    %vm3253 = vcmp.ge.f32.partialorder %v3101, 0.75
    %vm3254 = vcmp.ge.f32.partialorder %v3102, 0.75
    %vm3255 = vcmp.ge.f32.partialorder %v3103, 0.75
    %vm3256 = vcmp.ge.f32.partialorder %v3104, 0.75
    %vm3257 = vcmp.ge.f32.partialorder %v3105, 0.75
    %vm3258 = vcmp.ge.f32.partialorder %v3106, 0.75
    %v3259 = vmul.f32 %v2720, %v3099
    %v3260 = vmul.f32 %v2720, %v3100
    %v3261 = vmul.f32 %v2720, %v3101
    %v3262 = vmul.f32 %v2720, %v3102
    %v3263 = vmul.f32 %v2720, %v3103
    %v3264 = vmul.f32 %v2720, %v3104
    %v3265 = vmul.f32 %v2720, %v3105
    %v3266 = vmul.f32 %v2720, %v3106
    %v3267 = vadd.f32 %v3259, %v2730
    %v3268 = vadd.f32 %v3260, %v2730
    %v3269 = vadd.f32 %v3261, %v2730
    %v3270 = vadd.f32 %v3262, %v2730
    %v3271 = vadd.f32 %v3263, %v2730
    %v3272 = vadd.f32 %v3264, %v2730
    %v3273 = vadd.f32 %v3265, %v2730
    %v3274 = vadd.f32 %v3266, %v2730
    %v3275 = vsel %vm3251, %v3267, %v3243
    %v3276 = vsel %vm3252, %v3268, %v3244
    %v3277 = vsel %vm3253, %v3269, %v3245
    %v3278 = vsel %vm3254, %v3270, %v3246
    %v3279 = vsel %vm3255, %v3271, %v3247
    %v3280 = vsel %vm3256, %v3272, %v3248
    %v3281 = vsel %vm3257, %v3273, %v3249
    %v3282 = vsel %vm3258, %v3274, %v3250
    %vm3283 = vcmp.ge.f32.partialorder %v3099, 1.5
    %vm3284 = vcmp.ge.f32.partialorder %v3100, 1.5
    %vm3285 = vcmp.ge.f32.partialorder %v3101, 1.5
    %vm3286 = vcmp.ge.f32.partialorder %v3102, 1.5
    %vm3287 = vcmp.ge.f32.partialorder %v3103, 1.5
    %vm3288 = vcmp.ge.f32.partialorder %v3104, 1.5
    %vm3289 = vcmp.ge.f32.partialorder %v3105, 1.5
    %vm3290 = vcmp.ge.f32.partialorder %v3106, 1.5
    %v3291 = vmul.f32 %v2756, %v3099
    %v3292 = vmul.f32 %v2756, %v3100
    %v3293 = vmul.f32 %v2756, %v3101
    %v3294 = vmul.f32 %v2756, %v3102
    %v3295 = vmul.f32 %v2756, %v3103
    %v3296 = vmul.f32 %v2756, %v3104
    %v3297 = vmul.f32 %v2756, %v3105
    %v3298 = vmul.f32 %v2756, %v3106
    %v3299 = vadd.f32 %v3291, %v2766
    %v3300 = vadd.f32 %v3292, %v2766
    %v3301 = vadd.f32 %v3293, %v2766
    %v3302 = vadd.f32 %v3294, %v2766
    %v3303 = vadd.f32 %v3295, %v2766
    %v3304 = vadd.f32 %v3296, %v2766
    %v3305 = vadd.f32 %v3297, %v2766
    %v3306 = vadd.f32 %v3298, %v2766
    %v3307 = vsel %vm3283, %v3299, %v3275
    %v3308 = vsel %vm3284, %v3300, %v3276
    %v3309 = vsel %vm3285, %v3301, %v3277
    %v3310 = vsel %vm3286, %v3302, %v3278
    %v3311 = vsel %vm3287, %v3303, %v3279
    %v3312 = vsel %vm3288, %v3304, %v3280
    %v3313 = vsel %vm3289, %v3305, %v3281
    %v3314 = vsel %vm3290, %v3306, %v3282
    %vm3315 = vcmp.ge.f32.partialorder %v3099, 2.25
    %vm3316 = vcmp.ge.f32.partialorder %v3100, 2.25
    %vm3317 = vcmp.ge.f32.partialorder %v3101, 2.25
    %vm3318 = vcmp.ge.f32.partialorder %v3102, 2.25
    %vm3319 = vcmp.ge.f32.partialorder %v3103, 2.25
    %vm3320 = vcmp.ge.f32.partialorder %v3104, 2.25
    %vm3321 = vcmp.ge.f32.partialorder %v3105, 2.25
    %vm3322 = vcmp.ge.f32.partialorder %v3106, 2.25
    %v3323 = vmul.f32 %v2792, %v3099
    %v3324 = vmul.f32 %v2792, %v3100
    %v3325 = vmul.f32 %v2792, %v3101
    %v3326 = vmul.f32 %v2792, %v3102
    %v3327 = vmul.f32 %v2792, %v3103
    %v3328 = vmul.f32 %v2792, %v3104
    %v3329 = vmul.f32 %v2792, %v3105
    %v3330 = vmul.f32 %v2792, %v3106
    %v3331 = vadd.f32 %v3323, %v2802
    %v3332 = vadd.f32 %v3324, %v2802
    %v3333 = vadd.f32 %v3325, %v2802
    %v3334 = vadd.f32 %v3326, %v2802
    %v3335 = vadd.f32 %v3327, %v2802
    %v3336 = vadd.f32 %v3328, %v2802
    %v3337 = vadd.f32 %v3329, %v2802
    %v3338 = vadd.f32 %v3330, %v2802
    %v3339 = vsel %vm3315, %v3331, %v3307
    %v3340 = vsel %vm3316, %v3332, %v3308
    %v3341 = vsel %vm3317, %v3333, %v3309
    %v3342 = vsel %vm3318, %v3334, %v3310
    %v3343 = vsel %vm3319, %v3335, %v3311
    %v3344 = vsel %vm3320, %v3336, %v3312
    %v3345 = vsel %vm3321, %v3337, %v3313
    %v3346 = vsel %vm3322, %v3338, %v3314
    %v3347 = vadd.f32 %v3099, %v3339
    %v3348 = vadd.f32 %v3100, %v3340
    %v3349 = vadd.f32 %v3101, %v3341
    %v3350 = vadd.f32 %v3102, %v3342
    %v3351 = vadd.f32 %v3103, %v3343
    %v3352 = vadd.f32 %v3104, %v3344
    %v3353 = vadd.f32 %v3105, %v3345
    %v3354 = vadd.f32 %v3106, %v3346
    %v3355 = vmax.f32 %v3347, -3.0
    %v3356 = vmax.f32 %v3348, -3.0
    %v3357 = vmax.f32 %v3349, -3.0
    %v3358 = vmax.f32 %v3350, -3.0
    %v3359 = vmax.f32 %v3351, -3.0
    %v3360 = vmax.f32 %v3352, -3.0
    %v3361 = vmax.f32 %v3353, -3.0
    %v3362 = vmax.f32 %v3354, -3.0
    %v3363 = vmin.f32 %v3355, 3.0
    %v3364 = vmin.f32 %v3356, 3.0
    %v3365 = vmin.f32 %v3357, 3.0
    %v3366 = vmin.f32 %v3358, 3.0
    %v3367 = vmin.f32 %v3359, 3.0
    %v3368 = vmin.f32 %v3360, 3.0
    %v3369 = vmin.f32 %v3361, 3.0
    %v3370 = vmin.f32 %v3362, 3.0
    %v3371 = vmul.f32 %v2548, %v3363
    %v3372 = vmul.f32 %v2548, %v3364
    %v3373 = vmul.f32 %v2548, %v3365
    %v3374 = vmul.f32 %v2548, %v3366
    %v3375 = vmul.f32 %v2548, %v3367
    %v3376 = vmul.f32 %v2548, %v3368
    %v3377 = vmul.f32 %v2548, %v3369
    %v3378 = vmul.f32 %v2548, %v3370
    %v3379 = vadd.f32 %v3371, %v2558
    %v3380 = vadd.f32 %v3372, %v2558
    %v3381 = vadd.f32 %v3373, %v2558
    %v3382 = vadd.f32 %v3374, %v2558
    %v3383 = vadd.f32 %v3375, %v2558
    %v3384 = vadd.f32 %v3376, %v2558
    %v3385 = vadd.f32 %v3377, %v2558
    %v3386 = vadd.f32 %v3378, %v2558
    %vm3387 = vcmp.ge.f32.partialorder %v3363, -2.25
    %vm3388 = vcmp.ge.f32.partialorder %v3364, -2.25
    %vm3389 = vcmp.ge.f32.partialorder %v3365, -2.25
    %vm3390 = vcmp.ge.f32.partialorder %v3366, -2.25
    %vm3391 = vcmp.ge.f32.partialorder %v3367, -2.25
    %vm3392 = vcmp.ge.f32.partialorder %v3368, -2.25
    %vm3393 = vcmp.ge.f32.partialorder %v3369, -2.25
    %vm3394 = vcmp.ge.f32.partialorder %v3370, -2.25
    %v3395 = vmul.f32 %v2576, %v3363
    %v3396 = vmul.f32 %v2576, %v3364
    %v3397 = vmul.f32 %v2576, %v3365
    %v3398 = vmul.f32 %v2576, %v3366
    %v3399 = vmul.f32 %v2576, %v3367
    %v3400 = vmul.f32 %v2576, %v3368
    %v3401 = vmul.f32 %v2576, %v3369
    %v3402 = vmul.f32 %v2576, %v3370
    %v3403 = vadd.f32 %v3395, %v2586
    %v3404 = vadd.f32 %v3396, %v2586
    %v3405 = vadd.f32 %v3397, %v2586
    %v3406 = vadd.f32 %v3398, %v2586
    %v3407 = vadd.f32 %v3399, %v2586
    %v3408 = vadd.f32 %v3400, %v2586
    %v3409 = vadd.f32 %v3401, %v2586
    %v3410 = vadd.f32 %v3402, %v2586
    %v3411 = vsel %vm3387, %v3403, %v3379
    %v3412 = vsel %vm3388, %v3404, %v3380
    %v3413 = vsel %vm3389, %v3405, %v3381
    %v3414 = vsel %vm3390, %v3406, %v3382
    %v3415 = vsel %vm3391, %v3407, %v3383
    %v3416 = vsel %vm3392, %v3408, %v3384
    %v3417 = vsel %vm3393, %v3409, %v3385
    %v3418 = vsel %vm3394, %v3410, %v3386
    %vm3419 = vcmp.ge.f32.partialorder %v3363, -1.5
    %vm3420 = vcmp.ge.f32.partialorder %v3364, -1.5
    %vm3421 = vcmp.ge.f32.partialorder %v3365, -1.5
    %vm3422 = vcmp.ge.f32.partialorder %v3366, -1.5
    %vm3423 = vcmp.ge.f32.partialorder %v3367, -1.5
    %vm3424 = vcmp.ge.f32.partialorder %v3368, -1.5
    %vm3425 = vcmp.ge.f32.partialorder %v3369, -1.5
    %vm3426 = vcmp.ge.f32.partialorder %v3370, -1.5
    %v3427 = vmul.f32 %v2612, %v3363
    %v3428 = vmul.f32 %v2612, %v3364
    %v3429 = vmul.f32 %v2612, %v3365
    %v3430 = vmul.f32 %v2612, %v3366
    %v3431 = vmul.f32 %v2612, %v3367
    %v3432 = vmul.f32 %v2612, %v3368
    %v3433 = vmul.f32 %v2612, %v3369
    %v3434 = vmul.f32 %v2612, %v3370
    %v3435 = vadd.f32 %v3427, %v2622
    %v3436 = vadd.f32 %v3428, %v2622
    %v3437 = vadd.f32 %v3429, %v2622
    %v3438 = vadd.f32 %v3430, %v2622
    %v3439 = vadd.f32 %v3431, %v2622
    %v3440 = vadd.f32 %v3432, %v2622
    %v3441 = vadd.f32 %v3433, %v2622
    %v3442 = vadd.f32 %v3434, %v2622
    %v3443 = vsel %vm3419, %v3435, %v3411
    %v3444 = vsel %vm3420, %v3436, %v3412
    %v3445 = vsel %vm3421, %v3437, %v3413
    %v3446 = vsel %vm3422, %v3438, %v3414
    %v3447 = vsel %vm3423, %v3439, %v3415
    %v3448 = vsel %vm3424, %v3440, %v3416
    %v3449 = vsel %vm3425, %v3441, %v3417
    %v3450 = vsel %vm3426, %v3442, %v3418
    %vm3451 = vcmp.ge.f32.partialorder %v3363, -0.75
    %vm3452 = vcmp.ge.f32.partialorder %v3364, -0.75
    %vm3453 = vcmp.ge.f32.partialorder %v3365, -0.75
    %vm3454 = vcmp.ge.f32.partialorder %v3366, -0.75
    %vm3455 = vcmp.ge.f32.partialorder %v3367, -0.75
    %vm3456 = vcmp.ge.f32.partialorder %v3368, -0.75
    %vm3457 = vcmp.ge.f32.partialorder %v3369, -0.75
    %vm3458 = vcmp.ge.f32.partialorder %v3370, -0.75
    %v3459 = vmul.f32 %v2648, %v3363
    %v3460 = vmul.f32 %v2648, %v3364
    %v3461 = vmul.f32 %v2648, %v3365
    %v3462 = vmul.f32 %v2648, %v3366
    %v3463 = vmul.f32 %v2648, %v3367
    %v3464 = vmul.f32 %v2648, %v3368
    %v3465 = vmul.f32 %v2648, %v3369
    %v3466 = vmul.f32 %v2648, %v3370
    %v3467 = vadd.f32 %v3459, %v2658
    %v3468 = vadd.f32 %v3460, %v2658
    %v3469 = vadd.f32 %v3461, %v2658
    %v3470 = vadd.f32 %v3462, %v2658
    %v3471 = vadd.f32 %v3463, %v2658
    %v3472 = vadd.f32 %v3464, %v2658
    %v3473 = vadd.f32 %v3465, %v2658
    %v3474 = vadd.f32 %v3466, %v2658
    %v3475 = vsel %vm3451, %v3467, %v3443
    %v3476 = vsel %vm3452, %v3468, %v3444
    %v3477 = vsel %vm3453, %v3469, %v3445
    %v3478 = vsel %vm3454, %v3470, %v3446
    %v3479 = vsel %vm3455, %v3471, %v3447
    %v3480 = vsel %vm3456, %v3472, %v3448
    %v3481 = vsel %vm3457, %v3473, %v3449
    %v3482 = vsel %vm3458, %v3474, %v3450
    %vm3483 = vcmp.ge.f32.partialorder %v3363, 0.0
    %vm3484 = vcmp.ge.f32.partialorder %v3364, 0.0
    %vm3485 = vcmp.ge.f32.partialorder %v3365, 0.0
    %vm3486 = vcmp.ge.f32.partialorder %v3366, 0.0
    %vm3487 = vcmp.ge.f32.partialorder %v3367, 0.0
    %vm3488 = vcmp.ge.f32.partialorder %v3368, 0.0
    %vm3489 = vcmp.ge.f32.partialorder %v3369, 0.0
    %vm3490 = vcmp.ge.f32.partialorder %v3370, 0.0
    %v3491 = vmul.f32 %v2684, %v3363
    %v3492 = vmul.f32 %v2684, %v3364
    %v3493 = vmul.f32 %v2684, %v3365
    %v3494 = vmul.f32 %v2684, %v3366
    %v3495 = vmul.f32 %v2684, %v3367
    %v3496 = vmul.f32 %v2684, %v3368
    %v3497 = vmul.f32 %v2684, %v3369
    %v3498 = vmul.f32 %v2684, %v3370
    %v3499 = vadd.f32 %v3491, %v2694
    %v3500 = vadd.f32 %v3492, %v2694
    %v3501 = vadd.f32 %v3493, %v2694
    %v3502 = vadd.f32 %v3494, %v2694
    %v3503 = vadd.f32 %v3495, %v2694
    %v3504 = vadd.f32 %v3496, %v2694
    %v3505 = vadd.f32 %v3497, %v2694
    %v3506 = vadd.f32 %v3498, %v2694
    %v3507 = vsel %vm3483, %v3499, %v3475
    %v3508 = vsel %vm3484, %v3500, %v3476
    %v3509 = vsel %vm3485, %v3501, %v3477
    %v3510 = vsel %vm3486, %v3502, %v3478
    %v3511 = vsel %vm3487, %v3503, %v3479
    %v3512 = vsel %vm3488, %v3504, %v3480
    %v3513 = vsel %vm3489, %v3505, %v3481
    %v3514 = vsel %vm3490, %v3506, %v3482
    %vm3515 = vcmp.ge.f32.partialorder %v3363, 0.75
    %vm3516 = vcmp.ge.f32.partialorder %v3364, 0.75
    %vm3517 = vcmp.ge.f32.partialorder %v3365, 0.75
    %vm3518 = vcmp.ge.f32.partialorder %v3366, 0.75
    %vm3519 = vcmp.ge.f32.partialorder %v3367, 0.75
    %vm3520 = vcmp.ge.f32.partialorder %v3368, 0.75
    %vm3521 = vcmp.ge.f32.partialorder %v3369, 0.75
    %vm3522 = vcmp.ge.f32.partialorder %v3370, 0.75
    %v3523 = vmul.f32 %v2720, %v3363
    %v3524 = vmul.f32 %v2720, %v3364
    %v3525 = vmul.f32 %v2720, %v3365
    %v3526 = vmul.f32 %v2720, %v3366
    %v3527 = vmul.f32 %v2720, %v3367
    %v3528 = vmul.f32 %v2720, %v3368
    %v3529 = vmul.f32 %v2720, %v3369
    %v3530 = vmul.f32 %v2720, %v3370
    %v3531 = vadd.f32 %v3523, %v2730
    %v3532 = vadd.f32 %v3524, %v2730
    %v3533 = vadd.f32 %v3525, %v2730
    %v3534 = vadd.f32 %v3526, %v2730
    %v3535 = vadd.f32 %v3527, %v2730
    %v3536 = vadd.f32 %v3528, %v2730
    %v3537 = vadd.f32 %v3529, %v2730
    %v3538 = vadd.f32 %v3530, %v2730
    %v3539 = vsel %vm3515, %v3531, %v3507
    %v3540 = vsel %vm3516, %v3532, %v3508
    %v3541 = vsel %vm3517, %v3533, %v3509
    %v3542 = vsel %vm3518, %v3534, %v3510
    %v3543 = vsel %vm3519, %v3535, %v3511
    %v3544 = vsel %vm3520, %v3536, %v3512
    %v3545 = vsel %vm3521, %v3537, %v3513
    %v3546 = vsel %vm3522, %v3538, %v3514
    %vm3547 = vcmp.ge.f32.partialorder %v3363, 1.5
    %vm3548 = vcmp.ge.f32.partialorder %v3364, 1.5
    %vm3549 = vcmp.ge.f32.partialorder %v3365, 1.5
    %vm3550 = vcmp.ge.f32.partialorder %v3366, 1.5
    %vm3551 = vcmp.ge.f32.partialorder %v3367, 1.5
    %vm3552 = vcmp.ge.f32.partialorder %v3368, 1.5
    %vm3553 = vcmp.ge.f32.partialorder %v3369, 1.5
    %vm3554 = vcmp.ge.f32.partialorder %v3370, 1.5
    %v3555 = vmul.f32 %v2756, %v3363
    %v3556 = vmul.f32 %v2756, %v3364
    %v3557 = vmul.f32 %v2756, %v3365
    %v3558 = vmul.f32 %v2756, %v3366
    %v3559 = vmul.f32 %v2756, %v3367
    %v3560 = vmul.f32 %v2756, %v3368
    %v3561 = vmul.f32 %v2756, %v3369
    %v3562 = vmul.f32 %v2756, %v3370
    %v3563 = vadd.f32 %v3555, %v2766
    %v3564 = vadd.f32 %v3556, %v2766
    %v3565 = vadd.f32 %v3557, %v2766
    %v3566 = vadd.f32 %v3558, %v2766
    %v3567 = vadd.f32 %v3559, %v2766
    %v3568 = vadd.f32 %v3560, %v2766
    %v3569 = vadd.f32 %v3561, %v2766
    %v3570 = vadd.f32 %v3562, %v2766
    %v3571 = vsel %vm3547, %v3563, %v3539
    %v3572 = vsel %vm3548, %v3564, %v3540
    %v3573 = vsel %vm3549, %v3565, %v3541
    %v3574 = vsel %vm3550, %v3566, %v3542
    %v3575 = vsel %vm3551, %v3567, %v3543
    %v3576 = vsel %vm3552, %v3568, %v3544
    %v3577 = vsel %vm3553, %v3569, %v3545
    %v3578 = vsel %vm3554, %v3570, %v3546
    %vm3579 = vcmp.ge.f32.partialorder %v3363, 2.25
    %vm3580 = vcmp.ge.f32.partialorder %v3364, 2.25
    %vm3581 = vcmp.ge.f32.partialorder %v3365, 2.25
    %vm3582 = vcmp.ge.f32.partialorder %v3366, 2.25
    %vm3583 = vcmp.ge.f32.partialorder %v3367, 2.25
    %vm3584 = vcmp.ge.f32.partialorder %v3368, 2.25
    %vm3585 = vcmp.ge.f32.partialorder %v3369, 2.25
    %vm3586 = vcmp.ge.f32.partialorder %v3370, 2.25
    %v3587 = vmul.f32 %v2792, %v3363
    %v3588 = vmul.f32 %v2792, %v3364
    %v3589 = vmul.f32 %v2792, %v3365
    %v3590 = vmul.f32 %v2792, %v3366
    %v3591 = vmul.f32 %v2792, %v3367
    %v3592 = vmul.f32 %v2792, %v3368
    %v3593 = vmul.f32 %v2792, %v3369
    %v3594 = vmul.f32 %v2792, %v3370
    %v3595 = vadd.f32 %v3587, %v2802
    %v3596 = vadd.f32 %v3588, %v2802
    %v3597 = vadd.f32 %v3589, %v2802
    %v3598 = vadd.f32 %v3590, %v2802
    %v3599 = vadd.f32 %v3591, %v2802
    %v3600 = vadd.f32 %v3592, %v2802
    %v3601 = vadd.f32 %v3593, %v2802
    %v3602 = vadd.f32 %v3594, %v2802
    %v3603 = vsel %vm3579, %v3595, %v3571
    %v3604 = vsel %vm3580, %v3596, %v3572
    %v3605 = vsel %vm3581, %v3597, %v3573
    %v3606 = vsel %vm3582, %v3598, %v3574
    %v3607 = vsel %vm3583, %v3599, %v3575
    %v3608 = vsel %vm3584, %v3600, %v3576
    %v3609 = vsel %vm3585, %v3601, %v3577
    %v3610 = vsel %vm3586, %v3602, %v3578
    %v3611 = vadd.f32 %v3363, %v3603
    %v3612 = vadd.f32 %v3364, %v3604
    %v3613 = vadd.f32 %v3365, %v3605
    %v3614 = vadd.f32 %v3366, %v3606
    %v3615 = vadd.f32 %v3367, %v3607
    %v3616 = vadd.f32 %v3368, %v3608
    %v3617 = vadd.f32 %v3369, %v3609
    %v3618 = vadd.f32 %v3370, %v3610
    %v3619 = vmax.f32 %v3611, -3.0
    %v3620 = vmax.f32 %v3612, -3.0
    %v3621 = vmax.f32 %v3613, -3.0
    %v3622 = vmax.f32 %v3614, -3.0
    %v3623 = vmax.f32 %v3615, -3.0
    %v3624 = vmax.f32 %v3616, -3.0
    %v3625 = vmax.f32 %v3617, -3.0
    %v3626 = vmax.f32 %v3618, -3.0
    %v3627 = vmin.f32 %v3619, 3.0
    %v3628 = vmin.f32 %v3620, 3.0
    %v3629 = vmin.f32 %v3621, 3.0
    %v3630 = vmin.f32 %v3622, 3.0
    %v3631 = vmin.f32 %v3623, 3.0
    %v3632 = vmin.f32 %v3624, 3.0
    %v3633 = vmin.f32 %v3625, 3.0
    %v3634 = vmin.f32 %v3626, 3.0
    %v3635 = vmul.f32 %v2548, %v3627
    %v3636 = vmul.f32 %v2548, %v3628
    %v3637 = vmul.f32 %v2548, %v3629
    %v3638 = vmul.f32 %v2548, %v3630
    %v3639 = vmul.f32 %v2548, %v3631
    %v3640 = vmul.f32 %v2548, %v3632
    %v3641 = vmul.f32 %v2548, %v3633
    %v3642 = vmul.f32 %v2548, %v3634
    %v3643 = vadd.f32 %v3635, %v2558
    %v3644 = vadd.f32 %v3636, %v2558
    %v3645 = vadd.f32 %v3637, %v2558
    %v3646 = vadd.f32 %v3638, %v2558
    %v3647 = vadd.f32 %v3639, %v2558
    %v3648 = vadd.f32 %v3640, %v2558
    %v3649 = vadd.f32 %v3641, %v2558
    %v3650 = vadd.f32 %v3642, %v2558
    %vm3651 = vcmp.ge.f32.partialorder %v3627, -2.25
    %vm3652 = vcmp.ge.f32.partialorder %v3628, -2.25
    %vm3653 = vcmp.ge.f32.partialorder %v3629, -2.25
    %vm3654 = vcmp.ge.f32.partialorder %v3630, -2.25
    %vm3655 = vcmp.ge.f32.partialorder %v3631, -2.25
    %vm3656 = vcmp.ge.f32.partialorder %v3632, -2.25
    %vm3657 = vcmp.ge.f32.partialorder %v3633, -2.25
    %vm3658 = vcmp.ge.f32.partialorder %v3634, -2.25
    %v3659 = vmul.f32 %v2576, %v3627
    %v3660 = vmul.f32 %v2576, %v3628
    %v3661 = vmul.f32 %v2576, %v3629
    %v3662 = vmul.f32 %v2576, %v3630
    %v3663 = vmul.f32 %v2576, %v3631
    %v3664 = vmul.f32 %v2576, %v3632
    %v3665 = vmul.f32 %v2576, %v3633
    %v3666 = vmul.f32 %v2576, %v3634
    %v3667 = vadd.f32 %v3659, %v2586
    %v3668 = vadd.f32 %v3660, %v2586
    %v3669 = vadd.f32 %v3661, %v2586
    %v3670 = vadd.f32 %v3662, %v2586
    %v3671 = vadd.f32 %v3663, %v2586
    %v3672 = vadd.f32 %v3664, %v2586
    %v3673 = vadd.f32 %v3665, %v2586
    %v3674 = vadd.f32 %v3666, %v2586
    %v3675 = vsel %vm3651, %v3667, %v3643
    %v3676 = vsel %vm3652, %v3668, %v3644
    %v3677 = vsel %vm3653, %v3669, %v3645
    %v3678 = vsel %vm3654, %v3670, %v3646
    %v3679 = vsel %vm3655, %v3671, %v3647
    %v3680 = vsel %vm3656, %v3672, %v3648
    %v3681 = vsel %vm3657, %v3673, %v3649
    %v3682 = vsel %vm3658, %v3674, %v3650
    %vm3683 = vcmp.ge.f32.partialorder %v3627, -1.5
    %vm3684 = vcmp.ge.f32.partialorder %v3628, -1.5
    %vm3685 = vcmp.ge.f32.partialorder %v3629, -1.5
    %vm3686 = vcmp.ge.f32.partialorder %v3630, -1.5
    %vm3687 = vcmp.ge.f32.partialorder %v3631, -1.5
    %vm3688 = vcmp.ge.f32.partialorder %v3632, -1.5
    %vm3689 = vcmp.ge.f32.partialorder %v3633, -1.5
    %vm3690 = vcmp.ge.f32.partialorder %v3634, -1.5
    %v3691 = vmul.f32 %v2612, %v3627
    %v3692 = vmul.f32 %v2612, %v3628
    %v3693 = vmul.f32 %v2612, %v3629
    %v3694 = vmul.f32 %v2612, %v3630
    %v3695 = vmul.f32 %v2612, %v3631
    %v3696 = vmul.f32 %v2612, %v3632
    %v3697 = vmul.f32 %v2612, %v3633
    %v3698 = vmul.f32 %v2612, %v3634
    %v3699 = vadd.f32 %v3691, %v2622
    %v3700 = vadd.f32 %v3692, %v2622
    %v3701 = vadd.f32 %v3693, %v2622
    %v3702 = vadd.f32 %v3694, %v2622
    %v3703 = vadd.f32 %v3695, %v2622
    %v3704 = vadd.f32 %v3696, %v2622
    %v3705 = vadd.f32 %v3697, %v2622
    %v3706 = vadd.f32 %v3698, %v2622
    %v3707 = vsel %vm3683, %v3699, %v3675
    %v3708 = vsel %vm3684, %v3700, %v3676
    %v3709 = vsel %vm3685, %v3701, %v3677
    %v3710 = vsel %vm3686, %v3702, %v3678
    %v3711 = vsel %vm3687, %v3703, %v3679
    %v3712 = vsel %vm3688, %v3704, %v3680
    %v3713 = vsel %vm3689, %v3705, %v3681
    %v3714 = vsel %vm3690, %v3706, %v3682
    %vm3715 = vcmp.ge.f32.partialorder %v3627, -0.75
    %vm3716 = vcmp.ge.f32.partialorder %v3628, -0.75
    %vm3717 = vcmp.ge.f32.partialorder %v3629, -0.75
    %vm3718 = vcmp.ge.f32.partialorder %v3630, -0.75
    %vm3719 = vcmp.ge.f32.partialorder %v3631, -0.75
    %vm3720 = vcmp.ge.f32.partialorder %v3632, -0.75
    %vm3721 = vcmp.ge.f32.partialorder %v3633, -0.75
    %vm3722 = vcmp.ge.f32.partialorder %v3634, -0.75
    %v3723 = vmul.f32 %v2648, %v3627
    %v3724 = vmul.f32 %v2648, %v3628
    %v3725 = vmul.f32 %v2648, %v3629
    %v3726 = vmul.f32 %v2648, %v3630
    %v3727 = vmul.f32 %v2648, %v3631
    %v3728 = vmul.f32 %v2648, %v3632
    %v3729 = vmul.f32 %v2648, %v3633
    %v3730 = vmul.f32 %v2648, %v3634
    %v3731 = vadd.f32 %v3723, %v2658
    %v3732 = vadd.f32 %v3724, %v2658
    %v3733 = vadd.f32 %v3725, %v2658
    %v3734 = vadd.f32 %v3726, %v2658
    %v3735 = vadd.f32 %v3727, %v2658
    %v3736 = vadd.f32 %v3728, %v2658
    %v3737 = vadd.f32 %v3729, %v2658
    %v3738 = vadd.f32 %v3730, %v2658
    %v3739 = vsel %vm3715, %v3731, %v3707
    %v3740 = vsel %vm3716, %v3732, %v3708
    %v3741 = vsel %vm3717, %v3733, %v3709
    %v3742 = vsel %vm3718, %v3734, %v3710
    %v3743 = vsel %vm3719, %v3735, %v3711
    %v3744 = vsel %vm3720, %v3736, %v3712
    %v3745 = vsel %vm3721, %v3737, %v3713
    %v3746 = vsel %vm3722, %v3738, %v3714
    %vm3747 = vcmp.ge.f32.partialorder %v3627, 0.0
    %vm3748 = vcmp.ge.f32.partialorder %v3628, 0.0
    %vm3749 = vcmp.ge.f32.partialorder %v3629, 0.0
    %vm3750 = vcmp.ge.f32.partialorder %v3630, 0.0
    %vm3751 = vcmp.ge.f32.partialorder %v3631, 0.0
    %vm3752 = vcmp.ge.f32.partialorder %v3632, 0.0
    %vm3753 = vcmp.ge.f32.partialorder %v3633, 0.0
    %vm3754 = vcmp.ge.f32.partialorder %v3634, 0.0
    %v3755 = vmul.f32 %v2684, %v3627
    %v3756 = vmul.f32 %v2684, %v3628
    %v3757 = vmul.f32 %v2684, %v3629
    %v3758 = vmul.f32 %v2684, %v3630
    %v3759 = vmul.f32 %v2684, %v3631
    %v3760 = vmul.f32 %v2684, %v3632
    %v3761 = vmul.f32 %v2684, %v3633
    %v3762 = vmul.f32 %v2684, %v3634
    %v3763 = vadd.f32 %v3755, %v2694
    %v3764 = vadd.f32 %v3756, %v2694
    %v3765 = vadd.f32 %v3757, %v2694
    %v3766 = vadd.f32 %v3758, %v2694
    %v3767 = vadd.f32 %v3759, %v2694
    %v3768 = vadd.f32 %v3760, %v2694
    %v3769 = vadd.f32 %v3761, %v2694
    %v3770 = vadd.f32 %v3762, %v2694
    %v3771 = vsel %vm3747, %v3763, %v3739
    %v3772 = vsel %vm3748, %v3764, %v3740
    %v3773 = vsel %vm3749, %v3765, %v3741
    %v3774 = vsel %vm3750, %v3766, %v3742
    %v3775 = vsel %vm3751, %v3767, %v3743
    %v3776 = vsel %vm3752, %v3768, %v3744
    %v3777 = vsel %vm3753, %v3769, %v3745
    %v3778 = vsel %vm3754, %v3770, %v3746
    %vm3779 = vcmp.ge.f32.partialorder %v3627, 0.75
    %vm3780 = vcmp.ge.f32.partialorder %v3628, 0.75
    %vm3781 = vcmp.ge.f32.partialorder %v3629, 0.75
    %vm3782 = vcmp.ge.f32.partialorder %v3630, 0.75
    %vm3783 = vcmp.ge.f32.partialorder %v3631, 0.75
    %vm3784 = vcmp.ge.f32.partialorder %v3632, 0.75
    %vm3785 = vcmp.ge.f32.partialorder %v3633, 0.75
    %vm3786 = vcmp.ge.f32.partialorder %v3634, 0.75
    %v3787 = vmul.f32 %v2720, %v3627
    %v3788 = vmul.f32 %v2720, %v3628
    %v3789 = vmul.f32 %v2720, %v3629
    %v3790 = vmul.f32 %v2720, %v3630
    %v3791 = vmul.f32 %v2720, %v3631
    %v3792 = vmul.f32 %v2720, %v3632
    %v3793 = vmul.f32 %v2720, %v3633
    %v3794 = vmul.f32 %v2720, %v3634
    %v3795 = vadd.f32 %v3787, %v2730
    %v3796 = vadd.f32 %v3788, %v2730
    %v3797 = vadd.f32 %v3789, %v2730
    %v3798 = vadd.f32 %v3790, %v2730
    %v3799 = vadd.f32 %v3791, %v2730
    %v3800 = vadd.f32 %v3792, %v2730
    %v3801 = vadd.f32 %v3793, %v2730
    %v3802 = vadd.f32 %v3794, %v2730
    %v3803 = vsel %vm3779, %v3795, %v3771
    %v3804 = vsel %vm3780, %v3796, %v3772
    %v3805 = vsel %vm3781, %v3797, %v3773
    %v3806 = vsel %vm3782, %v3798, %v3774
    %v3807 = vsel %vm3783, %v3799, %v3775
    %v3808 = vsel %vm3784, %v3800, %v3776
    %v3809 = vsel %vm3785, %v3801, %v3777
    %v3810 = vsel %vm3786, %v3802, %v3778
    %vm3811 = vcmp.ge.f32.partialorder %v3627, 1.5
    %vm3812 = vcmp.ge.f32.partialorder %v3628, 1.5
    %vm3813 = vcmp.ge.f32.partialorder %v3629, 1.5
    %vm3814 = vcmp.ge.f32.partialorder %v3630, 1.5
    %vm3815 = vcmp.ge.f32.partialorder %v3631, 1.5
    %vm3816 = vcmp.ge.f32.partialorder %v3632, 1.5
    %vm3817 = vcmp.ge.f32.partialorder %v3633, 1.5
    %vm3818 = vcmp.ge.f32.partialorder %v3634, 1.5
    %v3819 = vmul.f32 %v2756, %v3627
    %v3820 = vmul.f32 %v2756, %v3628
    %v3821 = vmul.f32 %v2756, %v3629
    %v3822 = vmul.f32 %v2756, %v3630
    %v3823 = vmul.f32 %v2756, %v3631
    %v3824 = vmul.f32 %v2756, %v3632
    %v3825 = vmul.f32 %v2756, %v3633
    %v3826 = vmul.f32 %v2756, %v3634
    %v3827 = vadd.f32 %v3819, %v2766
    %v3828 = vadd.f32 %v3820, %v2766
    %v3829 = vadd.f32 %v3821, %v2766
    %v3830 = vadd.f32 %v3822, %v2766
    %v3831 = vadd.f32 %v3823, %v2766
    %v3832 = vadd.f32 %v3824, %v2766
    %v3833 = vadd.f32 %v3825, %v2766
    %v3834 = vadd.f32 %v3826, %v2766
    %v3835 = vsel %vm3811, %v3827, %v3803
    %v3836 = vsel %vm3812, %v3828, %v3804
    %v3837 = vsel %vm3813, %v3829, %v3805
    %v3838 = vsel %vm3814, %v3830, %v3806
    %v3839 = vsel %vm3815, %v3831, %v3807
    %v3840 = vsel %vm3816, %v3832, %v3808
    %v3841 = vsel %vm3817, %v3833, %v3809
    %v3842 = vsel %vm3818, %v3834, %v3810
    %vm3843 = vcmp.ge.f32.partialorder %v3627, 2.25
    %vm3844 = vcmp.ge.f32.partialorder %v3628, 2.25
    %vm3845 = vcmp.ge.f32.partialorder %v3629, 2.25
    %vm3846 = vcmp.ge.f32.partialorder %v3630, 2.25
    %vm3847 = vcmp.ge.f32.partialorder %v3631, 2.25
    %vm3848 = vcmp.ge.f32.partialorder %v3632, 2.25
    %vm3849 = vcmp.ge.f32.partialorder %v3633, 2.25
    %vm3850 = vcmp.ge.f32.partialorder %v3634, 2.25
    %v3851 = vmul.f32 %v2792, %v3627
    %v3852 = vmul.f32 %v2792, %v3628
    %v3853 = vmul.f32 %v2792, %v3629
    %v3854 = vmul.f32 %v2792, %v3630
    %v3855 = vmul.f32 %v2792, %v3631
    %v3856 = vmul.f32 %v2792, %v3632
    %v3857 = vmul.f32 %v2792, %v3633
    %v3858 = vmul.f32 %v2792, %v3634
    %v3859 = vadd.f32 %v3851, %v2802
    %v3860 = vadd.f32 %v3852, %v2802
    %v3861 = vadd.f32 %v3853, %v2802
    %v3862 = vadd.f32 %v3854, %v2802
    %v3863 = vadd.f32 %v3855, %v2802
    %v3864 = vadd.f32 %v3856, %v2802
    %v3865 = vadd.f32 %v3857, %v2802
    %v3866 = vadd.f32 %v3858, %v2802
    %v3867 = vsel %vm3843, %v3859, %v3835
    %v3868 = vsel %vm3844, %v3860, %v3836
    %v3869 = vsel %vm3845, %v3861, %v3837
    %v3870 = vsel %vm3846, %v3862, %v3838
    %v3871 = vsel %vm3847, %v3863, %v3839
    %v3872 = vsel %vm3848, %v3864, %v3840
    %v3873 = vsel %vm3849, %v3865, %v3841
    %v3874 = vsel %vm3850, %v3866, %v3842
    %v3875 = vadd.f32 %v3627, %v3867
    %v3876 = vadd.f32 %v3628, %v3868
    %v3877 = vadd.f32 %v3629, %v3869
    %v3878 = vadd.f32 %v3630, %v3870
    %v3879 = vadd.f32 %v3631, %v3871
    %v3880 = vadd.f32 %v3632, %v3872
    %v3881 = vadd.f32 %v3633, %v3873
    %v3882 = vadd.f32 %v3634, %v3874
    %v3883 = vmax.f32 %v3875, -3.0
    %v3884 = vmax.f32 %v3876, -3.0
    %v3885 = vmax.f32 %v3877, -3.0
    %v3886 = vmax.f32 %v3878, -3.0
    %v3887 = vmax.f32 %v3879, -3.0
    %v3888 = vmax.f32 %v3880, -3.0
    %v3889 = vmax.f32 %v3881, -3.0
    %v3890 = vmax.f32 %v3882, -3.0
    %v3891 = vmin.f32 %v3883, 3.0
    %v3892 = vmin.f32 %v3884, 3.0
    %v3893 = vmin.f32 %v3885, 3.0
    %v3894 = vmin.f32 %v3886, 3.0
    %v3895 = vmin.f32 %v3887, 3.0
    %v3896 = vmin.f32 %v3888, 3.0
    %v3897 = vmin.f32 %v3889, 3.0
    %v3898 = vmin.f32 %v3890, 3.0
    %v3899 = vmul.f32 %v2548, %v3891
    %v3900 = vmul.f32 %v2548, %v3892
    %v3901 = vmul.f32 %v2548, %v3893
    %v3902 = vmul.f32 %v2548, %v3894
    %v3903 = vmul.f32 %v2548, %v3895
    %v3904 = vmul.f32 %v2548, %v3896
    %v3905 = vmul.f32 %v2548, %v3897
    %v3906 = vmul.f32 %v2548, %v3898
    %v3907 = vadd.f32 %v3899, %v2558
    %v3908 = vadd.f32 %v3900, %v2558
    %v3909 = vadd.f32 %v3901, %v2558
    %v3910 = vadd.f32 %v3902, %v2558
    %v3911 = vadd.f32 %v3903, %v2558
    %v3912 = vadd.f32 %v3904, %v2558
    %v3913 = vadd.f32 %v3905, %v2558
    %v3914 = vadd.f32 %v3906, %v2558
    %vm3915 = vcmp.ge.f32.partialorder %v3891, -2.25
    %vm3916 = vcmp.ge.f32.partialorder %v3892, -2.25
    %vm3917 = vcmp.ge.f32.partialorder %v3893, -2.25
    %vm3918 = vcmp.ge.f32.partialorder %v3894, -2.25
    %vm3919 = vcmp.ge.f32.partialorder %v3895, -2.25
    %vm3920 = vcmp.ge.f32.partialorder %v3896, -2.25
    %vm3921 = vcmp.ge.f32.partialorder %v3897, -2.25
    %vm3922 = vcmp.ge.f32.partialorder %v3898, -2.25
    %v3923 = vmul.f32 %v2576, %v3891
    %v3924 = vmul.f32 %v2576, %v3892
    %v3925 = vmul.f32 %v2576, %v3893
    %v3926 = vmul.f32 %v2576, %v3894
    %v3927 = vmul.f32 %v2576, %v3895
    %v3928 = vmul.f32 %v2576, %v3896
    %v3929 = vmul.f32 %v2576, %v3897
    %v3930 = vmul.f32 %v2576, %v3898
    %v3931 = vadd.f32 %v3923, %v2586
    %v3932 = vadd.f32 %v3924, %v2586
    %v3933 = vadd.f32 %v3925, %v2586
    %v3934 = vadd.f32 %v3926, %v2586
    %v3935 = vadd.f32 %v3927, %v2586
    %v3936 = vadd.f32 %v3928, %v2586
    %v3937 = vadd.f32 %v3929, %v2586
    %v3938 = vadd.f32 %v3930, %v2586
    %v3939 = vsel %vm3915, %v3931, %v3907
    %v3940 = vsel %vm3916, %v3932, %v3908
    %v3941 = vsel %vm3917, %v3933, %v3909
    %v3942 = vsel %vm3918, %v3934, %v3910
    %v3943 = vsel %vm3919, %v3935, %v3911
    %v3944 = vsel %vm3920, %v3936, %v3912
    %v3945 = vsel %vm3921, %v3937, %v3913
    %v3946 = vsel %vm3922, %v3938, %v3914
    %vm3947 = vcmp.ge.f32.partialorder %v3891, -1.5
    %vm3948 = vcmp.ge.f32.partialorder %v3892, -1.5
    %vm3949 = vcmp.ge.f32.partialorder %v3893, -1.5
    %vm3950 = vcmp.ge.f32.partialorder %v3894, -1.5
    %vm3951 = vcmp.ge.f32.partialorder %v3895, -1.5
    %vm3952 = vcmp.ge.f32.partialorder %v3896, -1.5
    %vm3953 = vcmp.ge.f32.partialorder %v3897, -1.5
    %vm3954 = vcmp.ge.f32.partialorder %v3898, -1.5
    %v3955 = vmul.f32 %v2612, %v3891
    %v3956 = vmul.f32 %v2612, %v3892
    %v3957 = vmul.f32 %v2612, %v3893
    %v3958 = vmul.f32 %v2612, %v3894
    %v3959 = vmul.f32 %v2612, %v3895
    %v3960 = vmul.f32 %v2612, %v3896
    %v3961 = vmul.f32 %v2612, %v3897
    %v3962 = vmul.f32 %v2612, %v3898
    %v3963 = vadd.f32 %v3955, %v2622
    %v3964 = vadd.f32 %v3956, %v2622
    %v3965 = vadd.f32 %v3957, %v2622
    %v3966 = vadd.f32 %v3958, %v2622
    %v3967 = vadd.f32 %v3959, %v2622
    %v3968 = vadd.f32 %v3960, %v2622
    %v3969 = vadd.f32 %v3961, %v2622
    %v3970 = vadd.f32 %v3962, %v2622
    %v3971 = vsel %vm3947, %v3963, %v3939
    %v3972 = vsel %vm3948, %v3964, %v3940
    %v3973 = vsel %vm3949, %v3965, %v3941
    %v3974 = vsel %vm3950, %v3966, %v3942
    %v3975 = vsel %vm3951, %v3967, %v3943
    %v3976 = vsel %vm3952, %v3968, %v3944
    %v3977 = vsel %vm3953, %v3969, %v3945
    %v3978 = vsel %vm3954, %v3970, %v3946
    %vm3979 = vcmp.ge.f32.partialorder %v3891, -0.75
    %vm3980 = vcmp.ge.f32.partialorder %v3892, -0.75
    %vm3981 = vcmp.ge.f32.partialorder %v3893, -0.75
    %vm3982 = vcmp.ge.f32.partialorder %v3894, -0.75
    %vm3983 = vcmp.ge.f32.partialorder %v3895, -0.75
    %vm3984 = vcmp.ge.f32.partialorder %v3896, -0.75
    %vm3985 = vcmp.ge.f32.partialorder %v3897, -0.75
    %vm3986 = vcmp.ge.f32.partialorder %v3898, -0.75
    %v3987 = vmul.f32 %v2648, %v3891
    %v3988 = vmul.f32 %v2648, %v3892
    %v3989 = vmul.f32 %v2648, %v3893
    %v3990 = vmul.f32 %v2648, %v3894
    %v3991 = vmul.f32 %v2648, %v3895
    %v3992 = vmul.f32 %v2648, %v3896
    %v3993 = vmul.f32 %v2648, %v3897
    %v3994 = vmul.f32 %v2648, %v3898
    %v3995 = vadd.f32 %v3987, %v2658
    %v3996 = vadd.f32 %v3988, %v2658
    %v3997 = vadd.f32 %v3989, %v2658
    %v3998 = vadd.f32 %v3990, %v2658
    %v3999 = vadd.f32 %v3991, %v2658
    %v4000 = vadd.f32 %v3992, %v2658
    %v4001 = vadd.f32 %v3993, %v2658
    %v4002 = vadd.f32 %v3994, %v2658
    %v4003 = vsel %vm3979, %v3995, %v3971
    %v4004 = vsel %vm3980, %v3996, %v3972
    %v4005 = vsel %vm3981, %v3997, %v3973
    %v4006 = vsel %vm3982, %v3998, %v3974
    %v4007 = vsel %vm3983, %v3999, %v3975
    %v4008 = vsel %vm3984, %v4000, %v3976
    %v4009 = vsel %vm3985, %v4001, %v3977
    %v4010 = vsel %vm3986, %v4002, %v3978
    %vm4011 = vcmp.ge.f32.partialorder %v3891, 0.0
    %vm4012 = vcmp.ge.f32.partialorder %v3892, 0.0
    %vm4013 = vcmp.ge.f32.partialorder %v3893, 0.0
    %vm4014 = vcmp.ge.f32.partialorder %v3894, 0.0
    %vm4015 = vcmp.ge.f32.partialorder %v3895, 0.0
    %vm4016 = vcmp.ge.f32.partialorder %v3896, 0.0
    %vm4017 = vcmp.ge.f32.partialorder %v3897, 0.0
    %vm4018 = vcmp.ge.f32.partialorder %v3898, 0.0
    %v4019 = vmul.f32 %v2684, %v3891
    %v4020 = vmul.f32 %v2684, %v3892
    %v4021 = vmul.f32 %v2684, %v3893
    %v4022 = vmul.f32 %v2684, %v3894
    %v4023 = vmul.f32 %v2684, %v3895
    %v4024 = vmul.f32 %v2684, %v3896
    %v4025 = vmul.f32 %v2684, %v3897
    %v4026 = vmul.f32 %v2684, %v3898
    %v4027 = vadd.f32 %v4019, %v2694
    %v4028 = vadd.f32 %v4020, %v2694
    %v4029 = vadd.f32 %v4021, %v2694
    %v4030 = vadd.f32 %v4022, %v2694
    %v4031 = vadd.f32 %v4023, %v2694
    %v4032 = vadd.f32 %v4024, %v2694
    %v4033 = vadd.f32 %v4025, %v2694
    %v4034 = vadd.f32 %v4026, %v2694
    %v4035 = vsel %vm4011, %v4027, %v4003
    %v4036 = vsel %vm4012, %v4028, %v4004
    %v4037 = vsel %vm4013, %v4029, %v4005
    %v4038 = vsel %vm4014, %v4030, %v4006
    %v4039 = vsel %vm4015, %v4031, %v4007
    %v4040 = vsel %vm4016, %v4032, %v4008
    %v4041 = vsel %vm4017, %v4033, %v4009
    %v4042 = vsel %vm4018, %v4034, %v4010
    %vm4043 = vcmp.ge.f32.partialorder %v3891, 0.75
    %vm4044 = vcmp.ge.f32.partialorder %v3892, 0.75
    %vm4045 = vcmp.ge.f32.partialorder %v3893, 0.75
    %vm4046 = vcmp.ge.f32.partialorder %v3894, 0.75
    %vm4047 = vcmp.ge.f32.partialorder %v3895, 0.75
    %vm4048 = vcmp.ge.f32.partialorder %v3896, 0.75
    %vm4049 = vcmp.ge.f32.partialorder %v3897, 0.75
    %vm4050 = vcmp.ge.f32.partialorder %v3898, 0.75
    %v4051 = vmul.f32 %v2720, %v3891
    %v4052 = vmul.f32 %v2720, %v3892
    %v4053 = vmul.f32 %v2720, %v3893
    %v4054 = vmul.f32 %v2720, %v3894
    %v4055 = vmul.f32 %v2720, %v3895
    %v4056 = vmul.f32 %v2720, %v3896
    %v4057 = vmul.f32 %v2720, %v3897
    %v4058 = vmul.f32 %v2720, %v3898
    %v4059 = vadd.f32 %v4051, %v2730
    %v4060 = vadd.f32 %v4052, %v2730
    %v4061 = vadd.f32 %v4053, %v2730
    %v4062 = vadd.f32 %v4054, %v2730
    %v4063 = vadd.f32 %v4055, %v2730
    %v4064 = vadd.f32 %v4056, %v2730
    %v4065 = vadd.f32 %v4057, %v2730
    %v4066 = vadd.f32 %v4058, %v2730
    %v4067 = vsel %vm4043, %v4059, %v4035
    %v4068 = vsel %vm4044, %v4060, %v4036
    %v4069 = vsel %vm4045, %v4061, %v4037
    %v4070 = vsel %vm4046, %v4062, %v4038
    %v4071 = vsel %vm4047, %v4063, %v4039
    %v4072 = vsel %vm4048, %v4064, %v4040
    %v4073 = vsel %vm4049, %v4065, %v4041
    %v4074 = vsel %vm4050, %v4066, %v4042
    %vm4075 = vcmp.ge.f32.partialorder %v3891, 1.5
    %vm4076 = vcmp.ge.f32.partialorder %v3892, 1.5
    %vm4077 = vcmp.ge.f32.partialorder %v3893, 1.5
    %vm4078 = vcmp.ge.f32.partialorder %v3894, 1.5
    %vm4079 = vcmp.ge.f32.partialorder %v3895, 1.5
    %vm4080 = vcmp.ge.f32.partialorder %v3896, 1.5
    %vm4081 = vcmp.ge.f32.partialorder %v3897, 1.5
    %vm4082 = vcmp.ge.f32.partialorder %v3898, 1.5
    %v4083 = vmul.f32 %v2756, %v3891
    %v4084 = vmul.f32 %v2756, %v3892
    %v4085 = vmul.f32 %v2756, %v3893
    %v4086 = vmul.f32 %v2756, %v3894
    %v4087 = vmul.f32 %v2756, %v3895
    %v4088 = vmul.f32 %v2756, %v3896
    %v4089 = vmul.f32 %v2756, %v3897
    %v4090 = vmul.f32 %v2756, %v3898
    %v4091 = vadd.f32 %v4083, %v2766
    %v4092 = vadd.f32 %v4084, %v2766
    %v4093 = vadd.f32 %v4085, %v2766
    %v4094 = vadd.f32 %v4086, %v2766
    %v4095 = vadd.f32 %v4087, %v2766
    %v4096 = vadd.f32 %v4088, %v2766
    %v4097 = vadd.f32 %v4089, %v2766
    %v4098 = vadd.f32 %v4090, %v2766
    %v4099 = vsel %vm4075, %v4091, %v4067
    %v4100 = vsel %vm4076, %v4092, %v4068
    %v4101 = vsel %vm4077, %v4093, %v4069
    %v4102 = vsel %vm4078, %v4094, %v4070
    %v4103 = vsel %vm4079, %v4095, %v4071
    %v4104 = vsel %vm4080, %v4096, %v4072
    %v4105 = vsel %vm4081, %v4097, %v4073
    %v4106 = vsel %vm4082, %v4098, %v4074
    %vm4107 = vcmp.ge.f32.partialorder %v3891, 2.25
    %vm4108 = vcmp.ge.f32.partialorder %v3892, 2.25
    %vm4109 = vcmp.ge.f32.partialorder %v3893, 2.25
    %vm4110 = vcmp.ge.f32.partialorder %v3894, 2.25
    %vm4111 = vcmp.ge.f32.partialorder %v3895, 2.25
    %vm4112 = vcmp.ge.f32.partialorder %v3896, 2.25
    %vm4113 = vcmp.ge.f32.partialorder %v3897, 2.25
    %vm4114 = vcmp.ge.f32.partialorder %v3898, 2.25
    %v4115 = vmul.f32 %v2792, %v3891
    %v4116 = vmul.f32 %v2792, %v3892
    %v4117 = vmul.f32 %v2792, %v3893
    %v4118 = vmul.f32 %v2792, %v3894
    %v4119 = vmul.f32 %v2792, %v3895
    %v4120 = vmul.f32 %v2792, %v3896
    %v4121 = vmul.f32 %v2792, %v3897
    %v4122 = vmul.f32 %v2792, %v3898
    %v4123 = vadd.f32 %v4115, %v2802
    %v4124 = vadd.f32 %v4116, %v2802
    %v4125 = vadd.f32 %v4117, %v2802
    %v4126 = vadd.f32 %v4118, %v2802
    %v4127 = vadd.f32 %v4119, %v2802
    %v4128 = vadd.f32 %v4120, %v2802
    %v4129 = vadd.f32 %v4121, %v2802
    %v4130 = vadd.f32 %v4122, %v2802
    %v4131 = vsel %vm4107, %v4123, %v4099
    %v4132 = vsel %vm4108, %v4124, %v4100
    %v4133 = vsel %vm4109, %v4125, %v4101
    %v4134 = vsel %vm4110, %v4126, %v4102
    %v4135 = vsel %vm4111, %v4127, %v4103
    %v4136 = vsel %vm4112, %v4128, %v4104
    %v4137 = vsel %vm4113, %v4129, %v4105
    %v4138 = vsel %vm4114, %v4130, %v4106
    %v4139 = vadd.f32 %v3891, %v4131
    %v4140 = vadd.f32 %v3892, %v4132
    %v4141 = vadd.f32 %v3893, %v4133
    %v4142 = vadd.f32 %v3894, %v4134
    %v4143 = vadd.f32 %v3895, %v4135
    %v4144 = vadd.f32 %v3896, %v4136
    %v4145 = vadd.f32 %v3897, %v4137
    %v4146 = vadd.f32 %v3898, %v4138
    %v4147 = vmax.f32 %v4139, -3.0
    %v4148 = vmax.f32 %v4140, -3.0
    %v4149 = vmax.f32 %v4141, -3.0
    %v4150 = vmax.f32 %v4142, -3.0
    %v4151 = vmax.f32 %v4143, -3.0
    %v4152 = vmax.f32 %v4144, -3.0
    %v4153 = vmax.f32 %v4145, -3.0
    %v4154 = vmax.f32 %v4146, -3.0
    %v4155 = vmin.f32 %v4147, 3.0
    %v4156 = vmin.f32 %v4148, 3.0
    %v4157 = vmin.f32 %v4149, 3.0
    %v4158 = vmin.f32 %v4150, 3.0
    %v4159 = vmin.f32 %v4151, 3.0
    %v4160 = vmin.f32 %v4152, 3.0
    %v4161 = vmin.f32 %v4153, 3.0
    %v4162 = vmin.f32 %v4154, 3.0
    %v4163 = vmul.f32 %v2548, %v4155
    %v4164 = vmul.f32 %v2548, %v4156
    %v4165 = vmul.f32 %v2548, %v4157
    %v4166 = vmul.f32 %v2548, %v4158
    %v4167 = vmul.f32 %v2548, %v4159
    %v4168 = vmul.f32 %v2548, %v4160
    %v4169 = vmul.f32 %v2548, %v4161
    %v4170 = vmul.f32 %v2548, %v4162
    %v4171 = vadd.f32 %v4163, %v2558
    %v4172 = vadd.f32 %v4164, %v2558
    %v4173 = vadd.f32 %v4165, %v2558
    %v4174 = vadd.f32 %v4166, %v2558
    %v4175 = vadd.f32 %v4167, %v2558
    %v4176 = vadd.f32 %v4168, %v2558
    %v4177 = vadd.f32 %v4169, %v2558
    %v4178 = vadd.f32 %v4170, %v2558
    %vm4179 = vcmp.ge.f32.partialorder %v4155, -2.25
    %vm4180 = vcmp.ge.f32.partialorder %v4156, -2.25
    %vm4181 = vcmp.ge.f32.partialorder %v4157, -2.25
    %vm4182 = vcmp.ge.f32.partialorder %v4158, -2.25
    %vm4183 = vcmp.ge.f32.partialorder %v4159, -2.25
    %vm4184 = vcmp.ge.f32.partialorder %v4160, -2.25
    %vm4185 = vcmp.ge.f32.partialorder %v4161, -2.25
    %vm4186 = vcmp.ge.f32.partialorder %v4162, -2.25
    %v4187 = vmul.f32 %v2576, %v4155
    %v4188 = vmul.f32 %v2576, %v4156
    %v4189 = vmul.f32 %v2576, %v4157
    %v4190 = vmul.f32 %v2576, %v4158
    %v4191 = vmul.f32 %v2576, %v4159
    %v4192 = vmul.f32 %v2576, %v4160
    %v4193 = vmul.f32 %v2576, %v4161
    %v4194 = vmul.f32 %v2576, %v4162
    %v4195 = vadd.f32 %v4187, %v2586
    %v4196 = vadd.f32 %v4188, %v2586
    %v4197 = vadd.f32 %v4189, %v2586
    %v4198 = vadd.f32 %v4190, %v2586
    %v4199 = vadd.f32 %v4191, %v2586
    %v4200 = vadd.f32 %v4192, %v2586
    %v4201 = vadd.f32 %v4193, %v2586
    %v4202 = vadd.f32 %v4194, %v2586
    %v4203 = vsel %vm4179, %v4195, %v4171
    %v4204 = vsel %vm4180, %v4196, %v4172
    %v4205 = vsel %vm4181, %v4197, %v4173
    %v4206 = vsel %vm4182, %v4198, %v4174
    %v4207 = vsel %vm4183, %v4199, %v4175
    %v4208 = vsel %vm4184, %v4200, %v4176
    %v4209 = vsel %vm4185, %v4201, %v4177
    %v4210 = vsel %vm4186, %v4202, %v4178
    %vm4211 = vcmp.ge.f32.partialorder %v4155, -1.5
    %vm4212 = vcmp.ge.f32.partialorder %v4156, -1.5
    %vm4213 = vcmp.ge.f32.partialorder %v4157, -1.5
    %vm4214 = vcmp.ge.f32.partialorder %v4158, -1.5
    %vm4215 = vcmp.ge.f32.partialorder %v4159, -1.5
    %vm4216 = vcmp.ge.f32.partialorder %v4160, -1.5
    %vm4217 = vcmp.ge.f32.partialorder %v4161, -1.5
    %vm4218 = vcmp.ge.f32.partialorder %v4162, -1.5
    %v4219 = vmul.f32 %v2612, %v4155
    %v4220 = vmul.f32 %v2612, %v4156
    %v4221 = vmul.f32 %v2612, %v4157
    %v4222 = vmul.f32 %v2612, %v4158
    %v4223 = vmul.f32 %v2612, %v4159
    %v4224 = vmul.f32 %v2612, %v4160
    %v4225 = vmul.f32 %v2612, %v4161
    %v4226 = vmul.f32 %v2612, %v4162
    %v4227 = vadd.f32 %v4219, %v2622
    %v4228 = vadd.f32 %v4220, %v2622
    %v4229 = vadd.f32 %v4221, %v2622
    %v4230 = vadd.f32 %v4222, %v2622
    %v4231 = vadd.f32 %v4223, %v2622
    %v4232 = vadd.f32 %v4224, %v2622
    %v4233 = vadd.f32 %v4225, %v2622
    %v4234 = vadd.f32 %v4226, %v2622
    %v4235 = vsel %vm4211, %v4227, %v4203
    %v4236 = vsel %vm4212, %v4228, %v4204
    %v4237 = vsel %vm4213, %v4229, %v4205
    %v4238 = vsel %vm4214, %v4230, %v4206
    %v4239 = vsel %vm4215, %v4231, %v4207
    %v4240 = vsel %vm4216, %v4232, %v4208
    %v4241 = vsel %vm4217, %v4233, %v4209
    %v4242 = vsel %vm4218, %v4234, %v4210
    %vm4243 = vcmp.ge.f32.partialorder %v4155, -0.75
    %vm4244 = vcmp.ge.f32.partialorder %v4156, -0.75
    %vm4245 = vcmp.ge.f32.partialorder %v4157, -0.75
    %vm4246 = vcmp.ge.f32.partialorder %v4158, -0.75
    %vm4247 = vcmp.ge.f32.partialorder %v4159, -0.75
    %vm4248 = vcmp.ge.f32.partialorder %v4160, -0.75
    %vm4249 = vcmp.ge.f32.partialorder %v4161, -0.75
    %vm4250 = vcmp.ge.f32.partialorder %v4162, -0.75
    %v4251 = vmul.f32 %v2648, %v4155
    %v4252 = vmul.f32 %v2648, %v4156
    %v4253 = vmul.f32 %v2648, %v4157
    %v4254 = vmul.f32 %v2648, %v4158
    %v4255 = vmul.f32 %v2648, %v4159
    %v4256 = vmul.f32 %v2648, %v4160
    %v4257 = vmul.f32 %v2648, %v4161
    %v4258 = vmul.f32 %v2648, %v4162
    %v4259 = vadd.f32 %v4251, %v2658
    %v4260 = vadd.f32 %v4252, %v2658
    %v4261 = vadd.f32 %v4253, %v2658
    %v4262 = vadd.f32 %v4254, %v2658
    %v4263 = vadd.f32 %v4255, %v2658
    %v4264 = vadd.f32 %v4256, %v2658
    %v4265 = vadd.f32 %v4257, %v2658
    %v4266 = vadd.f32 %v4258, %v2658
    %v4267 = vsel %vm4243, %v4259, %v4235
    %v4268 = vsel %vm4244, %v4260, %v4236
    %v4269 = vsel %vm4245, %v4261, %v4237
    %v4270 = vsel %vm4246, %v4262, %v4238
    %v4271 = vsel %vm4247, %v4263, %v4239
    %v4272 = vsel %vm4248, %v4264, %v4240
    %v4273 = vsel %vm4249, %v4265, %v4241
    %v4274 = vsel %vm4250, %v4266, %v4242
    %vm4275 = vcmp.ge.f32.partialorder %v4155, 0.0
    %vm4276 = vcmp.ge.f32.partialorder %v4156, 0.0
    %vm4277 = vcmp.ge.f32.partialorder %v4157, 0.0
    %vm4278 = vcmp.ge.f32.partialorder %v4158, 0.0
    %vm4279 = vcmp.ge.f32.partialorder %v4159, 0.0
    %vm4280 = vcmp.ge.f32.partialorder %v4160, 0.0
    %vm4281 = vcmp.ge.f32.partialorder %v4161, 0.0
    %vm4282 = vcmp.ge.f32.partialorder %v4162, 0.0
    %v4283 = vmul.f32 %v2684, %v4155
    %v4284 = vmul.f32 %v2684, %v4156
    %v4285 = vmul.f32 %v2684, %v4157
    %v4286 = vmul.f32 %v2684, %v4158
    %v4287 = vmul.f32 %v2684, %v4159
    %v4288 = vmul.f32 %v2684, %v4160
    %v4289 = vmul.f32 %v2684, %v4161
    %v4290 = vmul.f32 %v2684, %v4162
    %v4291 = vadd.f32 %v4283, %v2694
    %v4292 = vadd.f32 %v4284, %v2694
    %v4293 = vadd.f32 %v4285, %v2694
    %v4294 = vadd.f32 %v4286, %v2694
    %v4295 = vadd.f32 %v4287, %v2694
    %v4296 = vadd.f32 %v4288, %v2694
    %v4297 = vadd.f32 %v4289, %v2694
    %v4298 = vadd.f32 %v4290, %v2694
    %v4299 = vsel %vm4275, %v4291, %v4267
    %v4300 = vsel %vm4276, %v4292, %v4268
    %v4301 = vsel %vm4277, %v4293, %v4269
    %v4302 = vsel %vm4278, %v4294, %v4270
    %v4303 = vsel %vm4279, %v4295, %v4271
    %v4304 = vsel %vm4280, %v4296, %v4272
    %v4305 = vsel %vm4281, %v4297, %v4273
    %v4306 = vsel %vm4282, %v4298, %v4274
    %vm4307 = vcmp.ge.f32.partialorder %v4155, 0.75
    %vm4308 = vcmp.ge.f32.partialorder %v4156, 0.75
    %vm4309 = vcmp.ge.f32.partialorder %v4157, 0.75
    %vm4310 = vcmp.ge.f32.partialorder %v4158, 0.75
    %vm4311 = vcmp.ge.f32.partialorder %v4159, 0.75
    %vm4312 = vcmp.ge.f32.partialorder %v4160, 0.75
    %vm4313 = vcmp.ge.f32.partialorder %v4161, 0.75
    %vm4314 = vcmp.ge.f32.partialorder %v4162, 0.75
    %v4315 = vmul.f32 %v2720, %v4155
    %v4316 = vmul.f32 %v2720, %v4156
    %v4317 = vmul.f32 %v2720, %v4157
    %v4318 = vmul.f32 %v2720, %v4158
    %v4319 = vmul.f32 %v2720, %v4159
    %v4320 = vmul.f32 %v2720, %v4160
    %v4321 = vmul.f32 %v2720, %v4161
    %v4322 = vmul.f32 %v2720, %v4162
    %v4323 = vadd.f32 %v4315, %v2730
    %v4324 = vadd.f32 %v4316, %v2730
    %v4325 = vadd.f32 %v4317, %v2730
    %v4326 = vadd.f32 %v4318, %v2730
    %v4327 = vadd.f32 %v4319, %v2730
    %v4328 = vadd.f32 %v4320, %v2730
    %v4329 = vadd.f32 %v4321, %v2730
    %v4330 = vadd.f32 %v4322, %v2730
    %v4331 = vsel %vm4307, %v4323, %v4299
    %v4332 = vsel %vm4308, %v4324, %v4300
    %v4333 = vsel %vm4309, %v4325, %v4301
    %v4334 = vsel %vm4310, %v4326, %v4302
    %v4335 = vsel %vm4311, %v4327, %v4303
    %v4336 = vsel %vm4312, %v4328, %v4304
    %v4337 = vsel %vm4313, %v4329, %v4305
    %v4338 = vsel %vm4314, %v4330, %v4306
    %vm4339 = vcmp.ge.f32.partialorder %v4155, 1.5
    %vm4340 = vcmp.ge.f32.partialorder %v4156, 1.5
    %vm4341 = vcmp.ge.f32.partialorder %v4157, 1.5
    %vm4342 = vcmp.ge.f32.partialorder %v4158, 1.5
    %vm4343 = vcmp.ge.f32.partialorder %v4159, 1.5
    %vm4344 = vcmp.ge.f32.partialorder %v4160, 1.5
    %vm4345 = vcmp.ge.f32.partialorder %v4161, 1.5
    %vm4346 = vcmp.ge.f32.partialorder %v4162, 1.5
    %v4347 = vmul.f32 %v2756, %v4155
    %v4348 = vmul.f32 %v2756, %v4156
    %v4349 = vmul.f32 %v2756, %v4157
    %v4350 = vmul.f32 %v2756, %v4158
    %v4351 = vmul.f32 %v2756, %v4159
    %v4352 = vmul.f32 %v2756, %v4160
    %v4353 = vmul.f32 %v2756, %v4161
    %v4354 = vmul.f32 %v2756, %v4162
    %v4355 = vadd.f32 %v4347, %v2766
    %v4356 = vadd.f32 %v4348, %v2766
    %v4357 = vadd.f32 %v4349, %v2766
    %v4358 = vadd.f32 %v4350, %v2766
    %v4359 = vadd.f32 %v4351, %v2766
    %v4360 = vadd.f32 %v4352, %v2766
    %v4361 = vadd.f32 %v4353, %v2766
    %v4362 = vadd.f32 %v4354, %v2766
    %v4363 = vsel %vm4339, %v4355, %v4331
    %v4364 = vsel %vm4340, %v4356, %v4332
    %v4365 = vsel %vm4341, %v4357, %v4333
    %v4366 = vsel %vm4342, %v4358, %v4334
    %v4367 = vsel %vm4343, %v4359, %v4335
    %v4368 = vsel %vm4344, %v4360, %v4336
    %v4369 = vsel %vm4345, %v4361, %v4337
    %v4370 = vsel %vm4346, %v4362, %v4338
    %vm4371 = vcmp.ge.f32.partialorder %v4155, 2.25
    %vm4372 = vcmp.ge.f32.partialorder %v4156, 2.25
    %vm4373 = vcmp.ge.f32.partialorder %v4157, 2.25
    %vm4374 = vcmp.ge.f32.partialorder %v4158, 2.25
    %vm4375 = vcmp.ge.f32.partialorder %v4159, 2.25
    %vm4376 = vcmp.ge.f32.partialorder %v4160, 2.25
    %vm4377 = vcmp.ge.f32.partialorder %v4161, 2.25
    %vm4378 = vcmp.ge.f32.partialorder %v4162, 2.25
    %v4379 = vmul.f32 %v2792, %v4155
    %v4380 = vmul.f32 %v2792, %v4156
    %v4381 = vmul.f32 %v2792, %v4157
    %v4382 = vmul.f32 %v2792, %v4158
    %v4383 = vmul.f32 %v2792, %v4159
    %v4384 = vmul.f32 %v2792, %v4160
    %v4385 = vmul.f32 %v2792, %v4161
    %v4386 = vmul.f32 %v2792, %v4162
    %v4387 = vadd.f32 %v4379, %v2802
    %v4388 = vadd.f32 %v4380, %v2802
    %v4389 = vadd.f32 %v4381, %v2802
    %v4390 = vadd.f32 %v4382, %v2802
    %v4391 = vadd.f32 %v4383, %v2802
    %v4392 = vadd.f32 %v4384, %v2802
    %v4393 = vadd.f32 %v4385, %v2802
    %v4394 = vadd.f32 %v4386, %v2802
    %v4395 = vsel %vm4371, %v4387, %v4363
    %v4396 = vsel %vm4372, %v4388, %v4364
    %v4397 = vsel %vm4373, %v4389, %v4365
    %v4398 = vsel %vm4374, %v4390, %v4366
    %v4399 = vsel %vm4375, %v4391, %v4367
    %v4400 = vsel %vm4376, %v4392, %v4368
    %v4401 = vsel %vm4377, %v4393, %v4369
    %v4402 = vsel %vm4378, %v4394, %v4370
    %v4403 = vadd.f32 %v4155, %v4395
    %v4404 = vadd.f32 %v4156, %v4396
    %v4405 = vadd.f32 %v4157, %v4397
    %v4406 = vadd.f32 %v4158, %v4398
    %v4407 = vadd.f32 %v4159, %v4399
    %v4408 = vadd.f32 %v4160, %v4400
    %v4409 = vadd.f32 %v4161, %v4401
    %v4410 = vadd.f32 %v4162, %v4402
    %v4411 = vmax.f32 %v4403, -3.0
    %v4412 = vmax.f32 %v4404, -3.0
    %v4413 = vmax.f32 %v4405, -3.0
    %v4414 = vmax.f32 %v4406, -3.0
    %v4415 = vmax.f32 %v4407, -3.0
    %v4416 = vmax.f32 %v4408, -3.0
    %v4417 = vmax.f32 %v4409, -3.0
    %v4418 = vmax.f32 %v4410, -3.0
    %v4419 = vmin.f32 %v4411, 3.0
    %v4420 = vmin.f32 %v4412, 3.0
    %v4421 = vmin.f32 %v4413, 3.0
    %v4422 = vmin.f32 %v4414, 3.0
    %v4423 = vmin.f32 %v4415, 3.0
    %v4424 = vmin.f32 %v4416, 3.0
    %v4425 = vmin.f32 %v4417, 3.0
    %v4426 = vmin.f32 %v4418, 3.0
    %v4427 = vmul.f32 %v2548, %v4419
    %v4428 = vmul.f32 %v2548, %v4420
    %v4429 = vmul.f32 %v2548, %v4421
    %v4430 = vmul.f32 %v2548, %v4422
    %v4431 = vmul.f32 %v2548, %v4423
    %v4432 = vmul.f32 %v2548, %v4424
    %v4433 = vmul.f32 %v2548, %v4425
    %v4434 = vmul.f32 %v2548, %v4426
    %v4435 = vadd.f32 %v4427, %v2558
    %v4436 = vadd.f32 %v4428, %v2558
    %v4437 = vadd.f32 %v4429, %v2558
    %v4438 = vadd.f32 %v4430, %v2558
    %v4439 = vadd.f32 %v4431, %v2558
    %v4440 = vadd.f32 %v4432, %v2558
    %v4441 = vadd.f32 %v4433, %v2558
    %v4442 = vadd.f32 %v4434, %v2558
    %vm4443 = vcmp.ge.f32.partialorder %v4419, -2.25
    %vm4444 = vcmp.ge.f32.partialorder %v4420, -2.25
    %vm4445 = vcmp.ge.f32.partialorder %v4421, -2.25
    %vm4446 = vcmp.ge.f32.partialorder %v4422, -2.25
    %vm4447 = vcmp.ge.f32.partialorder %v4423, -2.25
    %vm4448 = vcmp.ge.f32.partialorder %v4424, -2.25
    %vm4449 = vcmp.ge.f32.partialorder %v4425, -2.25
    %vm4450 = vcmp.ge.f32.partialorder %v4426, -2.25
    %v4451 = vmul.f32 %v2576, %v4419
    %v4452 = vmul.f32 %v2576, %v4420
    %v4453 = vmul.f32 %v2576, %v4421
    %v4454 = vmul.f32 %v2576, %v4422
    %v4455 = vmul.f32 %v2576, %v4423
    %v4456 = vmul.f32 %v2576, %v4424
    %v4457 = vmul.f32 %v2576, %v4425
    %v4458 = vmul.f32 %v2576, %v4426
    %v4459 = vadd.f32 %v4451, %v2586
    %v4460 = vadd.f32 %v4452, %v2586
    %v4461 = vadd.f32 %v4453, %v2586
    %v4462 = vadd.f32 %v4454, %v2586
    %v4463 = vadd.f32 %v4455, %v2586
    %v4464 = vadd.f32 %v4456, %v2586
    %v4465 = vadd.f32 %v4457, %v2586
    %v4466 = vadd.f32 %v4458, %v2586
    %v4467 = vsel %vm4443, %v4459, %v4435
    %v4468 = vsel %vm4444, %v4460, %v4436
    %v4469 = vsel %vm4445, %v4461, %v4437
    %v4470 = vsel %vm4446, %v4462, %v4438
    %v4471 = vsel %vm4447, %v4463, %v4439
    %v4472 = vsel %vm4448, %v4464, %v4440
    %v4473 = vsel %vm4449, %v4465, %v4441
    %v4474 = vsel %vm4450, %v4466, %v4442
    %vm4475 = vcmp.ge.f32.partialorder %v4419, -1.5
    %vm4476 = vcmp.ge.f32.partialorder %v4420, -1.5
    %vm4477 = vcmp.ge.f32.partialorder %v4421, -1.5
    %vm4478 = vcmp.ge.f32.partialorder %v4422, -1.5
    %vm4479 = vcmp.ge.f32.partialorder %v4423, -1.5
    %vm4480 = vcmp.ge.f32.partialorder %v4424, -1.5
    %vm4481 = vcmp.ge.f32.partialorder %v4425, -1.5
    %vm4482 = vcmp.ge.f32.partialorder %v4426, -1.5
    %v4483 = vmul.f32 %v2612, %v4419
    %v4484 = vmul.f32 %v2612, %v4420
    %v4485 = vmul.f32 %v2612, %v4421
    %v4486 = vmul.f32 %v2612, %v4422
    %v4487 = vmul.f32 %v2612, %v4423
    %v4488 = vmul.f32 %v2612, %v4424
    %v4489 = vmul.f32 %v2612, %v4425
    %v4490 = vmul.f32 %v2612, %v4426
    %v4491 = vadd.f32 %v4483, %v2622
    %v4492 = vadd.f32 %v4484, %v2622
    %v4493 = vadd.f32 %v4485, %v2622
    %v4494 = vadd.f32 %v4486, %v2622
    %v4495 = vadd.f32 %v4487, %v2622
    %v4496 = vadd.f32 %v4488, %v2622
    %v4497 = vadd.f32 %v4489, %v2622
    %v4498 = vadd.f32 %v4490, %v2622
    %v4499 = vsel %vm4475, %v4491, %v4467
    %v4500 = vsel %vm4476, %v4492, %v4468
    %v4501 = vsel %vm4477, %v4493, %v4469
    %v4502 = vsel %vm4478, %v4494, %v4470
    %v4503 = vsel %vm4479, %v4495, %v4471
    %v4504 = vsel %vm4480, %v4496, %v4472
    %v4505 = vsel %vm4481, %v4497, %v4473
    %v4506 = vsel %vm4482, %v4498, %v4474
    %vm4507 = vcmp.ge.f32.partialorder %v4419, -0.75
    %vm4508 = vcmp.ge.f32.partialorder %v4420, -0.75
    %vm4509 = vcmp.ge.f32.partialorder %v4421, -0.75
    %vm4510 = vcmp.ge.f32.partialorder %v4422, -0.75
    %vm4511 = vcmp.ge.f32.partialorder %v4423, -0.75
    %vm4512 = vcmp.ge.f32.partialorder %v4424, -0.75
    %vm4513 = vcmp.ge.f32.partialorder %v4425, -0.75
    %vm4514 = vcmp.ge.f32.partialorder %v4426, -0.75
    %v4515 = vmul.f32 %v2648, %v4419
    %v4516 = vmul.f32 %v2648, %v4420
    %v4517 = vmul.f32 %v2648, %v4421
    %v4518 = vmul.f32 %v2648, %v4422
    %v4519 = vmul.f32 %v2648, %v4423
    %v4520 = vmul.f32 %v2648, %v4424
    %v4521 = vmul.f32 %v2648, %v4425
    %v4522 = vmul.f32 %v2648, %v4426
    %v4523 = vadd.f32 %v4515, %v2658
    %v4524 = vadd.f32 %v4516, %v2658
    %v4525 = vadd.f32 %v4517, %v2658
    %v4526 = vadd.f32 %v4518, %v2658
    %v4527 = vadd.f32 %v4519, %v2658
    %v4528 = vadd.f32 %v4520, %v2658
    %v4529 = vadd.f32 %v4521, %v2658
    %v4530 = vadd.f32 %v4522, %v2658
    %v4531 = vsel %vm4507, %v4523, %v4499
    %v4532 = vsel %vm4508, %v4524, %v4500
    %v4533 = vsel %vm4509, %v4525, %v4501
    %v4534 = vsel %vm4510, %v4526, %v4502
    %v4535 = vsel %vm4511, %v4527, %v4503
    %v4536 = vsel %vm4512, %v4528, %v4504
    %v4537 = vsel %vm4513, %v4529, %v4505
    %v4538 = vsel %vm4514, %v4530, %v4506
    %vm4539 = vcmp.ge.f32.partialorder %v4419, 0.0
    %vm4540 = vcmp.ge.f32.partialorder %v4420, 0.0
    %vm4541 = vcmp.ge.f32.partialorder %v4421, 0.0
    %vm4542 = vcmp.ge.f32.partialorder %v4422, 0.0
    %vm4543 = vcmp.ge.f32.partialorder %v4423, 0.0
    %vm4544 = vcmp.ge.f32.partialorder %v4424, 0.0
    %vm4545 = vcmp.ge.f32.partialorder %v4425, 0.0
    %vm4546 = vcmp.ge.f32.partialorder %v4426, 0.0
    %v4547 = vmul.f32 %v2684, %v4419
    %v4548 = vmul.f32 %v2684, %v4420
    %v4549 = vmul.f32 %v2684, %v4421
    %v4550 = vmul.f32 %v2684, %v4422
    %v4551 = vmul.f32 %v2684, %v4423
    %v4552 = vmul.f32 %v2684, %v4424
    %v4553 = vmul.f32 %v2684, %v4425
    %v4554 = vmul.f32 %v2684, %v4426
    %v4555 = vadd.f32 %v4547, %v2694
    %v4556 = vadd.f32 %v4548, %v2694
    %v4557 = vadd.f32 %v4549, %v2694
    %v4558 = vadd.f32 %v4550, %v2694
    %v4559 = vadd.f32 %v4551, %v2694
    %v4560 = vadd.f32 %v4552, %v2694
    %v4561 = vadd.f32 %v4553, %v2694
    %v4562 = vadd.f32 %v4554, %v2694
    %v4563 = vsel %vm4539, %v4555, %v4531
    %v4564 = vsel %vm4540, %v4556, %v4532
    %v4565 = vsel %vm4541, %v4557, %v4533
    %v4566 = vsel %vm4542, %v4558, %v4534
    %v4567 = vsel %vm4543, %v4559, %v4535
    %v4568 = vsel %vm4544, %v4560, %v4536
    %v4569 = vsel %vm4545, %v4561, %v4537
    %v4570 = vsel %vm4546, %v4562, %v4538
    %vm4571 = vcmp.ge.f32.partialorder %v4419, 0.75
    %vm4572 = vcmp.ge.f32.partialorder %v4420, 0.75
    %vm4573 = vcmp.ge.f32.partialorder %v4421, 0.75
    %vm4574 = vcmp.ge.f32.partialorder %v4422, 0.75
    %vm4575 = vcmp.ge.f32.partialorder %v4423, 0.75
    %vm4576 = vcmp.ge.f32.partialorder %v4424, 0.75
    %vm4577 = vcmp.ge.f32.partialorder %v4425, 0.75
    %vm4578 = vcmp.ge.f32.partialorder %v4426, 0.75
    %v4579 = vmul.f32 %v2720, %v4419
    %v4580 = vmul.f32 %v2720, %v4420
    %v4581 = vmul.f32 %v2720, %v4421
    %v4582 = vmul.f32 %v2720, %v4422
    %v4583 = vmul.f32 %v2720, %v4423
    %v4584 = vmul.f32 %v2720, %v4424
    %v4585 = vmul.f32 %v2720, %v4425
    %v4586 = vmul.f32 %v2720, %v4426
    %v4587 = vadd.f32 %v4579, %v2730
    %v4588 = vadd.f32 %v4580, %v2730
    %v4589 = vadd.f32 %v4581, %v2730
    %v4590 = vadd.f32 %v4582, %v2730
    %v4591 = vadd.f32 %v4583, %v2730
    %v4592 = vadd.f32 %v4584, %v2730
    %v4593 = vadd.f32 %v4585, %v2730
    %v4594 = vadd.f32 %v4586, %v2730
    %v4595 = vsel %vm4571, %v4587, %v4563
    %v4596 = vsel %vm4572, %v4588, %v4564
    %v4597 = vsel %vm4573, %v4589, %v4565
    %v4598 = vsel %vm4574, %v4590, %v4566
    %v4599 = vsel %vm4575, %v4591, %v4567
    %v4600 = vsel %vm4576, %v4592, %v4568
    %v4601 = vsel %vm4577, %v4593, %v4569
    %v4602 = vsel %vm4578, %v4594, %v4570
    %vm4603 = vcmp.ge.f32.partialorder %v4419, 1.5
    %vm4604 = vcmp.ge.f32.partialorder %v4420, 1.5
    %vm4605 = vcmp.ge.f32.partialorder %v4421, 1.5
    %vm4606 = vcmp.ge.f32.partialorder %v4422, 1.5
    %vm4607 = vcmp.ge.f32.partialorder %v4423, 1.5
    %vm4608 = vcmp.ge.f32.partialorder %v4424, 1.5
    %vm4609 = vcmp.ge.f32.partialorder %v4425, 1.5
    %vm4610 = vcmp.ge.f32.partialorder %v4426, 1.5
    %v4611 = vmul.f32 %v2756, %v4419
    %v4612 = vmul.f32 %v2756, %v4420
    %v4613 = vmul.f32 %v2756, %v4421
    %v4614 = vmul.f32 %v2756, %v4422
    %v4615 = vmul.f32 %v2756, %v4423
    %v4616 = vmul.f32 %v2756, %v4424
    %v4617 = vmul.f32 %v2756, %v4425
    %v4618 = vmul.f32 %v2756, %v4426
    %v4619 = vadd.f32 %v4611, %v2766
    %v4620 = vadd.f32 %v4612, %v2766
    %v4621 = vadd.f32 %v4613, %v2766
    %v4622 = vadd.f32 %v4614, %v2766
    %v4623 = vadd.f32 %v4615, %v2766
    %v4624 = vadd.f32 %v4616, %v2766
    %v4625 = vadd.f32 %v4617, %v2766
    %v4626 = vadd.f32 %v4618, %v2766
    %v4627 = vsel %vm4603, %v4619, %v4595
    %v4628 = vsel %vm4604, %v4620, %v4596
    %v4629 = vsel %vm4605, %v4621, %v4597
    %v4630 = vsel %vm4606, %v4622, %v4598
    %v4631 = vsel %vm4607, %v4623, %v4599
    %v4632 = vsel %vm4608, %v4624, %v4600
    %v4633 = vsel %vm4609, %v4625, %v4601
    %v4634 = vsel %vm4610, %v4626, %v4602
    %vm4635 = vcmp.ge.f32.partialorder %v4419, 2.25
    %vm4636 = vcmp.ge.f32.partialorder %v4420, 2.25
    %vm4637 = vcmp.ge.f32.partialorder %v4421, 2.25
    %vm4638 = vcmp.ge.f32.partialorder %v4422, 2.25
    %vm4639 = vcmp.ge.f32.partialorder %v4423, 2.25
    %vm4640 = vcmp.ge.f32.partialorder %v4424, 2.25
    %vm4641 = vcmp.ge.f32.partialorder %v4425, 2.25
    %vm4642 = vcmp.ge.f32.partialorder %v4426, 2.25
    %v4643 = vmul.f32 %v2792, %v4419
    %v4644 = vmul.f32 %v2792, %v4420
    %v4645 = vmul.f32 %v2792, %v4421
    %v4646 = vmul.f32 %v2792, %v4422
    %v4647 = vmul.f32 %v2792, %v4423
    %v4648 = vmul.f32 %v2792, %v4424
    %v4649 = vmul.f32 %v2792, %v4425
    %v4650 = vmul.f32 %v2792, %v4426
    %v4651 = vadd.f32 %v4643, %v2802
    %v4652 = vadd.f32 %v4644, %v2802
    %v4653 = vadd.f32 %v4645, %v2802
    %v4654 = vadd.f32 %v4646, %v2802
    %v4655 = vadd.f32 %v4647, %v2802
    %v4656 = vadd.f32 %v4648, %v2802
    %v4657 = vadd.f32 %v4649, %v2802
    %v4658 = vadd.f32 %v4650, %v2802
    %v4659 = vsel %vm4635, %v4651, %v4627
    %v4660 = vsel %vm4636, %v4652, %v4628
    %v4661 = vsel %vm4637, %v4653, %v4629
    %v4662 = vsel %vm4638, %v4654, %v4630
    %v4663 = vsel %vm4639, %v4655, %v4631
    %v4664 = vsel %vm4640, %v4656, %v4632
    %v4665 = vsel %vm4641, %v4657, %v4633
    %v4666 = vsel %vm4642, %v4658, %v4634
    %v4667 = vadd.f32 %v4419, %v4659
    %v4668 = vadd.f32 %v4420, %v4660
    %v4669 = vadd.f32 %v4421, %v4661
    %v4670 = vadd.f32 %v4422, %v4662
    %v4671 = vadd.f32 %v4423, %v4663
    %v4672 = vadd.f32 %v4424, %v4664
    %v4673 = vadd.f32 %v4425, %v4665
    %v4674 = vadd.f32 %v4426, %v4666
    %v4675 = vmax.f32 %v4667, -3.0
    %v4676 = vmax.f32 %v4668, -3.0
    %v4677 = vmax.f32 %v4669, -3.0
    %v4678 = vmax.f32 %v4670, -3.0
    %v4679 = vmax.f32 %v4671, -3.0
    %v4680 = vmax.f32 %v4672, -3.0
    %v4681 = vmax.f32 %v4673, -3.0
    %v4682 = vmax.f32 %v4674, -3.0
    %v4683 = vmin.f32 %v4675, 3.0
    %v4684 = vmin.f32 %v4676, 3.0
    %v4685 = vmin.f32 %v4677, 3.0
    %v4686 = vmin.f32 %v4678, 3.0
    %v4687 = vmin.f32 %v4679, 3.0
    %v4688 = vmin.f32 %v4680, 3.0
    %v4689 = vmin.f32 %v4681, 3.0
    %v4690 = vmin.f32 %v4682, 3.0
    %vm4691 = vcmp.ge.f32.partialorder %v2509, -3.0
    %vm4692 = vcmp.ge.f32.partialorder %v2511, -3.0
    %vm4693 = vcmp.ge.f32.partialorder %v2515, -3.0
    %vm4694 = vcmp.ge.f32.partialorder %v2517, -3.0
    %vm4695 = vcmp.ge.f32.partialorder %v2521, -3.0
    %vm4696 = vcmp.ge.f32.partialorder %v2523, -3.0
    %vm4697 = vcmp.ge.f32.partialorder %v2527, -3.0
    %vm4698 = vcmp.ge.f32.partialorder %v2529, -3.0
    %vm4699 = vcmp.le.f32.partialorder %v2509, 3.0
    %vm4700 = vcmp.le.f32.partialorder %v2511, 3.0
    %vm4701 = vcmp.le.f32.partialorder %v2515, 3.0
    %vm4702 = vcmp.le.f32.partialorder %v2517, 3.0
    %vm4703 = vcmp.le.f32.partialorder %v2521, 3.0
    %vm4704 = vcmp.le.f32.partialorder %v2523, 3.0
    %vm4705 = vcmp.le.f32.partialorder %v2527, 3.0
    %vm4706 = vcmp.le.f32.partialorder %v2529, 3.0
    %vm4707 = vmand %vm4691, %vm4699
    %vm4708 = vmand %vm4692, %vm4700
    %vm4709 = vmand %vm4693, %vm4701
    %vm4710 = vmand %vm4694, %vm4702
    %vm4711 = vmand %vm4695, %vm4703
    %vm4712 = vmand %vm4696, %vm4704
    %vm4713 = vmand %vm4697, %vm4705
    %vm4714 = vmand %vm4698, %vm4706
    %v4715 = vsel %vm4707, %v4683, %v2509
    %v4716 = vsel %vm4708, %v4684, %v2511
    %v4717 = vsel %vm4709, %v4685, %v2515
    %v4718 = vsel %vm4710, %v4686, %v2517
    %v4719 = vsel %vm4711, %v4687, %v2521
    %v4720 = vsel %vm4712, %v4688, %v2523
    %v4721 = vsel %vm4713, %v4689, %v2527
    %v4722 = vsel %vm4714, %v4690, %v2529
    %v4723 = vld [vmem:[%s10] sm:$0xff]
    %v4724 = vld [vmem:[%s10 + $0x8] sm:$0xff]
    %v4725 = vld [vmem:[%s10 + $0x10] sm:$0xff]
    %v4726 = vld [vmem:[%s10 + $0x18] sm:$0xff]
    %4728 = vset.pattern.permute.xlu0 0
    %4729 = vperm.xlu0 %4728, %v4723
    %v4730 = vpop.permute.xlu0 %4729
    %4733 = vset.pattern.permute.xlu0 0
    %4734 = vperm.xlu0 %4733, %v4724
    %v4735 = vpop.permute.xlu0 %4734
    %4738 = vset.pattern.permute.xlu0 0
    %4739 = vperm.xlu0 %4738, %v4725
    %v4740 = vpop.permute.xlu0 %4739
    %4743 = vset.pattern.permute.xlu0 0
    %4744 = vperm.xlu0 %4743, %v4726
    %v4745 = vpop.permute.xlu0 %4744
    %v4747 = vmul.f32 %v4730, %v4715
    %v4748 = vmul.f32 %v4730, %v4716
    %v4749 = vmul.f32 %v4735, %v4717
    %v4750 = vmul.f32 %v4735, %v4718
    %v4751 = vmul.f32 %v4740, %v4719
    %v4752 = vmul.f32 %v4740, %v4720
    %v4753 = vmul.f32 %v4745, %v4721
    %v4754 = vmul.f32 %v4745, %v4722
    %v4755 = vadd.f32 %v4747, %v4749
    %v4756 = vadd.f32 %v4755, %v4751
    %v4757 = vadd.f32 %v4756, %v4753
    %v4758 = vrot.slane %v4757, 4
    %v4759 = vadd.f32 %v4757, %v4758
    %v4760 = vrot.slane %v4759, 2
    %v4761 = vadd.f32 %v4759, %v4760
    %v4762 = vrot.slane %v4761, 1
    %v4763 = vadd.f32 %v4761, %v4762
    %v4764 = vadd.f32 %v4748, %v4750
    %v4765 = vadd.f32 %v4764, %v4752
    %v4766 = vadd.f32 %v4765, %v4754
    %v4767 = vrot.slane %v4766, 4
    %v4768 = vadd.f32 %v4766, %v4767
    %v4769 = vrot.slane %v4768, 2
    %v4770 = vadd.f32 %v4768, %v4769
    %v4771 = vrot.slane %v4770, 1
    %v4772 = vadd.f32 %v4770, %v4771
    %s4773 = sld [smem:[#allocation2]]
    %v4774 = vstv %s4773
    %v4775 = vadd.f32 %v4763, %v4774
    %v4776 = vadd.f32 %v4772, %v4774
    %v4779 = vcombine.low %v4775, %v4776
    %v4781 = vunpack.c.l.s4 1966171168
    %v4782 = vunpack.c.0.s8 %v4781
    %v4783 = vlaneseq
    %v4784 = vshrl.u32 %v4783, 7
    %v4785 = vsub.s32 %v4782, %v4784
    %v4786 = vrot.slane %v4779, %v4785
    %v4788 = vunpack.c.l.s4 1966171168
    %v4789 = vunpack.c.0.s8 %v4788
    %v4790 = vlaneseq
    %v4791 = vshrl.u32 %v4790, 7
    %v4792 = vsub.s32 %v4789, %v4791
    %v4793 = vrot.slane %v4786, %v4792
    %v4795 = vlaneseq
    %vm4796 = vcmp.ge.s32.totalorder %v4795, 0
    %vm4797 = vcmp.lt.s32.totalorder %v4795, 256
    %vm4798 = vmand %vm4796, %vm4797
    %4799 = vst.msk [vmem:[#allocation11] sm:$0x3] %vm4798, %v4793
    // Predicated region
    $region62: #{tpu_custom_call.1} parent=1 // pred_check
      _
    $region63: #{tpu_custom_call.1} parent=1 // pred_check_branch
      %4801 = sbr.rel (0) target = $region65
    $region64: #{tpu_custom_call.1} parent=1 // pred_region
      %s4803 = ssub.s32 32, 32
      %4804 = vsyncadd [#allocation4], %s4803
      %s4806 = sshll.u32 [#allocation11], 4
      %s4807 = int_to_ptr.vmem [resolvable:$true] %s4806
      %4809 = dma.vmem_to_hbm [thread:$0]  %s4807, 32, %s11, [#allocation4]
    $region65: #{tpu_custom_call.1} parent=1 // pred_fallthru
      _
    // Predicated region
    $region66: #{tpu_custom_call.1} parent=1 // pred_check
      _
    $region67: #{tpu_custom_call.1} parent=1 // pred_check_branch
      %4811 = sbr.rel (0) target = $region69
    $region68: #{tpu_custom_call.1} parent=1 // pred_region
      %4812 = dma.done [#allocation4], 32
    $region69: #{tpu_custom_call.1} parent=1 // pred_fallthru
      _
    %4813 = vsyncpa [#allocation4], 1
    %4814 = vsyncpa [#allocation5], 1
    %4815 = vsyncpa [#allocation7], 1
    %4816 = vsyncpa [#allocation10], 1

</llo_original>
